<compile_context>
chip_gen: v5e
topology: v5e:2x2
jax: 0.10.0
libtpu: 0.0.40
codegen_flags: <defaults>
</compile_context>

<pallas_src>
import math

import jax
import jax.numpy as jnp
import numpy as np
from jax.experimental import pallas as pl
from jax.experimental.pallas import tpu as pltpu  # noqa: F401  (imported per task spec)

# ------------------------- small, module-consistent config -------------------
PATCH = 8                              # SimplePatchifier patch size
IMG = 16                               # image H = W  -> N = (16/8)^2 = 4 patches
BATCH = 2
N_PATCHES = (IMG // PATCH) ** 2        # 4
IN_FEATURES = 3 * PATCH * PATCH        # 192 (analogue of 3*16*16)
OUT_FEATURE = 32                       # divisible by 8 (out_feature // 8 used)
NUM_BLOCKS = 2                         # num_ViGBlocks (small)
NUM_EDGES = 3                          # k for the KNN graph (k <= N)
HEAD_NUM = 1                           # only groups=1 multi_head_fc supported
HIDDEN = 64                            # predictor hidden_layer
N_CLASSES = 10
BN_EPS = 1e-5
M_TOKENS = BATCH * N_PATCHES           # 8 rows in the token slab
LANES = 128                            # lane width of the packed parameter slab
LOGIT_PAD = 128                        # lane-dense logits output, sliced to 10 outside
PE_DIMS = [IN_FEATURES, OUT_FEATURE // 2, OUT_FEATURE // 4, OUT_FEATURE // 8,
           OUT_FEATURE // 4, OUT_FEATURE // 2, OUT_FEATURE]
_SQRT2 = math.sqrt(2.0)
_NEG = -1e30

# Per the review this can be relaxed to jax.lax.Precision.DEFAULT (single-pass
# bf16) for throughput runs -- at M=8/C=32 the MXU is nowhere near the
# bottleneck, so exact f32 is kept here purely so the 1e-2 cross-check against
# the pure-JAX reference cannot be perturbed by matmul-pass differences.
_PRECISION = jax.lax.Precision.HIGHEST


def _gelu(x):
    # PyTorch F.gelu / nn.GELU default = exact erf formulation.
    return 0.5 * x * (1.0 + jax.lax.erf(x / _SQRT2))


def _mm(a, b):
    return jnp.dot(a, b, precision=_PRECISION, preferred_element_type=jnp.float32)


# --------------------------- in-kernel building blocks ------------------------
def _dense_bn(x, lay, get, act):
    """Linear -> BatchNorm1d (training-mode batch stats) [-> GELU] on a (rows, C) slab."""
    aux = get(lay["aux"])                                    # rows: bias, gamma, beta
    y = _mm(x, get(lay["w"])) + aux[0:1, :]
    mean = jnp.mean(y, axis=0, keepdims=True)
    var = jnp.mean((y - mean) ** 2, axis=0, keepdims=True)   # biased, as torch train mode
    y = (y - mean) * jax.lax.rsqrt(var + BN_EPS)
    y = y * aux[1:2, :] + aux[2:3, :]
    return _gelu(y) if act else y


def _two_layer_nn(x, tp, get):
    # TwoLayerNN = Linear->BN->GELU->Linear->BN (see TODO at top of file).
    return _dense_bn(_dense_bn(x, tp["l1"], get, act=True), tp["l2"], get, act=False)


def _vig_block(x, neg_mask, bspec, get):
    """One ViGBlock on the full (M, C) token slab (all images at once)."""
    # ---- KNN graph from the block input; cross-image pairs masked additively ----
    sim = jax.lax.dot_general(x, x, (((1,), (1,)), ((), ())),
                              precision=_PRECISION,
                              preferred_element_type=jnp.float32) + neg_mask

    shortcut = x
    h = _two_layer_nn(x, bspec["in_layer1"], get)            # (M, C)

    # ---- exact top-k relative-max aggregation -------------------------------
    # k rounds: row-max threshold -> one-hot selection row -> (onehot @ h) picks
    # the selected neighbour's features; running max over rounds = max over S_i.
    s = sim
    neigh_max = jnp.full(h.shape, _NEG, jnp.float32)
    for t in range(NUM_EDGES):
        thr = jnp.max(s, axis=1, keepdims=True)              # (M, 1)
        sel = s >= thr                                       # one-hot rows (ties assumed absent)
        neigh_max = jnp.maximum(neigh_max, _mm(sel.astype(jnp.float32), h))
        if t + 1 < NUM_EDGES:
            s = jnp.where(sel, _NEG, s)                      # remove current max
    agg = neigh_max - h                                      # max_{j in S_i}(h_j - h_i)

    # ---- multi_head_fc (1x1 conv, groups=1): two lane-aligned dots, no scratch --
    y = _mm(h, get(bspec["fc_wh"])) + _mm(agg, get(bspec["fc_wa"])) + get(bspec["fc_b"])
    y = _two_layer_nn(_gelu(y), bspec["out_layer1"], get)
    x = y + shortcut                                         # residual 1
    z = _two_layer_nn(_gelu(_two_layer_nn(x, bspec["in_layer2"], get)),
                      bspec["out_layer2"], get)
    return z + x                                             # residual 2


def _fused_forward(x_ref, slab_ref, spec, feat_ref, logit_ref):
    def get(sp):
        off, r, c = sp
        return slab_ref[off:off + r, 0:c]

    # ---- patch embedding: (Linear+BN+GELU) x5, Linear+BN ----
    h = x_ref[...]                                           # (M, 192)
    n_pe = len(spec["patch_embed"])
    for i, lay in enumerate(spec["patch_embed"]):
        h = _dense_bn(h, lay, get, act=(i < n_pe - 1))
    x = h + get(spec["pose"])                                # pose pre-tiled (M, C)

    # ---- ViG blocks ----
    neg_mask = get(spec["neg_mask"])                         # (M, M) additive same-image mask
    for bspec in spec["blocks"]:
        x = _vig_block(x, neg_mask, bspec, get)
    feat_ref[...] = x                                        # features -> HBM

    # ---- classification head, without materializing the (B, N*C) flatten ----
    # flat[b] @ W1 == sum_n x[b*N+n] @ W1[n*C:(n+1)*C]; pick the n-th dot per
    # token with a one-hot patch mask, then sum each image's rows with a tiny
    # (B, M) reduction dot.  No staging scratch, no masked sub-lane stores.
    patch_sel = get(spec["patch_sel"])                       # (M, N) one-hot patch index
    batch_red = get(spec["batch_red"])                       # (B, M) image membership
    pw = spec["pred"]
    w1_off = pw["w1"][0]
    t = jnp.zeros((M_TOKENS, HIDDEN), jnp.float32)
    for n in range(N_PATCHES):
        w1n = slab_ref[w1_off + n * OUT_FEATURE:
                       w1_off + (n + 1) * OUT_FEATURE, 0:HIDDEN]
        t = t + patch_sel[:, n:n + 1] * _mm(x, w1n)
    aux1 = get(pw["aux1"])
    h1 = _mm(batch_red, t) + aux1[0:1, :]
    mean = jnp.mean(h1, axis=0, keepdims=True)
    var = jnp.mean((h1 - mean) ** 2, axis=0, keepdims=True)
    h1 = (h1 - mean) * jax.lax.rsqrt(var + BN_EPS)
    h1 = _gelu(h1 * aux1[1:2, :] + aux1[2:3, :])
    # lane-dense (B, 128) logits: W2 / b2 zero-padded on the host, sliced outside.
    logit_ref[...] = _mm(h1, get(pw["w2"])) + get(pw["b2"])


# ------------------------- host-side parameter packing ------------------------
class _Packer:
    """Packs many small (rows, cols<=128) f32 arrays into one (R, 128) slab.

    Every entry starts at an 8-aligned row so the in-kernel static slices stay
    sublane-aligned; the whole slab is a single HBM->VMEM DMA."""

    def __init__(self):
        self._rows = 0
        self._items = []

    def add(self, arr):
        a = np.asarray(jax.device_get(arr), np.float32)
        if a.ndim == 1:
            a = a[None, :]
        r, c = a.shape
        assert c <= LANES, (r, c)
        off = self._rows
        self._items.append((off, a))
        self._rows = off + ((r + 7) // 8) * 8
        return (off, r, c)

    def finalize(self):
        total = max(8, ((self._rows + 7) // 8) * 8)
        slab = np.zeros((total, LANES), np.float32)
        for off, a in self._items:
            slab[off:off + a.shape[0], :a.shape[1]] = a
        return jnp.asarray(slab)


def pack_params(params):
    pk = _Packer()

    def dense_spec(lay):
        return {"w": pk.add(lay["w"]), "aux": pk.add(lay["aux"])}

    def two_spec(tp):
        return {"l1": dense_spec(tp["l1"]), "l2": dense_spec(tp["l2"])}

    spec = {"patch_embed": [dense_spec(l) for l in params["patch_embed"]]}
    spec["pose"] = pk.add(np.tile(np.asarray(params["pose"], np.float32), (BATCH, 1)))
    img_id = np.arange(M_TOKENS) // N_PATCHES
    spec["neg_mask"] = pk.add(
        np.where(np.equal.outer(img_id, img_id), 0.0, _NEG).astype(np.float32))

    blocks = []
    for bp in params["blocks"]:
        fc_w = np.asarray(bp["fc_w"], np.float32)            # (2C, C) on [h | agg]
        blocks.append({
            "in_layer1": two_spec(bp["in_layer1"]),
            "out_layer1": two_spec(bp["out_layer1"]),
            "in_layer2": two_spec(bp["in_layer2"]),
            "out_layer2": two_spec(bp["out_layer2"]),
            "fc_wh": pk.add(fc_w[:OUT_FEATURE]),
            "fc_wa": pk.add(fc_w[OUT_FEATURE:]),
            "fc_b": pk.add(bp["fc_b"]),
        })
    spec["blocks"] = blocks

    # classification-head helpers (block-diagonal Linear over the flattened tokens)
    spec["patch_sel"] = pk.add(
        (np.arange(M_TOKENS)[:, None] % N_PATCHES ==
         np.arange(N_PATCHES)[None, :]).astype(np.float32))           # (M, N)
    spec["batch_red"] = pk.add(
        (np.arange(M_TOKENS)[None, :] // N_PATCHES ==
         np.arange(BATCH)[:, None]).astype(np.float32))               # (B, M)
    pr = params["pred"]
    w2 = np.asarray(pr["l2"]["w"], np.float32)
    b2 = np.asarray(pr["l2"]["b"], np.float32)
    spec["pred"] = {
        "w1": pk.add(pr["l1"]["w"]),                                  # (N*C, HIDDEN)
        "aux1": pk.add(pr["l1"]["aux"]),
        "w2": pk.add(np.pad(w2, ((0, 0), (0, LOGIT_PAD - N_CLASSES)))),
        "b2": pk.add(np.pad(b2, ((0, 0), (0, LOGIT_PAD - N_CLASSES)))),
    }
    return pk.finalize(), spec


# ------------------------------- model glue ----------------------------------
def patchify(x, p):
    """SimplePatchifier: NCHW -> (B, N, C, p, p), same ordering as torch unfold."""
    b, ch, hh, ww = x.shape
    x = x.reshape(b, ch, hh // p, p, ww // p, p)
    x = x.transpose(0, 2, 4, 1, 3, 5)
    return x.reshape(b, (hh // p) * (ww // p), ch, p, p)


def _cost_estimate(slab_nbytes):
    m, c, hd = M_TOKENS, OUT_FEATURE, HIDDEN
    flops = 0
    for din, dout in zip(PE_DIMS[:-1], PE_DIMS[1:]):
        flops += 2 * m * din * dout                           # patch embedding
    tln_small = 2 * (2 * m * c * c)                           # TwoLayerNN(C)
    tln_big = 2 * (2 * m * c * (4 * c))                       # TwoLayerNN(C, 4C)
    per_block = (2 * m * m * c                                # similarity matrix
                 + NUM_EDGES * 2 * m * m * c                  # one-hot neighbour selects
                 + 2 * tln_small + 2 * tln_big                # in/out layers 1 & 2
                 + 2 * m * (2 * c) * c)                       # multi_head_fc
    flops += NUM_BLOCKS * per_block
    flops += 2 * m * (N_PATCHES * c) * hd                     # head linear 1 (block-diag)
    flops += 2 * BATCH * m * hd                               # batch reduction dot
    flops += 2 * BATCH * hd * LOGIT_PAD                       # head linear 2 (lane padded)
    gelus = m * sum(PE_DIMS[1:-1]) + NUM_BLOCKS * m * 12 * c + BATCH * hd
    bytes_accessed = (slab_nbytes + M_TOKENS * IN_FEATURES * 4
                      + M_TOKENS * OUT_FEATURE * 4 + BATCH * LOGIT_PAD * 4)
    return pl.CostEstimate(flops=int(flops), transcendentals=int(gelus),
                           bytes_accessed=int(bytes_accessed))


def make_forward(spec, slab_shape):
    def kernel(x_ref, slab_ref, feat_ref, logit_ref):
        _fused_forward(x_ref, slab_ref, spec, feat_ref, logit_ref)

    call = pl.pallas_call(
        kernel,
        out_shape=(jax.ShapeDtypeStruct((M_TOKENS, OUT_FEATURE), jnp.float32),
                   jax.ShapeDtypeStruct((BATCH, LOGIT_PAD), jnp.float32)),
        cost_estimate=_cost_estimate(int(np.prod(slab_shape)) * 4),
    )

    @jax.jit
    def fwd(img, slab):
        patches = patchify(img, PATCH).reshape(M_TOKENS, IN_FEATURES)
        feat, logits_pad = call(patches, slab)
        return (feat.reshape(BATCH, N_PATCHES, OUT_FEATURE),
                logits_pad[:, :N_CLASSES])

    return fwd


# ------------------------------ parameter init -------------------------------
def init_params(key):
    keys = iter(jax.random.split(key, 512))

    def dense(din, dout):
        w = jax.random.normal(next(keys), (din, dout), jnp.float32) * 0.02
        b = jax.random.normal(next(keys), (1, dout), jnp.float32) * 0.02
        gamma = jnp.ones((1, dout), jnp.float32)
        beta = jnp.zeros((1, dout), jnp.float32)
        # pack bias / BN-gamma / BN-beta as rows of a single (3, dout) array
        return {"w": w, "aux": jnp.concatenate([b, gamma, beta], axis=0)}

    def two_nn(din, hidden):
        return {"l1": dense(din, hidden), "l2": dense(hidden, din)}

    d = OUT_FEATURE
    patch_embed = [dense(PE_DIMS[i], PE_DIMS[i + 1]) for i in range(len(PE_DIMS) - 1)]

    blocks = []
    for _ in range(NUM_BLOCKS):
        # torch Conv1d(2C, C, 1, groups=1): weight (C, 2C).  stack(...,-1).view
        # interleaves input channels as [x_0, max_0, x_1, max_1, ...]; de-interleave
        # once so the conv becomes dots on the de-interleaved [x | max] halves.
        wfc = jax.random.normal(next(keys), (d, 2 * d), jnp.float32) * 0.02
        bfc = jax.random.normal(next(keys), (1, d), jnp.float32) * 0.02
        fc_w = jnp.concatenate([jnp.transpose(wfc[:, 0::2]),
                                jnp.transpose(wfc[:, 1::2])], axis=0)   # (2C, C)
        blocks.append({
            "in_layer1": two_nn(d, d), "out_layer1": two_nn(d, d),
            "in_layer2": two_nn(d, 4 * d), "out_layer2": two_nn(d, 4 * d),
            "fc_w": fc_w, "fc_b": bfc,
        })

    pose = jax.random.uniform(next(keys), (N_PATCHES, d), jnp.float32)   # torch.rand
    pred = {"l1": dense(N_PATCHES * d, HIDDEN),
            "l2": {"w": jax.random.normal(next(keys), (HIDDEN, N_CLASSES),
                                          jnp.float32) * 0.02,
                   "b": jax.random.normal(next(keys), (1, N_CLASSES),
                                          jnp.float32) * 0.02}}
    return {"patch_embed": patch_embed, "pose": pose, "blocks": blocks, "pred": pred}


# -------------------- pure-JAX reference (for the self-check) -----------------
def _reference_forward(img, params):
    """Same math, written with lax.top_k + gather (no Pallas)."""
    def dense(x, lay, act):
        aux = lay["aux"]
        y = x @ lay["w"] + aux[0:1]
        m = y.mean(0, keepdims=True)
        v = ((y - m) ** 2).mean(0, keepdims=True)
        y = (y - m) / jnp.sqrt(v + BN_EPS) * aux[1:2] + aux[2:3]
        return _gelu(y) if act else y

    def two_nn(x, tp):
        return dense(dense(x, tp["l1"], True), tp["l2"], False)

    h = patchify(img, PATCH).reshape(M_TOKENS, IN_FEATURES)
    n_pe = len(params["patch_embed"])
    for i, lay in enumerate(params["patch_embed"]):
        h = dense(h, lay, act=(i < n_pe - 1))
    x = h.reshape(BATCH, N_PATCHES, OUT_FEATURE) + params["pose"][None]
    for bp in params["blocks"]:
        b, n, c = x.shape
        sim = jnp.einsum("bnc,bmc->bnm", x, x)
        graph = jax.lax.top_k(sim, NUM_EDGES)[1]
        shortcut = x
        h = two_nn(x.reshape(b * n, c), bp["in_layer1"]).reshape(b, n, c)
        neigh = jax.vmap(lambda xb, gb: xb[gb])(h, graph)           # (B, N, k, C)
        agg = jnp.max(neigh - h[:, :, None, :], axis=2)
        y = (jnp.concatenate([h, agg], -1).reshape(b * n, 2 * c) @ bp["fc_w"]
             + bp["fc_b"])
        y = two_nn(_gelu(y), bp["out_layer1"]).reshape(b, n, c)
        x = y + shortcut
        z = _gelu(two_nn(x.reshape(b * n, c), bp["in_layer2"]))
        x = two_nn(z, bp["out_layer2"]).reshape(b, n, c) + x
    features = x
    pr = params["pred"]
    flat = features.reshape(BATCH, -1)
    aux1 = pr["l1"]["aux"]
    h1 = flat @ pr["l1"]["w"] + aux1[0:1]
    m = h1.mean(0, keepdims=True)
    v = ((h1 - m) ** 2).mean(0, keepdims=True)
    h1 = _gelu((h1 - m) / jnp.sqrt(v + BN_EPS) * aux1[1:2] + aux1[2:3])
    logits = h1 @ pr["l2"]["w"] + pr["l2"]["b"]
    return features, logits


# ----------------------------------- main -------------------------------------
if __name__ == "__main__":
    root = jax.random.PRNGKey(0)
    k_params, k_img = jax.random.split(root)
    params = init_params(k_params)
    img = jax.random.uniform(k_img, (BATCH, 3, IMG, IMG), jnp.float32)  # NCHW

    slab, spec = pack_params(params)          # one lane-padded parameter slab (host-side)
    fwd = make_forward(spec, slab.shape)
    features, logits = fwd(img, slab)
    jax.block_until_ready((features, logits))

    assert features.shape == (BATCH, N_PATCHES, OUT_FEATURE), features.shape
    assert logits.shape == (BATCH, N_CLASSES), logits.shape
    assert bool(jnp.all(jnp.isfinite(features))) and bool(jnp.all(jnp.isfinite(logits)))

    # cross-check the fused kernel against a pure-JAX implementation of the same math
    # (scoped precision context instead of a global import-time config mutation)
    with jax.default_matmul_precision("highest"):
        ref_feat, ref_logits = _reference_forward(img, params)
    np.testing.assert_allclose(np.asarray(features), np.asarray(ref_feat),
                               rtol=1e-2, atol=1e-2)
    np.testing.assert_allclose(np.asarray(logits), np.asarray(ref_logits),
                               rtol=1e-2, atol=1e-2)
    print("KERNEL_OK")
</pallas_src>

<mosaic_0001>
module attributes {stable_mosaic.version = 11 : i64} {
  func.func @kernel(%arg0: memref<8x192xf32, #tpu.memory_space<vmem>>, %arg1: memref<1704x128xf32, #tpu.memory_space<vmem>>, %arg2: memref<8x32xf32, #tpu.memory_space<vmem>>, %arg3: memref<2x128xf32, #tpu.memory_space<vmem>>) attributes {dimension_semantics = [], scalar_prefetch = 0 : i64, scratch_operands = 0 : i64, tpu.core_type = #tpu.core_type<tc>} {
    %c0 = arith.constant 0 : index
    %c0_0 = arith.constant 0 : index
    %0 = vector.load %arg0[%c0, %c0_0] : memref<8x192xf32, #tpu.memory_space<vmem>>, vector<8x192xf32>
    %c192 = arith.constant 192 : index
    %c0_1 = arith.constant 0 : index
    %1 = vector.load %arg1[%c192, %c0_1] : memref<1704x128xf32, #tpu.memory_space<vmem>>, vector<3x16xf32>
    %c0_2 = arith.constant 0 : index
    %c0_3 = arith.constant 0 : index
    %2 = vector.load %arg1[%c0_2, %c0_3] : memref<1704x128xf32, #tpu.memory_space<vmem>>, vector<192x16xf32>
    %cst = arith.constant dense<0.000000e+00> : vector<8x16xf32>
    %3 = tpu.matmul %0, %2, %cst {dimension_numbers = #tpu.dot_dimension_numbers<[1], [0], [0], [1], [0, 0, 1, 1], [], []>, precision = #tpu.contract_precision<fp32>} : vector<8x192xf32>, vector<192x16xf32>, vector<8x16xf32> -> vector<8x16xf32>
    %4 = vector.extract_strided_slice %1 {offsets = [0, 0], sizes = [1, 16], strides = [1, 1]} : vector<3x16xf32> to vector<1x16xf32>
    %5 = vector.broadcast %4 : vector<1x16xf32> to vector<8x16xf32>
    %6 = arith.addf %3, %5 : vector<8x16xf32>
    %cst_4 = arith.constant dense<0.000000e+00> : vector<16xf32>
    %7 = vector.multi_reduction <add>, %6, %cst_4 [0] : vector<8x16xf32> to vector<16xf32>
    %8 = vector.shape_cast %7 : vector<16xf32> to vector<1x16xf32>
    %cst_5 = arith.constant 8.000000e+00 : f32
    %9 = vector.broadcast %cst_5 : f32 to vector<1x16xf32>
    %10 = arith.divf %8, %9 : vector<1x16xf32>
    %11 = vector.broadcast %10 : vector<1x16xf32> to vector<8x16xf32>
    %12 = arith.subf %6, %11 : vector<8x16xf32>
    %13 = arith.mulf %12, %12 : vector<8x16xf32>
    %cst_6 = arith.constant dense<0.000000e+00> : vector<16xf32>
    %14 = vector.multi_reduction <add>, %13, %cst_6 [0] : vector<8x16xf32> to vector<16xf32>
    %15 = vector.shape_cast %14 : vector<16xf32> to vector<1x16xf32>
    %cst_7 = arith.constant 8.000000e+00 : f32
    %16 = vector.broadcast %cst_7 : f32 to vector<1x16xf32>
    %17 = arith.divf %15, %16 : vector<1x16xf32>
    %18 = vector.broadcast %10 : vector<1x16xf32> to vector<8x16xf32>
    %19 = arith.subf %6, %18 : vector<8x16xf32>
    %cst_8 = arith.constant 9.99999974E-6 : f32
    %20 = vector.broadcast %cst_8 : f32 to vector<1x16xf32>
    %21 = arith.addf %17, %20 : vector<1x16xf32>
    %22 = math.rsqrt %21 : vector<1x16xf32>
    %23 = vector.broadcast %22 : vector<1x16xf32> to vector<8x16xf32>
    %24 = arith.mulf %19, %23 : vector<8x16xf32>
    %25 = vector.extract_strided_slice %1 {offsets = [1, 0], sizes = [1, 16], strides = [1, 1]} : vector<3x16xf32> to vector<1x16xf32>
    %26 = vector.broadcast %25 : vector<1x16xf32> to vector<8x16xf32>
    %27 = arith.mulf %24, %26 : vector<8x16xf32>
    %28 = vector.extract_strided_slice %1 {offsets = [2, 0], sizes = [1, 16], strides = [1, 1]} : vector<3x16xf32> to vector<1x16xf32>
    %29 = vector.broadcast %28 : vector<1x16xf32> to vector<8x16xf32>
    %30 = arith.addf %27, %29 : vector<8x16xf32>
    %cst_9 = arith.constant 5.000000e-01 : f32
    %31 = vector.broadcast %cst_9 : f32 to vector<8x16xf32>
    %32 = arith.mulf %31, %30 : vector<8x16xf32>
    %cst_10 = arith.constant 1.41421354 : f32
    %33 = vector.broadcast %cst_10 : f32 to vector<8x16xf32>
    %34 = arith.divf %30, %33 : vector<8x16xf32>
    %35 = math.erf %34 : vector<8x16xf32>
    %cst_11 = arith.constant 1.000000e+00 : f32
    %36 = vector.broadcast %cst_11 : f32 to vector<8x16xf32>
    %37 = arith.addf %36, %35 : vector<8x16xf32>
    %38 = arith.mulf %32, %37 : vector<8x16xf32>
    %c216 = arith.constant 216 : index
    %c0_12 = arith.constant 0 : index
    %39 = vector.load %arg1[%c216, %c0_12] : memref<1704x128xf32, #tpu.memory_space<vmem>>, vector<3x8xf32>
    %c200 = arith.constant 200 : index
    %c0_13 = arith.constant 0 : index
    %40 = vector.load %arg1[%c200, %c0_13] : memref<1704x128xf32, #tpu.memory_space<vmem>>, vector<16x8xf32>
    %cst_14 = arith.constant dense<0.000000e+00> : vector<8x8xf32>
    %41 = tpu.matmul %38, %40, %cst_14 {dimension_numbers = #tpu.dot_dimension_numbers<[1], [0], [0], [1], [0, 0, 1, 1], [], []>, precision = #tpu.contract_precision<fp32>} : vector<8x16xf32>, vector<16x8xf32>, vector<8x8xf32> -> vector<8x8xf32>
    %42 = vector.extract_strided_slice %39 {offsets = [0, 0], sizes = [1, 8], strides = [1, 1]} : vector<3x8xf32> to vector<1x8xf32>
    %43 = vector.broadcast %42 : vector<1x8xf32> to vector<8x8xf32>
    %44 = arith.addf %41, %43 : vector<8x8xf32>
    %cst_15 = arith.constant dense<0.000000e+00> : vector<8xf32>
    %45 = vector.multi_reduction <add>, %44, %cst_15 [0] : vector<8x8xf32> to vector<8xf32>
    %46 = vector.shape_cast %45 : vector<8xf32> to vector<1x8xf32>
    %cst_16 = arith.constant 8.000000e+00 : f32
    %47 = vector.broadcast %cst_16 : f32 to vector<1x8xf32>
    %48 = arith.divf %46, %47 : vector<1x8xf32>
    %49 = vector.broadcast %48 : vector<1x8xf32> to vector<8x8xf32>
    %50 = arith.subf %44, %49 : vector<8x8xf32>
    %51 = arith.mulf %50, %50 : vector<8x8xf32>
    %cst_17 = arith.constant dense<0.000000e+00> : vector<8xf32>
    %52 = vector.multi_reduction <add>, %51, %cst_17 [0] : vector<8x8xf32> to vector<8xf32>
    %53 = vector.shape_cast %52 : vector<8xf32> to vector<1x8xf32>
    %cst_18 = arith.constant 8.000000e+00 : f32
    %54 = vector.broadcast %cst_18 : f32 to vector<1x8xf32>
    %55 = arith.divf %53, %54 : vector<1x8xf32>
    %56 = vector.broadcast %48 : vector<1x8xf32> to vector<8x8xf32>
    %57 = arith.subf %44, %56 : vector<8x8xf32>
    %cst_19 = arith.constant 9.99999974E-6 : f32
    %58 = vector.broadcast %cst_19 : f32 to vector<1x8xf32>
    %59 = arith.addf %55, %58 : vector<1x8xf32>
    %60 = math.rsqrt %59 : vector<1x8xf32>
    %61 = vector.broadcast %60 : vector<1x8xf32> to vector<8x8xf32>
    %62 = arith.mulf %57, %61 : vector<8x8xf32>
    %63 = vector.extract_strided_slice %39 {offsets = [1, 0], sizes = [1, 8], strides = [1, 1]} : vector<3x8xf32> to vector<1x8xf32>
    %64 = vector.broadcast %63 : vector<1x8xf32> to vector<8x8xf32>
    %65 = arith.mulf %62, %64 : vector<8x8xf32>
    %66 = vector.extract_strided_slice %39 {offsets = [2, 0], sizes = [1, 8], strides = [1, 1]} : vector<3x8xf32> to vector<1x8xf32>
    %67 = vector.broadcast %66 : vector<1x8xf32> to vector<8x8xf32>
    %68 = arith.addf %65, %67 : vector<8x8xf32>
    %cst_20 = arith.constant 5.000000e-01 : f32
    %69 = vector.broadcast %cst_20 : f32 to vector<8x8xf32>
    %70 = arith.mulf %69, %68 : vector<8x8xf32>
    %cst_21 = arith.constant 1.41421354 : f32
    %71 = vector.broadcast %cst_21 : f32 to vector<8x8xf32>
    %72 = arith.divf %68, %71 : vector<8x8xf32>
    %73 = math.erf %72 : vector<8x8xf32>
    %cst_22 = arith.constant 1.000000e+00 : f32
    %74 = vector.broadcast %cst_22 : f32 to vector<8x8xf32>
    %75 = arith.addf %74, %73 : vector<8x8xf32>
    %76 = arith.mulf %70, %75 : vector<8x8xf32>
    %c232 = arith.constant 232 : index
    %c0_23 = arith.constant 0 : index
    %77 = vector.load %arg1[%c232, %c0_23] : memref<1704x128xf32, #tpu.memory_space<vmem>>, vector<3x4xf32>
    %c224 = arith.constant 224 : index
    %c0_24 = arith.constant 0 : index
    %78 = vector.load %arg1[%c224, %c0_24] : memref<1704x128xf32, #tpu.memory_space<vmem>>, vector<8x4xf32>
    %cst_25 = arith.constant dense<0.000000e+00> : vector<8x4xf32>
    %79 = tpu.matmul %76, %78, %cst_25 {dimension_numbers = #tpu.dot_dimension_numbers<[1], [0], [0], [1], [0, 0, 1, 1], [], []>, precision = #tpu.contract_precision<fp32>} : vector<8x8xf32>, vector<8x4xf32>, vector<8x4xf32> -> vector<8x4xf32>
    %80 = vector.extract_strided_slice %77 {offsets = [0, 0], sizes = [1, 4], strides = [1, 1]} : vector<3x4xf32> to vector<1x4xf32>
    %81 = vector.broadcast %80 : vector<1x4xf32> to vector<8x4xf32>
    %82 = arith.addf %79, %81 : vector<8x4xf32>
    %cst_26 = arith.constant dense<0.000000e+00> : vector<4xf32>
    %83 = vector.multi_reduction <add>, %82, %cst_26 [0] : vector<8x4xf32> to vector<4xf32>
    %84 = vector.shape_cast %83 : vector<4xf32> to vector<1x4xf32>
    %cst_27 = arith.constant 8.000000e+00 : f32
    %85 = vector.broadcast %cst_27 : f32 to vector<1x4xf32>
    %86 = arith.divf %84, %85 : vector<1x4xf32>
    %87 = vector.broadcast %86 : vector<1x4xf32> to vector<8x4xf32>
    %88 = arith.subf %82, %87 : vector<8x4xf32>
    %89 = arith.mulf %88, %88 : vector<8x4xf32>
    %cst_28 = arith.constant dense<0.000000e+00> : vector<4xf32>
    %90 = vector.multi_reduction <add>, %89, %cst_28 [0] : vector<8x4xf32> to vector<4xf32>
    %91 = vector.shape_cast %90 : vector<4xf32> to vector<1x4xf32>
    %cst_29 = arith.constant 8.000000e+00 : f32
    %92 = vector.broadcast %cst_29 : f32 to vector<1x4xf32>
    %93 = arith.divf %91, %92 : vector<1x4xf32>
    %94 = vector.broadcast %86 : vector<1x4xf32> to vector<8x4xf32>
    %95 = arith.subf %82, %94 : vector<8x4xf32>
    %cst_30 = arith.constant 9.99999974E-6 : f32
    %96 = vector.broadcast %cst_30 : f32 to vector<1x4xf32>
    %97 = arith.addf %93, %96 : vector<1x4xf32>
    %98 = math.rsqrt %97 : vector<1x4xf32>
    %99 = vector.broadcast %98 : vector<1x4xf32> to vector<8x4xf32>
    %100 = arith.mulf %95, %99 : vector<8x4xf32>
    %101 = vector.extract_strided_slice %77 {offsets = [1, 0], sizes = [1, 4], strides = [1, 1]} : vector<3x4xf32> to vector<1x4xf32>
    %102 = vector.broadcast %101 : vector<1x4xf32> to vector<8x4xf32>
    %103 = arith.mulf %100, %102 : vector<8x4xf32>
    %104 = vector.extract_strided_slice %77 {offsets = [2, 0], sizes = [1, 4], strides = [1, 1]} : vector<3x4xf32> to vector<1x4xf32>
    %105 = vector.broadcast %104 : vector<1x4xf32> to vector<8x4xf32>
    %106 = arith.addf %103, %105 : vector<8x4xf32>
    %cst_31 = arith.constant 5.000000e-01 : f32
    %107 = vector.broadcast %cst_31 : f32 to vector<8x4xf32>
    %108 = arith.mulf %107, %106 : vector<8x4xf32>
    %cst_32 = arith.constant 1.41421354 : f32
    %109 = vector.broadcast %cst_32 : f32 to vector<8x4xf32>
    %110 = arith.divf %106, %109 : vector<8x4xf32>
    %111 = math.erf %110 : vector<8x4xf32>
    %cst_33 = arith.constant 1.000000e+00 : f32
    %112 = vector.broadcast %cst_33 : f32 to vector<8x4xf32>
    %113 = arith.addf %112, %111 : vector<8x4xf32>
    %114 = arith.mulf %108, %113 : vector<8x4xf32>
    %c248 = arith.constant 248 : index
    %c0_34 = arith.constant 0 : index
    %115 = vector.load %arg1[%c248, %c0_34] : memref<1704x128xf32, #tpu.memory_space<vmem>>, vector<3x8xf32>
    %c240 = arith.constant 240 : index
    %c0_35 = arith.constant 0 : index
    %116 = vector.load %arg1[%c240, %c0_35] : memref<1704x128xf32, #tpu.memory_space<vmem>>, vector<4x8xf32>
    %cst_36 = arith.constant dense<0.000000e+00> : vector<8x8xf32>
    %117 = tpu.matmul %114, %116, %cst_36 {dimension_numbers = #tpu.dot_dimension_numbers<[1], [0], [0], [1], [0, 0, 1, 1], [], []>, precision = #tpu.contract_precision<fp32>} : vector<8x4xf32>, vector<4x8xf32>, vector<8x8xf32> -> vector<8x8xf32>
    %118 = vector.extract_strided_slice %115 {offsets = [0, 0], sizes = [1, 8], strides = [1, 1]} : vector<3x8xf32> to vector<1x8xf32>
    %119 = vector.broadcast %118 : vector<1x8xf32> to vector<8x8xf32>
    %120 = arith.addf %117, %119 : vector<8x8xf32>
    %cst_37 = arith.constant dense<0.000000e+00> : vector<8xf32>
    %121 = vector.multi_reduction <add>, %120, %cst_37 [0] : vector<8x8xf32> to vector<8xf32>
    %122 = vector.shape_cast %121 : vector<8xf32> to vector<1x8xf32>
    %cst_38 = arith.constant 8.000000e+00 : f32
    %123 = vector.broadcast %cst_38 : f32 to vector<1x8xf32>
    %124 = arith.divf %122, %123 : vector<1x8xf32>
    %125 = vector.broadcast %124 : vector<1x8xf32> to vector<8x8xf32>
    %126 = arith.subf %120, %125 : vector<8x8xf32>
    %127 = arith.mulf %126, %126 : vector<8x8xf32>
    %cst_39 = arith.constant dense<0.000000e+00> : vector<8xf32>
    %128 = vector.multi_reduction <add>, %127, %cst_39 [0] : vector<8x8xf32> to vector<8xf32>
    %129 = vector.shape_cast %128 : vector<8xf32> to vector<1x8xf32>
    %cst_40 = arith.constant 8.000000e+00 : f32
    %130 = vector.broadcast %cst_40 : f32 to vector<1x8xf32>
    %131 = arith.divf %129, %130 : vector<1x8xf32>
    %132 = vector.broadcast %124 : vector<1x8xf32> to vector<8x8xf32>
    %133 = arith.subf %120, %132 : vector<8x8xf32>
    %cst_41 = arith.constant 9.99999974E-6 : f32
    %134 = vector.broadcast %cst_41 : f32 to vector<1x8xf32>
    %135 = arith.addf %131, %134 : vector<1x8xf32>
    %136 = math.rsqrt %135 : vector<1x8xf32>
    %137 = vector.broadcast %136 : vector<1x8xf32> to vector<8x8xf32>
    %138 = arith.mulf %133, %137 : vector<8x8xf32>
    %139 = vector.extract_strided_slice %115 {offsets = [1, 0], sizes = [1, 8], strides = [1, 1]} : vector<3x8xf32> to vector<1x8xf32>
    %140 = vector.broadcast %139 : vector<1x8xf32> to vector<8x8xf32>
    %141 = arith.mulf %138, %140 : vector<8x8xf32>
    %142 = vector.extract_strided_slice %115 {offsets = [2, 0], sizes = [1, 8], strides = [1, 1]} : vector<3x8xf32> to vector<1x8xf32>
    %143 = vector.broadcast %142 : vector<1x8xf32> to vector<8x8xf32>
    %144 = arith.addf %141, %143 : vector<8x8xf32>
    %cst_42 = arith.constant 5.000000e-01 : f32
    %145 = vector.broadcast %cst_42 : f32 to vector<8x8xf32>
    %146 = arith.mulf %145, %144 : vector<8x8xf32>
    %cst_43 = arith.constant 1.41421354 : f32
    %147 = vector.broadcast %cst_43 : f32 to vector<8x8xf32>
    %148 = arith.divf %144, %147 : vector<8x8xf32>
    %149 = math.erf %148 : vector<8x8xf32>
    %cst_44 = arith.constant 1.000000e+00 : f32
    %150 = vector.broadcast %cst_44 : f32 to vector<8x8xf32>
    %151 = arith.addf %150, %149 : vector<8x8xf32>
    %152 = arith.mulf %146, %151 : vector<8x8xf32>
    %c264 = arith.constant 264 : index
    %c0_45 = arith.constant 0 : index
    %153 = vector.load %arg1[%c264, %c0_45] : memref<1704x128xf32, #tpu.memory_space<vmem>>, vector<3x16xf32>
    %c256 = arith.constant 256 : index
    %c0_46 = arith.constant 0 : index
    %154 = vector.load %arg1[%c256, %c0_46] : memref<1704x128xf32, #tpu.memory_space<vmem>>, vector<8x16xf32>
    %cst_47 = arith.constant dense<0.000000e+00> : vector<8x16xf32>
    %155 = tpu.matmul %152, %154, %cst_47 {dimension_numbers = #tpu.dot_dimension_numbers<[1], [0], [0], [1], [0, 0, 1, 1], [], []>, precision = #tpu.contract_precision<fp32>} : vector<8x8xf32>, vector<8x16xf32>, vector<8x16xf32> -> vector<8x16xf32>
    %156 = vector.extract_strided_slice %153 {offsets = [0, 0], sizes = [1, 16], strides = [1, 1]} : vector<3x16xf32> to vector<1x16xf32>
    %157 = vector.broadcast %156 : vector<1x16xf32> to vector<8x16xf32>
    %158 = arith.addf %155, %157 : vector<8x16xf32>
    %cst_48 = arith.constant dense<0.000000e+00> : vector<16xf32>
    %159 = vector.multi_reduction <add>, %158, %cst_48 [0] : vector<8x16xf32> to vector<16xf32>
    %160 = vector.shape_cast %159 : vector<16xf32> to vector<1x16xf32>
    %cst_49 = arith.constant 8.000000e+00 : f32
    %161 = vector.broadcast %cst_49 : f32 to vector<1x16xf32>
    %162 = arith.divf %160, %161 : vector<1x16xf32>
    %163 = vector.broadcast %162 : vector<1x16xf32> to vector<8x16xf32>
    %164 = arith.subf %158, %163 : vector<8x16xf32>
    %165 = arith.mulf %164, %164 : vector<8x16xf32>
    %cst_50 = arith.constant dense<0.000000e+00> : vector<16xf32>
    %166 = vector.multi_reduction <add>, %165, %cst_50 [0] : vector<8x16xf32> to vector<16xf32>
    %167 = vector.shape_cast %166 : vector<16xf32> to vector<1x16xf32>
    %cst_51 = arith.constant 8.000000e+00 : f32
    %168 = vector.broadcast %cst_51 : f32 to vector<1x16xf32>
    %169 = arith.divf %167, %168 : vector<1x16xf32>
    %170 = vector.broadcast %162 : vector<1x16xf32> to vector<8x16xf32>
    %171 = arith.subf %158, %170 : vector<8x16xf32>
    %cst_52 = arith.constant 9.99999974E-6 : f32
    %172 = vector.broadcast %cst_52 : f32 to vector<1x16xf32>
    %173 = arith.addf %169, %172 : vector<1x16xf32>
    %174 = math.rsqrt %173 : vector<1x16xf32>
    %175 = vector.broadcast %174 : vector<1x16xf32> to vector<8x16xf32>
    %176 = arith.mulf %171, %175 : vector<8x16xf32>
    %177 = vector.extract_strided_slice %153 {offsets = [1, 0], sizes = [1, 16], strides = [1, 1]} : vector<3x16xf32> to vector<1x16xf32>
    %178 = vector.broadcast %177 : vector<1x16xf32> to vector<8x16xf32>
    %179 = arith.mulf %176, %178 : vector<8x16xf32>
    %180 = vector.extract_strided_slice %153 {offsets = [2, 0], sizes = [1, 16], strides = [1, 1]} : vector<3x16xf32> to vector<1x16xf32>
    %181 = vector.broadcast %180 : vector<1x16xf32> to vector<8x16xf32>
    %182 = arith.addf %179, %181 : vector<8x16xf32>
    %cst_53 = arith.constant 5.000000e-01 : f32
    %183 = vector.broadcast %cst_53 : f32 to vector<8x16xf32>
    %184 = arith.mulf %183, %182 : vector<8x16xf32>
    %cst_54 = arith.constant 1.41421354 : f32
    %185 = vector.broadcast %cst_54 : f32 to vector<8x16xf32>
    %186 = arith.divf %182, %185 : vector<8x16xf32>
    %187 = math.erf %186 : vector<8x16xf32>
    %cst_55 = arith.constant 1.000000e+00 : f32
    %188 = vector.broadcast %cst_55 : f32 to vector<8x16xf32>
    %189 = arith.addf %188, %187 : vector<8x16xf32>
    %190 = arith.mulf %184, %189 : vector<8x16xf32>
    %c288 = arith.constant 288 : index
    %c0_56 = arith.constant 0 : index
    %191 = vector.load %arg1[%c288, %c0_56] : memref<1704x128xf32, #tpu.memory_space<vmem>>, vector<3x32xf32>
    %c272 = arith.constant 272 : index
    %c0_57 = arith.constant 0 : index
    %192 = vector.load %arg1[%c272, %c0_57] : memref<1704x128xf32, #tpu.memory_space<vmem>>, vector<16x32xf32>
    %cst_58 = arith.constant dense<0.000000e+00> : vector<8x32xf32>
    %193 = tpu.matmul %190, %192, %cst_58 {dimension_numbers = #tpu.dot_dimension_numbers<[1], [0], [0], [1], [0, 0, 1, 1], [], []>, precision = #tpu.contract_precision<fp32>} : vector<8x16xf32>, vector<16x32xf32>, vector<8x32xf32> -> vector<8x32xf32>
    %194 = vector.extract_strided_slice %191 {offsets = [0, 0], sizes = [1, 32], strides = [1, 1]} : vector<3x32xf32> to vector<1x32xf32>
    %195 = vector.broadcast %194 : vector<1x32xf32> to vector<8x32xf32>
    %196 = arith.addf %193, %195 : vector<8x32xf32>
    %cst_59 = arith.constant dense<0.000000e+00> : vector<32xf32>
    %197 = vector.multi_reduction <add>, %196, %cst_59 [0] : vector<8x32xf32> to vector<32xf32>
    %198 = vector.shape_cast %197 : vector<32xf32> to vector<1x32xf32>
    %cst_60 = arith.constant 8.000000e+00 : f32
    %199 = vector.broadcast %cst_60 : f32 to vector<1x32xf32>
    %200 = arith.divf %198, %199 : vector<1x32xf32>
    %201 = vector.broadcast %200 : vector<1x32xf32> to vector<8x32xf32>
    %202 = arith.subf %196, %201 : vector<8x32xf32>
    %203 = arith.mulf %202, %202 : vector<8x32xf32>
    %cst_61 = arith.constant dense<0.000000e+00> : vector<32xf32>
    %204 = vector.multi_reduction <add>, %203, %cst_61 [0] : vector<8x32xf32> to vector<32xf32>
    %205 = vector.shape_cast %204 : vector<32xf32> to vector<1x32xf32>
    %cst_62 = arith.constant 8.000000e+00 : f32
    %206 = vector.broadcast %cst_62 : f32 to vector<1x32xf32>
    %207 = arith.divf %205, %206 : vector<1x32xf32>
    %208 = vector.broadcast %200 : vector<1x32xf32> to vector<8x32xf32>
    %209 = arith.subf %196, %208 : vector<8x32xf32>
    %cst_63 = arith.constant 9.99999974E-6 : f32
    %210 = vector.broadcast %cst_63 : f32 to vector<1x32xf32>
    %211 = arith.addf %207, %210 : vector<1x32xf32>
    %212 = math.rsqrt %211 : vector<1x32xf32>
    %213 = vector.broadcast %212 : vector<1x32xf32> to vector<8x32xf32>
    %214 = arith.mulf %209, %213 : vector<8x32xf32>
    %215 = vector.extract_strided_slice %191 {offsets = [1, 0], sizes = [1, 32], strides = [1, 1]} : vector<3x32xf32> to vector<1x32xf32>
    %216 = vector.broadcast %215 : vector<1x32xf32> to vector<8x32xf32>
    %217 = arith.mulf %214, %216 : vector<8x32xf32>
    %218 = vector.extract_strided_slice %191 {offsets = [2, 0], sizes = [1, 32], strides = [1, 1]} : vector<3x32xf32> to vector<1x32xf32>
    %219 = vector.broadcast %218 : vector<1x32xf32> to vector<8x32xf32>
    %220 = arith.addf %217, %219 : vector<8x32xf32>
    %c296 = arith.constant 296 : index
    %c0_64 = arith.constant 0 : index
    %221 = vector.load %arg1[%c296, %c0_64] : memref<1704x128xf32, #tpu.memory_space<vmem>>, vector<8x32xf32>
    %222 = arith.addf %220, %221 : vector<8x32xf32>
    %c304 = arith.constant 304 : index
    %c0_65 = arith.constant 0 : index
    %223 = vector.load %arg1[%c304, %c0_65] : memref<1704x128xf32, #tpu.memory_space<vmem>>, vector<8x8xf32>
    %cst_66 = arith.constant dense<0.000000e+00> : vector<8x8xf32>
    %224 = tpu.matmul %222, %222, %cst_66 {dimension_numbers = #tpu.dot_dimension_numbers<[1], [1], [0], [0], [0, 0, 1, 0], [], []>, precision = #tpu.contract_precision<fp32>} : vector<8x32xf32>, vector<8x32xf32>, vector<8x8xf32> -> vector<8x8xf32>
    %225 = arith.addf %224, %223 : vector<8x8xf32>
    %c344 = arith.constant 344 : index
    %c0_67 = arith.constant 0 : index
    %226 = vector.load %arg1[%c344, %c0_67] : memref<1704x128xf32, #tpu.memory_space<vmem>>, vector<3x32xf32>
    %c312 = arith.constant 312 : index
    %c0_68 = arith.constant 0 : index
    %227 = vector.load %arg1[%c312, %c0_68] : memref<1704x128xf32, #tpu.memory_space<vmem>>, vector<32x32xf32>
    %cst_69 = arith.constant dense<0.000000e+00> : vector<8x32xf32>
    %228 = tpu.matmul %222, %227, %cst_69 {dimension_numbers = #tpu.dot_dimension_numbers<[1], [0], [0], [1], [0, 0, 1, 1], [], []>, precision = #tpu.contract_precision<fp32>} : vector<8x32xf32>, vector<32x32xf32>, vector<8x32xf32> -> vector<8x32xf32>
    %229 = vector.extract_strided_slice %226 {offsets = [0, 0], sizes = [1, 32], strides = [1, 1]} : vector<3x32xf32> to vector<1x32xf32>
    %230 = vector.broadcast %229 : vector<1x32xf32> to vector<8x32xf32>
    %231 = arith.addf %228, %230 : vector<8x32xf32>
    %cst_70 = arith.constant dense<0.000000e+00> : vector<32xf32>
    %232 = vector.multi_reduction <add>, %231, %cst_70 [0] : vector<8x32xf32> to vector<32xf32>
    %233 = vector.shape_cast %232 : vector<32xf32> to vector<1x32xf32>
    %cst_71 = arith.constant 8.000000e+00 : f32
    %234 = vector.broadcast %cst_71 : f32 to vector<1x32xf32>
    %235 = arith.divf %233, %234 : vector<1x32xf32>
    %236 = vector.broadcast %235 : vector<1x32xf32> to vector<8x32xf32>
    %237 = arith.subf %231, %236 : vector<8x32xf32>
    %238 = arith.mulf %237, %237 : vector<8x32xf32>
    %cst_72 = arith.constant dense<0.000000e+00> : vector<32xf32>
    %239 = vector.multi_reduction <add>, %238, %cst_72 [0] : vector<8x32xf32> to vector<32xf32>
    %240 = vector.shape_cast %239 : vector<32xf32> to vector<1x32xf32>
    %cst_73 = arith.constant 8.000000e+00 : f32
    %241 = vector.broadcast %cst_73 : f32 to vector<1x32xf32>
    %242 = arith.divf %240, %241 : vector<1x32xf32>
    %243 = vector.broadcast %235 : vector<1x32xf32> to vector<8x32xf32>
    %244 = arith.subf %231, %243 : vector<8x32xf32>
    %cst_74 = arith.constant 9.99999974E-6 : f32
    %245 = vector.broadcast %cst_74 : f32 to vector<1x32xf32>
    %246 = arith.addf %242, %245 : vector<1x32xf32>
    %247 = math.rsqrt %246 : vector<1x32xf32>
    %248 = vector.broadcast %247 : vector<1x32xf32> to vector<8x32xf32>
    %249 = arith.mulf %244, %248 : vector<8x32xf32>
    %250 = vector.extract_strided_slice %226 {offsets = [1, 0], sizes = [1, 32], strides = [1, 1]} : vector<3x32xf32> to vector<1x32xf32>
    %251 = vector.broadcast %250 : vector<1x32xf32> to vector<8x32xf32>
    %252 = arith.mulf %249, %251 : vector<8x32xf32>
    %253 = vector.extract_strided_slice %226 {offsets = [2, 0], sizes = [1, 32], strides = [1, 1]} : vector<3x32xf32> to vector<1x32xf32>
    %254 = vector.broadcast %253 : vector<1x32xf32> to vector<8x32xf32>
    %255 = arith.addf %252, %254 : vector<8x32xf32>
    %cst_75 = arith.constant 5.000000e-01 : f32
    %256 = vector.broadcast %cst_75 : f32 to vector<8x32xf32>
    %257 = arith.mulf %256, %255 : vector<8x32xf32>
    %cst_76 = arith.constant 1.41421354 : f32
    %258 = vector.broadcast %cst_76 : f32 to vector<8x32xf32>
    %259 = arith.divf %255, %258 : vector<8x32xf32>
    %260 = math.erf %259 : vector<8x32xf32>
    %cst_77 = arith.constant 1.000000e+00 : f32
    %261 = vector.broadcast %cst_77 : f32 to vector<8x32xf32>
    %262 = arith.addf %261, %260 : vector<8x32xf32>
    %263 = arith.mulf %257, %262 : vector<8x32xf32>
    %c384 = arith.constant 384 : index
    %c0_78 = arith.constant 0 : index
    %264 = vector.load %arg1[%c384, %c0_78] : memref<1704x128xf32, #tpu.memory_space<vmem>>, vector<3x32xf32>
    %c352 = arith.constant 352 : index
    %c0_79 = arith.constant 0 : index
    %265 = vector.load %arg1[%c352, %c0_79] : memref<1704x128xf32, #tpu.memory_space<vmem>>, vector<32x32xf32>
    %cst_80 = arith.constant dense<0.000000e+00> : vector<8x32xf32>
    %266 = tpu.matmul %263, %265, %cst_80 {dimension_numbers = #tpu.dot_dimension_numbers<[1], [0], [0], [1], [0, 0, 1, 1], [], []>, precision = #tpu.contract_precision<fp32>} : vector<8x32xf32>, vector<32x32xf32>, vector<8x32xf32> -> vector<8x32xf32>
    %267 = vector.extract_strided_slice %264 {offsets = [0, 0], sizes = [1, 32], strides = [1, 1]} : vector<3x32xf32> to vector<1x32xf32>
    %268 = vector.broadcast %267 : vector<1x32xf32> to vector<8x32xf32>
    %269 = arith.addf %266, %268 : vector<8x32xf32>
    %cst_81 = arith.constant dense<0.000000e+00> : vector<32xf32>
    %270 = vector.multi_reduction <add>, %269, %cst_81 [0] : vector<8x32xf32> to vector<32xf32>
    %271 = vector.shape_cast %270 : vector<32xf32> to vector<1x32xf32>
    %cst_82 = arith.constant 8.000000e+00 : f32
    %272 = vector.broadcast %cst_82 : f32 to vector<1x32xf32>
    %273 = arith.divf %271, %272 : vector<1x32xf32>
    %274 = vector.broadcast %273 : vector<1x32xf32> to vector<8x32xf32>
    %275 = arith.subf %269, %274 : vector<8x32xf32>
    %276 = arith.mulf %275, %275 : vector<8x32xf32>
    %cst_83 = arith.constant dense<0.000000e+00> : vector<32xf32>
    %277 = vector.multi_reduction <add>, %276, %cst_83 [0] : vector<8x32xf32> to vector<32xf32>
    %278 = vector.shape_cast %277 : vector<32xf32> to vector<1x32xf32>
    %cst_84 = arith.constant 8.000000e+00 : f32
    %279 = vector.broadcast %cst_84 : f32 to vector<1x32xf32>
    %280 = arith.divf %278, %279 : vector<1x32xf32>
    %281 = vector.broadcast %273 : vector<1x32xf32> to vector<8x32xf32>
    %282 = arith.subf %269, %281 : vector<8x32xf32>
    %cst_85 = arith.constant 9.99999974E-6 : f32
    %283 = vector.broadcast %cst_85 : f32 to vector<1x32xf32>
    %284 = arith.addf %280, %283 : vector<1x32xf32>
    %285 = math.rsqrt %284 : vector<1x32xf32>
    %286 = vector.broadcast %285 : vector<1x32xf32> to vector<8x32xf32>
    %287 = arith.mulf %282, %286 : vector<8x32xf32>
    %288 = vector.extract_strided_slice %264 {offsets = [1, 0], sizes = [1, 32], strides = [1, 1]} : vector<3x32xf32> to vector<1x32xf32>
    %289 = vector.broadcast %288 : vector<1x32xf32> to vector<8x32xf32>
    %290 = arith.mulf %287, %289 : vector<8x32xf32>
    %291 = vector.extract_strided_slice %264 {offsets = [2, 0], sizes = [1, 32], strides = [1, 1]} : vector<3x32xf32> to vector<1x32xf32>
    %292 = vector.broadcast %291 : vector<1x32xf32> to vector<8x32xf32>
    %293 = arith.addf %290, %292 : vector<8x32xf32>
    %cst_86 = arith.constant -1.000000e+30 : f32
    %294 = vector.broadcast %cst_86 : f32 to vector<8x32xf32>
    %cst_87 = arith.constant dense<0xFF800000> : vector<8xf32>
    %295 = vector.multi_reduction <maximumf>, %225, %cst_87 [1] : vector<8x8xf32> to vector<8xf32>
    %296 = vector.shape_cast %295 : vector<8xf32> to vector<8x1xf32>
    %297 = vector.broadcast %296 : vector<8x1xf32> to vector<8x8xf32>
    %298 = arith.cmpf oge, %225, %297 : vector<8x8xf32>
    %299 = arith.extui %298 : vector<8x8xi1> to vector<8x8xi32>
    %300 = arith.sitofp %299 : vector<8x8xi32> to vector<8x8xf32>
    %cst_88 = arith.constant dense<0.000000e+00> : vector<8x32xf32>
    %301 = tpu.matmul %300, %293, %cst_88 {dimension_numbers = #tpu.dot_dimension_numbers<[1], [0], [0], [1], [0, 0, 1, 1], [], []>, precision = #tpu.contract_precision<fp32>} : vector<8x8xf32>, vector<8x32xf32>, vector<8x32xf32> -> vector<8x32xf32>
    %302 = arith.maximumf %294, %301 : vector<8x32xf32>
    %cst_89 = arith.constant -1.000000e+30 : f32
    %303 = vector.broadcast %cst_89 : f32 to vector<8x8xf32>
    %304 = arith.select %298, %303, %225 : vector<8x8xi1>, vector<8x8xf32>
    %cst_90 = arith.constant dense<0xFF800000> : vector<8xf32>
    %305 = vector.multi_reduction <maximumf>, %304, %cst_90 [1] : vector<8x8xf32> to vector<8xf32>
    %306 = vector.shape_cast %305 : vector<8xf32> to vector<8x1xf32>
    %307 = vector.broadcast %306 : vector<8x1xf32> to vector<8x8xf32>
    %308 = arith.cmpf oge, %304, %307 : vector<8x8xf32>
    %309 = arith.extui %308 : vector<8x8xi1> to vector<8x8xi32>
    %310 = arith.sitofp %309 : vector<8x8xi32> to vector<8x8xf32>
    %cst_91 = arith.constant dense<0.000000e+00> : vector<8x32xf32>
    %311 = tpu.matmul %310, %293, %cst_91 {dimension_numbers = #tpu.dot_dimension_numbers<[1], [0], [0], [1], [0, 0, 1, 1], [], []>, precision = #tpu.contract_precision<fp32>} : vector<8x8xf32>, vector<8x32xf32>, vector<8x32xf32> -> vector<8x32xf32>
    %312 = arith.maximumf %302, %311 : vector<8x32xf32>
    %cst_92 = arith.constant -1.000000e+30 : f32
    %313 = vector.broadcast %cst_92 : f32 to vector<8x8xf32>
    %314 = arith.select %308, %313, %304 : vector<8x8xi1>, vector<8x8xf32>
    %cst_93 = arith.constant dense<0xFF800000> : vector<8xf32>
    %315 = vector.multi_reduction <maximumf>, %314, %cst_93 [1] : vector<8x8xf32> to vector<8xf32>
    %316 = vector.shape_cast %315 : vector<8xf32> to vector<8x1xf32>
    %317 = vector.broadcast %316 : vector<8x1xf32> to vector<8x8xf32>
    %318 = arith.cmpf oge, %314, %317 : vector<8x8xf32>
    %319 = arith.extui %318 : vector<8x8xi1> to vector<8x8xi32>
    %320 = arith.sitofp %319 : vector<8x8xi32> to vector<8x8xf32>
    %cst_94 = arith.constant dense<0.000000e+00> : vector<8x32xf32>
    %321 = tpu.matmul %320, %293, %cst_94 {dimension_numbers = #tpu.dot_dimension_numbers<[1], [0], [0], [1], [0, 0, 1, 1], [], []>, precision = #tpu.contract_precision<fp32>} : vector<8x8xf32>, vector<8x32xf32>, vector<8x32xf32> -> vector<8x32xf32>
    %322 = arith.maximumf %312, %321 : vector<8x32xf32>
    %323 = arith.subf %322, %293 : vector<8x32xf32>
    %c824 = arith.constant 824 : index
    %c0_95 = arith.constant 0 : index
    %324 = vector.load %arg1[%c824, %c0_95] : memref<1704x128xf32, #tpu.memory_space<vmem>>, vector<32x32xf32>
    %cst_96 = arith.constant dense<0.000000e+00> : vector<8x32xf32>
    %325 = tpu.matmul %293, %324, %cst_96 {dimension_numbers = #tpu.dot_dimension_numbers<[1], [0], [0], [1], [0, 0, 1, 1], [], []>, precision = #tpu.contract_precision<fp32>} : vector<8x32xf32>, vector<32x32xf32>, vector<8x32xf32> -> vector<8x32xf32>
    %c856 = arith.constant 856 : index
    %c0_97 = arith.constant 0 : index
    %326 = vector.load %arg1[%c856, %c0_97] : memref<1704x128xf32, #tpu.memory_space<vmem>>, vector<32x32xf32>
    %cst_98 = arith.constant dense<0.000000e+00> : vector<8x32xf32>
    %327 = tpu.matmul %323, %326, %cst_98 {dimension_numbers = #tpu.dot_dimension_numbers<[1], [0], [0], [1], [0, 0, 1, 1], [], []>, precision = #tpu.contract_precision<fp32>} : vector<8x32xf32>, vector<32x32xf32>, vector<8x32xf32> -> vector<8x32xf32>
    %328 = arith.addf %325, %327 : vector<8x32xf32>
    %c888 = arith.constant 888 : index
    %c0_99 = arith.constant 0 : index
    %329 = vector.load %arg1[%c888, %c0_99] : memref<1704x128xf32, #tpu.memory_space<vmem>>, vector<1x32xf32>
    %330 = vector.broadcast %329 : vector<1x32xf32> to vector<8x32xf32>
    %331 = arith.addf %328, %330 : vector<8x32xf32>
    %cst_100 = arith.constant 5.000000e-01 : f32
    %332 = vector.broadcast %cst_100 : f32 to vector<8x32xf32>
    %333 = arith.mulf %332, %331 : vector<8x32xf32>
    %cst_101 = arith.constant 1.41421354 : f32
    %334 = vector.broadcast %cst_101 : f32 to vector<8x32xf32>
    %335 = arith.divf %331, %334 : vector<8x32xf32>
    %336 = math.erf %335 : vector<8x32xf32>
    %cst_102 = arith.constant 1.000000e+00 : f32
    %337 = vector.broadcast %cst_102 : f32 to vector<8x32xf32>
    %338 = arith.addf %337, %336 : vector<8x32xf32>
    %339 = arith.mulf %333, %338 : vector<8x32xf32>
    %c424 = arith.constant 424 : index
    %c0_103 = arith.constant 0 : index
    %340 = vector.load %arg1[%c424, %c0_103] : memref<1704x128xf32, #tpu.memory_space<vmem>>, vector<3x32xf32>
    %c392 = arith.constant 392 : index
    %c0_104 = arith.constant 0 : index
    %341 = vector.load %arg1[%c392, %c0_104] : memref<1704x128xf32, #tpu.memory_space<vmem>>, vector<32x32xf32>
    %cst_105 = arith.constant dense<0.000000e+00> : vector<8x32xf32>
    %342 = tpu.matmul %339, %341, %cst_105 {dimension_numbers = #tpu.dot_dimension_numbers<[1], [0], [0], [1], [0, 0, 1, 1], [], []>, precision = #tpu.contract_precision<fp32>} : vector<8x32xf32>, vector<32x32xf32>, vector<8x32xf32> -> vector<8x32xf32>
    %343 = vector.extract_strided_slice %340 {offsets = [0, 0], sizes = [1, 32], strides = [1, 1]} : vector<3x32xf32> to vector<1x32xf32>
    %344 = vector.broadcast %343 : vector<1x32xf32> to vector<8x32xf32>
    %345 = arith.addf %342, %344 : vector<8x32xf32>
    %cst_106 = arith.constant dense<0.000000e+00> : vector<32xf32>
    %346 = vector.multi_reduction <add>, %345, %cst_106 [0] : vector<8x32xf32> to vector<32xf32>
    %347 = vector.shape_cast %346 : vector<32xf32> to vector<1x32xf32>
    %cst_107 = arith.constant 8.000000e+00 : f32
    %348 = vector.broadcast %cst_107 : f32 to vector<1x32xf32>
    %349 = arith.divf %347, %348 : vector<1x32xf32>
    %350 = vector.broadcast %349 : vector<1x32xf32> to vector<8x32xf32>
    %351 = arith.subf %345, %350 : vector<8x32xf32>
    %352 = arith.mulf %351, %351 : vector<8x32xf32>
    %cst_108 = arith.constant dense<0.000000e+00> : vector<32xf32>
    %353 = vector.multi_reduction <add>, %352, %cst_108 [0] : vector<8x32xf32> to vector<32xf32>
    %354 = vector.shape_cast %353 : vector<32xf32> to vector<1x32xf32>
    %cst_109 = arith.constant 8.000000e+00 : f32
    %355 = vector.broadcast %cst_109 : f32 to vector<1x32xf32>
    %356 = arith.divf %354, %355 : vector<1x32xf32>
    %357 = vector.broadcast %349 : vector<1x32xf32> to vector<8x32xf32>
    %358 = arith.subf %345, %357 : vector<8x32xf32>
    %cst_110 = arith.constant 9.99999974E-6 : f32
    %359 = vector.broadcast %cst_110 : f32 to vector<1x32xf32>
    %360 = arith.addf %356, %359 : vector<1x32xf32>
    %361 = math.rsqrt %360 : vector<1x32xf32>
    %362 = vector.broadcast %361 : vector<1x32xf32> to vector<8x32xf32>
    %363 = arith.mulf %358, %362 : vector<8x32xf32>
    %364 = vector.extract_strided_slice %340 {offsets = [1, 0], sizes = [1, 32], strides = [1, 1]} : vector<3x32xf32> to vector<1x32xf32>
    %365 = vector.broadcast %364 : vector<1x32xf32> to vector<8x32xf32>
    %366 = arith.mulf %363, %365 : vector<8x32xf32>
    %367 = vector.extract_strided_slice %340 {offsets = [2, 0], sizes = [1, 32], strides = [1, 1]} : vector<3x32xf32> to vector<1x32xf32>
    %368 = vector.broadcast %367 : vector<1x32xf32> to vector<8x32xf32>
    %369 = arith.addf %366, %368 : vector<8x32xf32>
    %cst_111 = arith.constant 5.000000e-01 : f32
    %370 = vector.broadcast %cst_111 : f32 to vector<8x32xf32>
    %371 = arith.mulf %370, %369 : vector<8x32xf32>
    %cst_112 = arith.constant 1.41421354 : f32
    %372 = vector.broadcast %cst_112 : f32 to vector<8x32xf32>
    %373 = arith.divf %369, %372 : vector<8x32xf32>
    %374 = math.erf %373 : vector<8x32xf32>
    %cst_113 = arith.constant 1.000000e+00 : f32
    %375 = vector.broadcast %cst_113 : f32 to vector<8x32xf32>
    %376 = arith.addf %375, %374 : vector<8x32xf32>
    %377 = arith.mulf %371, %376 : vector<8x32xf32>
    %c464 = arith.constant 464 : index
    %c0_114 = arith.constant 0 : index
    %378 = vector.load %arg1[%c464, %c0_114] : memref<1704x128xf32, #tpu.memory_space<vmem>>, vector<3x32xf32>
    %c432 = arith.constant 432 : index
    %c0_115 = arith.constant 0 : index
    %379 = vector.load %arg1[%c432, %c0_115] : memref<1704x128xf32, #tpu.memory_space<vmem>>, vector<32x32xf32>
    %cst_116 = arith.constant dense<0.000000e+00> : vector<8x32xf32>
    %380 = tpu.matmul %377, %379, %cst_116 {dimension_numbers = #tpu.dot_dimension_numbers<[1], [0], [0], [1], [0, 0, 1, 1], [], []>, precision = #tpu.contract_precision<fp32>} : vector<8x32xf32>, vector<32x32xf32>, vector<8x32xf32> -> vector<8x32xf32>
    %381 = vector.extract_strided_slice %378 {offsets = [0, 0], sizes = [1, 32], strides = [1, 1]} : vector<3x32xf32> to vector<1x32xf32>
    %382 = vector.broadcast %381 : vector<1x32xf32> to vector<8x32xf32>
    %383 = arith.addf %380, %382 : vector<8x32xf32>
    %cst_117 = arith.constant dense<0.000000e+00> : vector<32xf32>
    %384 = vector.multi_reduction <add>, %383, %cst_117 [0] : vector<8x32xf32> to vector<32xf32>
    %385 = vector.shape_cast %384 : vector<32xf32> to vector<1x32xf32>
    %cst_118 = arith.constant 8.000000e+00 : f32
    %386 = vector.broadcast %cst_118 : f32 to vector<1x32xf32>
    %387 = arith.divf %385, %386 : vector<1x32xf32>
    %388 = vector.broadcast %387 : vector<1x32xf32> to vector<8x32xf32>
    %389 = arith.subf %383, %388 : vector<8x32xf32>
    %390 = arith.mulf %389, %389 : vector<8x32xf32>
    %cst_119 = arith.constant dense<0.000000e+00> : vector<32xf32>
    %391 = vector.multi_reduction <add>, %390, %cst_119 [0] : vector<8x32xf32> to vector<32xf32>
    %392 = vector.shape_cast %391 : vector<32xf32> to vector<1x32xf32>
    %cst_120 = arith.constant 8.000000e+00 : f32
    %393 = vector.broadcast %cst_120 : f32 to vector<1x32xf32>
    %394 = arith.divf %392, %393 : vector<1x32xf32>
    %395 = vector.broadcast %387 : vector<1x32xf32> to vector<8x32xf32>
    %396 = arith.subf %383, %395 : vector<8x32xf32>
    %cst_121 = arith.constant 9.99999974E-6 : f32
    %397 = vector.broadcast %cst_121 : f32 to vector<1x32xf32>
    %398 = arith.addf %394, %397 : vector<1x32xf32>
    %399 = math.rsqrt %398 : vector<1x32xf32>
    %400 = vector.broadcast %399 : vector<1x32xf32> to vector<8x32xf32>
    %401 = arith.mulf %396, %400 : vector<8x32xf32>
    %402 = vector.extract_strided_slice %378 {offsets = [1, 0], sizes = [1, 32], strides = [1, 1]} : vector<3x32xf32> to vector<1x32xf32>
    %403 = vector.broadcast %402 : vector<1x32xf32> to vector<8x32xf32>
    %404 = arith.mulf %401, %403 : vector<8x32xf32>
    %405 = vector.extract_strided_slice %378 {offsets = [2, 0], sizes = [1, 32], strides = [1, 1]} : vector<3x32xf32> to vector<1x32xf32>
    %406 = vector.broadcast %405 : vector<1x32xf32> to vector<8x32xf32>
    %407 = arith.addf %404, %406 : vector<8x32xf32>
    %408 = arith.addf %407, %222 : vector<8x32xf32>
    %c504 = arith.constant 504 : index
    %c0_122 = arith.constant 0 : index
    %409 = vector.load %arg1[%c504, %c0_122] : memref<1704x128xf32, #tpu.memory_space<vmem>>, vector<3x128xf32>
    %c472 = arith.constant 472 : index
    %c0_123 = arith.constant 0 : index
    %410 = vector.load %arg1[%c472, %c0_123] : memref<1704x128xf32, #tpu.memory_space<vmem>>, vector<32x128xf32>
    %cst_124 = arith.constant dense<0.000000e+00> : vector<8x128xf32>
    %411 = tpu.matmul %408, %410, %cst_124 {dimension_numbers = #tpu.dot_dimension_numbers<[1], [0], [0], [1], [0, 0, 1, 1], [], []>, precision = #tpu.contract_precision<fp32>} : vector<8x32xf32>, vector<32x128xf32>, vector<8x128xf32> -> vector<8x128xf32>
    %412 = vector.extract_strided_slice %409 {offsets = [0, 0], sizes = [1, 128], strides = [1, 1]} : vector<3x128xf32> to vector<1x128xf32>
    %413 = vector.broadcast %412 : vector<1x128xf32> to vector<8x128xf32>
    %414 = arith.addf %411, %413 : vector<8x128xf32>
    %cst_125 = arith.constant dense<0.000000e+00> : vector<128xf32>
    %415 = vector.multi_reduction <add>, %414, %cst_125 [0] : vector<8x128xf32> to vector<128xf32>
    %416 = vector.shape_cast %415 : vector<128xf32> to vector<1x128xf32>
    %cst_126 = arith.constant 8.000000e+00 : f32
    %417 = vector.broadcast %cst_126 : f32 to vector<1x128xf32>
    %418 = arith.divf %416, %417 : vector<1x128xf32>
    %419 = vector.broadcast %418 : vector<1x128xf32> to vector<8x128xf32>
    %420 = arith.subf %414, %419 : vector<8x128xf32>
    %421 = arith.mulf %420, %420 : vector<8x128xf32>
    %cst_127 = arith.constant dense<0.000000e+00> : vector<128xf32>
    %422 = vector.multi_reduction <add>, %421, %cst_127 [0] : vector<8x128xf32> to vector<128xf32>
    %423 = vector.shape_cast %422 : vector<128xf32> to vector<1x128xf32>
    %cst_128 = arith.constant 8.000000e+00 : f32
    %424 = vector.broadcast %cst_128 : f32 to vector<1x128xf32>
    %425 = arith.divf %423, %424 : vector<1x128xf32>
    %426 = vector.broadcast %418 : vector<1x128xf32> to vector<8x128xf32>
    %427 = arith.subf %414, %426 : vector<8x128xf32>
    %cst_129 = arith.constant 9.99999974E-6 : f32
    %428 = vector.broadcast %cst_129 : f32 to vector<1x128xf32>
    %429 = arith.addf %425, %428 : vector<1x128xf32>
    %430 = math.rsqrt %429 : vector<1x128xf32>
    %431 = vector.broadcast %430 : vector<1x128xf32> to vector<8x128xf32>
    %432 = arith.mulf %427, %431 : vector<8x128xf32>
    %433 = vector.extract_strided_slice %409 {offsets = [1, 0], sizes = [1, 128], strides = [1, 1]} : vector<3x128xf32> to vector<1x128xf32>
    %434 = vector.broadcast %433 : vector<1x128xf32> to vector<8x128xf32>
    %435 = arith.mulf %432, %434 : vector<8x128xf32>
    %436 = vector.extract_strided_slice %409 {offsets = [2, 0], sizes = [1, 128], strides = [1, 1]} : vector<3x128xf32> to vector<1x128xf32>
    %437 = vector.broadcast %436 : vector<1x128xf32> to vector<8x128xf32>
    %438 = arith.addf %435, %437 : vector<8x128xf32>
    %cst_130 = arith.constant 5.000000e-01 : f32
    %439 = vector.broadcast %cst_130 : f32 to vector<8x128xf32>
    %440 = arith.mulf %439, %438 : vector<8x128xf32>
    %cst_131 = arith.constant 1.41421354 : f32
    %441 = vector.broadcast %cst_131 : f32 to vector<8x128xf32>
    %442 = arith.divf %438, %441 : vector<8x128xf32>
    %443 = math.erf %442 : vector<8x128xf32>
    %cst_132 = arith.constant 1.000000e+00 : f32
    %444 = vector.broadcast %cst_132 : f32 to vector<8x128xf32>
    %445 = arith.addf %444, %443 : vector<8x128xf32>
    %446 = arith.mulf %440, %445 : vector<8x128xf32>
    %c640 = arith.constant 640 : index
    %c0_133 = arith.constant 0 : index
    %447 = vector.load %arg1[%c640, %c0_133] : memref<1704x128xf32, #tpu.memory_space<vmem>>, vector<3x32xf32>
    %c512 = arith.constant 512 : index
    %c0_134 = arith.constant 0 : index
    %448 = vector.load %arg1[%c512, %c0_134] : memref<1704x128xf32, #tpu.memory_space<vmem>>, vector<128x32xf32>
    %cst_135 = arith.constant dense<0.000000e+00> : vector<8x32xf32>
    %449 = tpu.matmul %446, %448, %cst_135 {dimension_numbers = #tpu.dot_dimension_numbers<[1], [0], [0], [1], [0, 0, 1, 1], [], []>, precision = #tpu.contract_precision<fp32>} : vector<8x128xf32>, vector<128x32xf32>, vector<8x32xf32> -> vector<8x32xf32>
    %450 = vector.extract_strided_slice %447 {offsets = [0, 0], sizes = [1, 32], strides = [1, 1]} : vector<3x32xf32> to vector<1x32xf32>
    %451 = vector.broadcast %450 : vector<1x32xf32> to vector<8x32xf32>
    %452 = arith.addf %449, %451 : vector<8x32xf32>
    %cst_136 = arith.constant dense<0.000000e+00> : vector<32xf32>
    %453 = vector.multi_reduction <add>, %452, %cst_136 [0] : vector<8x32xf32> to vector<32xf32>
    %454 = vector.shape_cast %453 : vector<32xf32> to vector<1x32xf32>
    %cst_137 = arith.constant 8.000000e+00 : f32
    %455 = vector.broadcast %cst_137 : f32 to vector<1x32xf32>
    %456 = arith.divf %454, %455 : vector<1x32xf32>
    %457 = vector.broadcast %456 : vector<1x32xf32> to vector<8x32xf32>
    %458 = arith.subf %452, %457 : vector<8x32xf32>
    %459 = arith.mulf %458, %458 : vector<8x32xf32>
    %cst_138 = arith.constant dense<0.000000e+00> : vector<32xf32>
    %460 = vector.multi_reduction <add>, %459, %cst_138 [0] : vector<8x32xf32> to vector<32xf32>
    %461 = vector.shape_cast %460 : vector<32xf32> to vector<1x32xf32>
    %cst_139 = arith.constant 8.000000e+00 : f32
    %462 = vector.broadcast %cst_139 : f32 to vector<1x32xf32>
    %463 = arith.divf %461, %462 : vector<1x32xf32>
    %464 = vector.broadcast %456 : vector<1x32xf32> to vector<8x32xf32>
    %465 = arith.subf %452, %464 : vector<8x32xf32>
    %cst_140 = arith.constant 9.99999974E-6 : f32
    %466 = vector.broadcast %cst_140 : f32 to vector<1x32xf32>
    %467 = arith.addf %463, %466 : vector<1x32xf32>
    %468 = math.rsqrt %467 : vector<1x32xf32>
    %469 = vector.broadcast %468 : vector<1x32xf32> to vector<8x32xf32>
    %470 = arith.mulf %465, %469 : vector<8x32xf32>
    %471 = vector.extract_strided_slice %447 {offsets = [1, 0], sizes = [1, 32], strides = [1, 1]} : vector<3x32xf32> to vector<1x32xf32>
    %472 = vector.broadcast %471 : vector<1x32xf32> to vector<8x32xf32>
    %473 = arith.mulf %470, %472 : vector<8x32xf32>
    %474 = vector.extract_strided_slice %447 {offsets = [2, 0], sizes = [1, 32], strides = [1, 1]} : vector<3x32xf32> to vector<1x32xf32>
    %475 = vector.broadcast %474 : vector<1x32xf32> to vector<8x32xf32>
    %476 = arith.addf %473, %475 : vector<8x32xf32>
    %cst_141 = arith.constant 5.000000e-01 : f32
    %477 = vector.broadcast %cst_141 : f32 to vector<8x32xf32>
    %478 = arith.mulf %477, %476 : vector<8x32xf32>
    %cst_142 = arith.constant 1.41421354 : f32
    %479 = vector.broadcast %cst_142 : f32 to vector<8x32xf32>
    %480 = arith.divf %476, %479 : vector<8x32xf32>
    %481 = math.erf %480 : vector<8x32xf32>
    %cst_143 = arith.constant 1.000000e+00 : f32
    %482 = vector.broadcast %cst_143 : f32 to vector<8x32xf32>
    %483 = arith.addf %482, %481 : vector<8x32xf32>
    %484 = arith.mulf %478, %483 : vector<8x32xf32>
    %c680 = arith.constant 680 : index
    %c0_144 = arith.constant 0 : index
    %485 = vector.load %arg1[%c680, %c0_144] : memref<1704x128xf32, #tpu.memory_space<vmem>>, vector<3x128xf32>
    %c648 = arith.constant 648 : index
    %c0_145 = arith.constant 0 : index
    %486 = vector.load %arg1[%c648, %c0_145] : memref<1704x128xf32, #tpu.memory_space<vmem>>, vector<32x128xf32>
    %cst_146 = arith.constant dense<0.000000e+00> : vector<8x128xf32>
    %487 = tpu.matmul %484, %486, %cst_146 {dimension_numbers = #tpu.dot_dimension_numbers<[1], [0], [0], [1], [0, 0, 1, 1], [], []>, precision = #tpu.contract_precision<fp32>} : vector<8x32xf32>, vector<32x128xf32>, vector<8x128xf32> -> vector<8x128xf32>
    %488 = vector.extract_strided_slice %485 {offsets = [0, 0], sizes = [1, 128], strides = [1, 1]} : vector<3x128xf32> to vector<1x128xf32>
    %489 = vector.broadcast %488 : vector<1x128xf32> to vector<8x128xf32>
    %490 = arith.addf %487, %489 : vector<8x128xf32>
    %cst_147 = arith.constant dense<0.000000e+00> : vector<128xf32>
    %491 = vector.multi_reduction <add>, %490, %cst_147 [0] : vector<8x128xf32> to vector<128xf32>
    %492 = vector.shape_cast %491 : vector<128xf32> to vector<1x128xf32>
    %cst_148 = arith.constant 8.000000e+00 : f32
    %493 = vector.broadcast %cst_148 : f32 to vector<1x128xf32>
    %494 = arith.divf %492, %493 : vector<1x128xf32>
    %495 = vector.broadcast %494 : vector<1x128xf32> to vector<8x128xf32>
    %496 = arith.subf %490, %495 : vector<8x128xf32>
    %497 = arith.mulf %496, %496 : vector<8x128xf32>
    %cst_149 = arith.constant dense<0.000000e+00> : vector<128xf32>
    %498 = vector.multi_reduction <add>, %497, %cst_149 [0] : vector<8x128xf32> to vector<128xf32>
    %499 = vector.shape_cast %498 : vector<128xf32> to vector<1x128xf32>
    %cst_150 = arith.constant 8.000000e+00 : f32
    %500 = vector.broadcast %cst_150 : f32 to vector<1x128xf32>
    %501 = arith.divf %499, %500 : vector<1x128xf32>
    %502 = vector.broadcast %494 : vector<1x128xf32> to vector<8x128xf32>
    %503 = arith.subf %490, %502 : vector<8x128xf32>
    %cst_151 = arith.constant 9.99999974E-6 : f32
    %504 = vector.broadcast %cst_151 : f32 to vector<1x128xf32>
    %505 = arith.addf %501, %504 : vector<1x128xf32>
    %506 = math.rsqrt %505 : vector<1x128xf32>
    %507 = vector.broadcast %506 : vector<1x128xf32> to vector<8x128xf32>
    %508 = arith.mulf %503, %507 : vector<8x128xf32>
    %509 = vector.extract_strided_slice %485 {offsets = [1, 0], sizes = [1, 128], strides = [1, 1]} : vector<3x128xf32> to vector<1x128xf32>
    %510 = vector.broadcast %509 : vector<1x128xf32> to vector<8x128xf32>
    %511 = arith.mulf %508, %510 : vector<8x128xf32>
    %512 = vector.extract_strided_slice %485 {offsets = [2, 0], sizes = [1, 128], strides = [1, 1]} : vector<3x128xf32> to vector<1x128xf32>
    %513 = vector.broadcast %512 : vector<1x128xf32> to vector<8x128xf32>
    %514 = arith.addf %511, %513 : vector<8x128xf32>
    %cst_152 = arith.constant 5.000000e-01 : f32
    %515 = vector.broadcast %cst_152 : f32 to vector<8x128xf32>
    %516 = arith.mulf %515, %514 : vector<8x128xf32>
    %cst_153 = arith.constant 1.41421354 : f32
    %517 = vector.broadcast %cst_153 : f32 to vector<8x128xf32>
    %518 = arith.divf %514, %517 : vector<8x128xf32>
    %519 = math.erf %518 : vector<8x128xf32>
    %cst_154 = arith.constant 1.000000e+00 : f32
    %520 = vector.broadcast %cst_154 : f32 to vector<8x128xf32>
    %521 = arith.addf %520, %519 : vector<8x128xf32>
    %522 = arith.mulf %516, %521 : vector<8x128xf32>
    %c816 = arith.constant 816 : index
    %c0_155 = arith.constant 0 : index
    %523 = vector.load %arg1[%c816, %c0_155] : memref<1704x128xf32, #tpu.memory_space<vmem>>, vector<3x32xf32>
    %c688 = arith.constant 688 : index
    %c0_156 = arith.constant 0 : index
    %524 = vector.load %arg1[%c688, %c0_156] : memref<1704x128xf32, #tpu.memory_space<vmem>>, vector<128x32xf32>
    %cst_157 = arith.constant dense<0.000000e+00> : vector<8x32xf32>
    %525 = tpu.matmul %522, %524, %cst_157 {dimension_numbers = #tpu.dot_dimension_numbers<[1], [0], [0], [1], [0, 0, 1, 1], [], []>, precision = #tpu.contract_precision<fp32>} : vector<8x128xf32>, vector<128x32xf32>, vector<8x32xf32> -> vector<8x32xf32>
    %526 = vector.extract_strided_slice %523 {offsets = [0, 0], sizes = [1, 32], strides = [1, 1]} : vector<3x32xf32> to vector<1x32xf32>
    %527 = vector.broadcast %526 : vector<1x32xf32> to vector<8x32xf32>
    %528 = arith.addf %525, %527 : vector<8x32xf32>
    %cst_158 = arith.constant dense<0.000000e+00> : vector<32xf32>
    %529 = vector.multi_reduction <add>, %528, %cst_158 [0] : vector<8x32xf32> to vector<32xf32>
    %530 = vector.shape_cast %529 : vector<32xf32> to vector<1x32xf32>
    %cst_159 = arith.constant 8.000000e+00 : f32
    %531 = vector.broadcast %cst_159 : f32 to vector<1x32xf32>
    %532 = arith.divf %530, %531 : vector<1x32xf32>
    %533 = vector.broadcast %532 : vector<1x32xf32> to vector<8x32xf32>
    %534 = arith.subf %528, %533 : vector<8x32xf32>
    %535 = arith.mulf %534, %534 : vector<8x32xf32>
    %cst_160 = arith.constant dense<0.000000e+00> : vector<32xf32>
    %536 = vector.multi_reduction <add>, %535, %cst_160 [0] : vector<8x32xf32> to vector<32xf32>
    %537 = vector.shape_cast %536 : vector<32xf32> to vector<1x32xf32>
    %cst_161 = arith.constant 8.000000e+00 : f32
    %538 = vector.broadcast %cst_161 : f32 to vector<1x32xf32>
    %539 = arith.divf %537, %538 : vector<1x32xf32>
    %540 = vector.broadcast %532 : vector<1x32xf32> to vector<8x32xf32>
    %541 = arith.subf %528, %540 : vector<8x32xf32>
    %cst_162 = arith.constant 9.99999974E-6 : f32
    %542 = vector.broadcast %cst_162 : f32 to vector<1x32xf32>
    %543 = arith.addf %539, %542 : vector<1x32xf32>
    %544 = math.rsqrt %543 : vector<1x32xf32>
    %545 = vector.broadcast %544 : vector<1x32xf32> to vector<8x32xf32>
    %546 = arith.mulf %541, %545 : vector<8x32xf32>
    %547 = vector.extract_strided_slice %523 {offsets = [1, 0], sizes = [1, 32], strides = [1, 1]} : vector<3x32xf32> to vector<1x32xf32>
    %548 = vector.broadcast %547 : vector<1x32xf32> to vector<8x32xf32>
    %549 = arith.mulf %546, %548 : vector<8x32xf32>
    %550 = vector.extract_strided_slice %523 {offsets = [2, 0], sizes = [1, 32], strides = [1, 1]} : vector<3x32xf32> to vector<1x32xf32>
    %551 = vector.broadcast %550 : vector<1x32xf32> to vector<8x32xf32>
    %552 = arith.addf %549, %551 : vector<8x32xf32>
    %553 = arith.addf %552, %408 : vector<8x32xf32>
    %cst_163 = arith.constant dense<0.000000e+00> : vector<8x8xf32>
    %554 = tpu.matmul %553, %553, %cst_163 {dimension_numbers = #tpu.dot_dimension_numbers<[1], [1], [0], [0], [0, 0, 1, 0], [], []>, precision = #tpu.contract_precision<fp32>} : vector<8x32xf32>, vector<8x32xf32>, vector<8x8xf32> -> vector<8x8xf32>
    %555 = arith.addf %554, %223 : vector<8x8xf32>
    %c928 = arith.constant 928 : index
    %c0_164 = arith.constant 0 : index
    %556 = vector.load %arg1[%c928, %c0_164] : memref<1704x128xf32, #tpu.memory_space<vmem>>, vector<3x32xf32>
    %c896 = arith.constant 896 : index
    %c0_165 = arith.constant 0 : index
    %557 = vector.load %arg1[%c896, %c0_165] : memref<1704x128xf32, #tpu.memory_space<vmem>>, vector<32x32xf32>
    %cst_166 = arith.constant dense<0.000000e+00> : vector<8x32xf32>
    %558 = tpu.matmul %553, %557, %cst_166 {dimension_numbers = #tpu.dot_dimension_numbers<[1], [0], [0], [1], [0, 0, 1, 1], [], []>, precision = #tpu.contract_precision<fp32>} : vector<8x32xf32>, vector<32x32xf32>, vector<8x32xf32> -> vector<8x32xf32>
    %559 = vector.extract_strided_slice %556 {offsets = [0, 0], sizes = [1, 32], strides = [1, 1]} : vector<3x32xf32> to vector<1x32xf32>
    %560 = vector.broadcast %559 : vector<1x32xf32> to vector<8x32xf32>
    %561 = arith.addf %558, %560 : vector<8x32xf32>
    %cst_167 = arith.constant dense<0.000000e+00> : vector<32xf32>
    %562 = vector.multi_reduction <add>, %561, %cst_167 [0] : vector<8x32xf32> to vector<32xf32>
    %563 = vector.shape_cast %562 : vector<32xf32> to vector<1x32xf32>
    %cst_168 = arith.constant 8.000000e+00 : f32
    %564 = vector.broadcast %cst_168 : f32 to vector<1x32xf32>
    %565 = arith.divf %563, %564 : vector<1x32xf32>
    %566 = vector.broadcast %565 : vector<1x32xf32> to vector<8x32xf32>
    %567 = arith.subf %561, %566 : vector<8x32xf32>
    %568 = arith.mulf %567, %567 : vector<8x32xf32>
    %cst_169 = arith.constant dense<0.000000e+00> : vector<32xf32>
    %569 = vector.multi_reduction <add>, %568, %cst_169 [0] : vector<8x32xf32> to vector<32xf32>
    %570 = vector.shape_cast %569 : vector<32xf32> to vector<1x32xf32>
    %cst_170 = arith.constant 8.000000e+00 : f32
    %571 = vector.broadcast %cst_170 : f32 to vector<1x32xf32>
    %572 = arith.divf %570, %571 : vector<1x32xf32>
    %573 = vector.broadcast %565 : vector<1x32xf32> to vector<8x32xf32>
    %574 = arith.subf %561, %573 : vector<8x32xf32>
    %cst_171 = arith.constant 9.99999974E-6 : f32
    %575 = vector.broadcast %cst_171 : f32 to vector<1x32xf32>
    %576 = arith.addf %572, %575 : vector<1x32xf32>
    %577 = math.rsqrt %576 : vector<1x32xf32>
    %578 = vector.broadcast %577 : vector<1x32xf32> to vector<8x32xf32>
    %579 = arith.mulf %574, %578 : vector<8x32xf32>
    %580 = vector.extract_strided_slice %556 {offsets = [1, 0], sizes = [1, 32], strides = [1, 1]} : vector<3x32xf32> to vector<1x32xf32>
    %581 = vector.broadcast %580 : vector<1x32xf32> to vector<8x32xf32>
    %582 = arith.mulf %579, %581 : vector<8x32xf32>
    %583 = vector.extract_strided_slice %556 {offsets = [2, 0], sizes = [1, 32], strides = [1, 1]} : vector<3x32xf32> to vector<1x32xf32>
    %584 = vector.broadcast %583 : vector<1x32xf32> to vector<8x32xf32>
    %585 = arith.addf %582, %584 : vector<8x32xf32>
    %cst_172 = arith.constant 5.000000e-01 : f32
    %586 = vector.broadcast %cst_172 : f32 to vector<8x32xf32>
    %587 = arith.mulf %586, %585 : vector<8x32xf32>
    %cst_173 = arith.constant 1.41421354 : f32
    %588 = vector.broadcast %cst_173 : f32 to vector<8x32xf32>
    %589 = arith.divf %585, %588 : vector<8x32xf32>
    %590 = math.erf %589 : vector<8x32xf32>
    %cst_174 = arith.constant 1.000000e+00 : f32
    %591 = vector.broadcast %cst_174 : f32 to vector<8x32xf32>
    %592 = arith.addf %591, %590 : vector<8x32xf32>
    %593 = arith.mulf %587, %592 : vector<8x32xf32>
    %c968 = arith.constant 968 : index
    %c0_175 = arith.constant 0 : index
    %594 = vector.load %arg1[%c968, %c0_175] : memref<1704x128xf32, #tpu.memory_space<vmem>>, vector<3x32xf32>
    %c936 = arith.constant 936 : index
    %c0_176 = arith.constant 0 : index
    %595 = vector.load %arg1[%c936, %c0_176] : memref<1704x128xf32, #tpu.memory_space<vmem>>, vector<32x32xf32>
    %cst_177 = arith.constant dense<0.000000e+00> : vector<8x32xf32>
    %596 = tpu.matmul %593, %595, %cst_177 {dimension_numbers = #tpu.dot_dimension_numbers<[1], [0], [0], [1], [0, 0, 1, 1], [], []>, precision = #tpu.contract_precision<fp32>} : vector<8x32xf32>, vector<32x32xf32>, vector<8x32xf32> -> vector<8x32xf32>
    %597 = vector.extract_strided_slice %594 {offsets = [0, 0], sizes = [1, 32], strides = [1, 1]} : vector<3x32xf32> to vector<1x32xf32>
    %598 = vector.broadcast %597 : vector<1x32xf32> to vector<8x32xf32>
    %599 = arith.addf %596, %598 : vector<8x32xf32>
    %cst_178 = arith.constant dense<0.000000e+00> : vector<32xf32>
    %600 = vector.multi_reduction <add>, %599, %cst_178 [0] : vector<8x32xf32> to vector<32xf32>
    %601 = vector.shape_cast %600 : vector<32xf32> to vector<1x32xf32>
    %cst_179 = arith.constant 8.000000e+00 : f32
    %602 = vector.broadcast %cst_179 : f32 to vector<1x32xf32>
    %603 = arith.divf %601, %602 : vector<1x32xf32>
    %604 = vector.broadcast %603 : vector<1x32xf32> to vector<8x32xf32>
    %605 = arith.subf %599, %604 : vector<8x32xf32>
    %606 = arith.mulf %605, %605 : vector<8x32xf32>
    %cst_180 = arith.constant dense<0.000000e+00> : vector<32xf32>
    %607 = vector.multi_reduction <add>, %606, %cst_180 [0] : vector<8x32xf32> to vector<32xf32>
    %608 = vector.shape_cast %607 : vector<32xf32> to vector<1x32xf32>
    %cst_181 = arith.constant 8.000000e+00 : f32
    %609 = vector.broadcast %cst_181 : f32 to vector<1x32xf32>
    %610 = arith.divf %608, %609 : vector<1x32xf32>
    %611 = vector.broadcast %603 : vector<1x32xf32> to vector<8x32xf32>
    %612 = arith.subf %599, %611 : vector<8x32xf32>
    %cst_182 = arith.constant 9.99999974E-6 : f32
    %613 = vector.broadcast %cst_182 : f32 to vector<1x32xf32>
    %614 = arith.addf %610, %613 : vector<1x32xf32>
    %615 = math.rsqrt %614 : vector<1x32xf32>
    %616 = vector.broadcast %615 : vector<1x32xf32> to vector<8x32xf32>
    %617 = arith.mulf %612, %616 : vector<8x32xf32>
    %618 = vector.extract_strided_slice %594 {offsets = [1, 0], sizes = [1, 32], strides = [1, 1]} : vector<3x32xf32> to vector<1x32xf32>
    %619 = vector.broadcast %618 : vector<1x32xf32> to vector<8x32xf32>
    %620 = arith.mulf %617, %619 : vector<8x32xf32>
    %621 = vector.extract_strided_slice %594 {offsets = [2, 0], sizes = [1, 32], strides = [1, 1]} : vector<3x32xf32> to vector<1x32xf32>
    %622 = vector.broadcast %621 : vector<1x32xf32> to vector<8x32xf32>
    %623 = arith.addf %620, %622 : vector<8x32xf32>
    %cst_183 = arith.constant -1.000000e+30 : f32
    %624 = vector.broadcast %cst_183 : f32 to vector<8x32xf32>
    %cst_184 = arith.constant dense<0xFF800000> : vector<8xf32>
    %625 = vector.multi_reduction <maximumf>, %555, %cst_184 [1] : vector<8x8xf32> to vector<8xf32>
    %626 = vector.shape_cast %625 : vector<8xf32> to vector<8x1xf32>
    %627 = vector.broadcast %626 : vector<8x1xf32> to vector<8x8xf32>
    %628 = arith.cmpf oge, %555, %627 : vector<8x8xf32>
    %629 = arith.extui %628 : vector<8x8xi1> to vector<8x8xi32>
    %630 = arith.sitofp %629 : vector<8x8xi32> to vector<8x8xf32>
    %cst_185 = arith.constant dense<0.000000e+00> : vector<8x32xf32>
    %631 = tpu.matmul %630, %623, %cst_185 {dimension_numbers = #tpu.dot_dimension_numbers<[1], [0], [0], [1], [0, 0, 1, 1], [], []>, precision = #tpu.contract_precision<fp32>} : vector<8x8xf32>, vector<8x32xf32>, vector<8x32xf32> -> vector<8x32xf32>
    %632 = arith.maximumf %624, %631 : vector<8x32xf32>
    %cst_186 = arith.constant -1.000000e+30 : f32
    %633 = vector.broadcast %cst_186 : f32 to vector<8x8xf32>
    %634 = arith.select %628, %633, %555 : vector<8x8xi1>, vector<8x8xf32>
    %cst_187 = arith.constant dense<0xFF800000> : vector<8xf32>
    %635 = vector.multi_reduction <maximumf>, %634, %cst_187 [1] : vector<8x8xf32> to vector<8xf32>
    %636 = vector.shape_cast %635 : vector<8xf32> to vector<8x1xf32>
    %637 = vector.broadcast %636 : vector<8x1xf32> to vector<8x8xf32>
    %638 = arith.cmpf oge, %634, %637 : vector<8x8xf32>
    %639 = arith.extui %638 : vector<8x8xi1> to vector<8x8xi32>
    %640 = arith.sitofp %639 : vector<8x8xi32> to vector<8x8xf32>
    %cst_188 = arith.constant dense<0.000000e+00> : vector<8x32xf32>
    %641 = tpu.matmul %640, %623, %cst_188 {dimension_numbers = #tpu.dot_dimension_numbers<[1], [0], [0], [1], [0, 0, 1, 1], [], []>, precision = #tpu.contract_precision<fp32>} : vector<8x8xf32>, vector<8x32xf32>, vector<8x32xf32> -> vector<8x32xf32>
    %642 = arith.maximumf %632, %641 : vector<8x32xf32>
    %cst_189 = arith.constant -1.000000e+30 : f32
    %643 = vector.broadcast %cst_189 : f32 to vector<8x8xf32>
    %644 = arith.select %638, %643, %634 : vector<8x8xi1>, vector<8x8xf32>
    %cst_190 = arith.constant dense<0xFF800000> : vector<8xf32>
    %645 = vector.multi_reduction <maximumf>, %644, %cst_190 [1] : vector<8x8xf32> to vector<8xf32>
    %646 = vector.shape_cast %645 : vector<8xf32> to vector<8x1xf32>
    %647 = vector.broadcast %646 : vector<8x1xf32> to vector<8x8xf32>
    %648 = arith.cmpf oge, %644, %647 : vector<8x8xf32>
    %649 = arith.extui %648 : vector<8x8xi1> to vector<8x8xi32>
    %650 = arith.sitofp %649 : vector<8x8xi32> to vector<8x8xf32>
    %cst_191 = arith.constant dense<0.000000e+00> : vector<8x32xf32>
    %651 = tpu.matmul %650, %623, %cst_191 {dimension_numbers = #tpu.dot_dimension_numbers<[1], [0], [0], [1], [0, 0, 1, 1], [], []>, precision = #tpu.contract_precision<fp32>} : vector<8x8xf32>, vector<8x32xf32>, vector<8x32xf32> -> vector<8x32xf32>
    %652 = arith.maximumf %642, %651 : vector<8x32xf32>
    %653 = arith.subf %652, %623 : vector<8x32xf32>
    %c1408 = arith.constant 1408 : index
    %c0_192 = arith.constant 0 : index
    %654 = vector.load %arg1[%c1408, %c0_192] : memref<1704x128xf32, #tpu.memory_space<vmem>>, vector<32x32xf32>
    %cst_193 = arith.constant dense<0.000000e+00> : vector<8x32xf32>
    %655 = tpu.matmul %623, %654, %cst_193 {dimension_numbers = #tpu.dot_dimension_numbers<[1], [0], [0], [1], [0, 0, 1, 1], [], []>, precision = #tpu.contract_precision<fp32>} : vector<8x32xf32>, vector<32x32xf32>, vector<8x32xf32> -> vector<8x32xf32>
    %c1440 = arith.constant 1440 : index
    %c0_194 = arith.constant 0 : index
    %656 = vector.load %arg1[%c1440, %c0_194] : memref<1704x128xf32, #tpu.memory_space<vmem>>, vector<32x32xf32>
    %cst_195 = arith.constant dense<0.000000e+00> : vector<8x32xf32>
    %657 = tpu.matmul %653, %656, %cst_195 {dimension_numbers = #tpu.dot_dimension_numbers<[1], [0], [0], [1], [0, 0, 1, 1], [], []>, precision = #tpu.contract_precision<fp32>} : vector<8x32xf32>, vector<32x32xf32>, vector<8x32xf32> -> vector<8x32xf32>
    %658 = arith.addf %655, %657 : vector<8x32xf32>
    %c1472 = arith.constant 1472 : index
    %c0_196 = arith.constant 0 : index
    %659 = vector.load %arg1[%c1472, %c0_196] : memref<1704x128xf32, #tpu.memory_space<vmem>>, vector<1x32xf32>
    %660 = vector.broadcast %659 : vector<1x32xf32> to vector<8x32xf32>
    %661 = arith.addf %658, %660 : vector<8x32xf32>
    %cst_197 = arith.constant 5.000000e-01 : f32
    %662 = vector.broadcast %cst_197 : f32 to vector<8x32xf32>
    %663 = arith.mulf %662, %661 : vector<8x32xf32>
    %cst_198 = arith.constant 1.41421354 : f32
    %664 = vector.broadcast %cst_198 : f32 to vector<8x32xf32>
    %665 = arith.divf %661, %664 : vector<8x32xf32>
    %666 = math.erf %665 : vector<8x32xf32>
    %cst_199 = arith.constant 1.000000e+00 : f32
    %667 = vector.broadcast %cst_199 : f32 to vector<8x32xf32>
    %668 = arith.addf %667, %666 : vector<8x32xf32>
    %669 = arith.mulf %663, %668 : vector<8x32xf32>
    %c1008 = arith.constant 1008 : index
    %c0_200 = arith.constant 0 : index
    %670 = vector.load %arg1[%c1008, %c0_200] : memref<1704x128xf32, #tpu.memory_space<vmem>>, vector<3x32xf32>
    %c976 = arith.constant 976 : index
    %c0_201 = arith.constant 0 : index
    %671 = vector.load %arg1[%c976, %c0_201] : memref<1704x128xf32, #tpu.memory_space<vmem>>, vector<32x32xf32>
    %cst_202 = arith.constant dense<0.000000e+00> : vector<8x32xf32>
    %672 = tpu.matmul %669, %671, %cst_202 {dimension_numbers = #tpu.dot_dimension_numbers<[1], [0], [0], [1], [0, 0, 1, 1], [], []>, precision = #tpu.contract_precision<fp32>} : vector<8x32xf32>, vector<32x32xf32>, vector<8x32xf32> -> vector<8x32xf32>
    %673 = vector.extract_strided_slice %670 {offsets = [0, 0], sizes = [1, 32], strides = [1, 1]} : vector<3x32xf32> to vector<1x32xf32>
    %674 = vector.broadcast %673 : vector<1x32xf32> to vector<8x32xf32>
    %675 = arith.addf %672, %674 : vector<8x32xf32>
    %cst_203 = arith.constant dense<0.000000e+00> : vector<32xf32>
    %676 = vector.multi_reduction <add>, %675, %cst_203 [0] : vector<8x32xf32> to vector<32xf32>
    %677 = vector.shape_cast %676 : vector<32xf32> to vector<1x32xf32>
    %cst_204 = arith.constant 8.000000e+00 : f32
    %678 = vector.broadcast %cst_204 : f32 to vector<1x32xf32>
    %679 = arith.divf %677, %678 : vector<1x32xf32>
    %680 = vector.broadcast %679 : vector<1x32xf32> to vector<8x32xf32>
    %681 = arith.subf %675, %680 : vector<8x32xf32>
    %682 = arith.mulf %681, %681 : vector<8x32xf32>
    %cst_205 = arith.constant dense<0.000000e+00> : vector<32xf32>
    %683 = vector.multi_reduction <add>, %682, %cst_205 [0] : vector<8x32xf32> to vector<32xf32>
    %684 = vector.shape_cast %683 : vector<32xf32> to vector<1x32xf32>
    %cst_206 = arith.constant 8.000000e+00 : f32
    %685 = vector.broadcast %cst_206 : f32 to vector<1x32xf32>
    %686 = arith.divf %684, %685 : vector<1x32xf32>
    %687 = vector.broadcast %679 : vector<1x32xf32> to vector<8x32xf32>
    %688 = arith.subf %675, %687 : vector<8x32xf32>
    %cst_207 = arith.constant 9.99999974E-6 : f32
    %689 = vector.broadcast %cst_207 : f32 to vector<1x32xf32>
    %690 = arith.addf %686, %689 : vector<1x32xf32>
    %691 = math.rsqrt %690 : vector<1x32xf32>
    %692 = vector.broadcast %691 : vector<1x32xf32> to vector<8x32xf32>
    %693 = arith.mulf %688, %692 : vector<8x32xf32>
    %694 = vector.extract_strided_slice %670 {offsets = [1, 0], sizes = [1, 32], strides = [1, 1]} : vector<3x32xf32> to vector<1x32xf32>
    %695 = vector.broadcast %694 : vector<1x32xf32> to vector<8x32xf32>
    %696 = arith.mulf %693, %695 : vector<8x32xf32>
    %697 = vector.extract_strided_slice %670 {offsets = [2, 0], sizes = [1, 32], strides = [1, 1]} : vector<3x32xf32> to vector<1x32xf32>
    %698 = vector.broadcast %697 : vector<1x32xf32> to vector<8x32xf32>
    %699 = arith.addf %696, %698 : vector<8x32xf32>
    %cst_208 = arith.constant 5.000000e-01 : f32
    %700 = vector.broadcast %cst_208 : f32 to vector<8x32xf32>
    %701 = arith.mulf %700, %699 : vector<8x32xf32>
    %cst_209 = arith.constant 1.41421354 : f32
    %702 = vector.broadcast %cst_209 : f32 to vector<8x32xf32>
    %703 = arith.divf %699, %702 : vector<8x32xf32>
    %704 = math.erf %703 : vector<8x32xf32>
    %cst_210 = arith.constant 1.000000e+00 : f32
    %705 = vector.broadcast %cst_210 : f32 to vector<8x32xf32>
    %706 = arith.addf %705, %704 : vector<8x32xf32>
    %707 = arith.mulf %701, %706 : vector<8x32xf32>
    %c1048 = arith.constant 1048 : index
    %c0_211 = arith.constant 0 : index
    %708 = vector.load %arg1[%c1048, %c0_211] : memref<1704x128xf32, #tpu.memory_space<vmem>>, vector<3x32xf32>
    %c1016 = arith.constant 1016 : index
    %c0_212 = arith.constant 0 : index
    %709 = vector.load %arg1[%c1016, %c0_212] : memref<1704x128xf32, #tpu.memory_space<vmem>>, vector<32x32xf32>
    %cst_213 = arith.constant dense<0.000000e+00> : vector<8x32xf32>
    %710 = tpu.matmul %707, %709, %cst_213 {dimension_numbers = #tpu.dot_dimension_numbers<[1], [0], [0], [1], [0, 0, 1, 1], [], []>, precision = #tpu.contract_precision<fp32>} : vector<8x32xf32>, vector<32x32xf32>, vector<8x32xf32> -> vector<8x32xf32>
    %711 = vector.extract_strided_slice %708 {offsets = [0, 0], sizes = [1, 32], strides = [1, 1]} : vector<3x32xf32> to vector<1x32xf32>
    %712 = vector.broadcast %711 : vector<1x32xf32> to vector<8x32xf32>
    %713 = arith.addf %710, %712 : vector<8x32xf32>
    %cst_214 = arith.constant dense<0.000000e+00> : vector<32xf32>
    %714 = vector.multi_reduction <add>, %713, %cst_214 [0] : vector<8x32xf32> to vector<32xf32>
    %715 = vector.shape_cast %714 : vector<32xf32> to vector<1x32xf32>
    %cst_215 = arith.constant 8.000000e+00 : f32
    %716 = vector.broadcast %cst_215 : f32 to vector<1x32xf32>
    %717 = arith.divf %715, %716 : vector<1x32xf32>
    %718 = vector.broadcast %717 : vector<1x32xf32> to vector<8x32xf32>
    %719 = arith.subf %713, %718 : vector<8x32xf32>
    %720 = arith.mulf %719, %719 : vector<8x32xf32>
    %cst_216 = arith.constant dense<0.000000e+00> : vector<32xf32>
    %721 = vector.multi_reduction <add>, %720, %cst_216 [0] : vector<8x32xf32> to vector<32xf32>
    %722 = vector.shape_cast %721 : vector<32xf32> to vector<1x32xf32>
    %cst_217 = arith.constant 8.000000e+00 : f32
    %723 = vector.broadcast %cst_217 : f32 to vector<1x32xf32>
    %724 = arith.divf %722, %723 : vector<1x32xf32>
    %725 = vector.broadcast %717 : vector<1x32xf32> to vector<8x32xf32>
    %726 = arith.subf %713, %725 : vector<8x32xf32>
    %cst_218 = arith.constant 9.99999974E-6 : f32
    %727 = vector.broadcast %cst_218 : f32 to vector<1x32xf32>
    %728 = arith.addf %724, %727 : vector<1x32xf32>
    %729 = math.rsqrt %728 : vector<1x32xf32>
    %730 = vector.broadcast %729 : vector<1x32xf32> to vector<8x32xf32>
    %731 = arith.mulf %726, %730 : vector<8x32xf32>
    %732 = vector.extract_strided_slice %708 {offsets = [1, 0], sizes = [1, 32], strides = [1, 1]} : vector<3x32xf32> to vector<1x32xf32>
    %733 = vector.broadcast %732 : vector<1x32xf32> to vector<8x32xf32>
    %734 = arith.mulf %731, %733 : vector<8x32xf32>
    %735 = vector.extract_strided_slice %708 {offsets = [2, 0], sizes = [1, 32], strides = [1, 1]} : vector<3x32xf32> to vector<1x32xf32>
    %736 = vector.broadcast %735 : vector<1x32xf32> to vector<8x32xf32>
    %737 = arith.addf %734, %736 : vector<8x32xf32>
    %738 = arith.addf %737, %553 : vector<8x32xf32>
    %c1088 = arith.constant 1088 : index
    %c0_219 = arith.constant 0 : index
    %739 = vector.load %arg1[%c1088, %c0_219] : memref<1704x128xf32, #tpu.memory_space<vmem>>, vector<3x128xf32>
    %c1056 = arith.constant 1056 : index
    %c0_220 = arith.constant 0 : index
    %740 = vector.load %arg1[%c1056, %c0_220] : memref<1704x128xf32, #tpu.memory_space<vmem>>, vector<32x128xf32>
    %cst_221 = arith.constant dense<0.000000e+00> : vector<8x128xf32>
    %741 = tpu.matmul %738, %740, %cst_221 {dimension_numbers = #tpu.dot_dimension_numbers<[1], [0], [0], [1], [0, 0, 1, 1], [], []>, precision = #tpu.contract_precision<fp32>} : vector<8x32xf32>, vector<32x128xf32>, vector<8x128xf32> -> vector<8x128xf32>
    %742 = vector.extract_strided_slice %739 {offsets = [0, 0], sizes = [1, 128], strides = [1, 1]} : vector<3x128xf32> to vector<1x128xf32>
    %743 = vector.broadcast %742 : vector<1x128xf32> to vector<8x128xf32>
    %744 = arith.addf %741, %743 : vector<8x128xf32>
    %cst_222 = arith.constant dense<0.000000e+00> : vector<128xf32>
    %745 = vector.multi_reduction <add>, %744, %cst_222 [0] : vector<8x128xf32> to vector<128xf32>
    %746 = vector.shape_cast %745 : vector<128xf32> to vector<1x128xf32>
    %cst_223 = arith.constant 8.000000e+00 : f32
    %747 = vector.broadcast %cst_223 : f32 to vector<1x128xf32>
    %748 = arith.divf %746, %747 : vector<1x128xf32>
    %749 = vector.broadcast %748 : vector<1x128xf32> to vector<8x128xf32>
    %750 = arith.subf %744, %749 : vector<8x128xf32>
    %751 = arith.mulf %750, %750 : vector<8x128xf32>
    %cst_224 = arith.constant dense<0.000000e+00> : vector<128xf32>
    %752 = vector.multi_reduction <add>, %751, %cst_224 [0] : vector<8x128xf32> to vector<128xf32>
    %753 = vector.shape_cast %752 : vector<128xf32> to vector<1x128xf32>
    %cst_225 = arith.constant 8.000000e+00 : f32
    %754 = vector.broadcast %cst_225 : f32 to vector<1x128xf32>
    %755 = arith.divf %753, %754 : vector<1x128xf32>
    %756 = vector.broadcast %748 : vector<1x128xf32> to vector<8x128xf32>
    %757 = arith.subf %744, %756 : vector<8x128xf32>
    %cst_226 = arith.constant 9.99999974E-6 : f32
    %758 = vector.broadcast %cst_226 : f32 to vector<1x128xf32>
    %759 = arith.addf %755, %758 : vector<1x128xf32>
    %760 = math.rsqrt %759 : vector<1x128xf32>
    %761 = vector.broadcast %760 : vector<1x128xf32> to vector<8x128xf32>
    %762 = arith.mulf %757, %761 : vector<8x128xf32>
    %763 = vector.extract_strided_slice %739 {offsets = [1, 0], sizes = [1, 128], strides = [1, 1]} : vector<3x128xf32> to vector<1x128xf32>
    %764 = vector.broadcast %763 : vector<1x128xf32> to vector<8x128xf32>
    %765 = arith.mulf %762, %764 : vector<8x128xf32>
    %766 = vector.extract_strided_slice %739 {offsets = [2, 0], sizes = [1, 128], strides = [1, 1]} : vector<3x128xf32> to vector<1x128xf32>
    %767 = vector.broadcast %766 : vector<1x128xf32> to vector<8x128xf32>
    %768 = arith.addf %765, %767 : vector<8x128xf32>
    %cst_227 = arith.constant 5.000000e-01 : f32
    %769 = vector.broadcast %cst_227 : f32 to vector<8x128xf32>
    %770 = arith.mulf %769, %768 : vector<8x128xf32>
    %cst_228 = arith.constant 1.41421354 : f32
    %771 = vector.broadcast %cst_228 : f32 to vector<8x128xf32>
    %772 = arith.divf %768, %771 : vector<8x128xf32>
    %773 = math.erf %772 : vector<8x128xf32>
    %cst_229 = arith.constant 1.000000e+00 : f32
    %774 = vector.broadcast %cst_229 : f32 to vector<8x128xf32>
    %775 = arith.addf %774, %773 : vector<8x128xf32>
    %776 = arith.mulf %770, %775 : vector<8x128xf32>
    %c1224 = arith.constant 1224 : index
    %c0_230 = arith.constant 0 : index
    %777 = vector.load %arg1[%c1224, %c0_230] : memref<1704x128xf32, #tpu.memory_space<vmem>>, vector<3x32xf32>
    %c1096 = arith.constant 1096 : index
    %c0_231 = arith.constant 0 : index
    %778 = vector.load %arg1[%c1096, %c0_231] : memref<1704x128xf32, #tpu.memory_space<vmem>>, vector<128x32xf32>
    %cst_232 = arith.constant dense<0.000000e+00> : vector<8x32xf32>
    %779 = tpu.matmul %776, %778, %cst_232 {dimension_numbers = #tpu.dot_dimension_numbers<[1], [0], [0], [1], [0, 0, 1, 1], [], []>, precision = #tpu.contract_precision<fp32>} : vector<8x128xf32>, vector<128x32xf32>, vector<8x32xf32> -> vector<8x32xf32>
    %780 = vector.extract_strided_slice %777 {offsets = [0, 0], sizes = [1, 32], strides = [1, 1]} : vector<3x32xf32> to vector<1x32xf32>
    %781 = vector.broadcast %780 : vector<1x32xf32> to vector<8x32xf32>
    %782 = arith.addf %779, %781 : vector<8x32xf32>
    %cst_233 = arith.constant dense<0.000000e+00> : vector<32xf32>
    %783 = vector.multi_reduction <add>, %782, %cst_233 [0] : vector<8x32xf32> to vector<32xf32>
    %784 = vector.shape_cast %783 : vector<32xf32> to vector<1x32xf32>
    %cst_234 = arith.constant 8.000000e+00 : f32
    %785 = vector.broadcast %cst_234 : f32 to vector<1x32xf32>
    %786 = arith.divf %784, %785 : vector<1x32xf32>
    %787 = vector.broadcast %786 : vector<1x32xf32> to vector<8x32xf32>
    %788 = arith.subf %782, %787 : vector<8x32xf32>
    %789 = arith.mulf %788, %788 : vector<8x32xf32>
    %cst_235 = arith.constant dense<0.000000e+00> : vector<32xf32>
    %790 = vector.multi_reduction <add>, %789, %cst_235 [0] : vector<8x32xf32> to vector<32xf32>
    %791 = vector.shape_cast %790 : vector<32xf32> to vector<1x32xf32>
    %cst_236 = arith.constant 8.000000e+00 : f32
    %792 = vector.broadcast %cst_236 : f32 to vector<1x32xf32>
    %793 = arith.divf %791, %792 : vector<1x32xf32>
    %794 = vector.broadcast %786 : vector<1x32xf32> to vector<8x32xf32>
    %795 = arith.subf %782, %794 : vector<8x32xf32>
    %cst_237 = arith.constant 9.99999974E-6 : f32
    %796 = vector.broadcast %cst_237 : f32 to vector<1x32xf32>
    %797 = arith.addf %793, %796 : vector<1x32xf32>
    %798 = math.rsqrt %797 : vector<1x32xf32>
    %799 = vector.broadcast %798 : vector<1x32xf32> to vector<8x32xf32>
    %800 = arith.mulf %795, %799 : vector<8x32xf32>
    %801 = vector.extract_strided_slice %777 {offsets = [1, 0], sizes = [1, 32], strides = [1, 1]} : vector<3x32xf32> to vector<1x32xf32>
    %802 = vector.broadcast %801 : vector<1x32xf32> to vector<8x32xf32>
    %803 = arith.mulf %800, %802 : vector<8x32xf32>
    %804 = vector.extract_strided_slice %777 {offsets = [2, 0], sizes = [1, 32], strides = [1, 1]} : vector<3x32xf32> to vector<1x32xf32>
    %805 = vector.broadcast %804 : vector<1x32xf32> to vector<8x32xf32>
    %806 = arith.addf %803, %805 : vector<8x32xf32>
    %cst_238 = arith.constant 5.000000e-01 : f32
    %807 = vector.broadcast %cst_238 : f32 to vector<8x32xf32>
    %808 = arith.mulf %807, %806 : vector<8x32xf32>
    %cst_239 = arith.constant 1.41421354 : f32
    %809 = vector.broadcast %cst_239 : f32 to vector<8x32xf32>
    %810 = arith.divf %806, %809 : vector<8x32xf32>
    %811 = math.erf %810 : vector<8x32xf32>
    %cst_240 = arith.constant 1.000000e+00 : f32
    %812 = vector.broadcast %cst_240 : f32 to vector<8x32xf32>
    %813 = arith.addf %812, %811 : vector<8x32xf32>
    %814 = arith.mulf %808, %813 : vector<8x32xf32>
    %c1264 = arith.constant 1264 : index
    %c0_241 = arith.constant 0 : index
    %815 = vector.load %arg1[%c1264, %c0_241] : memref<1704x128xf32, #tpu.memory_space<vmem>>, vector<3x128xf32>
    %c1232 = arith.constant 1232 : index
    %c0_242 = arith.constant 0 : index
    %816 = vector.load %arg1[%c1232, %c0_242] : memref<1704x128xf32, #tpu.memory_space<vmem>>, vector<32x128xf32>
    %cst_243 = arith.constant dense<0.000000e+00> : vector<8x128xf32>
    %817 = tpu.matmul %814, %816, %cst_243 {dimension_numbers = #tpu.dot_dimension_numbers<[1], [0], [0], [1], [0, 0, 1, 1], [], []>, precision = #tpu.contract_precision<fp32>} : vector<8x32xf32>, vector<32x128xf32>, vector<8x128xf32> -> vector<8x128xf32>
    %818 = vector.extract_strided_slice %815 {offsets = [0, 0], sizes = [1, 128], strides = [1, 1]} : vector<3x128xf32> to vector<1x128xf32>
    %819 = vector.broadcast %818 : vector<1x128xf32> to vector<8x128xf32>
    %820 = arith.addf %817, %819 : vector<8x128xf32>
    %cst_244 = arith.constant dense<0.000000e+00> : vector<128xf32>
    %821 = vector.multi_reduction <add>, %820, %cst_244 [0] : vector<8x128xf32> to vector<128xf32>
    %822 = vector.shape_cast %821 : vector<128xf32> to vector<1x128xf32>
    %cst_245 = arith.constant 8.000000e+00 : f32
    %823 = vector.broadcast %cst_245 : f32 to vector<1x128xf32>
    %824 = arith.divf %822, %823 : vector<1x128xf32>
    %825 = vector.broadcast %824 : vector<1x128xf32> to vector<8x128xf32>
    %826 = arith.subf %820, %825 : vector<8x128xf32>
    %827 = arith.mulf %826, %826 : vector<8x128xf32>
    %cst_246 = arith.constant dense<0.000000e+00> : vector<128xf32>
    %828 = vector.multi_reduction <add>, %827, %cst_246 [0] : vector<8x128xf32> to vector<128xf32>
    %829 = vector.shape_cast %828 : vector<128xf32> to vector<1x128xf32>
    %cst_247 = arith.constant 8.000000e+00 : f32
    %830 = vector.broadcast %cst_247 : f32 to vector<1x128xf32>
    %831 = arith.divf %829, %830 : vector<1x128xf32>
    %832 = vector.broadcast %824 : vector<1x128xf32> to vector<8x128xf32>
    %833 = arith.subf %820, %832 : vector<8x128xf32>
    %cst_248 = arith.constant 9.99999974E-6 : f32
    %834 = vector.broadcast %cst_248 : f32 to vector<1x128xf32>
    %835 = arith.addf %831, %834 : vector<1x128xf32>
    %836 = math.rsqrt %835 : vector<1x128xf32>
    %837 = vector.broadcast %836 : vector<1x128xf32> to vector<8x128xf32>
    %838 = arith.mulf %833, %837 : vector<8x128xf32>
    %839 = vector.extract_strided_slice %815 {offsets = [1, 0], sizes = [1, 128], strides = [1, 1]} : vector<3x128xf32> to vector<1x128xf32>
    %840 = vector.broadcast %839 : vector<1x128xf32> to vector<8x128xf32>
    %841 = arith.mulf %838, %840 : vector<8x128xf32>
    %842 = vector.extract_strided_slice %815 {offsets = [2, 0], sizes = [1, 128], strides = [1, 1]} : vector<3x128xf32> to vector<1x128xf32>
    %843 = vector.broadcast %842 : vector<1x128xf32> to vector<8x128xf32>
    %844 = arith.addf %841, %843 : vector<8x128xf32>
    %cst_249 = arith.constant 5.000000e-01 : f32
    %845 = vector.broadcast %cst_249 : f32 to vector<8x128xf32>
    %846 = arith.mulf %845, %844 : vector<8x128xf32>
    %cst_250 = arith.constant 1.41421354 : f32
    %847 = vector.broadcast %cst_250 : f32 to vector<8x128xf32>
    %848 = arith.divf %844, %847 : vector<8x128xf32>
    %849 = math.erf %848 : vector<8x128xf32>
    %cst_251 = arith.constant 1.000000e+00 : f32
    %850 = vector.broadcast %cst_251 : f32 to vector<8x128xf32>
    %851 = arith.addf %850, %849 : vector<8x128xf32>
    %852 = arith.mulf %846, %851 : vector<8x128xf32>
    %c1400 = arith.constant 1400 : index
    %c0_252 = arith.constant 0 : index
    %853 = vector.load %arg1[%c1400, %c0_252] : memref<1704x128xf32, #tpu.memory_space<vmem>>, vector<3x32xf32>
    %c1272 = arith.constant 1272 : index
    %c0_253 = arith.constant 0 : index
    %854 = vector.load %arg1[%c1272, %c0_253] : memref<1704x128xf32, #tpu.memory_space<vmem>>, vector<128x32xf32>
    %cst_254 = arith.constant dense<0.000000e+00> : vector<8x32xf32>
    %855 = tpu.matmul %852, %854, %cst_254 {dimension_numbers = #tpu.dot_dimension_numbers<[1], [0], [0], [1], [0, 0, 1, 1], [], []>, precision = #tpu.contract_precision<fp32>} : vector<8x128xf32>, vector<128x32xf32>, vector<8x32xf32> -> vector<8x32xf32>
    %856 = vector.extract_strided_slice %853 {offsets = [0, 0], sizes = [1, 32], strides = [1, 1]} : vector<3x32xf32> to vector<1x32xf32>
    %857 = vector.broadcast %856 : vector<1x32xf32> to vector<8x32xf32>
    %858 = arith.addf %855, %857 : vector<8x32xf32>
    %cst_255 = arith.constant dense<0.000000e+00> : vector<32xf32>
    %859 = vector.multi_reduction <add>, %858, %cst_255 [0] : vector<8x32xf32> to vector<32xf32>
    %860 = vector.shape_cast %859 : vector<32xf32> to vector<1x32xf32>
    %cst_256 = arith.constant 8.000000e+00 : f32
    %861 = vector.broadcast %cst_256 : f32 to vector<1x32xf32>
    %862 = arith.divf %860, %861 : vector<1x32xf32>
    %863 = vector.broadcast %862 : vector<1x32xf32> to vector<8x32xf32>
    %864 = arith.subf %858, %863 : vector<8x32xf32>
    %865 = arith.mulf %864, %864 : vector<8x32xf32>
    %cst_257 = arith.constant dense<0.000000e+00> : vector<32xf32>
    %866 = vector.multi_reduction <add>, %865, %cst_257 [0] : vector<8x32xf32> to vector<32xf32>
    %867 = vector.shape_cast %866 : vector<32xf32> to vector<1x32xf32>
    %cst_258 = arith.constant 8.000000e+00 : f32
    %868 = vector.broadcast %cst_258 : f32 to vector<1x32xf32>
    %869 = arith.divf %867, %868 : vector<1x32xf32>
    %870 = vector.broadcast %862 : vector<1x32xf32> to vector<8x32xf32>
    %871 = arith.subf %858, %870 : vector<8x32xf32>
    %cst_259 = arith.constant 9.99999974E-6 : f32
    %872 = vector.broadcast %cst_259 : f32 to vector<1x32xf32>
    %873 = arith.addf %869, %872 : vector<1x32xf32>
    %874 = math.rsqrt %873 : vector<1x32xf32>
    %875 = vector.broadcast %874 : vector<1x32xf32> to vector<8x32xf32>
    %876 = arith.mulf %871, %875 : vector<8x32xf32>
    %877 = vector.extract_strided_slice %853 {offsets = [1, 0], sizes = [1, 32], strides = [1, 1]} : vector<3x32xf32> to vector<1x32xf32>
    %878 = vector.broadcast %877 : vector<1x32xf32> to vector<8x32xf32>
    %879 = arith.mulf %876, %878 : vector<8x32xf32>
    %880 = vector.extract_strided_slice %853 {offsets = [2, 0], sizes = [1, 32], strides = [1, 1]} : vector<3x32xf32> to vector<1x32xf32>
    %881 = vector.broadcast %880 : vector<1x32xf32> to vector<8x32xf32>
    %882 = arith.addf %879, %881 : vector<8x32xf32>
    %883 = arith.addf %882, %738 : vector<8x32xf32>
    %c0_260 = arith.constant 0 : index
    %c0_261 = arith.constant 0 : index
    %884 = vector.load %arg2[%c0_260, %c0_261] : memref<8x32xf32, #tpu.memory_space<vmem>>, vector<8x32xf32>
    tpu.vector_store %arg2[%c0_260, %c0_261], %883 {strides = array<i32>} : memref<8x32xf32, #tpu.memory_space<vmem>>, vector<8x32xf32>,
    %c1480 = arith.constant 1480 : index
    %c0_262 = arith.constant 0 : index
    %885 = vector.load %arg1[%c1480, %c0_262] : memref<1704x128xf32, #tpu.memory_space<vmem>>, vector<8x4xf32>
    %c1488 = arith.constant 1488 : index
    %c0_263 = arith.constant 0 : index
    %886 = vector.load %arg1[%c1488, %c0_263] : memref<1704x128xf32, #tpu.memory_space<vmem>>, vector<2x8xf32>
    %cst_264 = arith.constant 0.000000e+00 : f32
    %887 = vector.broadcast %cst_264 : f32 to vector<8x64xf32>
    %c1496 = arith.constant 1496 : index
    %c0_265 = arith.constant 0 : index
    %888 = vector.load %arg1[%c1496, %c0_265] : memref<1704x128xf32, #tpu.memory_space<vmem>>, vector<32x64xf32>
    %889 = vector.extract_strided_slice %885 {offsets = [0, 0], sizes = [8, 1], strides = [1, 1]} : vector<8x4xf32> to vector<8x1xf32>
    %cst_266 = arith.constant dense<0.000000e+00> : vector<8x64xf32>
    %890 = tpu.matmul %883, %888, %cst_266 {dimension_numbers = #tpu.dot_dimension_numbers<[1], [0], [0], [1], [0, 0, 1, 1], [], []>, precision = #tpu.contract_precision<fp32>} : vector<8x32xf32>, vector<32x64xf32>, vector<8x64xf32> -> vector<8x64xf32>
    %891 = vector.broadcast %889 : vector<8x1xf32> to vector<8x64xf32>
    %892 = arith.mulf %891, %890 : vector<8x64xf32>
    %893 = arith.addf %887, %892 : vector<8x64xf32>
    %c1528 = arith.constant 1528 : index
    %c0_267 = arith.constant 0 : index
    %894 = vector.load %arg1[%c1528, %c0_267] : memref<1704x128xf32, #tpu.memory_space<vmem>>, vector<32x64xf32>
    %895 = vector.extract_strided_slice %885 {offsets = [0, 1], sizes = [8, 1], strides = [1, 1]} : vector<8x4xf32> to vector<8x1xf32>
    %cst_268 = arith.constant dense<0.000000e+00> : vector<8x64xf32>
    %896 = tpu.matmul %883, %894, %cst_268 {dimension_numbers = #tpu.dot_dimension_numbers<[1], [0], [0], [1], [0, 0, 1, 1], [], []>, precision = #tpu.contract_precision<fp32>} : vector<8x32xf32>, vector<32x64xf32>, vector<8x64xf32> -> vector<8x64xf32>
    %897 = vector.broadcast %895 : vector<8x1xf32> to vector<8x64xf32>
    %898 = arith.mulf %897, %896 : vector<8x64xf32>
    %899 = arith.addf %893, %898 : vector<8x64xf32>
    %c1560 = arith.constant 1560 : index
    %c0_269 = arith.constant 0 : index
    %900 = vector.load %arg1[%c1560, %c0_269] : memref<1704x128xf32, #tpu.memory_space<vmem>>, vector<32x64xf32>
    %901 = vector.extract_strided_slice %885 {offsets = [0, 2], sizes = [8, 1], strides = [1, 1]} : vector<8x4xf32> to vector<8x1xf32>
    %cst_270 = arith.constant dense<0.000000e+00> : vector<8x64xf32>
    %902 = tpu.matmul %883, %900, %cst_270 {dimension_numbers = #tpu.dot_dimension_numbers<[1], [0], [0], [1], [0, 0, 1, 1], [], []>, precision = #tpu.contract_precision<fp32>} : vector<8x32xf32>, vector<32x64xf32>, vector<8x64xf32> -> vector<8x64xf32>
    %903 = vector.broadcast %901 : vector<8x1xf32> to vector<8x64xf32>
    %904 = arith.mulf %903, %902 : vector<8x64xf32>
    %905 = arith.addf %899, %904 : vector<8x64xf32>
    %c1592 = arith.constant 1592 : index
    %c0_271 = arith.constant 0 : index
    %906 = vector.load %arg1[%c1592, %c0_271] : memref<1704x128xf32, #tpu.memory_space<vmem>>, vector<32x64xf32>
    %907 = vector.extract_strided_slice %885 {offsets = [0, 3], sizes = [8, 1], strides = [1, 1]} : vector<8x4xf32> to vector<8x1xf32>
    %cst_272 = arith.constant dense<0.000000e+00> : vector<8x64xf32>
    %908 = tpu.matmul %883, %906, %cst_272 {dimension_numbers = #tpu.dot_dimension_numbers<[1], [0], [0], [1], [0, 0, 1, 1], [], []>, precision = #tpu.contract_precision<fp32>} : vector<8x32xf32>, vector<32x64xf32>, vector<8x64xf32> -> vector<8x64xf32>
    %909 = vector.broadcast %907 : vector<8x1xf32> to vector<8x64xf32>
    %910 = arith.mulf %909, %908 : vector<8x64xf32>
    %911 = arith.addf %905, %910 : vector<8x64xf32>
    %c1624 = arith.constant 1624 : index
    %c0_273 = arith.constant 0 : index
    %912 = vector.load %arg1[%c1624, %c0_273] : memref<1704x128xf32, #tpu.memory_space<vmem>>, vector<3x64xf32>
    %cst_274 = arith.constant dense<0.000000e+00> : vector<2x64xf32>
    %913 = tpu.matmul %886, %911, %cst_274 {dimension_numbers = #tpu.dot_dimension_numbers<[1], [0], [0], [1], [0, 0, 1, 1], [], []>, precision = #tpu.contract_precision<fp32>} : vector<2x8xf32>, vector<8x64xf32>, vector<2x64xf32> -> vector<2x64xf32>
    %914 = vector.extract_strided_slice %912 {offsets = [0, 0], sizes = [1, 64], strides = [1, 1]} : vector<3x64xf32> to vector<1x64xf32>
    %915 = vector.broadcast %914 : vector<1x64xf32> to vector<2x64xf32>
    %916 = arith.addf %913, %915 : vector<2x64xf32>
    %cst_275 = arith.constant dense<0.000000e+00> : vector<64xf32>
    %917 = vector.multi_reduction <add>, %916, %cst_275 [0] : vector<2x64xf32> to vector<64xf32>
    %918 = vector.shape_cast %917 : vector<64xf32> to vector<1x64xf32>
    %cst_276 = arith.constant 2.000000e+00 : f32
    %919 = vector.broadcast %cst_276 : f32 to vector<1x64xf32>
    %920 = arith.divf %918, %919 : vector<1x64xf32>
    %921 = vector.broadcast %920 : vector<1x64xf32> to vector<2x64xf32>
    %922 = arith.subf %916, %921 : vector<2x64xf32>
    %923 = arith.mulf %922, %922 : vector<2x64xf32>
    %cst_277 = arith.constant dense<0.000000e+00> : vector<64xf32>
    %924 = vector.multi_reduction <add>, %923, %cst_277 [0] : vector<2x64xf32> to vector<64xf32>
    %925 = vector.shape_cast %924 : vector<64xf32> to vector<1x64xf32>
    %cst_278 = arith.constant 2.000000e+00 : f32
    %926 = vector.broadcast %cst_278 : f32 to vector<1x64xf32>
    %927 = arith.divf %925, %926 : vector<1x64xf32>
    %928 = vector.broadcast %920 : vector<1x64xf32> to vector<2x64xf32>
    %929 = arith.subf %916, %928 : vector<2x64xf32>
    %cst_279 = arith.constant 9.99999974E-6 : f32
    %930 = vector.broadcast %cst_279 : f32 to vector<1x64xf32>
    %931 = arith.addf %927, %930 : vector<1x64xf32>
    %932 = math.rsqrt %931 : vector<1x64xf32>
    %933 = vector.broadcast %932 : vector<1x64xf32> to vector<2x64xf32>
    %934 = arith.mulf %929, %933 : vector<2x64xf32>
    %935 = vector.extract_strided_slice %912 {offsets = [1, 0], sizes = [1, 64], strides = [1, 1]} : vector<3x64xf32> to vector<1x64xf32>
    %936 = vector.broadcast %935 : vector<1x64xf32> to vector<2x64xf32>
    %937 = arith.mulf %934, %936 : vector<2x64xf32>
    %938 = vector.extract_strided_slice %912 {offsets = [2, 0], sizes = [1, 64], strides = [1, 1]} : vector<3x64xf32> to vector<1x64xf32>
    %939 = vector.broadcast %938 : vector<1x64xf32> to vector<2x64xf32>
    %940 = arith.addf %937, %939 : vector<2x64xf32>
    %cst_280 = arith.constant 5.000000e-01 : f32
    %941 = vector.broadcast %cst_280 : f32 to vector<2x64xf32>
    %942 = arith.mulf %941, %940 : vector<2x64xf32>
    %cst_281 = arith.constant 1.41421354 : f32
    %943 = vector.broadcast %cst_281 : f32 to vector<2x64xf32>
    %944 = arith.divf %940, %943 : vector<2x64xf32>
    %945 = math.erf %944 : vector<2x64xf32>
    %cst_282 = arith.constant 1.000000e+00 : f32
    %946 = vector.broadcast %cst_282 : f32 to vector<2x64xf32>
    %947 = arith.addf %946, %945 : vector<2x64xf32>
    %948 = arith.mulf %942, %947 : vector<2x64xf32>
    %c1632 = arith.constant 1632 : index
    %c0_283 = arith.constant 0 : index
    %949 = vector.load %arg1[%c1632, %c0_283] : memref<1704x128xf32, #tpu.memory_space<vmem>>, vector<64x128xf32>
    %cst_284 = arith.constant dense<0.000000e+00> : vector<2x128xf32>
    %950 = tpu.matmul %948, %949, %cst_284 {dimension_numbers = #tpu.dot_dimension_numbers<[1], [0], [0], [1], [0, 0, 1, 1], [], []>, precision = #tpu.contract_precision<fp32>} : vector<2x64xf32>, vector<64x128xf32>, vector<2x128xf32> -> vector<2x128xf32>
    %c1696 = arith.constant 1696 : index
    %c0_285 = arith.constant 0 : index
    %951 = vector.load %arg1[%c1696, %c0_285] : memref<1704x128xf32, #tpu.memory_space<vmem>>, vector<1x128xf32>
    %952 = vector.broadcast %951 : vector<1x128xf32> to vector<2x128xf32>
    %953 = arith.addf %950, %952 : vector<2x128xf32>
    %c0_286 = arith.constant 0 : index
    %c0_287 = arith.constant 0 : index
    %954 = vector.load %arg3[%c0_286, %c0_287] : memref<2x128xf32, #tpu.memory_space<vmem>>, vector<2x128xf32>
    tpu.vector_store %arg3[%c0_286, %c0_287], %953 {strides = array<i32>} : memref<2x128xf32, #tpu.memory_space<vmem>>, vector<2x128xf32>,
    return
  }
}

</mosaic_0001>

<llo_original>
// kernel: fwd.1
$region0: #{fwd.1}
  #allocation0 [shape = 'u32[]', space=smem, size = 0x4, offset = 0x4, fixed_abs, tag = 'smem constant byte address 0x4 - core index']
  #allocation1 [shape = 'u32[72,128]{1,0:T(1,128)}', space=vmem, size = 0x9000, scoped, tag = 'internal scratch']
  %s0 = inlined_call_operand.vmem [shape: f32[8,192], index: 0, kind: input, shape index: {}]
  %s1 = inlined_call_operand.hbm [shape: f32[1704,128], index: 1, kind: input, shape index: {}]
  %s2 = inlined_call_operand.hbm [shape: f32[8,32], index: 2, kind: output, shape index: {0}]
  %s3 = inlined_call_operand.hbm [shape: f32[2,128], index: 3, kind: output, shape index: {1}]
  %4 = xla_tuple %s2, %s3
  %s5 = sld [smem:[#allocation0]]
  $region30: #{fwd.1} parent=0
    _
  %s7 = ssub.s32 1, %s5
  %s8 = scalar_select 0, %s7, %s5
  $region1: #{fwd.1} parent=0
    #allocation2 [shape = 'u8[872448]{0}', space=vmem, size = 0xd5000, scoped, tag = 'input window, operand 1, single buffered']
    #allocation3 [shape = 's32[1]{0}', space=sflag, size = 0x4, scoped, tag = 'scoped memory for fwd.1']
    #allocation4 [shape = 's32[1]{0}', space=sflag, size = 0x4, scoped, tag = 'scoped memory for fwd.1']
    #allocation5 [shape = 'u8[4096]{0}', space=vmem, size = 0x1000, scoped, tag = 'output window, operand 0, single buffered']
    #allocation6 [shape = 'u8[1024]{0}', space=vmem, size = 0x400, scoped, tag = 'output window, operand 1, single buffered']
    #allocation7 [shape = 's32[1]{0}', space=sflag, size = 0x4, scoped, tag = 'scoped memory for fwd.1']
    %9 = vsyncpa [#allocation3], 0
    %10 = vsyncpa [#allocation4], 0
    %11 = vsyncpa [#allocation7], 0
    // Predicated region
    $region2: #{fwd.1} parent=1 // pred_check
      _
    $region3: #{fwd.1} parent=1 // pred_check_branch
      %13 = sbr.rel (0) target = $region5
    $region4: #{fwd.1} parent=1 // pred_region
      _
    $region5: #{fwd.1} parent=1 // pred_fallthru
      _
    // Predicated region
    $region6: #{fwd.1} parent=1 // pred_check
      _
    $region7: #{fwd.1} parent=1 // pred_check_branch
      %15 = sbr.rel (0) target = $region9
    $region8: #{fwd.1} parent=1 // pred_region
      %17 = vsyncadd [#allocation3], 0
      %s18 = sshll.u32 %s1, 4
      %s19 = int_to_ptr.hbm [resolvable:$true] %s18
      %s20 = sshll.u32 [#allocation2], 4
      %s21 = int_to_ptr.vmem [resolvable:$true] %s20
      %26 = dma.hbm_to_vmem [thread:$0]  %s19, 27264, %s21, [#allocation3], 128, 128, 8
    $region9: #{fwd.1} parent=1 // pred_fallthru
      _
    // Predicated region
    $region10: #{fwd.1} parent=1 // pred_check
      _
    $region11: #{fwd.1} parent=1 // pred_check_branch
      %28 = sbr.rel (0) target = $region13
    $region12: #{fwd.1} parent=1 // pred_region
      %30 = dma.done [#allocation3], 27264
    $region13: #{fwd.1} parent=1 // pred_fallthru
      _
    %v31 = vld [vmem:[%s0] sm:$0xff]
    %v32 = vld [vmem:[%s0 + $0x8] sm:$0xff]
    %v33 = vld [vmem:[#allocation2 + $0xc0] sm:$0x7]
    %v34 = vld [vmem:[#allocation2] sm:$0xff]
    %v35 = vld [vmem:[#allocation2 + $0x8] sm:$0xff]
    %v36 = vld [vmem:[#allocation2 + $0x10] sm:$0xff]
    %v37 = vld [vmem:[#allocation2 + $0x18] sm:$0xff]
    %v38 = vld [vmem:[#allocation2 + $0x20] sm:$0xff]
    %v39 = vld [vmem:[#allocation2 + $0x28] sm:$0xff]
    %v40 = vld [vmem:[#allocation2 + $0x30] sm:$0xff]
    %v41 = vld [vmem:[#allocation2 + $0x38] sm:$0xff]
    %v42 = vld [vmem:[#allocation2 + $0x40] sm:$0xff]
    %v43 = vld [vmem:[#allocation2 + $0x48] sm:$0xff]
    %v44 = vld [vmem:[#allocation2 + $0x50] sm:$0xff]
    %v45 = vld [vmem:[#allocation2 + $0x58] sm:$0xff]
    %v46 = vld [vmem:[#allocation2 + $0x60] sm:$0xff]
    %v47 = vld [vmem:[#allocation2 + $0x68] sm:$0xff]
    %v48 = vld [vmem:[#allocation2 + $0x70] sm:$0xff]
    %v49 = vld [vmem:[#allocation2 + $0x78] sm:$0xff]
    %v50 = vld [vmem:[#allocation2 + $0x80] sm:$0xff]
    %v51 = vld [vmem:[#allocation2 + $0x88] sm:$0xff]
    %v52 = vld [vmem:[#allocation2 + $0x90] sm:$0xff]
    %v53 = vld [vmem:[#allocation2 + $0x98] sm:$0xff]
    %v54 = vld [vmem:[#allocation2 + $0xa0] sm:$0xff]
    %v55 = vld [vmem:[#allocation2 + $0xa8] sm:$0xff]
    %v56 = vld [vmem:[#allocation2 + $0xb0] sm:$0xff]
    %v57 = vld [vmem:[#allocation2 + $0xb8] sm:$0xff]
    %v58 = vperm.slane %v33, 0
    %vm59 = vcmask 523264
    %v61 = vsel %vm59, %v32, 0
    %v63 = vand.u32 %v49, 4294901760
    %64 = vmatpush.msra.mxu0 %v63
    %v65 = vand.u32 %v48, 4294901760
    %66 = vmatpush.msra.mxu0 %v65
    %v67 = vand.u32 %v47, 4294901760
    %68 = vmatpush.msra.mxu0 %v67
    %v69 = vand.u32 %v46, 4294901760
    %70 = vmatpush.msra.mxu0 %v69
    %v71 = vand.u32 %v45, 4294901760
    %72 = vmatpush.msra.mxu0 %v71
    %v73 = vand.u32 %v44, 4294901760
    %74 = vmatpush.msra.mxu0 %v73
    %v75 = vand.u32 %v43, 4294901760
    %76 = vmatpush.msra.mxu0 %v75
    %v77 = vand.u32 %v42, 4294901760
    %78 = vmatpush.msra.mxu0 %v77
    %v79 = vand.u32 %v41, 4294901760
    %80 = vmatpush.msra.mxu0 %v79
    %v81 = vand.u32 %v40, 4294901760
    %82 = vmatpush.msra.mxu0 %v81
    %v83 = vand.u32 %v39, 4294901760
    %84 = vmatpush.msra.mxu0 %v83
    %v85 = vand.u32 %v38, 4294901760
    %86 = vmatpush.msra.mxu0 %v85
    %v87 = vand.u32 %v37, 4294901760
    %88 = vmatpush.msra.mxu0 %v87
    %v89 = vand.u32 %v36, 4294901760
    %90 = vmatpush.msra.mxu0 %v89
    %v91 = vand.u32 %v35, 4294901760
    %92 = vmatpush.msra.mxu0 %v91
    %v93 = vand.u32 %v34, 4294901760
    %94 = vmatpush.msra.mxu0 %v93
    %v95 = vand.u32 %v31, 4294901760
    %v96 = vsub.f32 %v31, %v95
    %v97 = vand.u32 %v96, 4294901760
    %v98 = vsub.f32 %v96, %v97
    %v99 = vand.u32 %v98, 4294901760
    %100 = vmatmul.f32.gmra.mxu0 %v99
    %v101 = vpop.f32.mrf.mxu0
    %v102 = vadd.f32 %v58, %v101
    %103 = vdwg.mxu0
    %v104 = vand.u32 %v49, 4294901760
    %v105 = vsub.f32 %v49, %v104
    %v106 = vand.u32 %v105, 4294901760
    %v107 = vsub.f32 %v105, %v106
    %v108 = vand.u32 %v107, 4294901760
    %109 = vmatpush.msra.mxu0 %v108
    %v110 = vand.u32 %v48, 4294901760
    %v111 = vsub.f32 %v48, %v110
    %v112 = vand.u32 %v111, 4294901760
    %v113 = vsub.f32 %v111, %v112
    %v114 = vand.u32 %v113, 4294901760
    %115 = vmatpush.msra.mxu0 %v114
    %v116 = vand.u32 %v47, 4294901760
    %v117 = vsub.f32 %v47, %v116
    %v118 = vand.u32 %v117, 4294901760
    %v119 = vsub.f32 %v117, %v118
    %v120 = vand.u32 %v119, 4294901760
    %121 = vmatpush.msra.mxu0 %v120
    %v122 = vand.u32 %v46, 4294901760
    %v123 = vsub.f32 %v46, %v122
    %v124 = vand.u32 %v123, 4294901760
    %v125 = vsub.f32 %v123, %v124
    %v126 = vand.u32 %v125, 4294901760
    %127 = vmatpush.msra.mxu0 %v126
    %v128 = vand.u32 %v45, 4294901760
    %v129 = vsub.f32 %v45, %v128
    %v130 = vand.u32 %v129, 4294901760
    %v131 = vsub.f32 %v129, %v130
    %v132 = vand.u32 %v131, 4294901760
    %133 = vmatpush.msra.mxu0 %v132
    %v134 = vand.u32 %v44, 4294901760
    %v135 = vsub.f32 %v44, %v134
    %v136 = vand.u32 %v135, 4294901760
    %v137 = vsub.f32 %v135, %v136
    %v138 = vand.u32 %v137, 4294901760
    %139 = vmatpush.msra.mxu0 %v138
    %v140 = vand.u32 %v43, 4294901760
    %v141 = vsub.f32 %v43, %v140
    %v142 = vand.u32 %v141, 4294901760
    %v143 = vsub.f32 %v141, %v142
    %v144 = vand.u32 %v143, 4294901760
    %145 = vmatpush.msra.mxu0 %v144
    %v146 = vand.u32 %v42, 4294901760
    %v147 = vsub.f32 %v42, %v146
    %v148 = vand.u32 %v147, 4294901760
    %v149 = vsub.f32 %v147, %v148
    %v150 = vand.u32 %v149, 4294901760
    %151 = vmatpush.msra.mxu0 %v150
    %v152 = vand.u32 %v41, 4294901760
    %v153 = vsub.f32 %v41, %v152
    %v154 = vand.u32 %v153, 4294901760
    %v155 = vsub.f32 %v153, %v154
    %v156 = vand.u32 %v155, 4294901760
    %157 = vmatpush.msra.mxu0 %v156
    %v158 = vand.u32 %v40, 4294901760
    %v159 = vsub.f32 %v40, %v158
    %v160 = vand.u32 %v159, 4294901760
    %v161 = vsub.f32 %v159, %v160
    %v162 = vand.u32 %v161, 4294901760
    %163 = vmatpush.msra.mxu0 %v162
    %v164 = vand.u32 %v39, 4294901760
    %v165 = vsub.f32 %v39, %v164
    %v166 = vand.u32 %v165, 4294901760
    %v167 = vsub.f32 %v165, %v166
    %v168 = vand.u32 %v167, 4294901760
    %169 = vmatpush.msra.mxu0 %v168
    %v170 = vand.u32 %v38, 4294901760
    %v171 = vsub.f32 %v38, %v170
    %v172 = vand.u32 %v171, 4294901760
    %v173 = vsub.f32 %v171, %v172
    %v174 = vand.u32 %v173, 4294901760
    %175 = vmatpush.msra.mxu0 %v174
    %v176 = vand.u32 %v37, 4294901760
    %v177 = vsub.f32 %v37, %v176
    %v178 = vand.u32 %v177, 4294901760
    %v179 = vsub.f32 %v177, %v178
    %v180 = vand.u32 %v179, 4294901760
    %181 = vmatpush.msra.mxu0 %v180
    %v182 = vand.u32 %v36, 4294901760
    %v183 = vsub.f32 %v36, %v182
    %v184 = vand.u32 %v183, 4294901760
    %v185 = vsub.f32 %v183, %v184
    %v186 = vand.u32 %v185, 4294901760
    %187 = vmatpush.msra.mxu0 %v186
    %v188 = vand.u32 %v35, 4294901760
    %v189 = vsub.f32 %v35, %v188
    %v190 = vand.u32 %v189, 4294901760
    %v191 = vsub.f32 %v189, %v190
    %v192 = vand.u32 %v191, 4294901760
    %193 = vmatpush.msra.mxu0 %v192
    %v194 = vand.u32 %v34, 4294901760
    %v195 = vsub.f32 %v34, %v194
    %v196 = vand.u32 %v195, 4294901760
    %v197 = vsub.f32 %v195, %v196
    %v198 = vand.u32 %v197, 4294901760
    %199 = vmatpush.msra.mxu0 %v198
    %v200 = vand.u32 %v31, 4294901760
    %201 = vmatmul.f32.gmra.mxu0 %v200
    %v202 = vpop.f32.mrf.mxu0
    %v203 = vadd.f32 %v102, %v202
    %204 = vdwg.mxu0
    %v205 = vand.u32 %v49, 4294901760
    %v206 = vsub.f32 %v49, %v205
    %207 = vmatpush.msra.mxu0 %v206
    %v208 = vand.u32 %v48, 4294901760
    %v209 = vsub.f32 %v48, %v208
    %210 = vmatpush.msra.mxu0 %v209
    %v211 = vand.u32 %v47, 4294901760
    %v212 = vsub.f32 %v47, %v211
    %213 = vmatpush.msra.mxu0 %v212
    %v214 = vand.u32 %v46, 4294901760
    %v215 = vsub.f32 %v46, %v214
    %216 = vmatpush.msra.mxu0 %v215
    %v217 = vand.u32 %v45, 4294901760
    %v218 = vsub.f32 %v45, %v217
    %219 = vmatpush.msra.mxu0 %v218
    %v220 = vand.u32 %v44, 4294901760
    %v221 = vsub.f32 %v44, %v220
    %222 = vmatpush.msra.mxu0 %v221
    %v223 = vand.u32 %v43, 4294901760
    %v224 = vsub.f32 %v43, %v223
    %225 = vmatpush.msra.mxu0 %v224
    %v226 = vand.u32 %v42, 4294901760
    %v227 = vsub.f32 %v42, %v226
    %228 = vmatpush.msra.mxu0 %v227
    %v229 = vand.u32 %v41, 4294901760
    %v230 = vsub.f32 %v41, %v229
    %231 = vmatpush.msra.mxu0 %v230
    %v232 = vand.u32 %v40, 4294901760
    %v233 = vsub.f32 %v40, %v232
    %234 = vmatpush.msra.mxu0 %v233
    %v235 = vand.u32 %v39, 4294901760
    %v236 = vsub.f32 %v39, %v235
    %237 = vmatpush.msra.mxu0 %v236
    %v238 = vand.u32 %v38, 4294901760
    %v239 = vsub.f32 %v38, %v238
    %240 = vmatpush.msra.mxu0 %v239
    %v241 = vand.u32 %v37, 4294901760
    %v242 = vsub.f32 %v37, %v241
    %243 = vmatpush.msra.mxu0 %v242
    %v244 = vand.u32 %v36, 4294901760
    %v245 = vsub.f32 %v36, %v244
    %246 = vmatpush.msra.mxu0 %v245
    %v247 = vand.u32 %v35, 4294901760
    %v248 = vsub.f32 %v35, %v247
    %249 = vmatpush.msra.mxu0 %v248
    %v250 = vand.u32 %v34, 4294901760
    %v251 = vsub.f32 %v34, %v250
    %252 = vmatpush.msra.mxu0 %v251
    %v253 = vand.u32 %v31, 4294901760
    %v254 = vsub.f32 %v31, %v253
    %255 = vmatmul.f32.gmra.mxu0 %v254
    %v256 = vpop.f32.mrf.mxu0
    %v257 = vadd.f32 %v203, %v256
    %258 = vdwg.mxu0
    %v259 = vand.u32 %v49, 4294901760
    %260 = vmatpush.msra.mxu0 %v259
    %v261 = vand.u32 %v48, 4294901760
    %262 = vmatpush.msra.mxu0 %v261
    %v263 = vand.u32 %v47, 4294901760
    %264 = vmatpush.msra.mxu0 %v263
    %v265 = vand.u32 %v46, 4294901760
    %266 = vmatpush.msra.mxu0 %v265
    %v267 = vand.u32 %v45, 4294901760
    %268 = vmatpush.msra.mxu0 %v267
    %v269 = vand.u32 %v44, 4294901760
    %270 = vmatpush.msra.mxu0 %v269
    %v271 = vand.u32 %v43, 4294901760
    %272 = vmatpush.msra.mxu0 %v271
    %v273 = vand.u32 %v42, 4294901760
    %274 = vmatpush.msra.mxu0 %v273
    %v275 = vand.u32 %v41, 4294901760
    %276 = vmatpush.msra.mxu0 %v275
    %v277 = vand.u32 %v40, 4294901760
    %278 = vmatpush.msra.mxu0 %v277
    %v279 = vand.u32 %v39, 4294901760
    %280 = vmatpush.msra.mxu0 %v279
    %v281 = vand.u32 %v38, 4294901760
    %282 = vmatpush.msra.mxu0 %v281
    %v283 = vand.u32 %v37, 4294901760
    %284 = vmatpush.msra.mxu0 %v283
    %v285 = vand.u32 %v36, 4294901760
    %286 = vmatpush.msra.mxu0 %v285
    %v287 = vand.u32 %v35, 4294901760
    %288 = vmatpush.msra.mxu0 %v287
    %v289 = vand.u32 %v34, 4294901760
    %290 = vmatpush.msra.mxu0 %v289
    %v291 = vand.u32 %v31, 4294901760
    %v292 = vsub.f32 %v31, %v291
    %v293 = vand.u32 %v292, 4294901760
    %294 = vmatmul.f32.gmra.mxu0 %v293
    %v295 = vpop.f32.mrf.mxu0
    %v296 = vadd.f32 %v257, %v295
    %297 = vdwg.mxu0
    %v298 = vand.u32 %v49, 4294901760
    %v299 = vsub.f32 %v49, %v298
    %v300 = vand.u32 %v299, 4294901760
    %301 = vmatpush.msra.mxu0 %v300
    %v302 = vand.u32 %v48, 4294901760
    %v303 = vsub.f32 %v48, %v302
    %v304 = vand.u32 %v303, 4294901760
    %305 = vmatpush.msra.mxu0 %v304
    %v306 = vand.u32 %v47, 4294901760
    %v307 = vsub.f32 %v47, %v306
    %v308 = vand.u32 %v307, 4294901760
    %309 = vmatpush.msra.mxu0 %v308
    %v310 = vand.u32 %v46, 4294901760
    %v311 = vsub.f32 %v46, %v310
    %v312 = vand.u32 %v311, 4294901760
    %313 = vmatpush.msra.mxu0 %v312
    %v314 = vand.u32 %v45, 4294901760
    %v315 = vsub.f32 %v45, %v314
    %v316 = vand.u32 %v315, 4294901760
    %317 = vmatpush.msra.mxu0 %v316
    %v318 = vand.u32 %v44, 4294901760
    %v319 = vsub.f32 %v44, %v318
    %v320 = vand.u32 %v319, 4294901760
    %321 = vmatpush.msra.mxu0 %v320
    %v322 = vand.u32 %v43, 4294901760
    %v323 = vsub.f32 %v43, %v322
    %v324 = vand.u32 %v323, 4294901760
    %325 = vmatpush.msra.mxu0 %v324
    %v326 = vand.u32 %v42, 4294901760
    %v327 = vsub.f32 %v42, %v326
    %v328 = vand.u32 %v327, 4294901760
    %329 = vmatpush.msra.mxu0 %v328
    %v330 = vand.u32 %v41, 4294901760
    %v331 = vsub.f32 %v41, %v330
    %v332 = vand.u32 %v331, 4294901760
    %333 = vmatpush.msra.mxu0 %v332
    %v334 = vand.u32 %v40, 4294901760
    %v335 = vsub.f32 %v40, %v334
    %v336 = vand.u32 %v335, 4294901760
    %337 = vmatpush.msra.mxu0 %v336
    %v338 = vand.u32 %v39, 4294901760
    %v339 = vsub.f32 %v39, %v338
    %v340 = vand.u32 %v339, 4294901760
    %341 = vmatpush.msra.mxu0 %v340
    %v342 = vand.u32 %v38, 4294901760
    %v343 = vsub.f32 %v38, %v342
    %v344 = vand.u32 %v343, 4294901760
    %345 = vmatpush.msra.mxu0 %v344
    %v346 = vand.u32 %v37, 4294901760
    %v347 = vsub.f32 %v37, %v346
    %v348 = vand.u32 %v347, 4294901760
    %349 = vmatpush.msra.mxu0 %v348
    %v350 = vand.u32 %v36, 4294901760
    %v351 = vsub.f32 %v36, %v350
    %v352 = vand.u32 %v351, 4294901760
    %353 = vmatpush.msra.mxu0 %v352
    %v354 = vand.u32 %v35, 4294901760
    %v355 = vsub.f32 %v35, %v354
    %v356 = vand.u32 %v355, 4294901760
    %357 = vmatpush.msra.mxu0 %v356
    %v358 = vand.u32 %v34, 4294901760
    %v359 = vsub.f32 %v34, %v358
    %v360 = vand.u32 %v359, 4294901760
    %361 = vmatpush.msra.mxu0 %v360
    %v362 = vand.u32 %v31, 4294901760
    %363 = vmatmul.f32.gmra.mxu0 %v362
    %v364 = vpop.f32.mrf.mxu0
    %v365 = vadd.f32 %v296, %v364
    %366 = vdwg.mxu0
    %v367 = vand.u32 %v49, 4294901760
    %368 = vmatpush.msra.mxu0 %v367
    %v369 = vand.u32 %v48, 4294901760
    %370 = vmatpush.msra.mxu0 %v369
    %v371 = vand.u32 %v47, 4294901760
    %372 = vmatpush.msra.mxu0 %v371
    %v373 = vand.u32 %v46, 4294901760
    %374 = vmatpush.msra.mxu0 %v373
    %v375 = vand.u32 %v45, 4294901760
    %376 = vmatpush.msra.mxu0 %v375
    %v377 = vand.u32 %v44, 4294901760
    %378 = vmatpush.msra.mxu0 %v377
    %v379 = vand.u32 %v43, 4294901760
    %380 = vmatpush.msra.mxu0 %v379
    %v381 = vand.u32 %v42, 4294901760
    %382 = vmatpush.msra.mxu0 %v381
    %v383 = vand.u32 %v41, 4294901760
    %384 = vmatpush.msra.mxu0 %v383
    %v385 = vand.u32 %v40, 4294901760
    %386 = vmatpush.msra.mxu0 %v385
    %v387 = vand.u32 %v39, 4294901760
    %388 = vmatpush.msra.mxu0 %v387
    %v389 = vand.u32 %v38, 4294901760
    %390 = vmatpush.msra.mxu0 %v389
    %v391 = vand.u32 %v37, 4294901760
    %392 = vmatpush.msra.mxu0 %v391
    %v393 = vand.u32 %v36, 4294901760
    %394 = vmatpush.msra.mxu0 %v393
    %v395 = vand.u32 %v35, 4294901760
    %396 = vmatpush.msra.mxu0 %v395
    %v397 = vand.u32 %v34, 4294901760
    %398 = vmatpush.msra.mxu0 %v397
    %v399 = vand.u32 %v31, 4294901760
    %400 = vmatmul.f32.gmra.mxu0 %v399
    %v401 = vpop.f32.mrf.mxu0
    %v402 = vadd.f32 %v365, %v401
    %403 = vdwg.mxu0
    %404 = vmatpush.msra.mxu0 0.0
    %405 = vmatpush.msra.mxu0 0.0
    %406 = vmatpush.msra.mxu0 0.0
    %407 = vmatpush.msra.mxu0 0.0
    %408 = vmatpush.msra.mxu0 0.0
    %409 = vmatpush.msra.mxu0 0.0
    %410 = vmatpush.msra.mxu0 0.0
    %411 = vmatpush.msra.mxu0 0.0
    %v412 = vand.u32 %v57, 4294901760
    %413 = vmatpush.msra.mxu0 %v412
    %v414 = vand.u32 %v56, 4294901760
    %415 = vmatpush.msra.mxu0 %v414
    %v416 = vand.u32 %v55, 4294901760
    %417 = vmatpush.msra.mxu0 %v416
    %v418 = vand.u32 %v54, 4294901760
    %419 = vmatpush.msra.mxu0 %v418
    %v420 = vand.u32 %v53, 4294901760
    %421 = vmatpush.msra.mxu0 %v420
    %v422 = vand.u32 %v52, 4294901760
    %423 = vmatpush.msra.mxu0 %v422
    %v424 = vand.u32 %v51, 4294901760
    %425 = vmatpush.msra.mxu0 %v424
    %v426 = vand.u32 %v50, 4294901760
    %427 = vmatpush.msra.mxu0 %v426
    %v428 = vand.u32 %v61, 4294901760
    %v429 = vsub.f32 %v61, %v428
    %v430 = vand.u32 %v429, 4294901760
    %v431 = vsub.f32 %v429, %v430
    %v432 = vand.u32 %v431, 4294901760
    %433 = vmatmul.f32.gmra.mxu0 %v432
    %v434 = vpop.f32.mrf.mxu0
    %v435 = vadd.f32 %v402, %v434
    %436 = vdwg.mxu0
    %437 = vmatpush.msra.mxu0 0.0
    %438 = vmatpush.msra.mxu0 0.0
    %439 = vmatpush.msra.mxu0 0.0
    %440 = vmatpush.msra.mxu0 0.0
    %441 = vmatpush.msra.mxu0 0.0
    %442 = vmatpush.msra.mxu0 0.0
    %443 = vmatpush.msra.mxu0 0.0
    %444 = vmatpush.msra.mxu0 0.0
    %v445 = vand.u32 %v57, 4294901760
    %v446 = vsub.f32 %v57, %v445
    %v447 = vand.u32 %v446, 4294901760
    %v448 = vsub.f32 %v446, %v447
    %v449 = vand.u32 %v448, 4294901760
    %450 = vmatpush.msra.mxu0 %v449
    %v451 = vand.u32 %v56, 4294901760
    %v452 = vsub.f32 %v56, %v451
    %v453 = vand.u32 %v452, 4294901760
    %v454 = vsub.f32 %v452, %v453
    %v455 = vand.u32 %v454, 4294901760
    %456 = vmatpush.msra.mxu0 %v455
    %v457 = vand.u32 %v55, 4294901760
    %v458 = vsub.f32 %v55, %v457
    %v459 = vand.u32 %v458, 4294901760
    %v460 = vsub.f32 %v458, %v459
    %v461 = vand.u32 %v460, 4294901760
    %462 = vmatpush.msra.mxu0 %v461
    %v463 = vand.u32 %v54, 4294901760
    %v464 = vsub.f32 %v54, %v463
    %v465 = vand.u32 %v464, 4294901760
    %v466 = vsub.f32 %v464, %v465
    %v467 = vand.u32 %v466, 4294901760
    %468 = vmatpush.msra.mxu0 %v467
    %v469 = vand.u32 %v53, 4294901760
    %v470 = vsub.f32 %v53, %v469
    %v471 = vand.u32 %v470, 4294901760
    %v472 = vsub.f32 %v470, %v471
    %v473 = vand.u32 %v472, 4294901760
    %474 = vmatpush.msra.mxu0 %v473
    %v475 = vand.u32 %v52, 4294901760
    %v476 = vsub.f32 %v52, %v475
    %v477 = vand.u32 %v476, 4294901760
    %v478 = vsub.f32 %v476, %v477
    %v479 = vand.u32 %v478, 4294901760
    %480 = vmatpush.msra.mxu0 %v479
    %v481 = vand.u32 %v51, 4294901760
    %v482 = vsub.f32 %v51, %v481
    %v483 = vand.u32 %v482, 4294901760
    %v484 = vsub.f32 %v482, %v483
    %v485 = vand.u32 %v484, 4294901760
    %486 = vmatpush.msra.mxu0 %v485
    %v487 = vand.u32 %v50, 4294901760
    %v488 = vsub.f32 %v50, %v487
    %v489 = vand.u32 %v488, 4294901760
    %v490 = vsub.f32 %v488, %v489
    %v491 = vand.u32 %v490, 4294901760
    %492 = vmatpush.msra.mxu0 %v491
    %v493 = vand.u32 %v61, 4294901760
    %494 = vmatmul.f32.gmra.mxu0 %v493
    %v495 = vpop.f32.mrf.mxu0
    %v496 = vadd.f32 %v435, %v495
    %497 = vdwg.mxu0
    %498 = vmatpush.msra.mxu0 0.0
    %499 = vmatpush.msra.mxu0 0.0
    %500 = vmatpush.msra.mxu0 0.0
    %501 = vmatpush.msra.mxu0 0.0
    %502 = vmatpush.msra.mxu0 0.0
    %503 = vmatpush.msra.mxu0 0.0
    %504 = vmatpush.msra.mxu0 0.0
    %505 = vmatpush.msra.mxu0 0.0
    %v506 = vand.u32 %v57, 4294901760
    %v507 = vsub.f32 %v57, %v506
    %508 = vmatpush.msra.mxu0 %v507
    %v509 = vand.u32 %v56, 4294901760
    %v510 = vsub.f32 %v56, %v509
    %511 = vmatpush.msra.mxu0 %v510
    %v512 = vand.u32 %v55, 4294901760
    %v513 = vsub.f32 %v55, %v512
    %514 = vmatpush.msra.mxu0 %v513
    %v515 = vand.u32 %v54, 4294901760
    %v516 = vsub.f32 %v54, %v515
    %517 = vmatpush.msra.mxu0 %v516
    %v518 = vand.u32 %v53, 4294901760
    %v519 = vsub.f32 %v53, %v518
    %520 = vmatpush.msra.mxu0 %v519
    %v521 = vand.u32 %v52, 4294901760
    %v522 = vsub.f32 %v52, %v521
    %523 = vmatpush.msra.mxu0 %v522
    %v524 = vand.u32 %v51, 4294901760
    %v525 = vsub.f32 %v51, %v524
    %526 = vmatpush.msra.mxu0 %v525
    %v527 = vand.u32 %v50, 4294901760
    %v528 = vsub.f32 %v50, %v527
    %529 = vmatpush.msra.mxu0 %v528
    %v530 = vand.u32 %v61, 4294901760
    %v531 = vsub.f32 %v61, %v530
    %532 = vmatmul.f32.gmra.mxu0 %v531
    %v533 = vpop.f32.mrf.mxu0
    %v534 = vadd.f32 %v496, %v533
    %535 = vdwg.mxu0
    %536 = vmatpush.msra.mxu0 0.0
    %537 = vmatpush.msra.mxu0 0.0
    %538 = vmatpush.msra.mxu0 0.0
    %539 = vmatpush.msra.mxu0 0.0
    %540 = vmatpush.msra.mxu0 0.0
    %541 = vmatpush.msra.mxu0 0.0
    %542 = vmatpush.msra.mxu0 0.0
    %543 = vmatpush.msra.mxu0 0.0
    %v544 = vand.u32 %v57, 4294901760
    %545 = vmatpush.msra.mxu0 %v544
    %v546 = vand.u32 %v56, 4294901760
    %547 = vmatpush.msra.mxu0 %v546
    %v548 = vand.u32 %v55, 4294901760
    %549 = vmatpush.msra.mxu0 %v548
    %v550 = vand.u32 %v54, 4294901760
    %551 = vmatpush.msra.mxu0 %v550
    %v552 = vand.u32 %v53, 4294901760
    %553 = vmatpush.msra.mxu0 %v552
    %v554 = vand.u32 %v52, 4294901760
    %555 = vmatpush.msra.mxu0 %v554
    %v556 = vand.u32 %v51, 4294901760
    %557 = vmatpush.msra.mxu0 %v556
    %v558 = vand.u32 %v50, 4294901760
    %559 = vmatpush.msra.mxu0 %v558
    %v560 = vand.u32 %v61, 4294901760
    %v561 = vsub.f32 %v61, %v560
    %v562 = vand.u32 %v561, 4294901760
    %563 = vmatmul.f32.gmra.mxu0 %v562
    %v564 = vpop.f32.mrf.mxu0
    %v565 = vadd.f32 %v534, %v564
    %566 = vdwg.mxu0
    %567 = vmatpush.msra.mxu0 0.0
    %568 = vmatpush.msra.mxu0 0.0
    %569 = vmatpush.msra.mxu0 0.0
    %570 = vmatpush.msra.mxu0 0.0
    %571 = vmatpush.msra.mxu0 0.0
    %572 = vmatpush.msra.mxu0 0.0
    %573 = vmatpush.msra.mxu0 0.0
    %574 = vmatpush.msra.mxu0 0.0
    %v575 = vand.u32 %v57, 4294901760
    %v576 = vsub.f32 %v57, %v575
    %v577 = vand.u32 %v576, 4294901760
    %578 = vmatpush.msra.mxu0 %v577
    %v579 = vand.u32 %v56, 4294901760
    %v580 = vsub.f32 %v56, %v579
    %v581 = vand.u32 %v580, 4294901760
    %582 = vmatpush.msra.mxu0 %v581
    %v583 = vand.u32 %v55, 4294901760
    %v584 = vsub.f32 %v55, %v583
    %v585 = vand.u32 %v584, 4294901760
    %586 = vmatpush.msra.mxu0 %v585
    %v587 = vand.u32 %v54, 4294901760
    %v588 = vsub.f32 %v54, %v587
    %v589 = vand.u32 %v588, 4294901760
    %590 = vmatpush.msra.mxu0 %v589
    %v591 = vand.u32 %v53, 4294901760
    %v592 = vsub.f32 %v53, %v591
    %v593 = vand.u32 %v592, 4294901760
    %594 = vmatpush.msra.mxu0 %v593
    %v595 = vand.u32 %v52, 4294901760
    %v596 = vsub.f32 %v52, %v595
    %v597 = vand.u32 %v596, 4294901760
    %598 = vmatpush.msra.mxu0 %v597
    %v599 = vand.u32 %v51, 4294901760
    %v600 = vsub.f32 %v51, %v599
    %v601 = vand.u32 %v600, 4294901760
    %602 = vmatpush.msra.mxu0 %v601
    %v603 = vand.u32 %v50, 4294901760
    %v604 = vsub.f32 %v50, %v603
    %v605 = vand.u32 %v604, 4294901760
    %606 = vmatpush.msra.mxu0 %v605
    %v607 = vand.u32 %v61, 4294901760
    %608 = vmatmul.f32.gmra.mxu0 %v607
    %v609 = vpop.f32.mrf.mxu0
    %v610 = vadd.f32 %v565, %v609
    %611 = vdwg.mxu0
    %612 = vmatpush.msra.mxu0 0.0
    %613 = vmatpush.msra.mxu0 0.0
    %614 = vmatpush.msra.mxu0 0.0
    %615 = vmatpush.msra.mxu0 0.0
    %616 = vmatpush.msra.mxu0 0.0
    %617 = vmatpush.msra.mxu0 0.0
    %618 = vmatpush.msra.mxu0 0.0
    %619 = vmatpush.msra.mxu0 0.0
    %v620 = vand.u32 %v57, 4294901760
    %621 = vmatpush.msra.mxu0 %v620
    %v622 = vand.u32 %v56, 4294901760
    %623 = vmatpush.msra.mxu0 %v622
    %v624 = vand.u32 %v55, 4294901760
    %625 = vmatpush.msra.mxu0 %v624
    %v626 = vand.u32 %v54, 4294901760
    %627 = vmatpush.msra.mxu0 %v626
    %v628 = vand.u32 %v53, 4294901760
    %629 = vmatpush.msra.mxu0 %v628
    %v630 = vand.u32 %v52, 4294901760
    %631 = vmatpush.msra.mxu0 %v630
    %v632 = vand.u32 %v51, 4294901760
    %633 = vmatpush.msra.mxu0 %v632
    %v634 = vand.u32 %v50, 4294901760
    %635 = vmatpush.msra.mxu0 %v634
    %v636 = vand.u32 %v61, 4294901760
    %637 = vmatmul.f32.gmra.mxu0 %v636
    %v638 = vpop.f32.mrf.mxu0
    %v639 = vadd.f32 %v610, %v638
    %640 = vdwg.mxu0
    %vm641 = vcmask 130048
    %v642 = vsel %vm641, %v639, 0.0
    %v643 = vrot.slane %v642, 4
    %v644 = vadd.f32 %v642, %v643
    %v645 = vrot.slane %v644, 2
    %v646 = vadd.f32 %v644, %v645
    %v647 = vrot.slane %v646, 1
    %v648 = vadd.f32 %v646, %v647
    %v649 = vrcp.pop 8.0
    %v650 = vmul.f32 8.0, %v649
    %v651 = vsub.f32 1.0, %v650
    %v652 = vmul.f32 %v649, %v651
    %v653 = vadd.f32 %v649, %v652
    %vm654 = vweird.f32 %v649
    %v655 = vsel %vm654, %v649, %v653
    %v656 = vmul.f32 %v648, %v655
    %v657 = vsub.f32 %v639, %v656
    %v658 = vmul.f32 %v657, %v657
    %v659 = vsel %vm641, %v658, 0.0
    %v660 = vrot.slane %v659, 4
    %v661 = vadd.f32 %v659, %v660
    %v662 = vrot.slane %v661, 2
    %v663 = vadd.f32 %v661, %v662
    %v664 = vrot.slane %v663, 1
    %v665 = vadd.f32 %v663, %v664
    %v666 = vmul.f32 %v665, %v655
    %v667 = vadd.f32 %v666, 1e-05
    %v668 = vrsqrt.pop %v667
    %v669 = vmul.f32 %v668, %v667
    %v670 = vmul.f32 %v669, %v668
    %v671 = vmul.f32 0.5, %v670
    %v672 = vsub.f32 1.5, %v671
    %v673 = vmul.f32 %v668, %v672
    %vm674 = vweird.f32 %v667
    %vm675 = vweird.f32 %v668
    %vm676 = vmor %vm674, %vm675
    %v677 = vsel %vm676, %v668, %v673
    %v678 = vmul.f32 %v657, %v677
    %v679 = vperm.slane %v33, 1
    %v680 = vmul.f32 %v678, %v679
    %v681 = vperm.slane %v33, 2
    %v682 = vadd.f32 %v680, %v681
    %v683 = vmul.f32 %v682, 0.5
    %v684 = vrcp.pop 1.4142135
    %v685 = vmul.f32 1.4142135, %v684
    %v686 = vsub.f32 1.0, %v685
    %v687 = vmul.f32 %v684, %v686
    %v688 = vadd.f32 %v684, %v687
    %vm689 = vweird.f32 %v684
    %v690 = vsel %vm689, %v684, %v688
    %v691 = vmul.f32 %v682, %v690
    %v692 = vmul.f32 %v691, %v691
    %v693 = vmin.f32 16.0, %v692
    %v694 = vmul.f32 %v693, 2.1237322e-06
    %v695 = vadd.f32 %v694, 0.00028619796
    %v696 = vmul.f32 %v693, %v695
    %v697 = vadd.f32 %v696, 0.0036580483
    %v698 = vmul.f32 %v693, %v697
    %v699 = vadd.f32 %v698, 0.05243302
    %v700 = vmul.f32 %v693, %v699
    %v701 = vadd.f32 %v700, 0.18741608
    %v702 = vmul.f32 %v693, %v701
    %v703 = vadd.f32 %v702, 1.1283791
    %v704 = vmul.f32 %v691, %v703
    %v705 = vmul.f32 %v693, 3.8918573e-05
    %v706 = vadd.f32 %v705, 0.001143296
    %v707 = vmul.f32 %v693, %v706
    %v708 = vadd.f32 %v707, 0.014752088
    %v709 = vmul.f32 %v693, %v708
    %v710 = vadd.f32 %v709, 0.112945676
    %v711 = vmul.f32 %v693, %v710
    %v712 = vadd.f32 %v711, 0.4994258
    %v713 = vmul.f32 %v693, %v712
    %v714 = vadd.f32 %v713, 1.0
    %v715 = vrcp.pop %v714
    %v716 = vmul.f32 %v714, %v715
    %v717 = vsub.f32 1.0, %v716
    %v718 = vmul.f32 %v715, %v717
    %v719 = vadd.f32 %v715, %v718
    %vm720 = vweird.f32 %v714
    %vm721 = vweird.f32 %v715
    %vm722 = vmor %vm720, %vm721
    %v723 = vsel %vm722, %v715, %v719
    %v724 = vand.u32 2147483647, %v714
    %vm725 = vcmp.eq.f32.partialorder %v724, 8.507059e+37
    %v726 = vand.u32 %v714, 2147483648
    %v727 = vor.u32 1.1754944e-38, %v726
    %v728 = vsel %vm725, %v727, %v723
    %v729 = vmul.f32 %v704, %v728
    %v730 = vmin.f32 %v729, 1.0
    %v731 = vmax.f32 %v730, -1.0
    %v732 = vadd.f32 %v731, 1.0
    %v733 = vmul.f32 %v683, %v732
    %v734 = vld [vmem:[#allocation2 + $0xd8] sm:$0x7]
    %v735 = vld [vmem:[#allocation2 + $0xc8] sm:$0xff]
    %v736 = vld [vmem:[#allocation2 + $0xd0] sm:$0xff]
    %v737 = vperm.slane %v734, 0
    %v739 = vsel %vm641, %v733, 0
    %741 = vmatpush.msra.mxu0 0.0
    %742 = vmatpush.msra.mxu0 0.0
    %743 = vmatpush.msra.mxu0 0.0
    %744 = vmatpush.msra.mxu0 0.0
    %745 = vmatpush.msra.mxu0 0.0
    %746 = vmatpush.msra.mxu0 0.0
    %747 = vmatpush.msra.mxu0 0.0
    %748 = vmatpush.msra.mxu0 0.0
    %749 = vmatpush.msra.mxu0 0.0
    %750 = vmatpush.msra.mxu0 0.0
    %751 = vmatpush.msra.mxu0 0.0
    %752 = vmatpush.msra.mxu0 0.0
    %753 = vmatpush.msra.mxu0 0.0
    %754 = vmatpush.msra.mxu0 0.0
    %v755 = vand.u32 %v736, 4294901760
    %756 = vmatpush.msra.mxu0 %v755
    %v757 = vand.u32 %v735, 4294901760
    %758 = vmatpush.msra.mxu0 %v757
    %v759 = vand.u32 %v739, 4294901760
    %v760 = vsub.f32 %v739, %v759
    %v761 = vand.u32 %v760, 4294901760
    %v762 = vsub.f32 %v760, %v761
    %v763 = vand.u32 %v762, 4294901760
    %764 = vmatmul.f32.gmra.mxu0 %v763
    %v765 = vpop.f32.mrf.mxu0
    %v766 = vadd.f32 %v737, %v765
    %767 = vdwg.mxu0
    %768 = vmatpush.msra.mxu0 0.0
    %769 = vmatpush.msra.mxu0 0.0
    %770 = vmatpush.msra.mxu0 0.0
    %771 = vmatpush.msra.mxu0 0.0
    %772 = vmatpush.msra.mxu0 0.0
    %773 = vmatpush.msra.mxu0 0.0
    %774 = vmatpush.msra.mxu0 0.0
    %775 = vmatpush.msra.mxu0 0.0
    %776 = vmatpush.msra.mxu0 0.0
    %777 = vmatpush.msra.mxu0 0.0
    %778 = vmatpush.msra.mxu0 0.0
    %779 = vmatpush.msra.mxu0 0.0
    %780 = vmatpush.msra.mxu0 0.0
    %781 = vmatpush.msra.mxu0 0.0
    %v782 = vand.u32 %v736, 4294901760
    %v783 = vsub.f32 %v736, %v782
    %v784 = vand.u32 %v783, 4294901760
    %v785 = vsub.f32 %v783, %v784
    %v786 = vand.u32 %v785, 4294901760
    %787 = vmatpush.msra.mxu0 %v786
    %v788 = vand.u32 %v735, 4294901760
    %v789 = vsub.f32 %v735, %v788
    %v790 = vand.u32 %v789, 4294901760
    %v791 = vsub.f32 %v789, %v790
    %v792 = vand.u32 %v791, 4294901760
    %793 = vmatpush.msra.mxu0 %v792
    %v794 = vand.u32 %v739, 4294901760
    %795 = vmatmul.f32.gmra.mxu0 %v794
    %v796 = vpop.f32.mrf.mxu0
    %v797 = vadd.f32 %v766, %v796
    %798 = vdwg.mxu0
    %799 = vmatpush.msra.mxu0 0.0
    %800 = vmatpush.msra.mxu0 0.0
    %801 = vmatpush.msra.mxu0 0.0
    %802 = vmatpush.msra.mxu0 0.0
    %803 = vmatpush.msra.mxu0 0.0
    %804 = vmatpush.msra.mxu0 0.0
    %805 = vmatpush.msra.mxu0 0.0
    %806 = vmatpush.msra.mxu0 0.0
    %807 = vmatpush.msra.mxu0 0.0
    %808 = vmatpush.msra.mxu0 0.0
    %809 = vmatpush.msra.mxu0 0.0
    %810 = vmatpush.msra.mxu0 0.0
    %811 = vmatpush.msra.mxu0 0.0
    %812 = vmatpush.msra.mxu0 0.0
    %v813 = vand.u32 %v736, 4294901760
    %v814 = vsub.f32 %v736, %v813
    %815 = vmatpush.msra.mxu0 %v814
    %v816 = vand.u32 %v735, 4294901760
    %v817 = vsub.f32 %v735, %v816
    %818 = vmatpush.msra.mxu0 %v817
    %v819 = vand.u32 %v739, 4294901760
    %v820 = vsub.f32 %v739, %v819
    %821 = vmatmul.f32.gmra.mxu0 %v820
    %v822 = vpop.f32.mrf.mxu0
    %v823 = vadd.f32 %v797, %v822
    %824 = vdwg.mxu0
    %825 = vmatpush.msra.mxu0 0.0
    %826 = vmatpush.msra.mxu0 0.0
    %827 = vmatpush.msra.mxu0 0.0
    %828 = vmatpush.msra.mxu0 0.0
    %829 = vmatpush.msra.mxu0 0.0
    %830 = vmatpush.msra.mxu0 0.0
    %831 = vmatpush.msra.mxu0 0.0
    %832 = vmatpush.msra.mxu0 0.0
    %833 = vmatpush.msra.mxu0 0.0
    %834 = vmatpush.msra.mxu0 0.0
    %835 = vmatpush.msra.mxu0 0.0
    %836 = vmatpush.msra.mxu0 0.0
    %837 = vmatpush.msra.mxu0 0.0
    %838 = vmatpush.msra.mxu0 0.0
    %v839 = vand.u32 %v736, 4294901760
    %840 = vmatpush.msra.mxu0 %v839
    %v841 = vand.u32 %v735, 4294901760
    %842 = vmatpush.msra.mxu0 %v841
    %v843 = vand.u32 %v739, 4294901760
    %v844 = vsub.f32 %v739, %v843
    %v845 = vand.u32 %v844, 4294901760
    %846 = vmatmul.f32.gmra.mxu0 %v845
    %v847 = vpop.f32.mrf.mxu0
    %v848 = vadd.f32 %v823, %v847
    %849 = vdwg.mxu0
    %850 = vmatpush.msra.mxu0 0.0
    %851 = vmatpush.msra.mxu0 0.0
    %852 = vmatpush.msra.mxu0 0.0
    %853 = vmatpush.msra.mxu0 0.0
    %854 = vmatpush.msra.mxu0 0.0
    %855 = vmatpush.msra.mxu0 0.0
    %856 = vmatpush.msra.mxu0 0.0
    %857 = vmatpush.msra.mxu0 0.0
    %858 = vmatpush.msra.mxu0 0.0
    %859 = vmatpush.msra.mxu0 0.0
    %860 = vmatpush.msra.mxu0 0.0
    %861 = vmatpush.msra.mxu0 0.0
    %862 = vmatpush.msra.mxu0 0.0
    %863 = vmatpush.msra.mxu0 0.0
    %v864 = vand.u32 %v736, 4294901760
    %v865 = vsub.f32 %v736, %v864
    %v866 = vand.u32 %v865, 4294901760
    %867 = vmatpush.msra.mxu0 %v866
    %v868 = vand.u32 %v735, 4294901760
    %v869 = vsub.f32 %v735, %v868
    %v870 = vand.u32 %v869, 4294901760
    %871 = vmatpush.msra.mxu0 %v870
    %v872 = vand.u32 %v739, 4294901760
    %873 = vmatmul.f32.gmra.mxu0 %v872
    %v874 = vpop.f32.mrf.mxu0
    %v875 = vadd.f32 %v848, %v874
    %876 = vdwg.mxu0
    %877 = vmatpush.msra.mxu0 0.0
    %878 = vmatpush.msra.mxu0 0.0
    %879 = vmatpush.msra.mxu0 0.0
    %880 = vmatpush.msra.mxu0 0.0
    %881 = vmatpush.msra.mxu0 0.0
    %882 = vmatpush.msra.mxu0 0.0
    %883 = vmatpush.msra.mxu0 0.0
    %884 = vmatpush.msra.mxu0 0.0
    %885 = vmatpush.msra.mxu0 0.0
    %886 = vmatpush.msra.mxu0 0.0
    %887 = vmatpush.msra.mxu0 0.0
    %888 = vmatpush.msra.mxu0 0.0
    %889 = vmatpush.msra.mxu0 0.0
    %890 = vmatpush.msra.mxu0 0.0
    %v891 = vand.u32 %v736, 4294901760
    %892 = vmatpush.msra.mxu0 %v891
    %v893 = vand.u32 %v735, 4294901760
    %894 = vmatpush.msra.mxu0 %v893
    %v895 = vand.u32 %v739, 4294901760
    %896 = vmatmul.f32.gmra.mxu0 %v895
    %v897 = vpop.f32.mrf.mxu0
    %v898 = vadd.f32 %v875, %v897
    %899 = vdwg.mxu0
    %vm900 = vcmask 64512
    %v901 = vsel %vm900, %v898, 0.0
    %v902 = vrot.slane %v901, 4
    %v903 = vadd.f32 %v901, %v902
    %v904 = vrot.slane %v903, 2
    %v905 = vadd.f32 %v903, %v904
    %v906 = vrot.slane %v905, 1
    %v907 = vadd.f32 %v905, %v906
    %v908 = vmul.f32 %v907, %v655
    %v909 = vsub.f32 %v898, %v908
    %v910 = vmul.f32 %v909, %v909
    %v911 = vsel %vm900, %v910, 0.0
    %v912 = vrot.slane %v911, 4
    %v913 = vadd.f32 %v911, %v912
    %v914 = vrot.slane %v913, 2
    %v915 = vadd.f32 %v913, %v914
    %v916 = vrot.slane %v915, 1
    %v917 = vadd.f32 %v915, %v916
    %v918 = vmul.f32 %v917, %v655
    %v919 = vadd.f32 %v918, 1e-05
    %v920 = vrsqrt.pop %v919
    %v921 = vmul.f32 %v920, %v919
    %v922 = vmul.f32 %v921, %v920
    %v923 = vmul.f32 0.5, %v922
    %v924 = vsub.f32 1.5, %v923
    %v925 = vmul.f32 %v920, %v924
    %vm926 = vweird.f32 %v919
    %vm927 = vweird.f32 %v920
    %vm928 = vmor %vm926, %vm927
    %v929 = vsel %vm928, %v920, %v925
    %v930 = vmul.f32 %v909, %v929
    %v931 = vperm.slane %v734, 1
    %v932 = vmul.f32 %v930, %v931
    %v933 = vperm.slane %v734, 2
    %v934 = vadd.f32 %v932, %v933
    %v935 = vmul.f32 %v934, 0.5
    %v936 = vmul.f32 %v934, %v690
    %v937 = vmul.f32 %v936, %v936
    %v938 = vmin.f32 16.0, %v937
    %v939 = vmul.f32 %v938, 2.1237322e-06
    %v940 = vadd.f32 %v939, 0.00028619796
    %v941 = vmul.f32 %v938, %v940
    %v942 = vadd.f32 %v941, 0.0036580483
    %v943 = vmul.f32 %v938, %v942
    %v944 = vadd.f32 %v943, 0.05243302
    %v945 = vmul.f32 %v938, %v944
    %v946 = vadd.f32 %v945, 0.18741608
    %v947 = vmul.f32 %v938, %v946
    %v948 = vadd.f32 %v947, 1.1283791
    %v949 = vmul.f32 %v936, %v948
    %v950 = vmul.f32 %v938, 3.8918573e-05
    %v951 = vadd.f32 %v950, 0.001143296
    %v952 = vmul.f32 %v938, %v951
    %v953 = vadd.f32 %v952, 0.014752088
    %v954 = vmul.f32 %v938, %v953
    %v955 = vadd.f32 %v954, 0.112945676
    %v956 = vmul.f32 %v938, %v955
    %v957 = vadd.f32 %v956, 0.4994258
    %v958 = vmul.f32 %v938, %v957
    %v959 = vadd.f32 %v958, 1.0
    %v960 = vrcp.pop %v959
    %v961 = vmul.f32 %v959, %v960
    %v962 = vsub.f32 1.0, %v961
    %v963 = vmul.f32 %v960, %v962
    %v964 = vadd.f32 %v960, %v963
    %vm965 = vweird.f32 %v959
    %vm966 = vweird.f32 %v960
    %vm967 = vmor %vm965, %vm966
    %v968 = vsel %vm967, %v960, %v964
    %v969 = vand.u32 2147483647, %v959
    %vm970 = vcmp.eq.f32.partialorder %v969, 8.507059e+37
    %v971 = vand.u32 %v959, 2147483648
    %v972 = vor.u32 1.1754944e-38, %v971
    %v973 = vsel %vm970, %v972, %v968
    %v974 = vmul.f32 %v949, %v973
    %v975 = vmin.f32 %v974, 1.0
    %v976 = vmax.f32 %v975, -1.0
    %v977 = vadd.f32 %v976, 1.0
    %v978 = vmul.f32 %v935, %v977
    %v979 = vld [vmem:[#allocation2 + $0xe8] sm:$0x7]
    %v980 = vld [vmem:[#allocation2 + $0xe0] sm:$0xff]
    %v981 = vperm.slane %v979, 0
    %v983 = vsel %vm900, %v978, 0
    %985 = vmatpush.msra.mxu0 0.0
    %986 = vmatpush.msra.mxu0 0.0
    %987 = vmatpush.msra.mxu0 0.0
    %988 = vmatpush.msra.mxu0 0.0
    %989 = vmatpush.msra.mxu0 0.0
    %990 = vmatpush.msra.mxu0 0.0
    %991 = vmatpush.msra.mxu0 0.0
    %992 = vmatpush.msra.mxu0 0.0
    %993 = vmatpush.msra.mxu0 0.0
    %994 = vmatpush.msra.mxu0 0.0
    %995 = vmatpush.msra.mxu0 0.0
    %996 = vmatpush.msra.mxu0 0.0
    %997 = vmatpush.msra.mxu0 0.0
    %998 = vmatpush.msra.mxu0 0.0
    %999 = vmatpush.msra.mxu0 0.0
    %v1000 = vand.u32 %v980, 4294901760
    %1001 = vmatpush.msra.mxu0 %v1000
    %v1002 = vand.u32 %v983, 4294901760
    %v1003 = vsub.f32 %v983, %v1002
    %v1004 = vand.u32 %v1003, 4294901760
    %v1005 = vsub.f32 %v1003, %v1004
    %v1006 = vand.u32 %v1005, 4294901760
    %1007 = vmatmul.f32.gmra.mxu0 %v1006
    %v1008 = vpop.f32.mrf.mxu0
    %v1009 = vadd.f32 %v981, %v1008
    %1010 = vdwg.mxu0
    %1011 = vmatpush.msra.mxu0 0.0
    %1012 = vmatpush.msra.mxu0 0.0
    %1013 = vmatpush.msra.mxu0 0.0
    %1014 = vmatpush.msra.mxu0 0.0
    %1015 = vmatpush.msra.mxu0 0.0
    %1016 = vmatpush.msra.mxu0 0.0
    %1017 = vmatpush.msra.mxu0 0.0
    %1018 = vmatpush.msra.mxu0 0.0
    %1019 = vmatpush.msra.mxu0 0.0
    %1020 = vmatpush.msra.mxu0 0.0
    %1021 = vmatpush.msra.mxu0 0.0
    %1022 = vmatpush.msra.mxu0 0.0
    %1023 = vmatpush.msra.mxu0 0.0
    %1024 = vmatpush.msra.mxu0 0.0
    %1025 = vmatpush.msra.mxu0 0.0
    %v1026 = vand.u32 %v980, 4294901760
    %v1027 = vsub.f32 %v980, %v1026
    %v1028 = vand.u32 %v1027, 4294901760
    %v1029 = vsub.f32 %v1027, %v1028
    %v1030 = vand.u32 %v1029, 4294901760
    %1031 = vmatpush.msra.mxu0 %v1030
    %v1032 = vand.u32 %v983, 4294901760
    %1033 = vmatmul.f32.gmra.mxu0 %v1032
    %v1034 = vpop.f32.mrf.mxu0
    %v1035 = vadd.f32 %v1009, %v1034
    %1036 = vdwg.mxu0
    %1037 = vmatpush.msra.mxu0 0.0
    %1038 = vmatpush.msra.mxu0 0.0
    %1039 = vmatpush.msra.mxu0 0.0
    %1040 = vmatpush.msra.mxu0 0.0
    %1041 = vmatpush.msra.mxu0 0.0
    %1042 = vmatpush.msra.mxu0 0.0
    %1043 = vmatpush.msra.mxu0 0.0
    %1044 = vmatpush.msra.mxu0 0.0
    %1045 = vmatpush.msra.mxu0 0.0
    %1046 = vmatpush.msra.mxu0 0.0
    %1047 = vmatpush.msra.mxu0 0.0
    %1048 = vmatpush.msra.mxu0 0.0
    %1049 = vmatpush.msra.mxu0 0.0
    %1050 = vmatpush.msra.mxu0 0.0
    %1051 = vmatpush.msra.mxu0 0.0
    %v1052 = vand.u32 %v980, 4294901760
    %v1053 = vsub.f32 %v980, %v1052
    %1054 = vmatpush.msra.mxu0 %v1053
    %v1055 = vand.u32 %v983, 4294901760
    %v1056 = vsub.f32 %v983, %v1055
    %1057 = vmatmul.f32.gmra.mxu0 %v1056
    %v1058 = vpop.f32.mrf.mxu0
    %v1059 = vadd.f32 %v1035, %v1058
    %1060 = vdwg.mxu0
    %1061 = vmatpush.msra.mxu0 0.0
    %1062 = vmatpush.msra.mxu0 0.0
    %1063 = vmatpush.msra.mxu0 0.0
    %1064 = vmatpush.msra.mxu0 0.0
    %1065 = vmatpush.msra.mxu0 0.0
    %1066 = vmatpush.msra.mxu0 0.0
    %1067 = vmatpush.msra.mxu0 0.0
    %1068 = vmatpush.msra.mxu0 0.0
    %1069 = vmatpush.msra.mxu0 0.0
    %1070 = vmatpush.msra.mxu0 0.0
    %1071 = vmatpush.msra.mxu0 0.0
    %1072 = vmatpush.msra.mxu0 0.0
    %1073 = vmatpush.msra.mxu0 0.0
    %1074 = vmatpush.msra.mxu0 0.0
    %1075 = vmatpush.msra.mxu0 0.0
    %v1076 = vand.u32 %v980, 4294901760
    %1077 = vmatpush.msra.mxu0 %v1076
    %v1078 = vand.u32 %v983, 4294901760
    %v1079 = vsub.f32 %v983, %v1078
    %v1080 = vand.u32 %v1079, 4294901760
    %1081 = vmatmul.f32.gmra.mxu0 %v1080
    %v1082 = vpop.f32.mrf.mxu0
    %v1083 = vadd.f32 %v1059, %v1082
    %1084 = vdwg.mxu0
    %1085 = vmatpush.msra.mxu0 0.0
    %1086 = vmatpush.msra.mxu0 0.0
    %1087 = vmatpush.msra.mxu0 0.0
    %1088 = vmatpush.msra.mxu0 0.0
    %1089 = vmatpush.msra.mxu0 0.0
    %1090 = vmatpush.msra.mxu0 0.0
    %1091 = vmatpush.msra.mxu0 0.0
    %1092 = vmatpush.msra.mxu0 0.0
    %1093 = vmatpush.msra.mxu0 0.0
    %1094 = vmatpush.msra.mxu0 0.0
    %1095 = vmatpush.msra.mxu0 0.0
    %1096 = vmatpush.msra.mxu0 0.0
    %1097 = vmatpush.msra.mxu0 0.0
    %1098 = vmatpush.msra.mxu0 0.0
    %1099 = vmatpush.msra.mxu0 0.0
    %v1100 = vand.u32 %v980, 4294901760
    %v1101 = vsub.f32 %v980, %v1100
    %v1102 = vand.u32 %v1101, 4294901760
    %1103 = vmatpush.msra.mxu0 %v1102
    %v1104 = vand.u32 %v983, 4294901760
    %1105 = vmatmul.f32.gmra.mxu0 %v1104
    %v1106 = vpop.f32.mrf.mxu0
    %v1107 = vadd.f32 %v1083, %v1106
    %1108 = vdwg.mxu0
    %1109 = vmatpush.msra.mxu0 0.0
    %1110 = vmatpush.msra.mxu0 0.0
    %1111 = vmatpush.msra.mxu0 0.0
    %1112 = vmatpush.msra.mxu0 0.0
    %1113 = vmatpush.msra.mxu0 0.0
    %1114 = vmatpush.msra.mxu0 0.0
    %1115 = vmatpush.msra.mxu0 0.0
    %1116 = vmatpush.msra.mxu0 0.0
    %1117 = vmatpush.msra.mxu0 0.0
    %1118 = vmatpush.msra.mxu0 0.0
    %1119 = vmatpush.msra.mxu0 0.0
    %1120 = vmatpush.msra.mxu0 0.0
    %1121 = vmatpush.msra.mxu0 0.0
    %1122 = vmatpush.msra.mxu0 0.0
    %1123 = vmatpush.msra.mxu0 0.0
    %v1124 = vand.u32 %v980, 4294901760
    %1125 = vmatpush.msra.mxu0 %v1124
    %v1126 = vand.u32 %v983, 4294901760
    %1127 = vmatmul.f32.gmra.mxu0 %v1126
    %v1128 = vpop.f32.mrf.mxu0
    %v1129 = vadd.f32 %v1107, %v1128
    %1130 = vdwg.mxu0
    %vm1131 = vcmask 31744
    %v1132 = vsel %vm1131, %v1129, 0.0
    %v1133 = vrot.slane %v1132, 4
    %v1134 = vadd.f32 %v1132, %v1133
    %v1135 = vrot.slane %v1134, 2
    %v1136 = vadd.f32 %v1134, %v1135
    %v1137 = vrot.slane %v1136, 1
    %v1138 = vadd.f32 %v1136, %v1137
    %v1139 = vmul.f32 %v1138, %v655
    %v1140 = vsub.f32 %v1129, %v1139
    %v1141 = vmul.f32 %v1140, %v1140
    %v1142 = vsel %vm1131, %v1141, 0.0
    %v1143 = vrot.slane %v1142, 4
    %v1144 = vadd.f32 %v1142, %v1143
    %v1145 = vrot.slane %v1144, 2
    %v1146 = vadd.f32 %v1144, %v1145
    %v1147 = vrot.slane %v1146, 1
    %v1148 = vadd.f32 %v1146, %v1147
    %v1149 = vmul.f32 %v1148, %v655
    %v1150 = vadd.f32 %v1149, 1e-05
    %v1151 = vrsqrt.pop %v1150
    %v1152 = vmul.f32 %v1151, %v1150
    %v1153 = vmul.f32 %v1152, %v1151
    %v1154 = vmul.f32 0.5, %v1153
    %v1155 = vsub.f32 1.5, %v1154
    %v1156 = vmul.f32 %v1151, %v1155
    %vm1157 = vweird.f32 %v1150
    %vm1158 = vweird.f32 %v1151
    %vm1159 = vmor %vm1157, %vm1158
    %v1160 = vsel %vm1159, %v1151, %v1156
    %v1161 = vmul.f32 %v1140, %v1160
    %v1162 = vperm.slane %v979, 1
    %v1163 = vmul.f32 %v1161, %v1162
    %v1164 = vperm.slane %v979, 2
    %v1165 = vadd.f32 %v1163, %v1164
    %v1166 = vmul.f32 %v1165, 0.5
    %v1167 = vmul.f32 %v1165, %v690
    %v1168 = vmul.f32 %v1167, %v1167
    %v1169 = vmin.f32 16.0, %v1168
    %v1170 = vmul.f32 %v1169, 2.1237322e-06
    %v1171 = vadd.f32 %v1170, 0.00028619796
    %v1172 = vmul.f32 %v1169, %v1171
    %v1173 = vadd.f32 %v1172, 0.0036580483
    %v1174 = vmul.f32 %v1169, %v1173
    %v1175 = vadd.f32 %v1174, 0.05243302
    %v1176 = vmul.f32 %v1169, %v1175
    %v1177 = vadd.f32 %v1176, 0.18741608
    %v1178 = vmul.f32 %v1169, %v1177
    %v1179 = vadd.f32 %v1178, 1.1283791
    %v1180 = vmul.f32 %v1167, %v1179
    %v1181 = vmul.f32 %v1169, 3.8918573e-05
    %v1182 = vadd.f32 %v1181, 0.001143296
    %v1183 = vmul.f32 %v1169, %v1182
    %v1184 = vadd.f32 %v1183, 0.014752088
    %v1185 = vmul.f32 %v1169, %v1184
    %v1186 = vadd.f32 %v1185, 0.112945676
    %v1187 = vmul.f32 %v1169, %v1186
    %v1188 = vadd.f32 %v1187, 0.4994258
    %v1189 = vmul.f32 %v1169, %v1188
    %v1190 = vadd.f32 %v1189, 1.0
    %v1191 = vrcp.pop %v1190
    %v1192 = vmul.f32 %v1190, %v1191
    %v1193 = vsub.f32 1.0, %v1192
    %v1194 = vmul.f32 %v1191, %v1193
    %v1195 = vadd.f32 %v1191, %v1194
    %vm1196 = vweird.f32 %v1190
    %vm1197 = vweird.f32 %v1191
    %vm1198 = vmor %vm1196, %vm1197
    %v1199 = vsel %vm1198, %v1191, %v1195
    %v1200 = vand.u32 2147483647, %v1190
    %vm1201 = vcmp.eq.f32.partialorder %v1200, 8.507059e+37
    %v1202 = vand.u32 %v1190, 2147483648
    %v1203 = vor.u32 1.1754944e-38, %v1202
    %v1204 = vsel %vm1201, %v1203, %v1199
    %v1205 = vmul.f32 %v1180, %v1204
    %v1206 = vmin.f32 %v1205, 1.0
    %v1207 = vmax.f32 %v1206, -1.0
    %v1208 = vadd.f32 %v1207, 1.0
    %v1209 = vmul.f32 %v1166, %v1208
    %v1210 = vld [vmem:[#allocation2 + $0xf8] sm:$0x7]
    %v1211 = vld [vmem:[#allocation2 + $0xf0] sm:$0xf]
    %v1212 = vperm.slane %v1210, 0
    %v1214 = vsel %vm1131, %v1209, 0
    %vm1216 = vcmask 1043456
    %v1218 = vsel %vm1216, %v1211, 0
    %1220 = vmatpush.msra.mxu0 0.0
    %1221 = vmatpush.msra.mxu0 0.0
    %1222 = vmatpush.msra.mxu0 0.0
    %1223 = vmatpush.msra.mxu0 0.0
    %1224 = vmatpush.msra.mxu0 0.0
    %1225 = vmatpush.msra.mxu0 0.0
    %1226 = vmatpush.msra.mxu0 0.0
    %1227 = vmatpush.msra.mxu0 0.0
    %1228 = vmatpush.msra.mxu0 0.0
    %1229 = vmatpush.msra.mxu0 0.0
    %1230 = vmatpush.msra.mxu0 0.0
    %1231 = vmatpush.msra.mxu0 0.0
    %1232 = vmatpush.msra.mxu0 0.0
    %1233 = vmatpush.msra.mxu0 0.0
    %1234 = vmatpush.msra.mxu0 0.0
    %v1235 = vand.u32 %v1218, 4294901760
    %1236 = vmatpush.msra.mxu0 %v1235
    %v1237 = vand.u32 %v1214, 4294901760
    %v1238 = vsub.f32 %v1214, %v1237
    %v1239 = vand.u32 %v1238, 4294901760
    %v1240 = vsub.f32 %v1238, %v1239
    %v1241 = vand.u32 %v1240, 4294901760
    %1242 = vmatmul.f32.gmra.mxu0 %v1241
    %v1243 = vpop.f32.mrf.mxu0
    %v1244 = vadd.f32 %v1212, %v1243
    %1245 = vdwg.mxu0
    %1246 = vmatpush.msra.mxu0 0.0
    %1247 = vmatpush.msra.mxu0 0.0
    %1248 = vmatpush.msra.mxu0 0.0
    %1249 = vmatpush.msra.mxu0 0.0
    %1250 = vmatpush.msra.mxu0 0.0
    %1251 = vmatpush.msra.mxu0 0.0
    %1252 = vmatpush.msra.mxu0 0.0
    %1253 = vmatpush.msra.mxu0 0.0
    %1254 = vmatpush.msra.mxu0 0.0
    %1255 = vmatpush.msra.mxu0 0.0
    %1256 = vmatpush.msra.mxu0 0.0
    %1257 = vmatpush.msra.mxu0 0.0
    %1258 = vmatpush.msra.mxu0 0.0
    %1259 = vmatpush.msra.mxu0 0.0
    %1260 = vmatpush.msra.mxu0 0.0
    %v1261 = vand.u32 %v1218, 4294901760
    %v1262 = vsub.f32 %v1218, %v1261
    %v1263 = vand.u32 %v1262, 4294901760
    %v1264 = vsub.f32 %v1262, %v1263
    %v1265 = vand.u32 %v1264, 4294901760
    %1266 = vmatpush.msra.mxu0 %v1265
    %v1267 = vand.u32 %v1214, 4294901760
    %1268 = vmatmul.f32.gmra.mxu0 %v1267
    %v1269 = vpop.f32.mrf.mxu0
    %v1270 = vadd.f32 %v1244, %v1269
    %1271 = vdwg.mxu0
    %1272 = vmatpush.msra.mxu0 0.0
    %1273 = vmatpush.msra.mxu0 0.0
    %1274 = vmatpush.msra.mxu0 0.0
    %1275 = vmatpush.msra.mxu0 0.0
    %1276 = vmatpush.msra.mxu0 0.0
    %1277 = vmatpush.msra.mxu0 0.0
    %1278 = vmatpush.msra.mxu0 0.0
    %1279 = vmatpush.msra.mxu0 0.0
    %1280 = vmatpush.msra.mxu0 0.0
    %1281 = vmatpush.msra.mxu0 0.0
    %1282 = vmatpush.msra.mxu0 0.0
    %1283 = vmatpush.msra.mxu0 0.0
    %1284 = vmatpush.msra.mxu0 0.0
    %1285 = vmatpush.msra.mxu0 0.0
    %1286 = vmatpush.msra.mxu0 0.0
    %v1287 = vand.u32 %v1218, 4294901760
    %v1288 = vsub.f32 %v1218, %v1287
    %1289 = vmatpush.msra.mxu0 %v1288
    %v1290 = vand.u32 %v1214, 4294901760
    %v1291 = vsub.f32 %v1214, %v1290
    %1292 = vmatmul.f32.gmra.mxu0 %v1291
    %v1293 = vpop.f32.mrf.mxu0
    %v1294 = vadd.f32 %v1270, %v1293
    %1295 = vdwg.mxu0
    %1296 = vmatpush.msra.mxu0 0.0
    %1297 = vmatpush.msra.mxu0 0.0
    %1298 = vmatpush.msra.mxu0 0.0
    %1299 = vmatpush.msra.mxu0 0.0
    %1300 = vmatpush.msra.mxu0 0.0
    %1301 = vmatpush.msra.mxu0 0.0
    %1302 = vmatpush.msra.mxu0 0.0
    %1303 = vmatpush.msra.mxu0 0.0
    %1304 = vmatpush.msra.mxu0 0.0
    %1305 = vmatpush.msra.mxu0 0.0
    %1306 = vmatpush.msra.mxu0 0.0
    %1307 = vmatpush.msra.mxu0 0.0
    %1308 = vmatpush.msra.mxu0 0.0
    %1309 = vmatpush.msra.mxu0 0.0
    %1310 = vmatpush.msra.mxu0 0.0
    %v1311 = vand.u32 %v1218, 4294901760
    %1312 = vmatpush.msra.mxu0 %v1311
    %v1313 = vand.u32 %v1214, 4294901760
    %v1314 = vsub.f32 %v1214, %v1313
    %v1315 = vand.u32 %v1314, 4294901760
    %1316 = vmatmul.f32.gmra.mxu0 %v1315
    %v1317 = vpop.f32.mrf.mxu0
    %v1318 = vadd.f32 %v1294, %v1317
    %1319 = vdwg.mxu0
    %1320 = vmatpush.msra.mxu0 0.0
    %1321 = vmatpush.msra.mxu0 0.0
    %1322 = vmatpush.msra.mxu0 0.0
    %1323 = vmatpush.msra.mxu0 0.0
    %1324 = vmatpush.msra.mxu0 0.0
    %1325 = vmatpush.msra.mxu0 0.0
    %1326 = vmatpush.msra.mxu0 0.0
    %1327 = vmatpush.msra.mxu0 0.0
    %1328 = vmatpush.msra.mxu0 0.0
    %1329 = vmatpush.msra.mxu0 0.0
    %1330 = vmatpush.msra.mxu0 0.0
    %1331 = vmatpush.msra.mxu0 0.0
    %1332 = vmatpush.msra.mxu0 0.0
    %1333 = vmatpush.msra.mxu0 0.0
    %1334 = vmatpush.msra.mxu0 0.0
    %v1335 = vand.u32 %v1218, 4294901760
    %v1336 = vsub.f32 %v1218, %v1335
    %v1337 = vand.u32 %v1336, 4294901760
    %1338 = vmatpush.msra.mxu0 %v1337
    %v1339 = vand.u32 %v1214, 4294901760
    %1340 = vmatmul.f32.gmra.mxu0 %v1339
    %v1341 = vpop.f32.mrf.mxu0
    %v1342 = vadd.f32 %v1318, %v1341
    %1343 = vdwg.mxu0
    %1344 = vmatpush.msra.mxu0 0.0
    %1345 = vmatpush.msra.mxu0 0.0
    %1346 = vmatpush.msra.mxu0 0.0
    %1347 = vmatpush.msra.mxu0 0.0
    %1348 = vmatpush.msra.mxu0 0.0
    %1349 = vmatpush.msra.mxu0 0.0
    %1350 = vmatpush.msra.mxu0 0.0
    %1351 = vmatpush.msra.mxu0 0.0
    %1352 = vmatpush.msra.mxu0 0.0
    %1353 = vmatpush.msra.mxu0 0.0
    %1354 = vmatpush.msra.mxu0 0.0
    %1355 = vmatpush.msra.mxu0 0.0
    %1356 = vmatpush.msra.mxu0 0.0
    %1357 = vmatpush.msra.mxu0 0.0
    %1358 = vmatpush.msra.mxu0 0.0
    %v1359 = vand.u32 %v1218, 4294901760
    %1360 = vmatpush.msra.mxu0 %v1359
    %v1361 = vand.u32 %v1214, 4294901760
    %1362 = vmatmul.f32.gmra.mxu0 %v1361
    %v1363 = vpop.f32.mrf.mxu0
    %v1364 = vadd.f32 %v1342, %v1363
    %1365 = vdwg.mxu0
    %v1366 = vsel %vm900, %v1364, 0.0
    %v1367 = vrot.slane %v1366, 4
    %v1368 = vadd.f32 %v1366, %v1367
    %v1369 = vrot.slane %v1368, 2
    %v1370 = vadd.f32 %v1368, %v1369
    %v1371 = vrot.slane %v1370, 1
    %v1372 = vadd.f32 %v1370, %v1371
    %v1373 = vmul.f32 %v1372, %v655
    %v1374 = vsub.f32 %v1364, %v1373
    %v1375 = vmul.f32 %v1374, %v1374
    %v1376 = vsel %vm900, %v1375, 0.0
    %v1377 = vrot.slane %v1376, 4
    %v1378 = vadd.f32 %v1376, %v1377
    %v1379 = vrot.slane %v1378, 2
    %v1380 = vadd.f32 %v1378, %v1379
    %v1381 = vrot.slane %v1380, 1
    %v1382 = vadd.f32 %v1380, %v1381
    %v1383 = vmul.f32 %v1382, %v655
    %v1384 = vadd.f32 %v1383, 1e-05
    %v1385 = vrsqrt.pop %v1384
    %v1386 = vmul.f32 %v1385, %v1384
    %v1387 = vmul.f32 %v1386, %v1385
    %v1388 = vmul.f32 0.5, %v1387
    %v1389 = vsub.f32 1.5, %v1388
    %v1390 = vmul.f32 %v1385, %v1389
    %vm1391 = vweird.f32 %v1384
    %vm1392 = vweird.f32 %v1385
    %vm1393 = vmor %vm1391, %vm1392
    %v1394 = vsel %vm1393, %v1385, %v1390
    %v1395 = vmul.f32 %v1374, %v1394
    %v1396 = vperm.slane %v1210, 1
    %v1397 = vmul.f32 %v1395, %v1396
    %v1398 = vperm.slane %v1210, 2
    %v1399 = vadd.f32 %v1397, %v1398
    %v1400 = vmul.f32 %v1399, 0.5
    %v1401 = vmul.f32 %v1399, %v690
    %v1402 = vmul.f32 %v1401, %v1401
    %v1403 = vmin.f32 16.0, %v1402
    %v1404 = vmul.f32 %v1403, 2.1237322e-06
    %v1405 = vadd.f32 %v1404, 0.00028619796
    %v1406 = vmul.f32 %v1403, %v1405
    %v1407 = vadd.f32 %v1406, 0.0036580483
    %v1408 = vmul.f32 %v1403, %v1407
    %v1409 = vadd.f32 %v1408, 0.05243302
    %v1410 = vmul.f32 %v1403, %v1409
    %v1411 = vadd.f32 %v1410, 0.18741608
    %v1412 = vmul.f32 %v1403, %v1411
    %v1413 = vadd.f32 %v1412, 1.1283791
    %v1414 = vmul.f32 %v1401, %v1413
    %v1415 = vmul.f32 %v1403, 3.8918573e-05
    %v1416 = vadd.f32 %v1415, 0.001143296
    %v1417 = vmul.f32 %v1403, %v1416
    %v1418 = vadd.f32 %v1417, 0.014752088
    %v1419 = vmul.f32 %v1403, %v1418
    %v1420 = vadd.f32 %v1419, 0.112945676
    %v1421 = vmul.f32 %v1403, %v1420
    %v1422 = vadd.f32 %v1421, 0.4994258
    %v1423 = vmul.f32 %v1403, %v1422
    %v1424 = vadd.f32 %v1423, 1.0
    %v1425 = vrcp.pop %v1424
    %v1426 = vmul.f32 %v1424, %v1425
    %v1427 = vsub.f32 1.0, %v1426
    %v1428 = vmul.f32 %v1425, %v1427
    %v1429 = vadd.f32 %v1425, %v1428
    %vm1430 = vweird.f32 %v1424
    %vm1431 = vweird.f32 %v1425
    %vm1432 = vmor %vm1430, %vm1431
    %v1433 = vsel %vm1432, %v1425, %v1429
    %v1434 = vand.u32 2147483647, %v1424
    %vm1435 = vcmp.eq.f32.partialorder %v1434, 8.507059e+37
    %v1436 = vand.u32 %v1424, 2147483648
    %v1437 = vor.u32 1.1754944e-38, %v1436
    %v1438 = vsel %vm1435, %v1437, %v1433
    %v1439 = vmul.f32 %v1414, %v1438
    %v1440 = vmin.f32 %v1439, 1.0
    %v1441 = vmax.f32 %v1440, -1.0
    %v1442 = vadd.f32 %v1441, 1.0
    %v1443 = vmul.f32 %v1400, %v1442
    %v1444 = vld [vmem:[#allocation2 + $0x108] sm:$0x7]
    %v1445 = vld [vmem:[#allocation2 + $0x100] sm:$0xff]
    %v1446 = vperm.slane %v1444, 0
    %v1448 = vsel %vm900, %v1443, 0
    %1450 = vmatpush.msra.mxu0 0.0
    %1451 = vmatpush.msra.mxu0 0.0
    %1452 = vmatpush.msra.mxu0 0.0
    %1453 = vmatpush.msra.mxu0 0.0
    %1454 = vmatpush.msra.mxu0 0.0
    %1455 = vmatpush.msra.mxu0 0.0
    %1456 = vmatpush.msra.mxu0 0.0
    %1457 = vmatpush.msra.mxu0 0.0
    %1458 = vmatpush.msra.mxu0 0.0
    %1459 = vmatpush.msra.mxu0 0.0
    %1460 = vmatpush.msra.mxu0 0.0
    %1461 = vmatpush.msra.mxu0 0.0
    %1462 = vmatpush.msra.mxu0 0.0
    %1463 = vmatpush.msra.mxu0 0.0
    %1464 = vmatpush.msra.mxu0 0.0
    %v1465 = vand.u32 %v1445, 4294901760
    %1466 = vmatpush.msra.mxu0 %v1465
    %v1467 = vand.u32 %v1448, 4294901760
    %v1468 = vsub.f32 %v1448, %v1467
    %v1469 = vand.u32 %v1468, 4294901760
    %v1470 = vsub.f32 %v1468, %v1469
    %v1471 = vand.u32 %v1470, 4294901760
    %1472 = vmatmul.f32.gmra.mxu0 %v1471
    %v1473 = vpop.f32.mrf.mxu0
    %v1474 = vadd.f32 %v1446, %v1473
    %1475 = vdwg.mxu0
    %1476 = vmatpush.msra.mxu0 0.0
    %1477 = vmatpush.msra.mxu0 0.0
    %1478 = vmatpush.msra.mxu0 0.0
    %1479 = vmatpush.msra.mxu0 0.0
    %1480 = vmatpush.msra.mxu0 0.0
    %1481 = vmatpush.msra.mxu0 0.0
    %1482 = vmatpush.msra.mxu0 0.0
    %1483 = vmatpush.msra.mxu0 0.0
    %1484 = vmatpush.msra.mxu0 0.0
    %1485 = vmatpush.msra.mxu0 0.0
    %1486 = vmatpush.msra.mxu0 0.0
    %1487 = vmatpush.msra.mxu0 0.0
    %1488 = vmatpush.msra.mxu0 0.0
    %1489 = vmatpush.msra.mxu0 0.0
    %1490 = vmatpush.msra.mxu0 0.0
    %v1491 = vand.u32 %v1445, 4294901760
    %v1492 = vsub.f32 %v1445, %v1491
    %v1493 = vand.u32 %v1492, 4294901760
    %v1494 = vsub.f32 %v1492, %v1493
    %v1495 = vand.u32 %v1494, 4294901760
    %1496 = vmatpush.msra.mxu0 %v1495
    %v1497 = vand.u32 %v1448, 4294901760
    %1498 = vmatmul.f32.gmra.mxu0 %v1497
    %v1499 = vpop.f32.mrf.mxu0
    %v1500 = vadd.f32 %v1474, %v1499
    %1501 = vdwg.mxu0
    %1502 = vmatpush.msra.mxu0 0.0
    %1503 = vmatpush.msra.mxu0 0.0
    %1504 = vmatpush.msra.mxu0 0.0
    %1505 = vmatpush.msra.mxu0 0.0
    %1506 = vmatpush.msra.mxu0 0.0
    %1507 = vmatpush.msra.mxu0 0.0
    %1508 = vmatpush.msra.mxu0 0.0
    %1509 = vmatpush.msra.mxu0 0.0
    %1510 = vmatpush.msra.mxu0 0.0
    %1511 = vmatpush.msra.mxu0 0.0
    %1512 = vmatpush.msra.mxu0 0.0
    %1513 = vmatpush.msra.mxu0 0.0
    %1514 = vmatpush.msra.mxu0 0.0
    %1515 = vmatpush.msra.mxu0 0.0
    %1516 = vmatpush.msra.mxu0 0.0
    %v1517 = vand.u32 %v1445, 4294901760
    %v1518 = vsub.f32 %v1445, %v1517
    %1519 = vmatpush.msra.mxu0 %v1518
    %v1520 = vand.u32 %v1448, 4294901760
    %v1521 = vsub.f32 %v1448, %v1520
    %1522 = vmatmul.f32.gmra.mxu0 %v1521
    %v1523 = vpop.f32.mrf.mxu0
    %v1524 = vadd.f32 %v1500, %v1523
    %1525 = vdwg.mxu0
    %1526 = vmatpush.msra.mxu0 0.0
    %1527 = vmatpush.msra.mxu0 0.0
    %1528 = vmatpush.msra.mxu0 0.0
    %1529 = vmatpush.msra.mxu0 0.0
    %1530 = vmatpush.msra.mxu0 0.0
    %1531 = vmatpush.msra.mxu0 0.0
    %1532 = vmatpush.msra.mxu0 0.0
    %1533 = vmatpush.msra.mxu0 0.0
    %1534 = vmatpush.msra.mxu0 0.0
    %1535 = vmatpush.msra.mxu0 0.0
    %1536 = vmatpush.msra.mxu0 0.0
    %1537 = vmatpush.msra.mxu0 0.0
    %1538 = vmatpush.msra.mxu0 0.0
    %1539 = vmatpush.msra.mxu0 0.0
    %1540 = vmatpush.msra.mxu0 0.0
    %v1541 = vand.u32 %v1445, 4294901760
    %1542 = vmatpush.msra.mxu0 %v1541
    %v1543 = vand.u32 %v1448, 4294901760
    %v1544 = vsub.f32 %v1448, %v1543
    %v1545 = vand.u32 %v1544, 4294901760
    %1546 = vmatmul.f32.gmra.mxu0 %v1545
    %v1547 = vpop.f32.mrf.mxu0
    %v1548 = vadd.f32 %v1524, %v1547
    %1549 = vdwg.mxu0
    %1550 = vmatpush.msra.mxu0 0.0
    %1551 = vmatpush.msra.mxu0 0.0
    %1552 = vmatpush.msra.mxu0 0.0
    %1553 = vmatpush.msra.mxu0 0.0
    %1554 = vmatpush.msra.mxu0 0.0
    %1555 = vmatpush.msra.mxu0 0.0
    %1556 = vmatpush.msra.mxu0 0.0
    %1557 = vmatpush.msra.mxu0 0.0
    %1558 = vmatpush.msra.mxu0 0.0
    %1559 = vmatpush.msra.mxu0 0.0
    %1560 = vmatpush.msra.mxu0 0.0
    %1561 = vmatpush.msra.mxu0 0.0
    %1562 = vmatpush.msra.mxu0 0.0
    %1563 = vmatpush.msra.mxu0 0.0
    %1564 = vmatpush.msra.mxu0 0.0
    %v1565 = vand.u32 %v1445, 4294901760
    %v1566 = vsub.f32 %v1445, %v1565
    %v1567 = vand.u32 %v1566, 4294901760
    %1568 = vmatpush.msra.mxu0 %v1567
    %v1569 = vand.u32 %v1448, 4294901760
    %1570 = vmatmul.f32.gmra.mxu0 %v1569
    %v1571 = vpop.f32.mrf.mxu0
    %v1572 = vadd.f32 %v1548, %v1571
    %1573 = vdwg.mxu0
    %1574 = vmatpush.msra.mxu0 0.0
    %1575 = vmatpush.msra.mxu0 0.0
    %1576 = vmatpush.msra.mxu0 0.0
    %1577 = vmatpush.msra.mxu0 0.0
    %1578 = vmatpush.msra.mxu0 0.0
    %1579 = vmatpush.msra.mxu0 0.0
    %1580 = vmatpush.msra.mxu0 0.0
    %1581 = vmatpush.msra.mxu0 0.0
    %1582 = vmatpush.msra.mxu0 0.0
    %1583 = vmatpush.msra.mxu0 0.0
    %1584 = vmatpush.msra.mxu0 0.0
    %1585 = vmatpush.msra.mxu0 0.0
    %1586 = vmatpush.msra.mxu0 0.0
    %1587 = vmatpush.msra.mxu0 0.0
    %1588 = vmatpush.msra.mxu0 0.0
    %v1589 = vand.u32 %v1445, 4294901760
    %1590 = vmatpush.msra.mxu0 %v1589
    %v1591 = vand.u32 %v1448, 4294901760
    %1592 = vmatmul.f32.gmra.mxu0 %v1591
    %v1593 = vpop.f32.mrf.mxu0
    %v1594 = vadd.f32 %v1572, %v1593
    %1595 = vdwg.mxu0
    %v1596 = vsel %vm641, %v1594, 0.0
    %v1597 = vrot.slane %v1596, 4
    %v1598 = vadd.f32 %v1596, %v1597
    %v1599 = vrot.slane %v1598, 2
    %v1600 = vadd.f32 %v1598, %v1599
    %v1601 = vrot.slane %v1600, 1
    %v1602 = vadd.f32 %v1600, %v1601
    %v1603 = vmul.f32 %v1602, %v655
    %v1604 = vsub.f32 %v1594, %v1603
    %v1605 = vmul.f32 %v1604, %v1604
    %v1606 = vsel %vm641, %v1605, 0.0
    %v1607 = vrot.slane %v1606, 4
    %v1608 = vadd.f32 %v1606, %v1607
    %v1609 = vrot.slane %v1608, 2
    %v1610 = vadd.f32 %v1608, %v1609
    %v1611 = vrot.slane %v1610, 1
    %v1612 = vadd.f32 %v1610, %v1611
    %v1613 = vmul.f32 %v1612, %v655
    %v1614 = vadd.f32 %v1613, 1e-05
    %v1615 = vrsqrt.pop %v1614
    %v1616 = vmul.f32 %v1615, %v1614
    %v1617 = vmul.f32 %v1616, %v1615
    %v1618 = vmul.f32 0.5, %v1617
    %v1619 = vsub.f32 1.5, %v1618
    %v1620 = vmul.f32 %v1615, %v1619
    %vm1621 = vweird.f32 %v1614
    %vm1622 = vweird.f32 %v1615
    %vm1623 = vmor %vm1621, %vm1622
    %v1624 = vsel %vm1623, %v1615, %v1620
    %v1625 = vmul.f32 %v1604, %v1624
    %v1626 = vperm.slane %v1444, 1
    %v1627 = vmul.f32 %v1625, %v1626
    %v1628 = vperm.slane %v1444, 2
    %v1629 = vadd.f32 %v1627, %v1628
    %v1630 = vmul.f32 %v1629, 0.5
    %v1631 = vmul.f32 %v1629, %v690
    %v1632 = vmul.f32 %v1631, %v1631
    %v1633 = vmin.f32 16.0, %v1632
    %v1634 = vmul.f32 %v1633, 2.1237322e-06
    %v1635 = vadd.f32 %v1634, 0.00028619796
    %v1636 = vmul.f32 %v1633, %v1635
    %v1637 = vadd.f32 %v1636, 0.0036580483
    %v1638 = vmul.f32 %v1633, %v1637
    %v1639 = vadd.f32 %v1638, 0.05243302
    %v1640 = vmul.f32 %v1633, %v1639
    %v1641 = vadd.f32 %v1640, 0.18741608
    %v1642 = vmul.f32 %v1633, %v1641
    %v1643 = vadd.f32 %v1642, 1.1283791
    %v1644 = vmul.f32 %v1631, %v1643
    %v1645 = vmul.f32 %v1633, 3.8918573e-05
    %v1646 = vadd.f32 %v1645, 0.001143296
    %v1647 = vmul.f32 %v1633, %v1646
    %v1648 = vadd.f32 %v1647, 0.014752088
    %v1649 = vmul.f32 %v1633, %v1648
    %v1650 = vadd.f32 %v1649, 0.112945676
    %v1651 = vmul.f32 %v1633, %v1650
    %v1652 = vadd.f32 %v1651, 0.4994258
    %v1653 = vmul.f32 %v1633, %v1652
    %v1654 = vadd.f32 %v1653, 1.0
    %v1655 = vrcp.pop %v1654
    %v1656 = vmul.f32 %v1654, %v1655
    %v1657 = vsub.f32 1.0, %v1656
    %v1658 = vmul.f32 %v1655, %v1657
    %v1659 = vadd.f32 %v1655, %v1658
    %vm1660 = vweird.f32 %v1654
    %vm1661 = vweird.f32 %v1655
    %vm1662 = vmor %vm1660, %vm1661
    %v1663 = vsel %vm1662, %v1655, %v1659
    %v1664 = vand.u32 2147483647, %v1654
    %vm1665 = vcmp.eq.f32.partialorder %v1664, 8.507059e+37
    %v1666 = vand.u32 %v1654, 2147483648
    %v1667 = vor.u32 1.1754944e-38, %v1666
    %v1668 = vsel %vm1665, %v1667, %v1663
    %v1669 = vmul.f32 %v1644, %v1668
    %v1670 = vmin.f32 %v1669, 1.0
    %v1671 = vmax.f32 %v1670, -1.0
    %v1672 = vadd.f32 %v1671, 1.0
    %v1673 = vmul.f32 %v1630, %v1672
    %v1674 = vld [vmem:[#allocation2 + $0x120] sm:$0x7]
    %v1675 = vld [vmem:[#allocation2 + $0x110] sm:$0xff]
    %v1676 = vld [vmem:[#allocation2 + $0x118] sm:$0xff]
    %v1677 = vperm.slane %v1674, 0
    %v1679 = vsel %vm641, %v1673, 0
    %1681 = vmatpush.msra.mxu0 0.0
    %1682 = vmatpush.msra.mxu0 0.0
    %1683 = vmatpush.msra.mxu0 0.0
    %1684 = vmatpush.msra.mxu0 0.0
    %1685 = vmatpush.msra.mxu0 0.0
    %1686 = vmatpush.msra.mxu0 0.0
    %1687 = vmatpush.msra.mxu0 0.0
    %1688 = vmatpush.msra.mxu0 0.0
    %1689 = vmatpush.msra.mxu0 0.0
    %1690 = vmatpush.msra.mxu0 0.0
    %1691 = vmatpush.msra.mxu0 0.0
    %1692 = vmatpush.msra.mxu0 0.0
    %1693 = vmatpush.msra.mxu0 0.0
    %1694 = vmatpush.msra.mxu0 0.0
    %v1695 = vand.u32 %v1676, 4294901760
    %1696 = vmatpush.msra.mxu0 %v1695
    %v1697 = vand.u32 %v1675, 4294901760
    %1698 = vmatpush.msra.mxu0 %v1697
    %v1699 = vand.u32 %v1679, 4294901760
    %v1700 = vsub.f32 %v1679, %v1699
    %v1701 = vand.u32 %v1700, 4294901760
    %v1702 = vsub.f32 %v1700, %v1701
    %v1703 = vand.u32 %v1702, 4294901760
    %1704 = vmatmul.f32.gmra.mxu0 %v1703
    %v1705 = vpop.f32.mrf.mxu0
    %v1706 = vadd.f32 %v1677, %v1705
    %1707 = vdwg.mxu0
    %1708 = vmatpush.msra.mxu0 0.0
    %1709 = vmatpush.msra.mxu0 0.0
    %1710 = vmatpush.msra.mxu0 0.0
    %1711 = vmatpush.msra.mxu0 0.0
    %1712 = vmatpush.msra.mxu0 0.0
    %1713 = vmatpush.msra.mxu0 0.0
    %1714 = vmatpush.msra.mxu0 0.0
    %1715 = vmatpush.msra.mxu0 0.0
    %1716 = vmatpush.msra.mxu0 0.0
    %1717 = vmatpush.msra.mxu0 0.0
    %1718 = vmatpush.msra.mxu0 0.0
    %1719 = vmatpush.msra.mxu0 0.0
    %1720 = vmatpush.msra.mxu0 0.0
    %1721 = vmatpush.msra.mxu0 0.0
    %v1722 = vand.u32 %v1676, 4294901760
    %v1723 = vsub.f32 %v1676, %v1722
    %v1724 = vand.u32 %v1723, 4294901760
    %v1725 = vsub.f32 %v1723, %v1724
    %v1726 = vand.u32 %v1725, 4294901760
    %1727 = vmatpush.msra.mxu0 %v1726
    %v1728 = vand.u32 %v1675, 4294901760
    %v1729 = vsub.f32 %v1675, %v1728
    %v1730 = vand.u32 %v1729, 4294901760
    %v1731 = vsub.f32 %v1729, %v1730
    %v1732 = vand.u32 %v1731, 4294901760
    %1733 = vmatpush.msra.mxu0 %v1732
    %v1734 = vand.u32 %v1679, 4294901760
    %1735 = vmatmul.f32.gmra.mxu0 %v1734
    %v1736 = vpop.f32.mrf.mxu0
    %v1737 = vadd.f32 %v1706, %v1736
    %1738 = vdwg.mxu0
    %1739 = vmatpush.msra.mxu0 0.0
    %1740 = vmatpush.msra.mxu0 0.0
    %1741 = vmatpush.msra.mxu0 0.0
    %1742 = vmatpush.msra.mxu0 0.0
    %1743 = vmatpush.msra.mxu0 0.0
    %1744 = vmatpush.msra.mxu0 0.0
    %1745 = vmatpush.msra.mxu0 0.0
    %1746 = vmatpush.msra.mxu0 0.0
    %1747 = vmatpush.msra.mxu0 0.0
    %1748 = vmatpush.msra.mxu0 0.0
    %1749 = vmatpush.msra.mxu0 0.0
    %1750 = vmatpush.msra.mxu0 0.0
    %1751 = vmatpush.msra.mxu0 0.0
    %1752 = vmatpush.msra.mxu0 0.0
    %v1753 = vand.u32 %v1676, 4294901760
    %v1754 = vsub.f32 %v1676, %v1753
    %1755 = vmatpush.msra.mxu0 %v1754
    %v1756 = vand.u32 %v1675, 4294901760
    %v1757 = vsub.f32 %v1675, %v1756
    %1758 = vmatpush.msra.mxu0 %v1757
    %v1759 = vand.u32 %v1679, 4294901760
    %v1760 = vsub.f32 %v1679, %v1759
    %1761 = vmatmul.f32.gmra.mxu0 %v1760
    %v1762 = vpop.f32.mrf.mxu0
    %v1763 = vadd.f32 %v1737, %v1762
    %1764 = vdwg.mxu0
    %1765 = vmatpush.msra.mxu0 0.0
    %1766 = vmatpush.msra.mxu0 0.0
    %1767 = vmatpush.msra.mxu0 0.0
    %1768 = vmatpush.msra.mxu0 0.0
    %1769 = vmatpush.msra.mxu0 0.0
    %1770 = vmatpush.msra.mxu0 0.0
    %1771 = vmatpush.msra.mxu0 0.0
    %1772 = vmatpush.msra.mxu0 0.0
    %1773 = vmatpush.msra.mxu0 0.0
    %1774 = vmatpush.msra.mxu0 0.0
    %1775 = vmatpush.msra.mxu0 0.0
    %1776 = vmatpush.msra.mxu0 0.0
    %1777 = vmatpush.msra.mxu0 0.0
    %1778 = vmatpush.msra.mxu0 0.0
    %v1779 = vand.u32 %v1676, 4294901760
    %1780 = vmatpush.msra.mxu0 %v1779
    %v1781 = vand.u32 %v1675, 4294901760
    %1782 = vmatpush.msra.mxu0 %v1781
    %v1783 = vand.u32 %v1679, 4294901760
    %v1784 = vsub.f32 %v1679, %v1783
    %v1785 = vand.u32 %v1784, 4294901760
    %1786 = vmatmul.f32.gmra.mxu0 %v1785
    %v1787 = vpop.f32.mrf.mxu0
    %v1788 = vadd.f32 %v1763, %v1787
    %1789 = vdwg.mxu0
    %1790 = vmatpush.msra.mxu0 0.0
    %1791 = vmatpush.msra.mxu0 0.0
    %1792 = vmatpush.msra.mxu0 0.0
    %1793 = vmatpush.msra.mxu0 0.0
    %1794 = vmatpush.msra.mxu0 0.0
    %1795 = vmatpush.msra.mxu0 0.0
    %1796 = vmatpush.msra.mxu0 0.0
    %1797 = vmatpush.msra.mxu0 0.0
    %1798 = vmatpush.msra.mxu0 0.0
    %1799 = vmatpush.msra.mxu0 0.0
    %1800 = vmatpush.msra.mxu0 0.0
    %1801 = vmatpush.msra.mxu0 0.0
    %1802 = vmatpush.msra.mxu0 0.0
    %1803 = vmatpush.msra.mxu0 0.0
    %v1804 = vand.u32 %v1676, 4294901760
    %v1805 = vsub.f32 %v1676, %v1804
    %v1806 = vand.u32 %v1805, 4294901760
    %1807 = vmatpush.msra.mxu0 %v1806
    %v1808 = vand.u32 %v1675, 4294901760
    %v1809 = vsub.f32 %v1675, %v1808
    %v1810 = vand.u32 %v1809, 4294901760
    %1811 = vmatpush.msra.mxu0 %v1810
    %v1812 = vand.u32 %v1679, 4294901760
    %1813 = vmatmul.f32.gmra.mxu0 %v1812
    %v1814 = vpop.f32.mrf.mxu0
    %v1815 = vadd.f32 %v1788, %v1814
    %1816 = vdwg.mxu0
    %1817 = vmatpush.msra.mxu0 0.0
    %1818 = vmatpush.msra.mxu0 0.0
    %1819 = vmatpush.msra.mxu0 0.0
    %1820 = vmatpush.msra.mxu0 0.0
    %1821 = vmatpush.msra.mxu0 0.0
    %1822 = vmatpush.msra.mxu0 0.0
    %1823 = vmatpush.msra.mxu0 0.0
    %1824 = vmatpush.msra.mxu0 0.0
    %1825 = vmatpush.msra.mxu0 0.0
    %1826 = vmatpush.msra.mxu0 0.0
    %1827 = vmatpush.msra.mxu0 0.0
    %1828 = vmatpush.msra.mxu0 0.0
    %1829 = vmatpush.msra.mxu0 0.0
    %1830 = vmatpush.msra.mxu0 0.0
    %v1831 = vand.u32 %v1676, 4294901760
    %1832 = vmatpush.msra.mxu0 %v1831
    %v1833 = vand.u32 %v1675, 4294901760
    %1834 = vmatpush.msra.mxu0 %v1833
    %v1835 = vand.u32 %v1679, 4294901760
    %1836 = vmatmul.f32.gmra.mxu0 %v1835
    %v1837 = vpop.f32.mrf.mxu0
    %v1838 = vadd.f32 %v1815, %v1837
    %1839 = vdwg.mxu0
    %vm1840 = vcmask 261120
    %v1841 = vsel %vm1840, %v1838, 0.0
    %v1842 = vrot.slane %v1841, 4
    %v1843 = vadd.f32 %v1841, %v1842
    %v1844 = vrot.slane %v1843, 2
    %v1845 = vadd.f32 %v1843, %v1844
    %v1846 = vrot.slane %v1845, 1
    %v1847 = vadd.f32 %v1845, %v1846
    %v1848 = vmul.f32 %v1847, %v655
    %v1849 = vsub.f32 %v1838, %v1848
    %v1850 = vmul.f32 %v1849, %v1849
    %v1851 = vsel %vm1840, %v1850, 0.0
    %v1852 = vrot.slane %v1851, 4
    %v1853 = vadd.f32 %v1851, %v1852
    %v1854 = vrot.slane %v1853, 2
    %v1855 = vadd.f32 %v1853, %v1854
    %v1856 = vrot.slane %v1855, 1
    %v1857 = vadd.f32 %v1855, %v1856
    %v1858 = vmul.f32 %v1857, %v655
    %v1859 = vadd.f32 %v1858, 1e-05
    %v1860 = vrsqrt.pop %v1859
    %v1861 = vmul.f32 %v1860, %v1859
    %v1862 = vmul.f32 %v1861, %v1860
    %v1863 = vmul.f32 0.5, %v1862
    %v1864 = vsub.f32 1.5, %v1863
    %v1865 = vmul.f32 %v1860, %v1864
    %vm1866 = vweird.f32 %v1859
    %vm1867 = vweird.f32 %v1860
    %vm1868 = vmor %vm1866, %vm1867
    %v1869 = vsel %vm1868, %v1860, %v1865
    %v1870 = vmul.f32 %v1849, %v1869
    %v1871 = vperm.slane %v1674, 1
    %v1872 = vmul.f32 %v1870, %v1871
    %v1873 = vperm.slane %v1674, 2
    %v1874 = vadd.f32 %v1872, %v1873
    %v1875 = vld [vmem:[#allocation2 + $0x128] sm:$0xff]
    %v1876 = vadd.f32 %v1874, %v1875
    %v1877 = vld [vmem:[#allocation2 + $0x130] sm:$0xff]
    %v1879 = vsel %vm1840, %v1876, 0
    %1881 = vmatpush.xpose.msra.mxu0 0.0
    %1882 = vmatpush.xpose.msra.mxu0 0.0
    %1883 = vmatpush.xpose.msra.mxu0 0.0
    %1884 = vmatpush.xpose.msra.mxu0 0.0
    %1885 = vmatpush.xpose.msra.mxu0 0.0
    %1886 = vmatpush.xpose.msra.mxu0 0.0
    %1887 = vmatpush.xpose.msra.mxu0 0.0
    %1888 = vmatpush.xpose.msra.mxu0 0.0
    %1889 = vmatpush.xpose.msra.mxu0 0.0
    %1890 = vmatpush.xpose.msra.mxu0 0.0
    %1891 = vmatpush.xpose.msra.mxu0 0.0
    %1892 = vmatpush.xpose.msra.mxu0 0.0
    %1893 = vmatpush.xpose.msra.mxu0 0.0
    %1894 = vmatpush.xpose.msra.mxu0 0.0
    %1895 = vmatpush.xpose.msra.mxu0 0.0
    %v1896 = vand.u32 %v1879, 4294901760
    %1897 = vmatpush.xpose.msra.mxu0 %v1896
    %v1898 = vand.u32 %v1879, 4294901760
    %v1899 = vsub.f32 %v1879, %v1898
    %v1900 = vand.u32 %v1899, 4294901760
    %v1901 = vsub.f32 %v1899, %v1900
    %v1902 = vand.u32 %v1901, 4294901760
    %1903 = vmatmul.f32.gmra.mxu0 %v1902
    %v1904 = vpop.f32.mrf.mxu0
    %v1905 = vadd.f32 %v1877, %v1904
    %1906 = vdwg.mxu0
    %1907 = vmatpush.xpose.msra.mxu0 0.0
    %1908 = vmatpush.xpose.msra.mxu0 0.0
    %1909 = vmatpush.xpose.msra.mxu0 0.0
    %1910 = vmatpush.xpose.msra.mxu0 0.0
    %1911 = vmatpush.xpose.msra.mxu0 0.0
    %1912 = vmatpush.xpose.msra.mxu0 0.0
    %1913 = vmatpush.xpose.msra.mxu0 0.0
    %1914 = vmatpush.xpose.msra.mxu0 0.0
    %1915 = vmatpush.xpose.msra.mxu0 0.0
    %1916 = vmatpush.xpose.msra.mxu0 0.0
    %1917 = vmatpush.xpose.msra.mxu0 0.0
    %1918 = vmatpush.xpose.msra.mxu0 0.0
    %1919 = vmatpush.xpose.msra.mxu0 0.0
    %1920 = vmatpush.xpose.msra.mxu0 0.0
    %1921 = vmatpush.xpose.msra.mxu0 0.0
    %v1922 = vand.u32 %v1879, 4294901760
    %v1923 = vsub.f32 %v1879, %v1922
    %v1924 = vand.u32 %v1923, 4294901760
    %v1925 = vsub.f32 %v1923, %v1924
    %v1926 = vand.u32 %v1925, 4294901760
    %1927 = vmatpush.xpose.msra.mxu0 %v1926
    %v1928 = vand.u32 %v1879, 4294901760
    %1929 = vmatmul.f32.gmra.mxu0 %v1928
    %v1930 = vpop.f32.mrf.mxu0
    %v1931 = vadd.f32 %v1905, %v1930
    %1932 = vdwg.mxu0
    %1933 = vmatpush.xpose.msra.mxu0 0.0
    %1934 = vmatpush.xpose.msra.mxu0 0.0
    %1935 = vmatpush.xpose.msra.mxu0 0.0
    %1936 = vmatpush.xpose.msra.mxu0 0.0
    %1937 = vmatpush.xpose.msra.mxu0 0.0
    %1938 = vmatpush.xpose.msra.mxu0 0.0
    %1939 = vmatpush.xpose.msra.mxu0 0.0
    %1940 = vmatpush.xpose.msra.mxu0 0.0
    %1941 = vmatpush.xpose.msra.mxu0 0.0
    %1942 = vmatpush.xpose.msra.mxu0 0.0
    %1943 = vmatpush.xpose.msra.mxu0 0.0
    %1944 = vmatpush.xpose.msra.mxu0 0.0
    %1945 = vmatpush.xpose.msra.mxu0 0.0
    %1946 = vmatpush.xpose.msra.mxu0 0.0
    %1947 = vmatpush.xpose.msra.mxu0 0.0
    %v1948 = vand.u32 %v1879, 4294901760
    %v1949 = vsub.f32 %v1879, %v1948
    %1950 = vmatpush.xpose.msra.mxu0 %v1949
    %v1951 = vand.u32 %v1879, 4294901760
    %v1952 = vsub.f32 %v1879, %v1951
    %1953 = vmatmul.f32.gmra.mxu0 %v1952
    %v1954 = vpop.f32.mrf.mxu0
    %v1955 = vadd.f32 %v1931, %v1954
    %1956 = vdwg.mxu0
    %1957 = vmatpush.xpose.msra.mxu0 0.0
    %1958 = vmatpush.xpose.msra.mxu0 0.0
    %1959 = vmatpush.xpose.msra.mxu0 0.0
    %1960 = vmatpush.xpose.msra.mxu0 0.0
    %1961 = vmatpush.xpose.msra.mxu0 0.0
    %1962 = vmatpush.xpose.msra.mxu0 0.0
    %1963 = vmatpush.xpose.msra.mxu0 0.0
    %1964 = vmatpush.xpose.msra.mxu0 0.0
    %1965 = vmatpush.xpose.msra.mxu0 0.0
    %1966 = vmatpush.xpose.msra.mxu0 0.0
    %1967 = vmatpush.xpose.msra.mxu0 0.0
    %1968 = vmatpush.xpose.msra.mxu0 0.0
    %1969 = vmatpush.xpose.msra.mxu0 0.0
    %1970 = vmatpush.xpose.msra.mxu0 0.0
    %1971 = vmatpush.xpose.msra.mxu0 0.0
    %v1972 = vand.u32 %v1879, 4294901760
    %1973 = vmatpush.xpose.msra.mxu0 %v1972
    %v1974 = vand.u32 %v1879, 4294901760
    %v1975 = vsub.f32 %v1879, %v1974
    %v1976 = vand.u32 %v1975, 4294901760
    %1977 = vmatmul.f32.gmra.mxu0 %v1976
    %v1978 = vpop.f32.mrf.mxu0
    %v1979 = vadd.f32 %v1955, %v1978
    %1980 = vdwg.mxu0
    %1981 = vmatpush.xpose.msra.mxu0 0.0
    %1982 = vmatpush.xpose.msra.mxu0 0.0
    %1983 = vmatpush.xpose.msra.mxu0 0.0
    %1984 = vmatpush.xpose.msra.mxu0 0.0
    %1985 = vmatpush.xpose.msra.mxu0 0.0
    %1986 = vmatpush.xpose.msra.mxu0 0.0
    %1987 = vmatpush.xpose.msra.mxu0 0.0
    %1988 = vmatpush.xpose.msra.mxu0 0.0
    %1989 = vmatpush.xpose.msra.mxu0 0.0
    %1990 = vmatpush.xpose.msra.mxu0 0.0
    %1991 = vmatpush.xpose.msra.mxu0 0.0
    %1992 = vmatpush.xpose.msra.mxu0 0.0
    %1993 = vmatpush.xpose.msra.mxu0 0.0
    %1994 = vmatpush.xpose.msra.mxu0 0.0
    %1995 = vmatpush.xpose.msra.mxu0 0.0
    %v1996 = vand.u32 %v1879, 4294901760
    %v1997 = vsub.f32 %v1879, %v1996
    %v1998 = vand.u32 %v1997, 4294901760
    %1999 = vmatpush.xpose.msra.mxu0 %v1998
    %v2000 = vand.u32 %v1879, 4294901760
    %2001 = vmatmul.f32.gmra.mxu0 %v2000
    %v2002 = vpop.f32.mrf.mxu0
    %v2003 = vadd.f32 %v1979, %v2002
    %2004 = vdwg.mxu0
    %2005 = vmatpush.xpose.msra.mxu0 0.0
    %2006 = vmatpush.xpose.msra.mxu0 0.0
    %2007 = vmatpush.xpose.msra.mxu0 0.0
    %2008 = vmatpush.xpose.msra.mxu0 0.0
    %2009 = vmatpush.xpose.msra.mxu0 0.0
    %2010 = vmatpush.xpose.msra.mxu0 0.0
    %2011 = vmatpush.xpose.msra.mxu0 0.0
    %2012 = vmatpush.xpose.msra.mxu0 0.0
    %2013 = vmatpush.xpose.msra.mxu0 0.0
    %2014 = vmatpush.xpose.msra.mxu0 0.0
    %2015 = vmatpush.xpose.msra.mxu0 0.0
    %2016 = vmatpush.xpose.msra.mxu0 0.0
    %2017 = vmatpush.xpose.msra.mxu0 0.0
    %2018 = vmatpush.xpose.msra.mxu0 0.0
    %2019 = vmatpush.xpose.msra.mxu0 0.0
    %v2020 = vand.u32 %v1879, 4294901760
    %2021 = vmatpush.xpose.msra.mxu0 %v2020
    %v2022 = vand.u32 %v1879, 4294901760
    %2023 = vmatmul.f32.gmra.mxu0 %v2022
    %v2024 = vpop.f32.mrf.mxu0
    %v2025 = vadd.f32 %v2003, %v2024
    %2026 = vdwg.mxu0
    %v2027 = vld [vmem:[#allocation2 + $0x158] sm:$0x7]
    %v2028 = vld [vmem:[#allocation2 + $0x138] sm:$0xff]
    %v2029 = vld [vmem:[#allocation2 + $0x140] sm:$0xff]
    %v2030 = vld [vmem:[#allocation2 + $0x148] sm:$0xff]
    %v2031 = vld [vmem:[#allocation2 + $0x150] sm:$0xff]
    %v2032 = vperm.slane %v2027, 0
    %2033 = vmatpush.msra.mxu0 0.0
    %2034 = vmatpush.msra.mxu0 0.0
    %2035 = vmatpush.msra.mxu0 0.0
    %2036 = vmatpush.msra.mxu0 0.0
    %2037 = vmatpush.msra.mxu0 0.0
    %2038 = vmatpush.msra.mxu0 0.0
    %2039 = vmatpush.msra.mxu0 0.0
    %2040 = vmatpush.msra.mxu0 0.0
    %2041 = vmatpush.msra.mxu0 0.0
    %2042 = vmatpush.msra.mxu0 0.0
    %2043 = vmatpush.msra.mxu0 0.0
    %2044 = vmatpush.msra.mxu0 0.0
    %v2045 = vand.u32 %v2031, 4294901760
    %2046 = vmatpush.msra.mxu0 %v2045
    %v2047 = vand.u32 %v2030, 4294901760
    %2048 = vmatpush.msra.mxu0 %v2047
    %v2049 = vand.u32 %v2029, 4294901760
    %2050 = vmatpush.msra.mxu0 %v2049
    %v2051 = vand.u32 %v2028, 4294901760
    %2052 = vmatpush.msra.mxu0 %v2051
    %v2053 = vand.u32 %v1879, 4294901760
    %v2054 = vsub.f32 %v1879, %v2053
    %v2055 = vand.u32 %v2054, 4294901760
    %v2056 = vsub.f32 %v2054, %v2055
    %v2057 = vand.u32 %v2056, 4294901760
    %2058 = vmatmul.f32.gmra.mxu0 %v2057
    %v2059 = vpop.f32.mrf.mxu0
    %v2060 = vadd.f32 %v2032, %v2059
    %2061 = vdwg.mxu0
    %2062 = vmatpush.msra.mxu0 0.0
    %2063 = vmatpush.msra.mxu0 0.0
    %2064 = vmatpush.msra.mxu0 0.0
    %2065 = vmatpush.msra.mxu0 0.0
    %2066 = vmatpush.msra.mxu0 0.0
    %2067 = vmatpush.msra.mxu0 0.0
    %2068 = vmatpush.msra.mxu0 0.0
    %2069 = vmatpush.msra.mxu0 0.0
    %2070 = vmatpush.msra.mxu0 0.0
    %2071 = vmatpush.msra.mxu0 0.0
    %2072 = vmatpush.msra.mxu0 0.0
    %2073 = vmatpush.msra.mxu0 0.0
    %v2074 = vand.u32 %v2031, 4294901760
    %v2075 = vsub.f32 %v2031, %v2074
    %v2076 = vand.u32 %v2075, 4294901760
    %v2077 = vsub.f32 %v2075, %v2076
    %v2078 = vand.u32 %v2077, 4294901760
    %2079 = vmatpush.msra.mxu0 %v2078
    %v2080 = vand.u32 %v2030, 4294901760
    %v2081 = vsub.f32 %v2030, %v2080
    %v2082 = vand.u32 %v2081, 4294901760
    %v2083 = vsub.f32 %v2081, %v2082
    %v2084 = vand.u32 %v2083, 4294901760
    %2085 = vmatpush.msra.mxu0 %v2084
    %v2086 = vand.u32 %v2029, 4294901760
    %v2087 = vsub.f32 %v2029, %v2086
    %v2088 = vand.u32 %v2087, 4294901760
    %v2089 = vsub.f32 %v2087, %v2088
    %v2090 = vand.u32 %v2089, 4294901760
    %2091 = vmatpush.msra.mxu0 %v2090
    %v2092 = vand.u32 %v2028, 4294901760
    %v2093 = vsub.f32 %v2028, %v2092
    %v2094 = vand.u32 %v2093, 4294901760
    %v2095 = vsub.f32 %v2093, %v2094
    %v2096 = vand.u32 %v2095, 4294901760
    %2097 = vmatpush.msra.mxu0 %v2096
    %v2098 = vand.u32 %v1879, 4294901760
    %2099 = vmatmul.f32.gmra.mxu0 %v2098
    %v2100 = vpop.f32.mrf.mxu0
    %v2101 = vadd.f32 %v2060, %v2100
    %2102 = vdwg.mxu0
    %2103 = vmatpush.msra.mxu0 0.0
    %2104 = vmatpush.msra.mxu0 0.0
    %2105 = vmatpush.msra.mxu0 0.0
    %2106 = vmatpush.msra.mxu0 0.0
    %2107 = vmatpush.msra.mxu0 0.0
    %2108 = vmatpush.msra.mxu0 0.0
    %2109 = vmatpush.msra.mxu0 0.0
    %2110 = vmatpush.msra.mxu0 0.0
    %2111 = vmatpush.msra.mxu0 0.0
    %2112 = vmatpush.msra.mxu0 0.0
    %2113 = vmatpush.msra.mxu0 0.0
    %2114 = vmatpush.msra.mxu0 0.0
    %v2115 = vand.u32 %v2031, 4294901760
    %v2116 = vsub.f32 %v2031, %v2115
    %2117 = vmatpush.msra.mxu0 %v2116
    %v2118 = vand.u32 %v2030, 4294901760
    %v2119 = vsub.f32 %v2030, %v2118
    %2120 = vmatpush.msra.mxu0 %v2119
    %v2121 = vand.u32 %v2029, 4294901760
    %v2122 = vsub.f32 %v2029, %v2121
    %2123 = vmatpush.msra.mxu0 %v2122
    %v2124 = vand.u32 %v2028, 4294901760
    %v2125 = vsub.f32 %v2028, %v2124
    %2126 = vmatpush.msra.mxu0 %v2125
    %v2127 = vand.u32 %v1879, 4294901760
    %v2128 = vsub.f32 %v1879, %v2127
    %2129 = vmatmul.f32.gmra.mxu0 %v2128
    %v2130 = vpop.f32.mrf.mxu0
    %v2131 = vadd.f32 %v2101, %v2130
    %2132 = vdwg.mxu0
    %2133 = vmatpush.msra.mxu0 0.0
    %2134 = vmatpush.msra.mxu0 0.0
    %2135 = vmatpush.msra.mxu0 0.0
    %2136 = vmatpush.msra.mxu0 0.0
    %2137 = vmatpush.msra.mxu0 0.0
    %2138 = vmatpush.msra.mxu0 0.0
    %2139 = vmatpush.msra.mxu0 0.0
    %2140 = vmatpush.msra.mxu0 0.0
    %2141 = vmatpush.msra.mxu0 0.0
    %2142 = vmatpush.msra.mxu0 0.0
    %2143 = vmatpush.msra.mxu0 0.0
    %2144 = vmatpush.msra.mxu0 0.0
    %v2145 = vand.u32 %v2031, 4294901760
    %2146 = vmatpush.msra.mxu0 %v2145
    %v2147 = vand.u32 %v2030, 4294901760
    %2148 = vmatpush.msra.mxu0 %v2147
    %v2149 = vand.u32 %v2029, 4294901760
    %2150 = vmatpush.msra.mxu0 %v2149
    %v2151 = vand.u32 %v2028, 4294901760
    %2152 = vmatpush.msra.mxu0 %v2151
    %v2153 = vand.u32 %v1879, 4294901760
    %v2154 = vsub.f32 %v1879, %v2153
    %v2155 = vand.u32 %v2154, 4294901760
    %2156 = vmatmul.f32.gmra.mxu0 %v2155
    %v2157 = vpop.f32.mrf.mxu0
    %v2158 = vadd.f32 %v2131, %v2157
    %2159 = vdwg.mxu0
    %2160 = vmatpush.msra.mxu0 0.0
    %2161 = vmatpush.msra.mxu0 0.0
    %2162 = vmatpush.msra.mxu0 0.0
    %2163 = vmatpush.msra.mxu0 0.0
    %2164 = vmatpush.msra.mxu0 0.0
    %2165 = vmatpush.msra.mxu0 0.0
    %2166 = vmatpush.msra.mxu0 0.0
    %2167 = vmatpush.msra.mxu0 0.0
    %2168 = vmatpush.msra.mxu0 0.0
    %2169 = vmatpush.msra.mxu0 0.0
    %2170 = vmatpush.msra.mxu0 0.0
    %2171 = vmatpush.msra.mxu0 0.0
    %v2172 = vand.u32 %v2031, 4294901760
    %v2173 = vsub.f32 %v2031, %v2172
    %v2174 = vand.u32 %v2173, 4294901760
    %2175 = vmatpush.msra.mxu0 %v2174
    %v2176 = vand.u32 %v2030, 4294901760
    %v2177 = vsub.f32 %v2030, %v2176
    %v2178 = vand.u32 %v2177, 4294901760
    %2179 = vmatpush.msra.mxu0 %v2178
    %v2180 = vand.u32 %v2029, 4294901760
    %v2181 = vsub.f32 %v2029, %v2180
    %v2182 = vand.u32 %v2181, 4294901760
    %2183 = vmatpush.msra.mxu0 %v2182
    %v2184 = vand.u32 %v2028, 4294901760
    %v2185 = vsub.f32 %v2028, %v2184
    %v2186 = vand.u32 %v2185, 4294901760
    %2187 = vmatpush.msra.mxu0 %v2186
    %v2188 = vand.u32 %v1879, 4294901760
    %2189 = vmatmul.f32.gmra.mxu0 %v2188
    %v2190 = vpop.f32.mrf.mxu0
    %v2191 = vadd.f32 %v2158, %v2190
    %2192 = vdwg.mxu0
    %2193 = vmatpush.msra.mxu0 0.0
    %2194 = vmatpush.msra.mxu0 0.0
    %2195 = vmatpush.msra.mxu0 0.0
    %2196 = vmatpush.msra.mxu0 0.0
    %2197 = vmatpush.msra.mxu0 0.0
    %2198 = vmatpush.msra.mxu0 0.0
    %2199 = vmatpush.msra.mxu0 0.0
    %2200 = vmatpush.msra.mxu0 0.0
    %2201 = vmatpush.msra.mxu0 0.0
    %2202 = vmatpush.msra.mxu0 0.0
    %2203 = vmatpush.msra.mxu0 0.0
    %2204 = vmatpush.msra.mxu0 0.0
    %v2205 = vand.u32 %v2031, 4294901760
    %2206 = vmatpush.msra.mxu0 %v2205
    %v2207 = vand.u32 %v2030, 4294901760
    %2208 = vmatpush.msra.mxu0 %v2207
    %v2209 = vand.u32 %v2029, 4294901760
    %2210 = vmatpush.msra.mxu0 %v2209
    %v2211 = vand.u32 %v2028, 4294901760
    %2212 = vmatpush.msra.mxu0 %v2211
    %v2213 = vand.u32 %v1879, 4294901760
    %2214 = vmatmul.f32.gmra.mxu0 %v2213
    %v2215 = vpop.f32.mrf.mxu0
    %v2216 = vadd.f32 %v2191, %v2215
    %2217 = vdwg.mxu0
    %v2218 = vsel %vm1840, %v2216, 0.0
    %v2219 = vrot.slane %v2218, 4
    %v2220 = vadd.f32 %v2218, %v2219
    %v2221 = vrot.slane %v2220, 2
    %v2222 = vadd.f32 %v2220, %v2221
    %v2223 = vrot.slane %v2222, 1
    %v2224 = vadd.f32 %v2222, %v2223
    %v2225 = vmul.f32 %v2224, %v655
    %v2226 = vsub.f32 %v2216, %v2225
    %v2227 = vmul.f32 %v2226, %v2226
    %v2228 = vsel %vm1840, %v2227, 0.0
    %v2229 = vrot.slane %v2228, 4
    %v2230 = vadd.f32 %v2228, %v2229
    %v2231 = vrot.slane %v2230, 2
    %v2232 = vadd.f32 %v2230, %v2231
    %v2233 = vrot.slane %v2232, 1
    %v2234 = vadd.f32 %v2232, %v2233
    %v2235 = vmul.f32 %v2234, %v655
    %v2236 = vadd.f32 %v2235, 1e-05
    %v2237 = vrsqrt.pop %v2236
    %v2238 = vmul.f32 %v2237, %v2236
    %v2239 = vmul.f32 %v2238, %v2237
    %v2240 = vmul.f32 0.5, %v2239
    %v2241 = vsub.f32 1.5, %v2240
    %v2242 = vmul.f32 %v2237, %v2241
    %vm2243 = vweird.f32 %v2236
    %vm2244 = vweird.f32 %v2237
    %vm2245 = vmor %vm2243, %vm2244
    %v2246 = vsel %vm2245, %v2237, %v2242
    %v2247 = vmul.f32 %v2226, %v2246
    %v2248 = vperm.slane %v2027, 1
    %v2249 = vmul.f32 %v2247, %v2248
    %v2250 = vperm.slane %v2027, 2
    %v2251 = vadd.f32 %v2249, %v2250
    %v2252 = vmul.f32 %v2251, 0.5
    %v2253 = vmul.f32 %v2251, %v690
    %v2254 = vmul.f32 %v2253, %v2253
    %v2255 = vmin.f32 16.0, %v2254
    %v2256 = vmul.f32 %v2255, 2.1237322e-06
    %v2257 = vadd.f32 %v2256, 0.00028619796
    %v2258 = vmul.f32 %v2255, %v2257
    %v2259 = vadd.f32 %v2258, 0.0036580483
    %v2260 = vmul.f32 %v2255, %v2259
    %v2261 = vadd.f32 %v2260, 0.05243302
    %v2262 = vmul.f32 %v2255, %v2261
    %v2263 = vadd.f32 %v2262, 0.18741608
    %v2264 = vmul.f32 %v2255, %v2263
    %v2265 = vadd.f32 %v2264, 1.1283791
    %v2266 = vmul.f32 %v2253, %v2265
    %v2267 = vmul.f32 %v2255, 3.8918573e-05
    %v2268 = vadd.f32 %v2267, 0.001143296
    %v2269 = vmul.f32 %v2255, %v2268
    %v2270 = vadd.f32 %v2269, 0.014752088
    %v2271 = vmul.f32 %v2255, %v2270
    %v2272 = vadd.f32 %v2271, 0.112945676
    %v2273 = vmul.f32 %v2255, %v2272
    %v2274 = vadd.f32 %v2273, 0.4994258
    %v2275 = vmul.f32 %v2255, %v2274
    %v2276 = vadd.f32 %v2275, 1.0
    %v2277 = vrcp.pop %v2276
    %v2278 = vmul.f32 %v2276, %v2277
    %v2279 = vsub.f32 1.0, %v2278
    %v2280 = vmul.f32 %v2277, %v2279
    %v2281 = vadd.f32 %v2277, %v2280
    %vm2282 = vweird.f32 %v2276
    %vm2283 = vweird.f32 %v2277
    %vm2284 = vmor %vm2282, %vm2283
    %v2285 = vsel %vm2284, %v2277, %v2281
    %v2286 = vand.u32 2147483647, %v2276
    %vm2287 = vcmp.eq.f32.partialorder %v2286, 8.507059e+37
    %v2288 = vand.u32 %v2276, 2147483648
    %v2289 = vor.u32 1.1754944e-38, %v2288
    %v2290 = vsel %vm2287, %v2289, %v2285
    %v2291 = vmul.f32 %v2266, %v2290
    %v2292 = vmin.f32 %v2291, 1.0
    %v2293 = vmax.f32 %v2292, -1.0
    %v2294 = vadd.f32 %v2293, 1.0
    %v2295 = vmul.f32 %v2252, %v2294
    %v2296 = vld [vmem:[#allocation2 + $0x180] sm:$0x7]
    %v2297 = vld [vmem:[#allocation2 + $0x160] sm:$0xff]
    %v2298 = vld [vmem:[#allocation2 + $0x168] sm:$0xff]
    %v2299 = vld [vmem:[#allocation2 + $0x170] sm:$0xff]
    %v2300 = vld [vmem:[#allocation2 + $0x178] sm:$0xff]
    %v2301 = vperm.slane %v2296, 0
    %v2303 = vsel %vm1840, %v2295, 0
    %2305 = vmatpush.msra.mxu0 0.0
    %2306 = vmatpush.msra.mxu0 0.0
    %2307 = vmatpush.msra.mxu0 0.0
    %2308 = vmatpush.msra.mxu0 0.0
    %2309 = vmatpush.msra.mxu0 0.0
    %2310 = vmatpush.msra.mxu0 0.0
    %2311 = vmatpush.msra.mxu0 0.0
    %2312 = vmatpush.msra.mxu0 0.0
    %2313 = vmatpush.msra.mxu0 0.0
    %2314 = vmatpush.msra.mxu0 0.0
    %2315 = vmatpush.msra.mxu0 0.0
    %2316 = vmatpush.msra.mxu0 0.0
    %v2317 = vand.u32 %v2300, 4294901760
    %2318 = vmatpush.msra.mxu0 %v2317
    %v2319 = vand.u32 %v2299, 4294901760
    %2320 = vmatpush.msra.mxu0 %v2319
    %v2321 = vand.u32 %v2298, 4294901760
    %2322 = vmatpush.msra.mxu0 %v2321
    %v2323 = vand.u32 %v2297, 4294901760
    %2324 = vmatpush.msra.mxu0 %v2323
    %v2325 = vand.u32 %v2303, 4294901760
    %v2326 = vsub.f32 %v2303, %v2325
    %v2327 = vand.u32 %v2326, 4294901760
    %v2328 = vsub.f32 %v2326, %v2327
    %v2329 = vand.u32 %v2328, 4294901760
    %2330 = vmatmul.f32.gmra.mxu0 %v2329
    %v2331 = vpop.f32.mrf.mxu0
    %v2332 = vadd.f32 %v2301, %v2331
    %2333 = vdwg.mxu0
    %2334 = vmatpush.msra.mxu0 0.0
    %2335 = vmatpush.msra.mxu0 0.0
    %2336 = vmatpush.msra.mxu0 0.0
    %2337 = vmatpush.msra.mxu0 0.0
    %2338 = vmatpush.msra.mxu0 0.0
    %2339 = vmatpush.msra.mxu0 0.0
    %2340 = vmatpush.msra.mxu0 0.0
    %2341 = vmatpush.msra.mxu0 0.0
    %2342 = vmatpush.msra.mxu0 0.0
    %2343 = vmatpush.msra.mxu0 0.0
    %2344 = vmatpush.msra.mxu0 0.0
    %2345 = vmatpush.msra.mxu0 0.0
    %v2346 = vand.u32 %v2300, 4294901760
    %v2347 = vsub.f32 %v2300, %v2346
    %v2348 = vand.u32 %v2347, 4294901760
    %v2349 = vsub.f32 %v2347, %v2348
    %v2350 = vand.u32 %v2349, 4294901760
    %2351 = vmatpush.msra.mxu0 %v2350
    %v2352 = vand.u32 %v2299, 4294901760
    %v2353 = vsub.f32 %v2299, %v2352
    %v2354 = vand.u32 %v2353, 4294901760
    %v2355 = vsub.f32 %v2353, %v2354
    %v2356 = vand.u32 %v2355, 4294901760
    %2357 = vmatpush.msra.mxu0 %v2356
    %v2358 = vand.u32 %v2298, 4294901760
    %v2359 = vsub.f32 %v2298, %v2358
    %v2360 = vand.u32 %v2359, 4294901760
    %v2361 = vsub.f32 %v2359, %v2360
    %v2362 = vand.u32 %v2361, 4294901760
    %2363 = vmatpush.msra.mxu0 %v2362
    %v2364 = vand.u32 %v2297, 4294901760
    %v2365 = vsub.f32 %v2297, %v2364
    %v2366 = vand.u32 %v2365, 4294901760
    %v2367 = vsub.f32 %v2365, %v2366
    %v2368 = vand.u32 %v2367, 4294901760
    %2369 = vmatpush.msra.mxu0 %v2368
    %v2370 = vand.u32 %v2303, 4294901760
    %2371 = vmatmul.f32.gmra.mxu0 %v2370
    %v2372 = vpop.f32.mrf.mxu0
    %v2373 = vadd.f32 %v2332, %v2372
    %2374 = vdwg.mxu0
    %2375 = vmatpush.msra.mxu0 0.0
    %2376 = vmatpush.msra.mxu0 0.0
    %2377 = vmatpush.msra.mxu0 0.0
    %2378 = vmatpush.msra.mxu0 0.0
    %2379 = vmatpush.msra.mxu0 0.0
    %2380 = vmatpush.msra.mxu0 0.0
    %2381 = vmatpush.msra.mxu0 0.0
    %2382 = vmatpush.msra.mxu0 0.0
    %2383 = vmatpush.msra.mxu0 0.0
    %2384 = vmatpush.msra.mxu0 0.0
    %2385 = vmatpush.msra.mxu0 0.0
    %2386 = vmatpush.msra.mxu0 0.0
    %v2387 = vand.u32 %v2300, 4294901760
    %v2388 = vsub.f32 %v2300, %v2387
    %2389 = vmatpush.msra.mxu0 %v2388
    %v2390 = vand.u32 %v2299, 4294901760
    %v2391 = vsub.f32 %v2299, %v2390
    %2392 = vmatpush.msra.mxu0 %v2391
    %v2393 = vand.u32 %v2298, 4294901760
    %v2394 = vsub.f32 %v2298, %v2393
    %2395 = vmatpush.msra.mxu0 %v2394
    %v2396 = vand.u32 %v2297, 4294901760
    %v2397 = vsub.f32 %v2297, %v2396
    %2398 = vmatpush.msra.mxu0 %v2397
    %v2399 = vand.u32 %v2303, 4294901760
    %v2400 = vsub.f32 %v2303, %v2399
    %2401 = vmatmul.f32.gmra.mxu0 %v2400
    %v2402 = vpop.f32.mrf.mxu0
    %v2403 = vadd.f32 %v2373, %v2402
    %2404 = vdwg.mxu0
    %2405 = vmatpush.msra.mxu0 0.0
    %2406 = vmatpush.msra.mxu0 0.0
    %2407 = vmatpush.msra.mxu0 0.0
    %2408 = vmatpush.msra.mxu0 0.0
    %2409 = vmatpush.msra.mxu0 0.0
    %2410 = vmatpush.msra.mxu0 0.0
    %2411 = vmatpush.msra.mxu0 0.0
    %2412 = vmatpush.msra.mxu0 0.0
    %2413 = vmatpush.msra.mxu0 0.0
    %2414 = vmatpush.msra.mxu0 0.0
    %2415 = vmatpush.msra.mxu0 0.0
    %2416 = vmatpush.msra.mxu0 0.0
    %v2417 = vand.u32 %v2300, 4294901760
    %2418 = vmatpush.msra.mxu0 %v2417
    %v2419 = vand.u32 %v2299, 4294901760
    %2420 = vmatpush.msra.mxu0 %v2419
    %v2421 = vand.u32 %v2298, 4294901760
    %2422 = vmatpush.msra.mxu0 %v2421
    %v2423 = vand.u32 %v2297, 4294901760
    %2424 = vmatpush.msra.mxu0 %v2423
    %v2425 = vand.u32 %v2303, 4294901760
    %v2426 = vsub.f32 %v2303, %v2425
    %v2427 = vand.u32 %v2426, 4294901760
    %2428 = vmatmul.f32.gmra.mxu0 %v2427
    %v2429 = vpop.f32.mrf.mxu0
    %v2430 = vadd.f32 %v2403, %v2429
    %2431 = vdwg.mxu0
    %2432 = vmatpush.msra.mxu0 0.0
    %2433 = vmatpush.msra.mxu0 0.0
    %2434 = vmatpush.msra.mxu0 0.0
    %2435 = vmatpush.msra.mxu0 0.0
    %2436 = vmatpush.msra.mxu0 0.0
    %2437 = vmatpush.msra.mxu0 0.0
    %2438 = vmatpush.msra.mxu0 0.0
    %2439 = vmatpush.msra.mxu0 0.0
    %2440 = vmatpush.msra.mxu0 0.0
    %2441 = vmatpush.msra.mxu0 0.0
    %2442 = vmatpush.msra.mxu0 0.0
    %2443 = vmatpush.msra.mxu0 0.0
    %v2444 = vand.u32 %v2300, 4294901760
    %v2445 = vsub.f32 %v2300, %v2444
    %v2446 = vand.u32 %v2445, 4294901760
    %2447 = vmatpush.msra.mxu0 %v2446
    %v2448 = vand.u32 %v2299, 4294901760
    %v2449 = vsub.f32 %v2299, %v2448
    %v2450 = vand.u32 %v2449, 4294901760
    %2451 = vmatpush.msra.mxu0 %v2450
    %v2452 = vand.u32 %v2298, 4294901760
    %v2453 = vsub.f32 %v2298, %v2452
    %v2454 = vand.u32 %v2453, 4294901760
    %2455 = vmatpush.msra.mxu0 %v2454
    %v2456 = vand.u32 %v2297, 4294901760
    %v2457 = vsub.f32 %v2297, %v2456
    %v2458 = vand.u32 %v2457, 4294901760
    %2459 = vmatpush.msra.mxu0 %v2458
    %v2460 = vand.u32 %v2303, 4294901760
    %2461 = vmatmul.f32.gmra.mxu0 %v2460
    %v2462 = vpop.f32.mrf.mxu0
    %v2463 = vadd.f32 %v2430, %v2462
    %2464 = vdwg.mxu0
    %2465 = vmatpush.msra.mxu0 0.0
    %2466 = vmatpush.msra.mxu0 0.0
    %2467 = vmatpush.msra.mxu0 0.0
    %2468 = vmatpush.msra.mxu0 0.0
    %2469 = vmatpush.msra.mxu0 0.0
    %2470 = vmatpush.msra.mxu0 0.0
    %2471 = vmatpush.msra.mxu0 0.0
    %2472 = vmatpush.msra.mxu0 0.0
    %2473 = vmatpush.msra.mxu0 0.0
    %2474 = vmatpush.msra.mxu0 0.0
    %2475 = vmatpush.msra.mxu0 0.0
    %2476 = vmatpush.msra.mxu0 0.0
    %v2477 = vand.u32 %v2300, 4294901760
    %2478 = vmatpush.msra.mxu0 %v2477
    %v2479 = vand.u32 %v2299, 4294901760
    %2480 = vmatpush.msra.mxu0 %v2479
    %v2481 = vand.u32 %v2298, 4294901760
    %2482 = vmatpush.msra.mxu0 %v2481
    %v2483 = vand.u32 %v2297, 4294901760
    %2484 = vmatpush.msra.mxu0 %v2483
    %v2485 = vand.u32 %v2303, 4294901760
    %2486 = vmatmul.f32.gmra.mxu0 %v2485
    %v2487 = vpop.f32.mrf.mxu0
    %v2488 = vadd.f32 %v2463, %v2487
    %2489 = vdwg.mxu0
    %v2490 = vsel %vm1840, %v2488, 0.0
    %v2491 = vrot.slane %v2490, 4
    %v2492 = vadd.f32 %v2490, %v2491
    %v2493 = vrot.slane %v2492, 2
    %v2494 = vadd.f32 %v2492, %v2493
    %v2495 = vrot.slane %v2494, 1
    %v2496 = vadd.f32 %v2494, %v2495
    %v2497 = vmul.f32 %v2496, %v655
    %v2498 = vsub.f32 %v2488, %v2497
    %v2499 = vmul.f32 %v2498, %v2498
    %v2500 = vsel %vm1840, %v2499, 0.0
    %v2501 = vrot.slane %v2500, 4
    %v2502 = vadd.f32 %v2500, %v2501
    %v2503 = vrot.slane %v2502, 2
    %v2504 = vadd.f32 %v2502, %v2503
    %v2505 = vrot.slane %v2504, 1
    %v2506 = vadd.f32 %v2504, %v2505
    %v2507 = vmul.f32 %v2506, %v655
    %v2508 = vadd.f32 %v2507, 1e-05
    %v2509 = vrsqrt.pop %v2508
    %v2510 = vmul.f32 %v2509, %v2508
    %v2511 = vmul.f32 %v2510, %v2509
    %v2512 = vmul.f32 0.5, %v2511
    %v2513 = vsub.f32 1.5, %v2512
    %v2514 = vmul.f32 %v2509, %v2513
    %vm2515 = vweird.f32 %v2508
    %vm2516 = vweird.f32 %v2509
    %vm2517 = vmor %vm2515, %vm2516
    %v2518 = vsel %vm2517, %v2509, %v2514
    %v2519 = vmul.f32 %v2498, %v2518
    %v2520 = vperm.slane %v2296, 1
    %v2521 = vmul.f32 %v2519, %v2520
    %v2522 = vperm.slane %v2296, 2
    %v2523 = vadd.f32 %v2521, %v2522
    %v2524 = vsel %vm900, %v2025, -inf
    %2525 = vmax.xlane.f32.xlu0 %v2524
    %v2526 = vpop.xlane.xlu0 %2525
    %vm2527 = vcmp.ge.f32.partialorder %v2025, %v2526
    %v2528 = vsel %vm2527, 1, 0
    %v2529 = vcvt.s32.f32 %v2528
    %v2531 = vsel %vm900, %v2529, 0
    %2533 = vmatpush.msra.mxu0 0.0
    %2534 = vmatpush.msra.mxu0 0.0
    %2535 = vmatpush.msra.mxu0 0.0
    %2536 = vmatpush.msra.mxu0 0.0
    %2537 = vmatpush.msra.mxu0 0.0
    %2538 = vmatpush.msra.mxu0 0.0
    %2539 = vmatpush.msra.mxu0 0.0
    %2540 = vmatpush.msra.mxu0 0.0
    %2541 = vmatpush.msra.mxu0 0.0
    %2542 = vmatpush.msra.mxu0 0.0
    %2543 = vmatpush.msra.mxu0 0.0
    %2544 = vmatpush.msra.mxu0 0.0
    %2545 = vmatpush.msra.mxu0 0.0
    %2546 = vmatpush.msra.mxu0 0.0
    %2547 = vmatpush.msra.mxu0 0.0
    %v2548 = vand.u32 %v2523, 4294901760
    %2549 = vmatpush.msra.mxu0 %v2548
    %v2550 = vand.u32 %v2531, 4294901760
    %v2551 = vsub.f32 %v2531, %v2550
    %v2552 = vand.u32 %v2551, 4294901760
    %v2553 = vsub.f32 %v2551, %v2552
    %v2554 = vand.u32 %v2553, 4294901760
    %2555 = vmatmul.f32.gmra.mxu0 %v2554
    %v2556 = vpop.f32.mrf.mxu0
    %v2557 = vadd.f32 0.0, %v2556
    %2558 = vdwg.mxu0
    %2559 = vmatpush.msra.mxu0 0.0
    %2560 = vmatpush.msra.mxu0 0.0
    %2561 = vmatpush.msra.mxu0 0.0
    %2562 = vmatpush.msra.mxu0 0.0
    %2563 = vmatpush.msra.mxu0 0.0
    %2564 = vmatpush.msra.mxu0 0.0
    %2565 = vmatpush.msra.mxu0 0.0
    %2566 = vmatpush.msra.mxu0 0.0
    %2567 = vmatpush.msra.mxu0 0.0
    %2568 = vmatpush.msra.mxu0 0.0
    %2569 = vmatpush.msra.mxu0 0.0
    %2570 = vmatpush.msra.mxu0 0.0
    %2571 = vmatpush.msra.mxu0 0.0
    %2572 = vmatpush.msra.mxu0 0.0
    %2573 = vmatpush.msra.mxu0 0.0
    %v2574 = vand.u32 %v2523, 4294901760
    %v2575 = vsub.f32 %v2523, %v2574
    %v2576 = vand.u32 %v2575, 4294901760
    %v2577 = vsub.f32 %v2575, %v2576
    %v2578 = vand.u32 %v2577, 4294901760
    %2579 = vmatpush.msra.mxu0 %v2578
    %v2580 = vand.u32 %v2531, 4294901760
    %2581 = vmatmul.f32.gmra.mxu0 %v2580
    %v2582 = vpop.f32.mrf.mxu0
    %v2583 = vadd.f32 %v2557, %v2582
    %2584 = vdwg.mxu0
    %2585 = vmatpush.msra.mxu0 0.0
    %2586 = vmatpush.msra.mxu0 0.0
    %2587 = vmatpush.msra.mxu0 0.0
    %2588 = vmatpush.msra.mxu0 0.0
    %2589 = vmatpush.msra.mxu0 0.0
    %2590 = vmatpush.msra.mxu0 0.0
    %2591 = vmatpush.msra.mxu0 0.0
    %2592 = vmatpush.msra.mxu0 0.0
    %2593 = vmatpush.msra.mxu0 0.0
    %2594 = vmatpush.msra.mxu0 0.0
    %2595 = vmatpush.msra.mxu0 0.0
    %2596 = vmatpush.msra.mxu0 0.0
    %2597 = vmatpush.msra.mxu0 0.0
    %2598 = vmatpush.msra.mxu0 0.0
    %2599 = vmatpush.msra.mxu0 0.0
    %v2600 = vand.u32 %v2523, 4294901760
    %v2601 = vsub.f32 %v2523, %v2600
    %2602 = vmatpush.msra.mxu0 %v2601
    %v2603 = vand.u32 %v2531, 4294901760
    %v2604 = vsub.f32 %v2531, %v2603
    %2605 = vmatmul.f32.gmra.mxu0 %v2604
    %v2606 = vpop.f32.mrf.mxu0
    %v2607 = vadd.f32 %v2583, %v2606
    %2608 = vdwg.mxu0
    %2609 = vmatpush.msra.mxu0 0.0
    %2610 = vmatpush.msra.mxu0 0.0
    %2611 = vmatpush.msra.mxu0 0.0
    %2612 = vmatpush.msra.mxu0 0.0
    %2613 = vmatpush.msra.mxu0 0.0
    %2614 = vmatpush.msra.mxu0 0.0
    %2615 = vmatpush.msra.mxu0 0.0
    %2616 = vmatpush.msra.mxu0 0.0
    %2617 = vmatpush.msra.mxu0 0.0
    %2618 = vmatpush.msra.mxu0 0.0
    %2619 = vmatpush.msra.mxu0 0.0
    %2620 = vmatpush.msra.mxu0 0.0
    %2621 = vmatpush.msra.mxu0 0.0
    %2622 = vmatpush.msra.mxu0 0.0
    %2623 = vmatpush.msra.mxu0 0.0
    %v2624 = vand.u32 %v2523, 4294901760
    %2625 = vmatpush.msra.mxu0 %v2624
    %v2626 = vand.u32 %v2531, 4294901760
    %v2627 = vsub.f32 %v2531, %v2626
    %v2628 = vand.u32 %v2627, 4294901760
    %2629 = vmatmul.f32.gmra.mxu0 %v2628
    %v2630 = vpop.f32.mrf.mxu0
    %v2631 = vadd.f32 %v2607, %v2630
    %2632 = vdwg.mxu0
    %2633 = vmatpush.msra.mxu0 0.0
    %2634 = vmatpush.msra.mxu0 0.0
    %2635 = vmatpush.msra.mxu0 0.0
    %2636 = vmatpush.msra.mxu0 0.0
    %2637 = vmatpush.msra.mxu0 0.0
    %2638 = vmatpush.msra.mxu0 0.0
    %2639 = vmatpush.msra.mxu0 0.0
    %2640 = vmatpush.msra.mxu0 0.0
    %2641 = vmatpush.msra.mxu0 0.0
    %2642 = vmatpush.msra.mxu0 0.0
    %2643 = vmatpush.msra.mxu0 0.0
    %2644 = vmatpush.msra.mxu0 0.0
    %2645 = vmatpush.msra.mxu0 0.0
    %2646 = vmatpush.msra.mxu0 0.0
    %2647 = vmatpush.msra.mxu0 0.0
    %v2648 = vand.u32 %v2523, 4294901760
    %v2649 = vsub.f32 %v2523, %v2648
    %v2650 = vand.u32 %v2649, 4294901760
    %2651 = vmatpush.msra.mxu0 %v2650
    %v2652 = vand.u32 %v2531, 4294901760
    %2653 = vmatmul.f32.gmra.mxu0 %v2652
    %v2654 = vpop.f32.mrf.mxu0
    %v2655 = vadd.f32 %v2631, %v2654
    %2656 = vdwg.mxu0
    %2657 = vmatpush.msra.mxu0 0.0
    %2658 = vmatpush.msra.mxu0 0.0
    %2659 = vmatpush.msra.mxu0 0.0
    %2660 = vmatpush.msra.mxu0 0.0
    %2661 = vmatpush.msra.mxu0 0.0
    %2662 = vmatpush.msra.mxu0 0.0
    %2663 = vmatpush.msra.mxu0 0.0
    %2664 = vmatpush.msra.mxu0 0.0
    %2665 = vmatpush.msra.mxu0 0.0
    %2666 = vmatpush.msra.mxu0 0.0
    %2667 = vmatpush.msra.mxu0 0.0
    %2668 = vmatpush.msra.mxu0 0.0
    %2669 = vmatpush.msra.mxu0 0.0
    %2670 = vmatpush.msra.mxu0 0.0
    %2671 = vmatpush.msra.mxu0 0.0
    %v2672 = vand.u32 %v2523, 4294901760
    %2673 = vmatpush.msra.mxu0 %v2672
    %v2674 = vand.u32 %v2531, 4294901760
    %2675 = vmatmul.f32.gmra.mxu0 %v2674
    %v2676 = vpop.f32.mrf.mxu0
    %v2677 = vadd.f32 %v2655, %v2676
    %2678 = vdwg.mxu0
    %v2679 = vmax.f32 %v2677, -1e+30
    %v2680 = vsel %vm2527, -1e+30, %v2025
    %v2681 = vsel %vm900, %v2680, -inf
    %2682 = vmax.xlane.f32.xlu0 %v2681
    %v2683 = vpop.xlane.xlu0 %2682
    %vm2684 = vcmp.ge.f32.partialorder %v2680, %v2683
    %v2685 = vsel %vm2684, 1, 0
    %v2686 = vcvt.s32.f32 %v2685
    %v2688 = vsel %vm900, %v2686, 0
    %2690 = vmatpush.msra.mxu0 0.0
    %2691 = vmatpush.msra.mxu0 0.0
    %2692 = vmatpush.msra.mxu0 0.0
    %2693 = vmatpush.msra.mxu0 0.0
    %2694 = vmatpush.msra.mxu0 0.0
    %2695 = vmatpush.msra.mxu0 0.0
    %2696 = vmatpush.msra.mxu0 0.0
    %2697 = vmatpush.msra.mxu0 0.0
    %2698 = vmatpush.msra.mxu0 0.0
    %2699 = vmatpush.msra.mxu0 0.0
    %2700 = vmatpush.msra.mxu0 0.0
    %2701 = vmatpush.msra.mxu0 0.0
    %2702 = vmatpush.msra.mxu0 0.0
    %2703 = vmatpush.msra.mxu0 0.0
    %2704 = vmatpush.msra.mxu0 0.0
    %v2705 = vand.u32 %v2523, 4294901760
    %2706 = vmatpush.msra.mxu0 %v2705
    %v2707 = vand.u32 %v2688, 4294901760
    %v2708 = vsub.f32 %v2688, %v2707
    %v2709 = vand.u32 %v2708, 4294901760
    %v2710 = vsub.f32 %v2708, %v2709
    %v2711 = vand.u32 %v2710, 4294901760
    %2712 = vmatmul.f32.gmra.mxu0 %v2711
    %v2713 = vpop.f32.mrf.mxu0
    %v2714 = vadd.f32 0.0, %v2713
    %2715 = vdwg.mxu0
    %2716 = vmatpush.msra.mxu0 0.0
    %2717 = vmatpush.msra.mxu0 0.0
    %2718 = vmatpush.msra.mxu0 0.0
    %2719 = vmatpush.msra.mxu0 0.0
    %2720 = vmatpush.msra.mxu0 0.0
    %2721 = vmatpush.msra.mxu0 0.0
    %2722 = vmatpush.msra.mxu0 0.0
    %2723 = vmatpush.msra.mxu0 0.0
    %2724 = vmatpush.msra.mxu0 0.0
    %2725 = vmatpush.msra.mxu0 0.0
    %2726 = vmatpush.msra.mxu0 0.0
    %2727 = vmatpush.msra.mxu0 0.0
    %2728 = vmatpush.msra.mxu0 0.0
    %2729 = vmatpush.msra.mxu0 0.0
    %2730 = vmatpush.msra.mxu0 0.0
    %v2731 = vand.u32 %v2523, 4294901760
    %v2732 = vsub.f32 %v2523, %v2731
    %v2733 = vand.u32 %v2732, 4294901760
    %v2734 = vsub.f32 %v2732, %v2733
    %v2735 = vand.u32 %v2734, 4294901760
    %2736 = vmatpush.msra.mxu0 %v2735
    %v2737 = vand.u32 %v2688, 4294901760
    %2738 = vmatmul.f32.gmra.mxu0 %v2737
    %v2739 = vpop.f32.mrf.mxu0
    %v2740 = vadd.f32 %v2714, %v2739
    %2741 = vdwg.mxu0
    %2742 = vmatpush.msra.mxu0 0.0
    %2743 = vmatpush.msra.mxu0 0.0
    %2744 = vmatpush.msra.mxu0 0.0
    %2745 = vmatpush.msra.mxu0 0.0
    %2746 = vmatpush.msra.mxu0 0.0
    %2747 = vmatpush.msra.mxu0 0.0
    %2748 = vmatpush.msra.mxu0 0.0
    %2749 = vmatpush.msra.mxu0 0.0
    %2750 = vmatpush.msra.mxu0 0.0
    %2751 = vmatpush.msra.mxu0 0.0
    %2752 = vmatpush.msra.mxu0 0.0
    %2753 = vmatpush.msra.mxu0 0.0
    %2754 = vmatpush.msra.mxu0 0.0
    %2755 = vmatpush.msra.mxu0 0.0
    %2756 = vmatpush.msra.mxu0 0.0
    %v2757 = vand.u32 %v2523, 4294901760
    %v2758 = vsub.f32 %v2523, %v2757
    %2759 = vmatpush.msra.mxu0 %v2758
    %v2760 = vand.u32 %v2688, 4294901760
    %v2761 = vsub.f32 %v2688, %v2760
    %2762 = vmatmul.f32.gmra.mxu0 %v2761
    %v2763 = vpop.f32.mrf.mxu0
    %v2764 = vadd.f32 %v2740, %v2763
    %2765 = vdwg.mxu0
    %2766 = vmatpush.msra.mxu0 0.0
    %2767 = vmatpush.msra.mxu0 0.0
    %2768 = vmatpush.msra.mxu0 0.0
    %2769 = vmatpush.msra.mxu0 0.0
    %2770 = vmatpush.msra.mxu0 0.0
    %2771 = vmatpush.msra.mxu0 0.0
    %2772 = vmatpush.msra.mxu0 0.0
    %2773 = vmatpush.msra.mxu0 0.0
    %2774 = vmatpush.msra.mxu0 0.0
    %2775 = vmatpush.msra.mxu0 0.0
    %2776 = vmatpush.msra.mxu0 0.0
    %2777 = vmatpush.msra.mxu0 0.0
    %2778 = vmatpush.msra.mxu0 0.0
    %2779 = vmatpush.msra.mxu0 0.0
    %2780 = vmatpush.msra.mxu0 0.0
    %v2781 = vand.u32 %v2523, 4294901760
    %2782 = vmatpush.msra.mxu0 %v2781
    %v2783 = vand.u32 %v2688, 4294901760
    %v2784 = vsub.f32 %v2688, %v2783
    %v2785 = vand.u32 %v2784, 4294901760
    %2786 = vmatmul.f32.gmra.mxu0 %v2785
    %v2787 = vpop.f32.mrf.mxu0
    %v2788 = vadd.f32 %v2764, %v2787
    %2789 = vdwg.mxu0
    %2790 = vmatpush.msra.mxu0 0.0
    %2791 = vmatpush.msra.mxu0 0.0
    %2792 = vmatpush.msra.mxu0 0.0
    %2793 = vmatpush.msra.mxu0 0.0
    %2794 = vmatpush.msra.mxu0 0.0
    %2795 = vmatpush.msra.mxu0 0.0
    %2796 = vmatpush.msra.mxu0 0.0
    %2797 = vmatpush.msra.mxu0 0.0
    %2798 = vmatpush.msra.mxu0 0.0
    %2799 = vmatpush.msra.mxu0 0.0
    %2800 = vmatpush.msra.mxu0 0.0
    %2801 = vmatpush.msra.mxu0 0.0
    %2802 = vmatpush.msra.mxu0 0.0
    %2803 = vmatpush.msra.mxu0 0.0
    %2804 = vmatpush.msra.mxu0 0.0
    %v2805 = vand.u32 %v2523, 4294901760
    %v2806 = vsub.f32 %v2523, %v2805
    %v2807 = vand.u32 %v2806, 4294901760
    %2808 = vmatpush.msra.mxu0 %v2807
    %v2809 = vand.u32 %v2688, 4294901760
    %2810 = vmatmul.f32.gmra.mxu0 %v2809
    %v2811 = vpop.f32.mrf.mxu0
    %v2812 = vadd.f32 %v2788, %v2811
    %2813 = vdwg.mxu0
    %2814 = vmatpush.msra.mxu0 0.0
    %2815 = vmatpush.msra.mxu0 0.0
    %2816 = vmatpush.msra.mxu0 0.0
    %2817 = vmatpush.msra.mxu0 0.0
    %2818 = vmatpush.msra.mxu0 0.0
    %2819 = vmatpush.msra.mxu0 0.0
    %2820 = vmatpush.msra.mxu0 0.0
    %2821 = vmatpush.msra.mxu0 0.0
    %2822 = vmatpush.msra.mxu0 0.0
    %2823 = vmatpush.msra.mxu0 0.0
    %2824 = vmatpush.msra.mxu0 0.0
    %2825 = vmatpush.msra.mxu0 0.0
    %2826 = vmatpush.msra.mxu0 0.0
    %2827 = vmatpush.msra.mxu0 0.0
    %2828 = vmatpush.msra.mxu0 0.0
    %v2829 = vand.u32 %v2523, 4294901760
    %2830 = vmatpush.msra.mxu0 %v2829
    %v2831 = vand.u32 %v2688, 4294901760
    %2832 = vmatmul.f32.gmra.mxu0 %v2831
    %v2833 = vpop.f32.mrf.mxu0
    %v2834 = vadd.f32 %v2812, %v2833
    %2835 = vdwg.mxu0
    %v2836 = vmax.f32 %v2679, %v2834
    %v2837 = vsel %vm2684, -1e+30, %v2680
    %v2838 = vsel %vm900, %v2837, -inf
    %2839 = vmax.xlane.f32.xlu0 %v2838
    %v2840 = vpop.xlane.xlu0 %2839
    %vm2841 = vcmp.ge.f32.partialorder %v2837, %v2840
    %v2842 = vsel %vm2841, 1, 0
    %v2843 = vcvt.s32.f32 %v2842
    %v2845 = vsel %vm900, %v2843, 0
    %2847 = vmatpush.msra.mxu0 0.0
    %2848 = vmatpush.msra.mxu0 0.0
    %2849 = vmatpush.msra.mxu0 0.0
    %2850 = vmatpush.msra.mxu0 0.0
    %2851 = vmatpush.msra.mxu0 0.0
    %2852 = vmatpush.msra.mxu0 0.0
    %2853 = vmatpush.msra.mxu0 0.0
    %2854 = vmatpush.msra.mxu0 0.0
    %2855 = vmatpush.msra.mxu0 0.0
    %2856 = vmatpush.msra.mxu0 0.0
    %2857 = vmatpush.msra.mxu0 0.0
    %2858 = vmatpush.msra.mxu0 0.0
    %2859 = vmatpush.msra.mxu0 0.0
    %2860 = vmatpush.msra.mxu0 0.0
    %2861 = vmatpush.msra.mxu0 0.0
    %v2862 = vand.u32 %v2523, 4294901760
    %2863 = vmatpush.msra.mxu0 %v2862
    %v2864 = vand.u32 %v2845, 4294901760
    %v2865 = vsub.f32 %v2845, %v2864
    %v2866 = vand.u32 %v2865, 4294901760
    %v2867 = vsub.f32 %v2865, %v2866
    %v2868 = vand.u32 %v2867, 4294901760
    %2869 = vmatmul.f32.gmra.mxu0 %v2868
    %v2870 = vpop.f32.mrf.mxu0
    %v2871 = vadd.f32 0.0, %v2870
    %2872 = vdwg.mxu0
    %2873 = vmatpush.msra.mxu0 0.0
    %2874 = vmatpush.msra.mxu0 0.0
    %2875 = vmatpush.msra.mxu0 0.0
    %2876 = vmatpush.msra.mxu0 0.0
    %2877 = vmatpush.msra.mxu0 0.0
    %2878 = vmatpush.msra.mxu0 0.0
    %2879 = vmatpush.msra.mxu0 0.0
    %2880 = vmatpush.msra.mxu0 0.0
    %2881 = vmatpush.msra.mxu0 0.0
    %2882 = vmatpush.msra.mxu0 0.0
    %2883 = vmatpush.msra.mxu0 0.0
    %2884 = vmatpush.msra.mxu0 0.0
    %2885 = vmatpush.msra.mxu0 0.0
    %2886 = vmatpush.msra.mxu0 0.0
    %2887 = vmatpush.msra.mxu0 0.0
    %v2888 = vand.u32 %v2523, 4294901760
    %v2889 = vsub.f32 %v2523, %v2888
    %v2890 = vand.u32 %v2889, 4294901760
    %v2891 = vsub.f32 %v2889, %v2890
    %v2892 = vand.u32 %v2891, 4294901760
    %2893 = vmatpush.msra.mxu0 %v2892
    %v2894 = vand.u32 %v2845, 4294901760
    %2895 = vmatmul.f32.gmra.mxu0 %v2894
    %v2896 = vpop.f32.mrf.mxu0
    %v2897 = vadd.f32 %v2871, %v2896
    %2898 = vdwg.mxu0
    %2899 = vmatpush.msra.mxu0 0.0
    %2900 = vmatpush.msra.mxu0 0.0
    %2901 = vmatpush.msra.mxu0 0.0
    %2902 = vmatpush.msra.mxu0 0.0
    %2903 = vmatpush.msra.mxu0 0.0
    %2904 = vmatpush.msra.mxu0 0.0
    %2905 = vmatpush.msra.mxu0 0.0
    %2906 = vmatpush.msra.mxu0 0.0
    %2907 = vmatpush.msra.mxu0 0.0
    %2908 = vmatpush.msra.mxu0 0.0
    %2909 = vmatpush.msra.mxu0 0.0
    %2910 = vmatpush.msra.mxu0 0.0
    %2911 = vmatpush.msra.mxu0 0.0
    %2912 = vmatpush.msra.mxu0 0.0
    %2913 = vmatpush.msra.mxu0 0.0
    %v2914 = vand.u32 %v2523, 4294901760
    %v2915 = vsub.f32 %v2523, %v2914
    %2916 = vmatpush.msra.mxu0 %v2915
    %v2917 = vand.u32 %v2845, 4294901760
    %v2918 = vsub.f32 %v2845, %v2917
    %2919 = vmatmul.f32.gmra.mxu0 %v2918
    %v2920 = vpop.f32.mrf.mxu0
    %v2921 = vadd.f32 %v2897, %v2920
    %2922 = vdwg.mxu0
    %2923 = vmatpush.msra.mxu0 0.0
    %2924 = vmatpush.msra.mxu0 0.0
    %2925 = vmatpush.msra.mxu0 0.0
    %2926 = vmatpush.msra.mxu0 0.0
    %2927 = vmatpush.msra.mxu0 0.0
    %2928 = vmatpush.msra.mxu0 0.0
    %2929 = vmatpush.msra.mxu0 0.0
    %2930 = vmatpush.msra.mxu0 0.0
    %2931 = vmatpush.msra.mxu0 0.0
    %2932 = vmatpush.msra.mxu0 0.0
    %2933 = vmatpush.msra.mxu0 0.0
    %2934 = vmatpush.msra.mxu0 0.0
    %2935 = vmatpush.msra.mxu0 0.0
    %2936 = vmatpush.msra.mxu0 0.0
    %2937 = vmatpush.msra.mxu0 0.0
    %v2938 = vand.u32 %v2523, 4294901760
    %2939 = vmatpush.msra.mxu0 %v2938
    %v2940 = vand.u32 %v2845, 4294901760
    %v2941 = vsub.f32 %v2845, %v2940
    %v2942 = vand.u32 %v2941, 4294901760
    %2943 = vmatmul.f32.gmra.mxu0 %v2942
    %v2944 = vpop.f32.mrf.mxu0
    %v2945 = vadd.f32 %v2921, %v2944
    %2946 = vdwg.mxu0
    %2947 = vmatpush.msra.mxu0 0.0
    %2948 = vmatpush.msra.mxu0 0.0
    %2949 = vmatpush.msra.mxu0 0.0
    %2950 = vmatpush.msra.mxu0 0.0
    %2951 = vmatpush.msra.mxu0 0.0
    %2952 = vmatpush.msra.mxu0 0.0
    %2953 = vmatpush.msra.mxu0 0.0
    %2954 = vmatpush.msra.mxu0 0.0
    %2955 = vmatpush.msra.mxu0 0.0
    %2956 = vmatpush.msra.mxu0 0.0
    %2957 = vmatpush.msra.mxu0 0.0
    %2958 = vmatpush.msra.mxu0 0.0
    %2959 = vmatpush.msra.mxu0 0.0
    %2960 = vmatpush.msra.mxu0 0.0
    %2961 = vmatpush.msra.mxu0 0.0
    %v2962 = vand.u32 %v2523, 4294901760
    %v2963 = vsub.f32 %v2523, %v2962
    %v2964 = vand.u32 %v2963, 4294901760
    %2965 = vmatpush.msra.mxu0 %v2964
    %v2966 = vand.u32 %v2845, 4294901760
    %2967 = vmatmul.f32.gmra.mxu0 %v2966
    %v2968 = vpop.f32.mrf.mxu0
    %v2969 = vadd.f32 %v2945, %v2968
    %2970 = vdwg.mxu0
    %2971 = vmatpush.msra.mxu0 0.0
    %2972 = vmatpush.msra.mxu0 0.0
    %2973 = vmatpush.msra.mxu0 0.0
    %2974 = vmatpush.msra.mxu0 0.0
    %2975 = vmatpush.msra.mxu0 0.0
    %2976 = vmatpush.msra.mxu0 0.0
    %2977 = vmatpush.msra.mxu0 0.0
    %2978 = vmatpush.msra.mxu0 0.0
    %2979 = vmatpush.msra.mxu0 0.0
    %2980 = vmatpush.msra.mxu0 0.0
    %2981 = vmatpush.msra.mxu0 0.0
    %2982 = vmatpush.msra.mxu0 0.0
    %2983 = vmatpush.msra.mxu0 0.0
    %2984 = vmatpush.msra.mxu0 0.0
    %2985 = vmatpush.msra.mxu0 0.0
    %v2986 = vand.u32 %v2523, 4294901760
    %2987 = vmatpush.msra.mxu0 %v2986
    %v2988 = vand.u32 %v2845, 4294901760
    %2989 = vmatmul.f32.gmra.mxu0 %v2988
    %v2990 = vpop.f32.mrf.mxu0
    %v2991 = vadd.f32 %v2969, %v2990
    %2992 = vdwg.mxu0
    %v2993 = vmax.f32 %v2836, %v2991
    %v2994 = vsub.f32 %v2993, %v2523
    %v2995 = vld [vmem:[#allocation2 + $0x338] sm:$0xff]
    %v2996 = vld [vmem:[#allocation2 + $0x340] sm:$0xff]
    %v2997 = vld [vmem:[#allocation2 + $0x348] sm:$0xff]
    %v2998 = vld [vmem:[#allocation2 + $0x350] sm:$0xff]
    %v2999 = vld [vmem:[#allocation2 + $0x358] sm:$0xff]
    %v3000 = vld [vmem:[#allocation2 + $0x360] sm:$0xff]
    %v3001 = vld [vmem:[#allocation2 + $0x368] sm:$0xff]
    %v3002 = vld [vmem:[#allocation2 + $0x370] sm:$0xff]
    %v3004 = vsel %vm1840, %v2994, 0
    %3006 = vmatpush.msra.mxu0 0.0
    %3007 = vmatpush.msra.mxu0 0.0
    %3008 = vmatpush.msra.mxu0 0.0
    %3009 = vmatpush.msra.mxu0 0.0
    %3010 = vmatpush.msra.mxu0 0.0
    %3011 = vmatpush.msra.mxu0 0.0
    %3012 = vmatpush.msra.mxu0 0.0
    %3013 = vmatpush.msra.mxu0 0.0
    %3014 = vmatpush.msra.mxu0 0.0
    %3015 = vmatpush.msra.mxu0 0.0
    %3016 = vmatpush.msra.mxu0 0.0
    %3017 = vmatpush.msra.mxu0 0.0
    %v3018 = vand.u32 %v3002, 4294901760
    %3019 = vmatpush.msra.mxu0 %v3018
    %v3020 = vand.u32 %v3001, 4294901760
    %3021 = vmatpush.msra.mxu0 %v3020
    %v3022 = vand.u32 %v3000, 4294901760
    %3023 = vmatpush.msra.mxu0 %v3022
    %v3024 = vand.u32 %v2999, 4294901760
    %3025 = vmatpush.msra.mxu0 %v3024
    %v3026 = vand.u32 %v3004, 4294901760
    %v3027 = vsub.f32 %v3004, %v3026
    %v3028 = vand.u32 %v3027, 4294901760
    %v3029 = vsub.f32 %v3027, %v3028
    %v3030 = vand.u32 %v3029, 4294901760
    %3031 = vmatmul.f32.gmra.mxu0 %v3030
    %v3032 = vpop.f32.mrf.mxu0
    %v3033 = vadd.f32 0.0, %v3032
    %3034 = vdwg.mxu0
    %3035 = vmatpush.msra.mxu0 0.0
    %3036 = vmatpush.msra.mxu0 0.0
    %3037 = vmatpush.msra.mxu0 0.0
    %3038 = vmatpush.msra.mxu0 0.0
    %3039 = vmatpush.msra.mxu0 0.0
    %3040 = vmatpush.msra.mxu0 0.0
    %3041 = vmatpush.msra.mxu0 0.0
    %3042 = vmatpush.msra.mxu0 0.0
    %3043 = vmatpush.msra.mxu0 0.0
    %3044 = vmatpush.msra.mxu0 0.0
    %3045 = vmatpush.msra.mxu0 0.0
    %3046 = vmatpush.msra.mxu0 0.0
    %v3047 = vand.u32 %v3002, 4294901760
    %v3048 = vsub.f32 %v3002, %v3047
    %v3049 = vand.u32 %v3048, 4294901760
    %v3050 = vsub.f32 %v3048, %v3049
    %v3051 = vand.u32 %v3050, 4294901760
    %3052 = vmatpush.msra.mxu0 %v3051
    %v3053 = vand.u32 %v3001, 4294901760
    %v3054 = vsub.f32 %v3001, %v3053
    %v3055 = vand.u32 %v3054, 4294901760
    %v3056 = vsub.f32 %v3054, %v3055
    %v3057 = vand.u32 %v3056, 4294901760
    %3058 = vmatpush.msra.mxu0 %v3057
    %v3059 = vand.u32 %v3000, 4294901760
    %v3060 = vsub.f32 %v3000, %v3059
    %v3061 = vand.u32 %v3060, 4294901760
    %v3062 = vsub.f32 %v3060, %v3061
    %v3063 = vand.u32 %v3062, 4294901760
    %3064 = vmatpush.msra.mxu0 %v3063
    %v3065 = vand.u32 %v2999, 4294901760
    %v3066 = vsub.f32 %v2999, %v3065
    %v3067 = vand.u32 %v3066, 4294901760
    %v3068 = vsub.f32 %v3066, %v3067
    %v3069 = vand.u32 %v3068, 4294901760
    %3070 = vmatpush.msra.mxu0 %v3069
    %v3071 = vand.u32 %v3004, 4294901760
    %3072 = vmatmul.f32.gmra.mxu0 %v3071
    %v3073 = vpop.f32.mrf.mxu0
    %v3074 = vadd.f32 %v3033, %v3073
    %3075 = vdwg.mxu0
    %3076 = vmatpush.msra.mxu0 0.0
    %3077 = vmatpush.msra.mxu0 0.0
    %3078 = vmatpush.msra.mxu0 0.0
    %3079 = vmatpush.msra.mxu0 0.0
    %3080 = vmatpush.msra.mxu0 0.0
    %3081 = vmatpush.msra.mxu0 0.0
    %3082 = vmatpush.msra.mxu0 0.0
    %3083 = vmatpush.msra.mxu0 0.0
    %3084 = vmatpush.msra.mxu0 0.0
    %3085 = vmatpush.msra.mxu0 0.0
    %3086 = vmatpush.msra.mxu0 0.0
    %3087 = vmatpush.msra.mxu0 0.0
    %v3088 = vand.u32 %v3002, 4294901760
    %v3089 = vsub.f32 %v3002, %v3088
    %3090 = vmatpush.msra.mxu0 %v3089
    %v3091 = vand.u32 %v3001, 4294901760
    %v3092 = vsub.f32 %v3001, %v3091
    %3093 = vmatpush.msra.mxu0 %v3092
    %v3094 = vand.u32 %v3000, 4294901760
    %v3095 = vsub.f32 %v3000, %v3094
    %3096 = vmatpush.msra.mxu0 %v3095
    %v3097 = vand.u32 %v2999, 4294901760
    %v3098 = vsub.f32 %v2999, %v3097
    %3099 = vmatpush.msra.mxu0 %v3098
    %v3100 = vand.u32 %v3004, 4294901760
    %v3101 = vsub.f32 %v3004, %v3100
    %3102 = vmatmul.f32.gmra.mxu0 %v3101
    %v3103 = vpop.f32.mrf.mxu0
    %v3104 = vadd.f32 %v3074, %v3103
    %3105 = vdwg.mxu0
    %3106 = vmatpush.msra.mxu0 0.0
    %3107 = vmatpush.msra.mxu0 0.0
    %3108 = vmatpush.msra.mxu0 0.0
    %3109 = vmatpush.msra.mxu0 0.0
    %3110 = vmatpush.msra.mxu0 0.0
    %3111 = vmatpush.msra.mxu0 0.0
    %3112 = vmatpush.msra.mxu0 0.0
    %3113 = vmatpush.msra.mxu0 0.0
    %3114 = vmatpush.msra.mxu0 0.0
    %3115 = vmatpush.msra.mxu0 0.0
    %3116 = vmatpush.msra.mxu0 0.0
    %3117 = vmatpush.msra.mxu0 0.0
    %v3118 = vand.u32 %v3002, 4294901760
    %3119 = vmatpush.msra.mxu0 %v3118
    %v3120 = vand.u32 %v3001, 4294901760
    %3121 = vmatpush.msra.mxu0 %v3120
    %v3122 = vand.u32 %v3000, 4294901760
    %3123 = vmatpush.msra.mxu0 %v3122
    %v3124 = vand.u32 %v2999, 4294901760
    %3125 = vmatpush.msra.mxu0 %v3124
    %v3126 = vand.u32 %v3004, 4294901760
    %v3127 = vsub.f32 %v3004, %v3126
    %v3128 = vand.u32 %v3127, 4294901760
    %3129 = vmatmul.f32.gmra.mxu0 %v3128
    %v3130 = vpop.f32.mrf.mxu0
    %v3131 = vadd.f32 %v3104, %v3130
    %3132 = vdwg.mxu0
    %3133 = vmatpush.msra.mxu0 0.0
    %3134 = vmatpush.msra.mxu0 0.0
    %3135 = vmatpush.msra.mxu0 0.0
    %3136 = vmatpush.msra.mxu0 0.0
    %3137 = vmatpush.msra.mxu0 0.0
    %3138 = vmatpush.msra.mxu0 0.0
    %3139 = vmatpush.msra.mxu0 0.0
    %3140 = vmatpush.msra.mxu0 0.0
    %3141 = vmatpush.msra.mxu0 0.0
    %3142 = vmatpush.msra.mxu0 0.0
    %3143 = vmatpush.msra.mxu0 0.0
    %3144 = vmatpush.msra.mxu0 0.0
    %v3145 = vand.u32 %v3002, 4294901760
    %v3146 = vsub.f32 %v3002, %v3145
    %v3147 = vand.u32 %v3146, 4294901760
    %3148 = vmatpush.msra.mxu0 %v3147
    %v3149 = vand.u32 %v3001, 4294901760
    %v3150 = vsub.f32 %v3001, %v3149
    %v3151 = vand.u32 %v3150, 4294901760
    %3152 = vmatpush.msra.mxu0 %v3151
    %v3153 = vand.u32 %v3000, 4294901760
    %v3154 = vsub.f32 %v3000, %v3153
    %v3155 = vand.u32 %v3154, 4294901760
    %3156 = vmatpush.msra.mxu0 %v3155
    %v3157 = vand.u32 %v2999, 4294901760
    %v3158 = vsub.f32 %v2999, %v3157
    %v3159 = vand.u32 %v3158, 4294901760
    %3160 = vmatpush.msra.mxu0 %v3159
    %v3161 = vand.u32 %v3004, 4294901760
    %3162 = vmatmul.f32.gmra.mxu0 %v3161
    %v3163 = vpop.f32.mrf.mxu0
    %v3164 = vadd.f32 %v3131, %v3163
    %3165 = vdwg.mxu0
    %3166 = vmatpush.msra.mxu0 0.0
    %3167 = vmatpush.msra.mxu0 0.0
    %3168 = vmatpush.msra.mxu0 0.0
    %3169 = vmatpush.msra.mxu0 0.0
    %3170 = vmatpush.msra.mxu0 0.0
    %3171 = vmatpush.msra.mxu0 0.0
    %3172 = vmatpush.msra.mxu0 0.0
    %3173 = vmatpush.msra.mxu0 0.0
    %3174 = vmatpush.msra.mxu0 0.0
    %3175 = vmatpush.msra.mxu0 0.0
    %3176 = vmatpush.msra.mxu0 0.0
    %3177 = vmatpush.msra.mxu0 0.0
    %v3178 = vand.u32 %v3002, 4294901760
    %3179 = vmatpush.msra.mxu0 %v3178
    %v3180 = vand.u32 %v3001, 4294901760
    %3181 = vmatpush.msra.mxu0 %v3180
    %v3182 = vand.u32 %v3000, 4294901760
    %3183 = vmatpush.msra.mxu0 %v3182
    %v3184 = vand.u32 %v2999, 4294901760
    %3185 = vmatpush.msra.mxu0 %v3184
    %v3186 = vand.u32 %v3004, 4294901760
    %3187 = vmatmul.f32.gmra.mxu0 %v3186
    %v3188 = vpop.f32.mrf.mxu0
    %v3189 = vadd.f32 %v3164, %v3188
    %3190 = vdwg.mxu0
    %v3192 = vsel %vm1840, %v2523, 0
    %3194 = vmatpush.msra.mxu0 0.0
    %3195 = vmatpush.msra.mxu0 0.0
    %3196 = vmatpush.msra.mxu0 0.0
    %3197 = vmatpush.msra.mxu0 0.0
    %3198 = vmatpush.msra.mxu0 0.0
    %3199 = vmatpush.msra.mxu0 0.0
    %3200 = vmatpush.msra.mxu0 0.0
    %3201 = vmatpush.msra.mxu0 0.0
    %3202 = vmatpush.msra.mxu0 0.0
    %3203 = vmatpush.msra.mxu0 0.0
    %3204 = vmatpush.msra.mxu0 0.0
    %3205 = vmatpush.msra.mxu0 0.0
    %v3206 = vand.u32 %v2998, 4294901760
    %3207 = vmatpush.msra.mxu0 %v3206
    %v3208 = vand.u32 %v2997, 4294901760
    %3209 = vmatpush.msra.mxu0 %v3208
    %v3210 = vand.u32 %v2996, 4294901760
    %3211 = vmatpush.msra.mxu0 %v3210
    %v3212 = vand.u32 %v2995, 4294901760
    %3213 = vmatpush.msra.mxu0 %v3212
    %v3214 = vand.u32 %v3192, 4294901760
    %v3215 = vsub.f32 %v3192, %v3214
    %v3216 = vand.u32 %v3215, 4294901760
    %v3217 = vsub.f32 %v3215, %v3216
    %v3218 = vand.u32 %v3217, 4294901760
    %3219 = vmatmul.f32.gmra.mxu0 %v3218
    %v3220 = vpop.f32.mrf.mxu0
    %v3221 = vadd.f32 %v3189, %v3220
    %3222 = vdwg.mxu0
    %3223 = vmatpush.msra.mxu0 0.0
    %3224 = vmatpush.msra.mxu0 0.0
    %3225 = vmatpush.msra.mxu0 0.0
    %3226 = vmatpush.msra.mxu0 0.0
    %3227 = vmatpush.msra.mxu0 0.0
    %3228 = vmatpush.msra.mxu0 0.0
    %3229 = vmatpush.msra.mxu0 0.0
    %3230 = vmatpush.msra.mxu0 0.0
    %3231 = vmatpush.msra.mxu0 0.0
    %3232 = vmatpush.msra.mxu0 0.0
    %3233 = vmatpush.msra.mxu0 0.0
    %3234 = vmatpush.msra.mxu0 0.0
    %v3235 = vand.u32 %v2998, 4294901760
    %v3236 = vsub.f32 %v2998, %v3235
    %v3237 = vand.u32 %v3236, 4294901760
    %v3238 = vsub.f32 %v3236, %v3237
    %v3239 = vand.u32 %v3238, 4294901760
    %3240 = vmatpush.msra.mxu0 %v3239
    %v3241 = vand.u32 %v2997, 4294901760
    %v3242 = vsub.f32 %v2997, %v3241
    %v3243 = vand.u32 %v3242, 4294901760
    %v3244 = vsub.f32 %v3242, %v3243
    %v3245 = vand.u32 %v3244, 4294901760
    %3246 = vmatpush.msra.mxu0 %v3245
    %v3247 = vand.u32 %v2996, 4294901760
    %v3248 = vsub.f32 %v2996, %v3247
    %v3249 = vand.u32 %v3248, 4294901760
    %v3250 = vsub.f32 %v3248, %v3249
    %v3251 = vand.u32 %v3250, 4294901760
    %3252 = vmatpush.msra.mxu0 %v3251
    %v3253 = vand.u32 %v2995, 4294901760
    %v3254 = vsub.f32 %v2995, %v3253
    %v3255 = vand.u32 %v3254, 4294901760
    %v3256 = vsub.f32 %v3254, %v3255
    %v3257 = vand.u32 %v3256, 4294901760
    %3258 = vmatpush.msra.mxu0 %v3257
    %v3259 = vand.u32 %v3192, 4294901760
    %3260 = vmatmul.f32.gmra.mxu0 %v3259
    %v3261 = vpop.f32.mrf.mxu0
    %v3262 = vadd.f32 %v3221, %v3261
    %3263 = vdwg.mxu0
    %3264 = vmatpush.msra.mxu0 0.0
    %3265 = vmatpush.msra.mxu0 0.0
    %3266 = vmatpush.msra.mxu0 0.0
    %3267 = vmatpush.msra.mxu0 0.0
    %3268 = vmatpush.msra.mxu0 0.0
    %3269 = vmatpush.msra.mxu0 0.0
    %3270 = vmatpush.msra.mxu0 0.0
    %3271 = vmatpush.msra.mxu0 0.0
    %3272 = vmatpush.msra.mxu0 0.0
    %3273 = vmatpush.msra.mxu0 0.0
    %3274 = vmatpush.msra.mxu0 0.0
    %3275 = vmatpush.msra.mxu0 0.0
    %v3276 = vand.u32 %v2998, 4294901760
    %v3277 = vsub.f32 %v2998, %v3276
    %3278 = vmatpush.msra.mxu0 %v3277
    %v3279 = vand.u32 %v2997, 4294901760
    %v3280 = vsub.f32 %v2997, %v3279
    %3281 = vmatpush.msra.mxu0 %v3280
    %v3282 = vand.u32 %v2996, 4294901760
    %v3283 = vsub.f32 %v2996, %v3282
    %3284 = vmatpush.msra.mxu0 %v3283
    %v3285 = vand.u32 %v2995, 4294901760
    %v3286 = vsub.f32 %v2995, %v3285
    %3287 = vmatpush.msra.mxu0 %v3286
    %v3288 = vand.u32 %v3192, 4294901760
    %v3289 = vsub.f32 %v3192, %v3288
    %3290 = vmatmul.f32.gmra.mxu0 %v3289
    %v3291 = vpop.f32.mrf.mxu0
    %v3292 = vadd.f32 %v3262, %v3291
    %3293 = vdwg.mxu0
    %3294 = vmatpush.msra.mxu0 0.0
    %3295 = vmatpush.msra.mxu0 0.0
    %3296 = vmatpush.msra.mxu0 0.0
    %3297 = vmatpush.msra.mxu0 0.0
    %3298 = vmatpush.msra.mxu0 0.0
    %3299 = vmatpush.msra.mxu0 0.0
    %3300 = vmatpush.msra.mxu0 0.0
    %3301 = vmatpush.msra.mxu0 0.0
    %3302 = vmatpush.msra.mxu0 0.0
    %3303 = vmatpush.msra.mxu0 0.0
    %3304 = vmatpush.msra.mxu0 0.0
    %3305 = vmatpush.msra.mxu0 0.0
    %v3306 = vand.u32 %v2998, 4294901760
    %3307 = vmatpush.msra.mxu0 %v3306
    %v3308 = vand.u32 %v2997, 4294901760
    %3309 = vmatpush.msra.mxu0 %v3308
    %v3310 = vand.u32 %v2996, 4294901760
    %3311 = vmatpush.msra.mxu0 %v3310
    %v3312 = vand.u32 %v2995, 4294901760
    %3313 = vmatpush.msra.mxu0 %v3312
    %v3314 = vand.u32 %v3192, 4294901760
    %v3315 = vsub.f32 %v3192, %v3314
    %v3316 = vand.u32 %v3315, 4294901760
    %3317 = vmatmul.f32.gmra.mxu0 %v3316
    %v3318 = vpop.f32.mrf.mxu0
    %v3319 = vadd.f32 %v3292, %v3318
    %3320 = vdwg.mxu0
    %3321 = vmatpush.msra.mxu0 0.0
    %3322 = vmatpush.msra.mxu0 0.0
    %3323 = vmatpush.msra.mxu0 0.0
    %3324 = vmatpush.msra.mxu0 0.0
    %3325 = vmatpush.msra.mxu0 0.0
    %3326 = vmatpush.msra.mxu0 0.0
    %3327 = vmatpush.msra.mxu0 0.0
    %3328 = vmatpush.msra.mxu0 0.0
    %3329 = vmatpush.msra.mxu0 0.0
    %3330 = vmatpush.msra.mxu0 0.0
    %3331 = vmatpush.msra.mxu0 0.0
    %3332 = vmatpush.msra.mxu0 0.0
    %v3333 = vand.u32 %v2998, 4294901760
    %v3334 = vsub.f32 %v2998, %v3333
    %v3335 = vand.u32 %v3334, 4294901760
    %3336 = vmatpush.msra.mxu0 %v3335
    %v3337 = vand.u32 %v2997, 4294901760
    %v3338 = vsub.f32 %v2997, %v3337
    %v3339 = vand.u32 %v3338, 4294901760
    %3340 = vmatpush.msra.mxu0 %v3339
    %v3341 = vand.u32 %v2996, 4294901760
    %v3342 = vsub.f32 %v2996, %v3341
    %v3343 = vand.u32 %v3342, 4294901760
    %3344 = vmatpush.msra.mxu0 %v3343
    %v3345 = vand.u32 %v2995, 4294901760
    %v3346 = vsub.f32 %v2995, %v3345
    %v3347 = vand.u32 %v3346, 4294901760
    %3348 = vmatpush.msra.mxu0 %v3347
    %v3349 = vand.u32 %v3192, 4294901760
    %3350 = vmatmul.f32.gmra.mxu0 %v3349
    %v3351 = vpop.f32.mrf.mxu0
    %v3352 = vadd.f32 %v3319, %v3351
    %3353 = vdwg.mxu0
    %3354 = vmatpush.msra.mxu0 0.0
    %3355 = vmatpush.msra.mxu0 0.0
    %3356 = vmatpush.msra.mxu0 0.0
    %3357 = vmatpush.msra.mxu0 0.0
    %3358 = vmatpush.msra.mxu0 0.0
    %3359 = vmatpush.msra.mxu0 0.0
    %3360 = vmatpush.msra.mxu0 0.0
    %3361 = vmatpush.msra.mxu0 0.0
    %3362 = vmatpush.msra.mxu0 0.0
    %3363 = vmatpush.msra.mxu0 0.0
    %3364 = vmatpush.msra.mxu0 0.0
    %3365 = vmatpush.msra.mxu0 0.0
    %v3366 = vand.u32 %v2998, 4294901760
    %3367 = vmatpush.msra.mxu0 %v3366
    %v3368 = vand.u32 %v2997, 4294901760
    %3369 = vmatpush.msra.mxu0 %v3368
    %v3370 = vand.u32 %v2996, 4294901760
    %3371 = vmatpush.msra.mxu0 %v3370
    %v3372 = vand.u32 %v2995, 4294901760
    %3373 = vmatpush.msra.mxu0 %v3372
    %v3374 = vand.u32 %v3192, 4294901760
    %3375 = vmatmul.f32.gmra.mxu0 %v3374
    %v3376 = vpop.f32.mrf.mxu0
    %v3377 = vadd.f32 %v3352, %v3376
    %3378 = vdwg.mxu0
    %v3379 = vld [vmem:[#allocation2 + $0x378] sm:$0x1]
    %v3380 = vperm.slane %v3379, 0
    %v3381 = vadd.f32 %v3377, %v3380
    %v3382 = vmul.f32 %v3381, 0.5
    %v3383 = vmul.f32 %v3381, %v690
    %v3384 = vmul.f32 %v3383, %v3383
    %v3385 = vmin.f32 16.0, %v3384
    %v3386 = vmul.f32 %v3385, 2.1237322e-06
    %v3387 = vadd.f32 %v3386, 0.00028619796
    %v3388 = vmul.f32 %v3385, %v3387
    %v3389 = vadd.f32 %v3388, 0.0036580483
    %v3390 = vmul.f32 %v3385, %v3389
    %v3391 = vadd.f32 %v3390, 0.05243302
    %v3392 = vmul.f32 %v3385, %v3391
    %v3393 = vadd.f32 %v3392, 0.18741608
    %v3394 = vmul.f32 %v3385, %v3393
    %v3395 = vadd.f32 %v3394, 1.1283791
    %v3396 = vmul.f32 %v3383, %v3395
    %v3397 = vmul.f32 %v3385, 3.8918573e-05
    %v3398 = vadd.f32 %v3397, 0.001143296
    %v3399 = vmul.f32 %v3385, %v3398
    %v3400 = vadd.f32 %v3399, 0.014752088
    %v3401 = vmul.f32 %v3385, %v3400
    %v3402 = vadd.f32 %v3401, 0.112945676
    %v3403 = vmul.f32 %v3385, %v3402
    %v3404 = vadd.f32 %v3403, 0.4994258
    %v3405 = vmul.f32 %v3385, %v3404
    %v3406 = vadd.f32 %v3405, 1.0
    %v3407 = vrcp.pop %v3406
    %v3408 = vmul.f32 %v3406, %v3407
    %v3409 = vsub.f32 1.0, %v3408
    %v3410 = vmul.f32 %v3407, %v3409
    %v3411 = vadd.f32 %v3407, %v3410
    %vm3412 = vweird.f32 %v3406
    %vm3413 = vweird.f32 %v3407
    %vm3414 = vmor %vm3412, %vm3413
    %v3415 = vsel %vm3414, %v3407, %v3411
    %v3416 = vand.u32 2147483647, %v3406
    %vm3417 = vcmp.eq.f32.partialorder %v3416, 8.507059e+37
    %v3418 = vand.u32 %v3406, 2147483648
    %v3419 = vor.u32 1.1754944e-38, %v3418
    %v3420 = vsel %vm3417, %v3419, %v3415
    %v3421 = vmul.f32 %v3396, %v3420
    %v3422 = vmin.f32 %v3421, 1.0
    %v3423 = vmax.f32 %v3422, -1.0
    %v3424 = vadd.f32 %v3423, 1.0
    %v3425 = vmul.f32 %v3382, %v3424
    %v3426 = vld [vmem:[#allocation2 + $0x1a8] sm:$0x7]
    %v3427 = vld [vmem:[#allocation2 + $0x188] sm:$0xff]
    %v3428 = vld [vmem:[#allocation2 + $0x190] sm:$0xff]
    %v3429 = vld [vmem:[#allocation2 + $0x198] sm:$0xff]
    %v3430 = vld [vmem:[#allocation2 + $0x1a0] sm:$0xff]
    %v3431 = vperm.slane %v3426, 0
    %v3433 = vsel %vm1840, %v3425, 0
    %3435 = vmatpush.msra.mxu0 0.0
    %3436 = vmatpush.msra.mxu0 0.0
    %3437 = vmatpush.msra.mxu0 0.0
    %3438 = vmatpush.msra.mxu0 0.0
    %3439 = vmatpush.msra.mxu0 0.0
    %3440 = vmatpush.msra.mxu0 0.0
    %3441 = vmatpush.msra.mxu0 0.0
    %3442 = vmatpush.msra.mxu0 0.0
    %3443 = vmatpush.msra.mxu0 0.0
    %3444 = vmatpush.msra.mxu0 0.0
    %3445 = vmatpush.msra.mxu0 0.0
    %3446 = vmatpush.msra.mxu0 0.0
    %v3447 = vand.u32 %v3430, 4294901760
    %3448 = vmatpush.msra.mxu0 %v3447
    %v3449 = vand.u32 %v3429, 4294901760
    %3450 = vmatpush.msra.mxu0 %v3449
    %v3451 = vand.u32 %v3428, 4294901760
    %3452 = vmatpush.msra.mxu0 %v3451
    %v3453 = vand.u32 %v3427, 4294901760
    %3454 = vmatpush.msra.mxu0 %v3453
    %v3455 = vand.u32 %v3433, 4294901760
    %v3456 = vsub.f32 %v3433, %v3455
    %v3457 = vand.u32 %v3456, 4294901760
    %v3458 = vsub.f32 %v3456, %v3457
    %v3459 = vand.u32 %v3458, 4294901760
    %3460 = vmatmul.f32.gmra.mxu0 %v3459
    %v3461 = vpop.f32.mrf.mxu0
    %v3462 = vadd.f32 %v3431, %v3461
    %3463 = vdwg.mxu0
    %3464 = vmatpush.msra.mxu0 0.0
    %3465 = vmatpush.msra.mxu0 0.0
    %3466 = vmatpush.msra.mxu0 0.0
    %3467 = vmatpush.msra.mxu0 0.0
    %3468 = vmatpush.msra.mxu0 0.0
    %3469 = vmatpush.msra.mxu0 0.0
    %3470 = vmatpush.msra.mxu0 0.0
    %3471 = vmatpush.msra.mxu0 0.0
    %3472 = vmatpush.msra.mxu0 0.0
    %3473 = vmatpush.msra.mxu0 0.0
    %3474 = vmatpush.msra.mxu0 0.0
    %3475 = vmatpush.msra.mxu0 0.0
    %v3476 = vand.u32 %v3430, 4294901760
    %v3477 = vsub.f32 %v3430, %v3476
    %v3478 = vand.u32 %v3477, 4294901760
    %v3479 = vsub.f32 %v3477, %v3478
    %v3480 = vand.u32 %v3479, 4294901760
    %3481 = vmatpush.msra.mxu0 %v3480
    %v3482 = vand.u32 %v3429, 4294901760
    %v3483 = vsub.f32 %v3429, %v3482
    %v3484 = vand.u32 %v3483, 4294901760
    %v3485 = vsub.f32 %v3483, %v3484
    %v3486 = vand.u32 %v3485, 4294901760
    %3487 = vmatpush.msra.mxu0 %v3486
    %v3488 = vand.u32 %v3428, 4294901760
    %v3489 = vsub.f32 %v3428, %v3488
    %v3490 = vand.u32 %v3489, 4294901760
    %v3491 = vsub.f32 %v3489, %v3490
    %v3492 = vand.u32 %v3491, 4294901760
    %3493 = vmatpush.msra.mxu0 %v3492
    %v3494 = vand.u32 %v3427, 4294901760
    %v3495 = vsub.f32 %v3427, %v3494
    %v3496 = vand.u32 %v3495, 4294901760
    %v3497 = vsub.f32 %v3495, %v3496
    %v3498 = vand.u32 %v3497, 4294901760
    %3499 = vmatpush.msra.mxu0 %v3498
    %v3500 = vand.u32 %v3433, 4294901760
    %3501 = vmatmul.f32.gmra.mxu0 %v3500
    %v3502 = vpop.f32.mrf.mxu0
    %v3503 = vadd.f32 %v3462, %v3502
    %3504 = vdwg.mxu0
    %3505 = vmatpush.msra.mxu0 0.0
    %3506 = vmatpush.msra.mxu0 0.0
    %3507 = vmatpush.msra.mxu0 0.0
    %3508 = vmatpush.msra.mxu0 0.0
    %3509 = vmatpush.msra.mxu0 0.0
    %3510 = vmatpush.msra.mxu0 0.0
    %3511 = vmatpush.msra.mxu0 0.0
    %3512 = vmatpush.msra.mxu0 0.0
    %3513 = vmatpush.msra.mxu0 0.0
    %3514 = vmatpush.msra.mxu0 0.0
    %3515 = vmatpush.msra.mxu0 0.0
    %3516 = vmatpush.msra.mxu0 0.0
    %v3517 = vand.u32 %v3430, 4294901760
    %v3518 = vsub.f32 %v3430, %v3517
    %3519 = vmatpush.msra.mxu0 %v3518
    %v3520 = vand.u32 %v3429, 4294901760
    %v3521 = vsub.f32 %v3429, %v3520
    %3522 = vmatpush.msra.mxu0 %v3521
    %v3523 = vand.u32 %v3428, 4294901760
    %v3524 = vsub.f32 %v3428, %v3523
    %3525 = vmatpush.msra.mxu0 %v3524
    %v3526 = vand.u32 %v3427, 4294901760
    %v3527 = vsub.f32 %v3427, %v3526
    %3528 = vmatpush.msra.mxu0 %v3527
    %v3529 = vand.u32 %v3433, 4294901760
    %v3530 = vsub.f32 %v3433, %v3529
    %3531 = vmatmul.f32.gmra.mxu0 %v3530
    %v3532 = vpop.f32.mrf.mxu0
    %v3533 = vadd.f32 %v3503, %v3532
    %3534 = vdwg.mxu0
    %3535 = vmatpush.msra.mxu0 0.0
    %3536 = vmatpush.msra.mxu0 0.0
    %3537 = vmatpush.msra.mxu0 0.0
    %3538 = vmatpush.msra.mxu0 0.0
    %3539 = vmatpush.msra.mxu0 0.0
    %3540 = vmatpush.msra.mxu0 0.0
    %3541 = vmatpush.msra.mxu0 0.0
    %3542 = vmatpush.msra.mxu0 0.0
    %3543 = vmatpush.msra.mxu0 0.0
    %3544 = vmatpush.msra.mxu0 0.0
    %3545 = vmatpush.msra.mxu0 0.0
    %3546 = vmatpush.msra.mxu0 0.0
    %v3547 = vand.u32 %v3430, 4294901760
    %3548 = vmatpush.msra.mxu0 %v3547
    %v3549 = vand.u32 %v3429, 4294901760
    %3550 = vmatpush.msra.mxu0 %v3549
    %v3551 = vand.u32 %v3428, 4294901760
    %3552 = vmatpush.msra.mxu0 %v3551
    %v3553 = vand.u32 %v3427, 4294901760
    %3554 = vmatpush.msra.mxu0 %v3553
    %v3555 = vand.u32 %v3433, 4294901760
    %v3556 = vsub.f32 %v3433, %v3555
    %v3557 = vand.u32 %v3556, 4294901760
    %3558 = vmatmul.f32.gmra.mxu0 %v3557
    %v3559 = vpop.f32.mrf.mxu0
    %v3560 = vadd.f32 %v3533, %v3559
    %3561 = vdwg.mxu0
    %3562 = vmatpush.msra.mxu0 0.0
    %3563 = vmatpush.msra.mxu0 0.0
    %3564 = vmatpush.msra.mxu0 0.0
    %3565 = vmatpush.msra.mxu0 0.0
    %3566 = vmatpush.msra.mxu0 0.0
    %3567 = vmatpush.msra.mxu0 0.0
    %3568 = vmatpush.msra.mxu0 0.0
    %3569 = vmatpush.msra.mxu0 0.0
    %3570 = vmatpush.msra.mxu0 0.0
    %3571 = vmatpush.msra.mxu0 0.0
    %3572 = vmatpush.msra.mxu0 0.0
    %3573 = vmatpush.msra.mxu0 0.0
    %v3574 = vand.u32 %v3430, 4294901760
    %v3575 = vsub.f32 %v3430, %v3574
    %v3576 = vand.u32 %v3575, 4294901760
    %3577 = vmatpush.msra.mxu0 %v3576
    %v3578 = vand.u32 %v3429, 4294901760
    %v3579 = vsub.f32 %v3429, %v3578
    %v3580 = vand.u32 %v3579, 4294901760
    %3581 = vmatpush.msra.mxu0 %v3580
    %v3582 = vand.u32 %v3428, 4294901760
    %v3583 = vsub.f32 %v3428, %v3582
    %v3584 = vand.u32 %v3583, 4294901760
    %3585 = vmatpush.msra.mxu0 %v3584
    %v3586 = vand.u32 %v3427, 4294901760
    %v3587 = vsub.f32 %v3427, %v3586
    %v3588 = vand.u32 %v3587, 4294901760
    %3589 = vmatpush.msra.mxu0 %v3588
    %v3590 = vand.u32 %v3433, 4294901760
    %3591 = vmatmul.f32.gmra.mxu0 %v3590
    %v3592 = vpop.f32.mrf.mxu0
    %v3593 = vadd.f32 %v3560, %v3592
    %3594 = vdwg.mxu0
    %3595 = vmatpush.msra.mxu0 0.0
    %3596 = vmatpush.msra.mxu0 0.0
    %3597 = vmatpush.msra.mxu0 0.0
    %3598 = vmatpush.msra.mxu0 0.0
    %3599 = vmatpush.msra.mxu0 0.0
    %3600 = vmatpush.msra.mxu0 0.0
    %3601 = vmatpush.msra.mxu0 0.0
    %3602 = vmatpush.msra.mxu0 0.0
    %3603 = vmatpush.msra.mxu0 0.0
    %3604 = vmatpush.msra.mxu0 0.0
    %3605 = vmatpush.msra.mxu0 0.0
    %3606 = vmatpush.msra.mxu0 0.0
    %v3607 = vand.u32 %v3430, 4294901760
    %3608 = vmatpush.msra.mxu0 %v3607
    %v3609 = vand.u32 %v3429, 4294901760
    %3610 = vmatpush.msra.mxu0 %v3609
    %v3611 = vand.u32 %v3428, 4294901760
    %3612 = vmatpush.msra.mxu0 %v3611
    %v3613 = vand.u32 %v3427, 4294901760
    %3614 = vmatpush.msra.mxu0 %v3613
    %v3615 = vand.u32 %v3433, 4294901760
    %3616 = vmatmul.f32.gmra.mxu0 %v3615
    %v3617 = vpop.f32.mrf.mxu0
    %v3618 = vadd.f32 %v3593, %v3617
    %3619 = vdwg.mxu0
    %v3620 = vsel %vm1840, %v3618, 0.0
    %v3621 = vrot.slane %v3620, 4
    %v3622 = vadd.f32 %v3620, %v3621
    %v3623 = vrot.slane %v3622, 2
    %v3624 = vadd.f32 %v3622, %v3623
    %v3625 = vrot.slane %v3624, 1
    %v3626 = vadd.f32 %v3624, %v3625
    %v3627 = vmul.f32 %v3626, %v655
    %v3628 = vsub.f32 %v3618, %v3627
    %v3629 = vmul.f32 %v3628, %v3628
    %v3630 = vsel %vm1840, %v3629, 0.0
    %v3631 = vrot.slane %v3630, 4
    %v3632 = vadd.f32 %v3630, %v3631
    %v3633 = vrot.slane %v3632, 2
    %v3634 = vadd.f32 %v3632, %v3633
    %v3635 = vrot.slane %v3634, 1
    %v3636 = vadd.f32 %v3634, %v3635
    %v3637 = vmul.f32 %v3636, %v655
    %v3638 = vadd.f32 %v3637, 1e-05
    %v3639 = vrsqrt.pop %v3638
    %v3640 = vmul.f32 %v3639, %v3638
    %v3641 = vmul.f32 %v3640, %v3639
    %v3642 = vmul.f32 0.5, %v3641
    %v3643 = vsub.f32 1.5, %v3642
    %v3644 = vmul.f32 %v3639, %v3643
    %vm3645 = vweird.f32 %v3638
    %vm3646 = vweird.f32 %v3639
    %vm3647 = vmor %vm3645, %vm3646
    %v3648 = vsel %vm3647, %v3639, %v3644
    %v3649 = vmul.f32 %v3628, %v3648
    %v3650 = vperm.slane %v3426, 1
    %v3651 = vmul.f32 %v3649, %v3650
    %v3652 = vperm.slane %v3426, 2
    %v3653 = vadd.f32 %v3651, %v3652
    %v3654 = vmul.f32 %v3653, 0.5
    %v3655 = vmul.f32 %v3653, %v690
    %v3656 = vmul.f32 %v3655, %v3655
    %v3657 = vmin.f32 16.0, %v3656
    %v3658 = vmul.f32 %v3657, 2.1237322e-06
    %v3659 = vadd.f32 %v3658, 0.00028619796
    %v3660 = vmul.f32 %v3657, %v3659
    %v3661 = vadd.f32 %v3660, 0.0036580483
    %v3662 = vmul.f32 %v3657, %v3661
    %v3663 = vadd.f32 %v3662, 0.05243302
    %v3664 = vmul.f32 %v3657, %v3663
    %v3665 = vadd.f32 %v3664, 0.18741608
    %v3666 = vmul.f32 %v3657, %v3665
    %v3667 = vadd.f32 %v3666, 1.1283791
    %v3668 = vmul.f32 %v3655, %v3667
    %v3669 = vmul.f32 %v3657, 3.8918573e-05
    %v3670 = vadd.f32 %v3669, 0.001143296
    %v3671 = vmul.f32 %v3657, %v3670
    %v3672 = vadd.f32 %v3671, 0.014752088
    %v3673 = vmul.f32 %v3657, %v3672
    %v3674 = vadd.f32 %v3673, 0.112945676
    %v3675 = vmul.f32 %v3657, %v3674
    %v3676 = vadd.f32 %v3675, 0.4994258
    %v3677 = vmul.f32 %v3657, %v3676
    %v3678 = vadd.f32 %v3677, 1.0
    %v3679 = vrcp.pop %v3678
    %v3680 = vmul.f32 %v3678, %v3679
    %v3681 = vsub.f32 1.0, %v3680
    %v3682 = vmul.f32 %v3679, %v3681
    %v3683 = vadd.f32 %v3679, %v3682
    %vm3684 = vweird.f32 %v3678
    %vm3685 = vweird.f32 %v3679
    %vm3686 = vmor %vm3684, %vm3685
    %v3687 = vsel %vm3686, %v3679, %v3683
    %v3688 = vand.u32 2147483647, %v3678
    %vm3689 = vcmp.eq.f32.partialorder %v3688, 8.507059e+37
    %v3690 = vand.u32 %v3678, 2147483648
    %v3691 = vor.u32 1.1754944e-38, %v3690
    %v3692 = vsel %vm3689, %v3691, %v3687
    %v3693 = vmul.f32 %v3668, %v3692
    %v3694 = vmin.f32 %v3693, 1.0
    %v3695 = vmax.f32 %v3694, -1.0
    %v3696 = vadd.f32 %v3695, 1.0
    %v3697 = vmul.f32 %v3654, %v3696
    %v3698 = vld [vmem:[#allocation2 + $0x1d0] sm:$0x7]
    %v3699 = vld [vmem:[#allocation2 + $0x1b0] sm:$0xff]
    %v3700 = vld [vmem:[#allocation2 + $0x1b8] sm:$0xff]
    %v3701 = vld [vmem:[#allocation2 + $0x1c0] sm:$0xff]
    %v3702 = vld [vmem:[#allocation2 + $0x1c8] sm:$0xff]
    %v3703 = vperm.slane %v3698, 0
    %v3705 = vsel %vm1840, %v3697, 0
    %3707 = vmatpush.msra.mxu0 0.0
    %3708 = vmatpush.msra.mxu0 0.0
    %3709 = vmatpush.msra.mxu0 0.0
    %3710 = vmatpush.msra.mxu0 0.0
    %3711 = vmatpush.msra.mxu0 0.0
    %3712 = vmatpush.msra.mxu0 0.0
    %3713 = vmatpush.msra.mxu0 0.0
    %3714 = vmatpush.msra.mxu0 0.0
    %3715 = vmatpush.msra.mxu0 0.0
    %3716 = vmatpush.msra.mxu0 0.0
    %3717 = vmatpush.msra.mxu0 0.0
    %3718 = vmatpush.msra.mxu0 0.0
    %v3719 = vand.u32 %v3702, 4294901760
    %3720 = vmatpush.msra.mxu0 %v3719
    %v3721 = vand.u32 %v3701, 4294901760
    %3722 = vmatpush.msra.mxu0 %v3721
    %v3723 = vand.u32 %v3700, 4294901760
    %3724 = vmatpush.msra.mxu0 %v3723
    %v3725 = vand.u32 %v3699, 4294901760
    %3726 = vmatpush.msra.mxu0 %v3725
    %v3727 = vand.u32 %v3705, 4294901760
    %v3728 = vsub.f32 %v3705, %v3727
    %v3729 = vand.u32 %v3728, 4294901760
    %v3730 = vsub.f32 %v3728, %v3729
    %v3731 = vand.u32 %v3730, 4294901760
    %3732 = vmatmul.f32.gmra.mxu0 %v3731
    %v3733 = vpop.f32.mrf.mxu0
    %v3734 = vadd.f32 %v3703, %v3733
    %3735 = vdwg.mxu0
    %3736 = vmatpush.msra.mxu0 0.0
    %3737 = vmatpush.msra.mxu0 0.0
    %3738 = vmatpush.msra.mxu0 0.0
    %3739 = vmatpush.msra.mxu0 0.0
    %3740 = vmatpush.msra.mxu0 0.0
    %3741 = vmatpush.msra.mxu0 0.0
    %3742 = vmatpush.msra.mxu0 0.0
    %3743 = vmatpush.msra.mxu0 0.0
    %3744 = vmatpush.msra.mxu0 0.0
    %3745 = vmatpush.msra.mxu0 0.0
    %3746 = vmatpush.msra.mxu0 0.0
    %3747 = vmatpush.msra.mxu0 0.0
    %v3748 = vand.u32 %v3702, 4294901760
    %v3749 = vsub.f32 %v3702, %v3748
    %v3750 = vand.u32 %v3749, 4294901760
    %v3751 = vsub.f32 %v3749, %v3750
    %v3752 = vand.u32 %v3751, 4294901760
    %3753 = vmatpush.msra.mxu0 %v3752
    %v3754 = vand.u32 %v3701, 4294901760
    %v3755 = vsub.f32 %v3701, %v3754
    %v3756 = vand.u32 %v3755, 4294901760
    %v3757 = vsub.f32 %v3755, %v3756
    %v3758 = vand.u32 %v3757, 4294901760
    %3759 = vmatpush.msra.mxu0 %v3758
    %v3760 = vand.u32 %v3700, 4294901760
    %v3761 = vsub.f32 %v3700, %v3760
    %v3762 = vand.u32 %v3761, 4294901760
    %v3763 = vsub.f32 %v3761, %v3762
    %v3764 = vand.u32 %v3763, 4294901760
    %3765 = vmatpush.msra.mxu0 %v3764
    %v3766 = vand.u32 %v3699, 4294901760
    %v3767 = vsub.f32 %v3699, %v3766
    %v3768 = vand.u32 %v3767, 4294901760
    %v3769 = vsub.f32 %v3767, %v3768
    %v3770 = vand.u32 %v3769, 4294901760
    %3771 = vmatpush.msra.mxu0 %v3770
    %v3772 = vand.u32 %v3705, 4294901760
    %3773 = vmatmul.f32.gmra.mxu0 %v3772
    %v3774 = vpop.f32.mrf.mxu0
    %v3775 = vadd.f32 %v3734, %v3774
    %3776 = vdwg.mxu0
    %3777 = vmatpush.msra.mxu0 0.0
    %3778 = vmatpush.msra.mxu0 0.0
    %3779 = vmatpush.msra.mxu0 0.0
    %3780 = vmatpush.msra.mxu0 0.0
    %3781 = vmatpush.msra.mxu0 0.0
    %3782 = vmatpush.msra.mxu0 0.0
    %3783 = vmatpush.msra.mxu0 0.0
    %3784 = vmatpush.msra.mxu0 0.0
    %3785 = vmatpush.msra.mxu0 0.0
    %3786 = vmatpush.msra.mxu0 0.0
    %3787 = vmatpush.msra.mxu0 0.0
    %3788 = vmatpush.msra.mxu0 0.0
    %v3789 = vand.u32 %v3702, 4294901760
    %v3790 = vsub.f32 %v3702, %v3789
    %3791 = vmatpush.msra.mxu0 %v3790
    %v3792 = vand.u32 %v3701, 4294901760
    %v3793 = vsub.f32 %v3701, %v3792
    %3794 = vmatpush.msra.mxu0 %v3793
    %v3795 = vand.u32 %v3700, 4294901760
    %v3796 = vsub.f32 %v3700, %v3795
    %3797 = vmatpush.msra.mxu0 %v3796
    %v3798 = vand.u32 %v3699, 4294901760
    %v3799 = vsub.f32 %v3699, %v3798
    %3800 = vmatpush.msra.mxu0 %v3799
    %v3801 = vand.u32 %v3705, 4294901760
    %v3802 = vsub.f32 %v3705, %v3801
    %3803 = vmatmul.f32.gmra.mxu0 %v3802
    %v3804 = vpop.f32.mrf.mxu0
    %v3805 = vadd.f32 %v3775, %v3804
    %3806 = vdwg.mxu0
    %3807 = vmatpush.msra.mxu0 0.0
    %3808 = vmatpush.msra.mxu0 0.0
    %3809 = vmatpush.msra.mxu0 0.0
    %3810 = vmatpush.msra.mxu0 0.0
    %3811 = vmatpush.msra.mxu0 0.0
    %3812 = vmatpush.msra.mxu0 0.0
    %3813 = vmatpush.msra.mxu0 0.0
    %3814 = vmatpush.msra.mxu0 0.0
    %3815 = vmatpush.msra.mxu0 0.0
    %3816 = vmatpush.msra.mxu0 0.0
    %3817 = vmatpush.msra.mxu0 0.0
    %3818 = vmatpush.msra.mxu0 0.0
    %v3819 = vand.u32 %v3702, 4294901760
    %3820 = vmatpush.msra.mxu0 %v3819
    %v3821 = vand.u32 %v3701, 4294901760
    %3822 = vmatpush.msra.mxu0 %v3821
    %v3823 = vand.u32 %v3700, 4294901760
    %3824 = vmatpush.msra.mxu0 %v3823
    %v3825 = vand.u32 %v3699, 4294901760
    %3826 = vmatpush.msra.mxu0 %v3825
    %v3827 = vand.u32 %v3705, 4294901760
    %v3828 = vsub.f32 %v3705, %v3827
    %v3829 = vand.u32 %v3828, 4294901760
    %3830 = vmatmul.f32.gmra.mxu0 %v3829
    %v3831 = vpop.f32.mrf.mxu0
    %v3832 = vadd.f32 %v3805, %v3831
    %3833 = vdwg.mxu0
    %3834 = vmatpush.msra.mxu0 0.0
    %3835 = vmatpush.msra.mxu0 0.0
    %3836 = vmatpush.msra.mxu0 0.0
    %3837 = vmatpush.msra.mxu0 0.0
    %3838 = vmatpush.msra.mxu0 0.0
    %3839 = vmatpush.msra.mxu0 0.0
    %3840 = vmatpush.msra.mxu0 0.0
    %3841 = vmatpush.msra.mxu0 0.0
    %3842 = vmatpush.msra.mxu0 0.0
    %3843 = vmatpush.msra.mxu0 0.0
    %3844 = vmatpush.msra.mxu0 0.0
    %3845 = vmatpush.msra.mxu0 0.0
    %v3846 = vand.u32 %v3702, 4294901760
    %v3847 = vsub.f32 %v3702, %v3846
    %v3848 = vand.u32 %v3847, 4294901760
    %3849 = vmatpush.msra.mxu0 %v3848
    %v3850 = vand.u32 %v3701, 4294901760
    %v3851 = vsub.f32 %v3701, %v3850
    %v3852 = vand.u32 %v3851, 4294901760
    %3853 = vmatpush.msra.mxu0 %v3852
    %v3854 = vand.u32 %v3700, 4294901760
    %v3855 = vsub.f32 %v3700, %v3854
    %v3856 = vand.u32 %v3855, 4294901760
    %3857 = vmatpush.msra.mxu0 %v3856
    %v3858 = vand.u32 %v3699, 4294901760
    %v3859 = vsub.f32 %v3699, %v3858
    %v3860 = vand.u32 %v3859, 4294901760
    %3861 = vmatpush.msra.mxu0 %v3860
    %v3862 = vand.u32 %v3705, 4294901760
    %3863 = vmatmul.f32.gmra.mxu0 %v3862
    %v3864 = vpop.f32.mrf.mxu0
    %v3865 = vadd.f32 %v3832, %v3864
    %3866 = vdwg.mxu0
    %3867 = vmatpush.msra.mxu0 0.0
    %3868 = vmatpush.msra.mxu0 0.0
    %3869 = vmatpush.msra.mxu0 0.0
    %3870 = vmatpush.msra.mxu0 0.0
    %3871 = vmatpush.msra.mxu0 0.0
    %3872 = vmatpush.msra.mxu0 0.0
    %3873 = vmatpush.msra.mxu0 0.0
    %3874 = vmatpush.msra.mxu0 0.0
    %3875 = vmatpush.msra.mxu0 0.0
    %3876 = vmatpush.msra.mxu0 0.0
    %3877 = vmatpush.msra.mxu0 0.0
    %3878 = vmatpush.msra.mxu0 0.0
    %v3879 = vand.u32 %v3702, 4294901760
    %3880 = vmatpush.msra.mxu0 %v3879
    %v3881 = vand.u32 %v3701, 4294901760
    %3882 = vmatpush.msra.mxu0 %v3881
    %v3883 = vand.u32 %v3700, 4294901760
    %3884 = vmatpush.msra.mxu0 %v3883
    %v3885 = vand.u32 %v3699, 4294901760
    %3886 = vmatpush.msra.mxu0 %v3885
    %v3887 = vand.u32 %v3705, 4294901760
    %3888 = vmatmul.f32.gmra.mxu0 %v3887
    %v3889 = vpop.f32.mrf.mxu0
    %v3890 = vadd.f32 %v3865, %v3889
    %3891 = vdwg.mxu0
    %v3892 = vsel %vm1840, %v3890, 0.0
    %v3893 = vrot.slane %v3892, 4
    %v3894 = vadd.f32 %v3892, %v3893
    %v3895 = vrot.slane %v3894, 2
    %v3896 = vadd.f32 %v3894, %v3895
    %v3897 = vrot.slane %v3896, 1
    %v3898 = vadd.f32 %v3896, %v3897
    %v3899 = vmul.f32 %v3898, %v655
    %v3900 = vsub.f32 %v3890, %v3899
    %v3901 = vmul.f32 %v3900, %v3900
    %v3902 = vsel %vm1840, %v3901, 0.0
    %v3903 = vrot.slane %v3902, 4
    %v3904 = vadd.f32 %v3902, %v3903
    %v3905 = vrot.slane %v3904, 2
    %v3906 = vadd.f32 %v3904, %v3905
    %v3907 = vrot.slane %v3906, 1
    %v3908 = vadd.f32 %v3906, %v3907
    %v3909 = vmul.f32 %v3908, %v655
    %v3910 = vadd.f32 %v3909, 1e-05
    %v3911 = vrsqrt.pop %v3910
    %v3912 = vmul.f32 %v3911, %v3910
    %v3913 = vmul.f32 %v3912, %v3911
    %v3914 = vmul.f32 0.5, %v3913
    %v3915 = vsub.f32 1.5, %v3914
    %v3916 = vmul.f32 %v3911, %v3915
    %vm3917 = vweird.f32 %v3910
    %vm3918 = vweird.f32 %v3911
    %vm3919 = vmor %vm3917, %vm3918
    %v3920 = vsel %vm3919, %v3911, %v3916
    %v3921 = vmul.f32 %v3900, %v3920
    %v3922 = vperm.slane %v3698, 1
    %v3923 = vmul.f32 %v3921, %v3922
    %v3924 = vperm.slane %v3698, 2
    %v3925 = vadd.f32 %v3923, %v3924
    %v3926 = vadd.f32 %v3925, %v1876
    %v3927 = vld [vmem:[#allocation2 + $0x1f8] sm:$0x7]
    %v3928 = vld [vmem:[#allocation2 + $0x1d8] sm:$0xff]
    %v3929 = vld [vmem:[#allocation2 + $0x1e0] sm:$0xff]
    %v3930 = vld [vmem:[#allocation2 + $0x1e8] sm:$0xff]
    %v3931 = vld [vmem:[#allocation2 + $0x1f0] sm:$0xff]
    %v3932 = vperm.slane %v3927, 0
    %v3934 = vsel %vm1840, %v3926, 0
    %3936 = vmatpush.msra.mxu0 0.0
    %3937 = vmatpush.msra.mxu0 0.0
    %3938 = vmatpush.msra.mxu0 0.0
    %3939 = vmatpush.msra.mxu0 0.0
    %3940 = vmatpush.msra.mxu0 0.0
    %3941 = vmatpush.msra.mxu0 0.0
    %3942 = vmatpush.msra.mxu0 0.0
    %3943 = vmatpush.msra.mxu0 0.0
    %3944 = vmatpush.msra.mxu0 0.0
    %3945 = vmatpush.msra.mxu0 0.0
    %3946 = vmatpush.msra.mxu0 0.0
    %3947 = vmatpush.msra.mxu0 0.0
    %v3948 = vand.u32 %v3931, 4294901760
    %3949 = vmatpush.msra.mxu0 %v3948
    %v3950 = vand.u32 %v3930, 4294901760
    %3951 = vmatpush.msra.mxu0 %v3950
    %v3952 = vand.u32 %v3929, 4294901760
    %3953 = vmatpush.msra.mxu0 %v3952
    %v3954 = vand.u32 %v3928, 4294901760
    %3955 = vmatpush.msra.mxu0 %v3954
    %v3956 = vand.u32 %v3934, 4294901760
    %v3957 = vsub.f32 %v3934, %v3956
    %v3958 = vand.u32 %v3957, 4294901760
    %v3959 = vsub.f32 %v3957, %v3958
    %v3960 = vand.u32 %v3959, 4294901760
    %3961 = vmatmul.f32.gmra.mxu0 %v3960
    %v3962 = vpop.f32.mrf.mxu0
    %v3963 = vadd.f32 %v3932, %v3962
    %3964 = vdwg.mxu0
    %3965 = vmatpush.msra.mxu0 0.0
    %3966 = vmatpush.msra.mxu0 0.0
    %3967 = vmatpush.msra.mxu0 0.0
    %3968 = vmatpush.msra.mxu0 0.0
    %3969 = vmatpush.msra.mxu0 0.0
    %3970 = vmatpush.msra.mxu0 0.0
    %3971 = vmatpush.msra.mxu0 0.0
    %3972 = vmatpush.msra.mxu0 0.0
    %3973 = vmatpush.msra.mxu0 0.0
    %3974 = vmatpush.msra.mxu0 0.0
    %3975 = vmatpush.msra.mxu0 0.0
    %3976 = vmatpush.msra.mxu0 0.0
    %v3977 = vand.u32 %v3931, 4294901760
    %v3978 = vsub.f32 %v3931, %v3977
    %v3979 = vand.u32 %v3978, 4294901760
    %v3980 = vsub.f32 %v3978, %v3979
    %v3981 = vand.u32 %v3980, 4294901760
    %3982 = vmatpush.msra.mxu0 %v3981
    %v3983 = vand.u32 %v3930, 4294901760
    %v3984 = vsub.f32 %v3930, %v3983
    %v3985 = vand.u32 %v3984, 4294901760
    %v3986 = vsub.f32 %v3984, %v3985
    %v3987 = vand.u32 %v3986, 4294901760
    %3988 = vmatpush.msra.mxu0 %v3987
    %v3989 = vand.u32 %v3929, 4294901760
    %v3990 = vsub.f32 %v3929, %v3989
    %v3991 = vand.u32 %v3990, 4294901760
    %v3992 = vsub.f32 %v3990, %v3991
    %v3993 = vand.u32 %v3992, 4294901760
    %3994 = vmatpush.msra.mxu0 %v3993
    %v3995 = vand.u32 %v3928, 4294901760
    %v3996 = vsub.f32 %v3928, %v3995
    %v3997 = vand.u32 %v3996, 4294901760
    %v3998 = vsub.f32 %v3996, %v3997
    %v3999 = vand.u32 %v3998, 4294901760
    %4000 = vmatpush.msra.mxu0 %v3999
    %v4001 = vand.u32 %v3934, 4294901760
    %4002 = vmatmul.f32.gmra.mxu0 %v4001
    %v4003 = vpop.f32.mrf.mxu0
    %v4004 = vadd.f32 %v3963, %v4003
    %4005 = vdwg.mxu0
    %4006 = vmatpush.msra.mxu0 0.0
    %4007 = vmatpush.msra.mxu0 0.0
    %4008 = vmatpush.msra.mxu0 0.0
    %4009 = vmatpush.msra.mxu0 0.0
    %4010 = vmatpush.msra.mxu0 0.0
    %4011 = vmatpush.msra.mxu0 0.0
    %4012 = vmatpush.msra.mxu0 0.0
    %4013 = vmatpush.msra.mxu0 0.0
    %4014 = vmatpush.msra.mxu0 0.0
    %4015 = vmatpush.msra.mxu0 0.0
    %4016 = vmatpush.msra.mxu0 0.0
    %4017 = vmatpush.msra.mxu0 0.0
    %v4018 = vand.u32 %v3931, 4294901760
    %v4019 = vsub.f32 %v3931, %v4018
    %4020 = vmatpush.msra.mxu0 %v4019
    %v4021 = vand.u32 %v3930, 4294901760
    %v4022 = vsub.f32 %v3930, %v4021
    %4023 = vmatpush.msra.mxu0 %v4022
    %v4024 = vand.u32 %v3929, 4294901760
    %v4025 = vsub.f32 %v3929, %v4024
    %4026 = vmatpush.msra.mxu0 %v4025
    %v4027 = vand.u32 %v3928, 4294901760
    %v4028 = vsub.f32 %v3928, %v4027
    %4029 = vmatpush.msra.mxu0 %v4028
    %v4030 = vand.u32 %v3934, 4294901760
    %v4031 = vsub.f32 %v3934, %v4030
    %4032 = vmatmul.f32.gmra.mxu0 %v4031
    %v4033 = vpop.f32.mrf.mxu0
    %v4034 = vadd.f32 %v4004, %v4033
    %4035 = vdwg.mxu0
    %4036 = vmatpush.msra.mxu0 0.0
    %4037 = vmatpush.msra.mxu0 0.0
    %4038 = vmatpush.msra.mxu0 0.0
    %4039 = vmatpush.msra.mxu0 0.0
    %4040 = vmatpush.msra.mxu0 0.0
    %4041 = vmatpush.msra.mxu0 0.0
    %4042 = vmatpush.msra.mxu0 0.0
    %4043 = vmatpush.msra.mxu0 0.0
    %4044 = vmatpush.msra.mxu0 0.0
    %4045 = vmatpush.msra.mxu0 0.0
    %4046 = vmatpush.msra.mxu0 0.0
    %4047 = vmatpush.msra.mxu0 0.0
    %v4048 = vand.u32 %v3931, 4294901760
    %4049 = vmatpush.msra.mxu0 %v4048
    %v4050 = vand.u32 %v3930, 4294901760
    %4051 = vmatpush.msra.mxu0 %v4050
    %v4052 = vand.u32 %v3929, 4294901760
    %4053 = vmatpush.msra.mxu0 %v4052
    %v4054 = vand.u32 %v3928, 4294901760
    %4055 = vmatpush.msra.mxu0 %v4054
    %v4056 = vand.u32 %v3934, 4294901760
    %v4057 = vsub.f32 %v3934, %v4056
    %v4058 = vand.u32 %v4057, 4294901760
    %4059 = vmatmul.f32.gmra.mxu0 %v4058
    %v4060 = vpop.f32.mrf.mxu0
    %v4061 = vadd.f32 %v4034, %v4060
    %4062 = vdwg.mxu0
    %4063 = vmatpush.msra.mxu0 0.0
    %4064 = vmatpush.msra.mxu0 0.0
    %4065 = vmatpush.msra.mxu0 0.0
    %4066 = vmatpush.msra.mxu0 0.0
    %4067 = vmatpush.msra.mxu0 0.0
    %4068 = vmatpush.msra.mxu0 0.0
    %4069 = vmatpush.msra.mxu0 0.0
    %4070 = vmatpush.msra.mxu0 0.0
    %4071 = vmatpush.msra.mxu0 0.0
    %4072 = vmatpush.msra.mxu0 0.0
    %4073 = vmatpush.msra.mxu0 0.0
    %4074 = vmatpush.msra.mxu0 0.0
    %v4075 = vand.u32 %v3931, 4294901760
    %v4076 = vsub.f32 %v3931, %v4075
    %v4077 = vand.u32 %v4076, 4294901760
    %4078 = vmatpush.msra.mxu0 %v4077
    %v4079 = vand.u32 %v3930, 4294901760
    %v4080 = vsub.f32 %v3930, %v4079
    %v4081 = vand.u32 %v4080, 4294901760
    %4082 = vmatpush.msra.mxu0 %v4081
    %v4083 = vand.u32 %v3929, 4294901760
    %v4084 = vsub.f32 %v3929, %v4083
    %v4085 = vand.u32 %v4084, 4294901760
    %4086 = vmatpush.msra.mxu0 %v4085
    %v4087 = vand.u32 %v3928, 4294901760
    %v4088 = vsub.f32 %v3928, %v4087
    %v4089 = vand.u32 %v4088, 4294901760
    %4090 = vmatpush.msra.mxu0 %v4089
    %v4091 = vand.u32 %v3934, 4294901760
    %4092 = vmatmul.f32.gmra.mxu0 %v4091
    %v4093 = vpop.f32.mrf.mxu0
    %v4094 = vadd.f32 %v4061, %v4093
    %4095 = vdwg.mxu0
    %4096 = vmatpush.msra.mxu0 0.0
    %4097 = vmatpush.msra.mxu0 0.0
    %4098 = vmatpush.msra.mxu0 0.0
    %4099 = vmatpush.msra.mxu0 0.0
    %4100 = vmatpush.msra.mxu0 0.0
    %4101 = vmatpush.msra.mxu0 0.0
    %4102 = vmatpush.msra.mxu0 0.0
    %4103 = vmatpush.msra.mxu0 0.0
    %4104 = vmatpush.msra.mxu0 0.0
    %4105 = vmatpush.msra.mxu0 0.0
    %4106 = vmatpush.msra.mxu0 0.0
    %4107 = vmatpush.msra.mxu0 0.0
    %v4108 = vand.u32 %v3931, 4294901760
    %4109 = vmatpush.msra.mxu0 %v4108
    %v4110 = vand.u32 %v3930, 4294901760
    %4111 = vmatpush.msra.mxu0 %v4110
    %v4112 = vand.u32 %v3929, 4294901760
    %4113 = vmatpush.msra.mxu0 %v4112
    %v4114 = vand.u32 %v3928, 4294901760
    %4115 = vmatpush.msra.mxu0 %v4114
    %v4116 = vand.u32 %v3934, 4294901760
    %4117 = vmatmul.f32.gmra.mxu0 %v4116
    %v4118 = vpop.f32.mrf.mxu0
    %v4119 = vadd.f32 %v4094, %v4118
    %4120 = vdwg.mxu0
    %v4121 = vrot.slane %v4119, 4
    %v4122 = vadd.f32 %v4119, %v4121
    %v4123 = vrot.slane %v4122, 2
    %v4124 = vadd.f32 %v4122, %v4123
    %v4125 = vrot.slane %v4124, 1
    %v4126 = vadd.f32 %v4124, %v4125
    %v4127 = vmul.f32 %v4126, %v655
    %v4128 = vsub.f32 %v4119, %v4127
    %v4129 = vmul.f32 %v4128, %v4128
    %v4130 = vrot.slane %v4129, 4
    %v4131 = vadd.f32 %v4129, %v4130
    %v4132 = vrot.slane %v4131, 2
    %v4133 = vadd.f32 %v4131, %v4132
    %v4134 = vrot.slane %v4133, 1
    %v4135 = vadd.f32 %v4133, %v4134
    %v4136 = vmul.f32 %v4135, %v655
    %v4137 = vadd.f32 %v4136, 1e-05
    %v4138 = vrsqrt.pop %v4137
    %v4139 = vmul.f32 %v4138, %v4137
    %v4140 = vmul.f32 %v4139, %v4138
    %v4141 = vmul.f32 0.5, %v4140
    %v4142 = vsub.f32 1.5, %v4141
    %v4143 = vmul.f32 %v4138, %v4142
    %vm4144 = vweird.f32 %v4137
    %vm4145 = vweird.f32 %v4138
    %vm4146 = vmor %vm4144, %vm4145
    %v4147 = vsel %vm4146, %v4138, %v4143
    %v4148 = vmul.f32 %v4128, %v4147
    %v4149 = vperm.slane %v3927, 1
    %v4150 = vmul.f32 %v4148, %v4149
    %v4151 = vperm.slane %v3927, 2
    %v4152 = vadd.f32 %v4150, %v4151
    %v4153 = vmul.f32 %v4152, 0.5
    %v4154 = vmul.f32 %v4152, %v690
    %v4155 = vmul.f32 %v4154, %v4154
    %v4156 = vmin.f32 16.0, %v4155
    %v4157 = vmul.f32 %v4156, 2.1237322e-06
    %v4158 = vadd.f32 %v4157, 0.00028619796
    %v4159 = vmul.f32 %v4156, %v4158
    %v4160 = vadd.f32 %v4159, 0.0036580483
    %v4161 = vmul.f32 %v4156, %v4160
    %v4162 = vadd.f32 %v4161, 0.05243302
    %v4163 = vmul.f32 %v4156, %v4162
    %v4164 = vadd.f32 %v4163, 0.18741608
    %v4165 = vmul.f32 %v4156, %v4164
    %v4166 = vadd.f32 %v4165, 1.1283791
    %v4167 = vmul.f32 %v4154, %v4166
    %v4168 = vmul.f32 %v4156, 3.8918573e-05
    %v4169 = vadd.f32 %v4168, 0.001143296
    %v4170 = vmul.f32 %v4156, %v4169
    %v4171 = vadd.f32 %v4170, 0.014752088
    %v4172 = vmul.f32 %v4156, %v4171
    %v4173 = vadd.f32 %v4172, 0.112945676
    %v4174 = vmul.f32 %v4156, %v4173
    %v4175 = vadd.f32 %v4174, 0.4994258
    %v4176 = vmul.f32 %v4156, %v4175
    %v4177 = vadd.f32 %v4176, 1.0
    %v4178 = vrcp.pop %v4177
    %v4179 = vmul.f32 %v4177, %v4178
    %v4180 = vsub.f32 1.0, %v4179
    %v4181 = vmul.f32 %v4178, %v4180
    %v4182 = vadd.f32 %v4178, %v4181
    %vm4183 = vweird.f32 %v4177
    %vm4184 = vweird.f32 %v4178
    %vm4185 = vmor %vm4183, %vm4184
    %v4186 = vsel %vm4185, %v4178, %v4182
    %v4187 = vand.u32 2147483647, %v4177
    %vm4188 = vcmp.eq.f32.partialorder %v4187, 8.507059e+37
    %v4189 = vand.u32 %v4177, 2147483648
    %v4190 = vor.u32 1.1754944e-38, %v4189
    %v4191 = vsel %vm4188, %v4190, %v4186
    %v4192 = vmul.f32 %v4167, %v4191
    %v4193 = vmin.f32 %v4192, 1.0
    %v4194 = vmax.f32 %v4193, -1.0
    %v4195 = vadd.f32 %v4194, 1.0
    %v4196 = vmul.f32 %v4153, %v4195
    %v4197 = vld [vmem:[#allocation2 + $0x280] sm:$0x7]
    %v4198 = vld [vmem:[#allocation2 + $0x200] sm:$0xff]
    %v4199 = vld [vmem:[#allocation2 + $0x208] sm:$0xff]
    %v4200 = vld [vmem:[#allocation2 + $0x210] sm:$0xff]
    %v4201 = vld [vmem:[#allocation2 + $0x218] sm:$0xff]
    %v4202 = vld [vmem:[#allocation2 + $0x220] sm:$0xff]
    %v4203 = vld [vmem:[#allocation2 + $0x228] sm:$0xff]
    %v4204 = vld [vmem:[#allocation2 + $0x230] sm:$0xff]
    %v4205 = vld [vmem:[#allocation2 + $0x238] sm:$0xff]
    %v4206 = vld [vmem:[#allocation2 + $0x240] sm:$0xff]
    %v4207 = vld [vmem:[#allocation2 + $0x248] sm:$0xff]
    %v4208 = vld [vmem:[#allocation2 + $0x250] sm:$0xff]
    %v4209 = vld [vmem:[#allocation2 + $0x258] sm:$0xff]
    %v4210 = vld [vmem:[#allocation2 + $0x260] sm:$0xff]
    %v4211 = vld [vmem:[#allocation2 + $0x268] sm:$0xff]
    %v4212 = vld [vmem:[#allocation2 + $0x270] sm:$0xff]
    %v4213 = vld [vmem:[#allocation2 + $0x278] sm:$0xff]
    %v4214 = vperm.slane %v4197, 0
    %v4215 = vand.u32 %v4213, 4294901760
    %4216 = vmatpush.msra.mxu0 %v4215
    %v4217 = vand.u32 %v4212, 4294901760
    %4218 = vmatpush.msra.mxu0 %v4217
    %v4219 = vand.u32 %v4211, 4294901760
    %4220 = vmatpush.msra.mxu0 %v4219
    %v4221 = vand.u32 %v4210, 4294901760
    %4222 = vmatpush.msra.mxu0 %v4221
    %v4223 = vand.u32 %v4209, 4294901760
    %4224 = vmatpush.msra.mxu0 %v4223
    %v4225 = vand.u32 %v4208, 4294901760
    %4226 = vmatpush.msra.mxu0 %v4225
    %v4227 = vand.u32 %v4207, 4294901760
    %4228 = vmatpush.msra.mxu0 %v4227
    %v4229 = vand.u32 %v4206, 4294901760
    %4230 = vmatpush.msra.mxu0 %v4229
    %v4231 = vand.u32 %v4205, 4294901760
    %4232 = vmatpush.msra.mxu0 %v4231
    %v4233 = vand.u32 %v4204, 4294901760
    %4234 = vmatpush.msra.mxu0 %v4233
    %v4235 = vand.u32 %v4203, 4294901760
    %4236 = vmatpush.msra.mxu0 %v4235
    %v4237 = vand.u32 %v4202, 4294901760
    %4238 = vmatpush.msra.mxu0 %v4237
    %v4239 = vand.u32 %v4201, 4294901760
    %4240 = vmatpush.msra.mxu0 %v4239
    %v4241 = vand.u32 %v4200, 4294901760
    %4242 = vmatpush.msra.mxu0 %v4241
    %v4243 = vand.u32 %v4199, 4294901760
    %4244 = vmatpush.msra.mxu0 %v4243
    %v4245 = vand.u32 %v4198, 4294901760
    %4246 = vmatpush.msra.mxu0 %v4245
    %v4247 = vand.u32 %v4196, 4294901760
    %v4248 = vsub.f32 %v4196, %v4247
    %v4249 = vand.u32 %v4248, 4294901760
    %v4250 = vsub.f32 %v4248, %v4249
    %v4251 = vand.u32 %v4250, 4294901760
    %4252 = vmatmul.f32.gmra.mxu0 %v4251
    %v4253 = vpop.f32.mrf.mxu0
    %v4254 = vadd.f32 %v4214, %v4253
    %4255 = vdwg.mxu0
    %v4256 = vand.u32 %v4213, 4294901760
    %v4257 = vsub.f32 %v4213, %v4256
    %v4258 = vand.u32 %v4257, 4294901760
    %v4259 = vsub.f32 %v4257, %v4258
    %v4260 = vand.u32 %v4259, 4294901760
    %4261 = vmatpush.msra.mxu0 %v4260
    %v4262 = vand.u32 %v4212, 4294901760
    %v4263 = vsub.f32 %v4212, %v4262
    %v4264 = vand.u32 %v4263, 4294901760
    %v4265 = vsub.f32 %v4263, %v4264
    %v4266 = vand.u32 %v4265, 4294901760
    %4267 = vmatpush.msra.mxu0 %v4266
    %v4268 = vand.u32 %v4211, 4294901760
    %v4269 = vsub.f32 %v4211, %v4268
    %v4270 = vand.u32 %v4269, 4294901760
    %v4271 = vsub.f32 %v4269, %v4270
    %v4272 = vand.u32 %v4271, 4294901760
    %4273 = vmatpush.msra.mxu0 %v4272
    %v4274 = vand.u32 %v4210, 4294901760
    %v4275 = vsub.f32 %v4210, %v4274
    %v4276 = vand.u32 %v4275, 4294901760
    %v4277 = vsub.f32 %v4275, %v4276
    %v4278 = vand.u32 %v4277, 4294901760
    %4279 = vmatpush.msra.mxu0 %v4278
    %v4280 = vand.u32 %v4209, 4294901760
    %v4281 = vsub.f32 %v4209, %v4280
    %v4282 = vand.u32 %v4281, 4294901760
    %v4283 = vsub.f32 %v4281, %v4282
    %v4284 = vand.u32 %v4283, 4294901760
    %4285 = vmatpush.msra.mxu0 %v4284
    %v4286 = vand.u32 %v4208, 4294901760
    %v4287 = vsub.f32 %v4208, %v4286
    %v4288 = vand.u32 %v4287, 4294901760
    %v4289 = vsub.f32 %v4287, %v4288
    %v4290 = vand.u32 %v4289, 4294901760
    %4291 = vmatpush.msra.mxu0 %v4290
    %v4292 = vand.u32 %v4207, 4294901760
    %v4293 = vsub.f32 %v4207, %v4292
    %v4294 = vand.u32 %v4293, 4294901760
    %v4295 = vsub.f32 %v4293, %v4294
    %v4296 = vand.u32 %v4295, 4294901760
    %4297 = vmatpush.msra.mxu0 %v4296
    %v4298 = vand.u32 %v4206, 4294901760
    %v4299 = vsub.f32 %v4206, %v4298
    %v4300 = vand.u32 %v4299, 4294901760
    %v4301 = vsub.f32 %v4299, %v4300
    %v4302 = vand.u32 %v4301, 4294901760
    %4303 = vmatpush.msra.mxu0 %v4302
    %v4304 = vand.u32 %v4205, 4294901760
    %v4305 = vsub.f32 %v4205, %v4304
    %v4306 = vand.u32 %v4305, 4294901760
    %v4307 = vsub.f32 %v4305, %v4306
    %v4308 = vand.u32 %v4307, 4294901760
    %4309 = vmatpush.msra.mxu0 %v4308
    %v4310 = vand.u32 %v4204, 4294901760
    %v4311 = vsub.f32 %v4204, %v4310
    %v4312 = vand.u32 %v4311, 4294901760
    %v4313 = vsub.f32 %v4311, %v4312
    %v4314 = vand.u32 %v4313, 4294901760
    %4315 = vmatpush.msra.mxu0 %v4314
    %v4316 = vand.u32 %v4203, 4294901760
    %v4317 = vsub.f32 %v4203, %v4316
    %v4318 = vand.u32 %v4317, 4294901760
    %v4319 = vsub.f32 %v4317, %v4318
    %v4320 = vand.u32 %v4319, 4294901760
    %4321 = vmatpush.msra.mxu0 %v4320
    %v4322 = vand.u32 %v4202, 4294901760
    %v4323 = vsub.f32 %v4202, %v4322
    %v4324 = vand.u32 %v4323, 4294901760
    %v4325 = vsub.f32 %v4323, %v4324
    %v4326 = vand.u32 %v4325, 4294901760
    %4327 = vmatpush.msra.mxu0 %v4326
    %v4328 = vand.u32 %v4201, 4294901760
    %v4329 = vsub.f32 %v4201, %v4328
    %v4330 = vand.u32 %v4329, 4294901760
    %v4331 = vsub.f32 %v4329, %v4330
    %v4332 = vand.u32 %v4331, 4294901760
    %4333 = vmatpush.msra.mxu0 %v4332
    %v4334 = vand.u32 %v4200, 4294901760
    %v4335 = vsub.f32 %v4200, %v4334
    %v4336 = vand.u32 %v4335, 4294901760
    %v4337 = vsub.f32 %v4335, %v4336
    %v4338 = vand.u32 %v4337, 4294901760
    %4339 = vmatpush.msra.mxu0 %v4338
    %v4340 = vand.u32 %v4199, 4294901760
    %v4341 = vsub.f32 %v4199, %v4340
    %v4342 = vand.u32 %v4341, 4294901760
    %v4343 = vsub.f32 %v4341, %v4342
    %v4344 = vand.u32 %v4343, 4294901760
    %4345 = vmatpush.msra.mxu0 %v4344
    %v4346 = vand.u32 %v4198, 4294901760
    %v4347 = vsub.f32 %v4198, %v4346
    %v4348 = vand.u32 %v4347, 4294901760
    %v4349 = vsub.f32 %v4347, %v4348
    %v4350 = vand.u32 %v4349, 4294901760
    %4351 = vmatpush.msra.mxu0 %v4350
    %v4352 = vand.u32 %v4196, 4294901760
    %4353 = vmatmul.f32.gmra.mxu0 %v4352
    %v4354 = vpop.f32.mrf.mxu0
    %v4355 = vadd.f32 %v4254, %v4354
    %4356 = vdwg.mxu0
    %v4357 = vand.u32 %v4213, 4294901760
    %v4358 = vsub.f32 %v4213, %v4357
    %4359 = vmatpush.msra.mxu0 %v4358
    %v4360 = vand.u32 %v4212, 4294901760
    %v4361 = vsub.f32 %v4212, %v4360
    %4362 = vmatpush.msra.mxu0 %v4361
    %v4363 = vand.u32 %v4211, 4294901760
    %v4364 = vsub.f32 %v4211, %v4363
    %4365 = vmatpush.msra.mxu0 %v4364
    %v4366 = vand.u32 %v4210, 4294901760
    %v4367 = vsub.f32 %v4210, %v4366
    %4368 = vmatpush.msra.mxu0 %v4367
    %v4369 = vand.u32 %v4209, 4294901760
    %v4370 = vsub.f32 %v4209, %v4369
    %4371 = vmatpush.msra.mxu0 %v4370
    %v4372 = vand.u32 %v4208, 4294901760
    %v4373 = vsub.f32 %v4208, %v4372
    %4374 = vmatpush.msra.mxu0 %v4373
    %v4375 = vand.u32 %v4207, 4294901760
    %v4376 = vsub.f32 %v4207, %v4375
    %4377 = vmatpush.msra.mxu0 %v4376
    %v4378 = vand.u32 %v4206, 4294901760
    %v4379 = vsub.f32 %v4206, %v4378
    %4380 = vmatpush.msra.mxu0 %v4379
    %v4381 = vand.u32 %v4205, 4294901760
    %v4382 = vsub.f32 %v4205, %v4381
    %4383 = vmatpush.msra.mxu0 %v4382
    %v4384 = vand.u32 %v4204, 4294901760
    %v4385 = vsub.f32 %v4204, %v4384
    %4386 = vmatpush.msra.mxu0 %v4385
    %v4387 = vand.u32 %v4203, 4294901760
    %v4388 = vsub.f32 %v4203, %v4387
    %4389 = vmatpush.msra.mxu0 %v4388
    %v4390 = vand.u32 %v4202, 4294901760
    %v4391 = vsub.f32 %v4202, %v4390
    %4392 = vmatpush.msra.mxu0 %v4391
    %v4393 = vand.u32 %v4201, 4294901760
    %v4394 = vsub.f32 %v4201, %v4393
    %4395 = vmatpush.msra.mxu0 %v4394
    %v4396 = vand.u32 %v4200, 4294901760
    %v4397 = vsub.f32 %v4200, %v4396
    %4398 = vmatpush.msra.mxu0 %v4397
    %v4399 = vand.u32 %v4199, 4294901760
    %v4400 = vsub.f32 %v4199, %v4399
    %4401 = vmatpush.msra.mxu0 %v4400
    %v4402 = vand.u32 %v4198, 4294901760
    %v4403 = vsub.f32 %v4198, %v4402
    %4404 = vmatpush.msra.mxu0 %v4403
    %v4405 = vand.u32 %v4196, 4294901760
    %v4406 = vsub.f32 %v4196, %v4405
    %4407 = vmatmul.f32.gmra.mxu0 %v4406
    %v4408 = vpop.f32.mrf.mxu0
    %v4409 = vadd.f32 %v4355, %v4408
    %4410 = vdwg.mxu0
    %v4411 = vand.u32 %v4213, 4294901760
    %4412 = vmatpush.msra.mxu0 %v4411
    %v4413 = vand.u32 %v4212, 4294901760
    %4414 = vmatpush.msra.mxu0 %v4413
    %v4415 = vand.u32 %v4211, 4294901760
    %4416 = vmatpush.msra.mxu0 %v4415
    %v4417 = vand.u32 %v4210, 4294901760
    %4418 = vmatpush.msra.mxu0 %v4417
    %v4419 = vand.u32 %v4209, 4294901760
    %4420 = vmatpush.msra.mxu0 %v4419
    %v4421 = vand.u32 %v4208, 4294901760
    %4422 = vmatpush.msra.mxu0 %v4421
    %v4423 = vand.u32 %v4207, 4294901760
    %4424 = vmatpush.msra.mxu0 %v4423
    %v4425 = vand.u32 %v4206, 4294901760
    %4426 = vmatpush.msra.mxu0 %v4425
    %v4427 = vand.u32 %v4205, 4294901760
    %4428 = vmatpush.msra.mxu0 %v4427
    %v4429 = vand.u32 %v4204, 4294901760
    %4430 = vmatpush.msra.mxu0 %v4429
    %v4431 = vand.u32 %v4203, 4294901760
    %4432 = vmatpush.msra.mxu0 %v4431
    %v4433 = vand.u32 %v4202, 4294901760
    %4434 = vmatpush.msra.mxu0 %v4433
    %v4435 = vand.u32 %v4201, 4294901760
    %4436 = vmatpush.msra.mxu0 %v4435
    %v4437 = vand.u32 %v4200, 4294901760
    %4438 = vmatpush.msra.mxu0 %v4437
    %v4439 = vand.u32 %v4199, 4294901760
    %4440 = vmatpush.msra.mxu0 %v4439
    %v4441 = vand.u32 %v4198, 4294901760
    %4442 = vmatpush.msra.mxu0 %v4441
    %v4443 = vand.u32 %v4196, 4294901760
    %v4444 = vsub.f32 %v4196, %v4443
    %v4445 = vand.u32 %v4444, 4294901760
    %4446 = vmatmul.f32.gmra.mxu0 %v4445
    %v4447 = vpop.f32.mrf.mxu0
    %v4448 = vadd.f32 %v4409, %v4447
    %4449 = vdwg.mxu0
    %v4450 = vand.u32 %v4213, 4294901760
    %v4451 = vsub.f32 %v4213, %v4450
    %v4452 = vand.u32 %v4451, 4294901760
    %4453 = vmatpush.msra.mxu0 %v4452
    %v4454 = vand.u32 %v4212, 4294901760
    %v4455 = vsub.f32 %v4212, %v4454
    %v4456 = vand.u32 %v4455, 4294901760
    %4457 = vmatpush.msra.mxu0 %v4456
    %v4458 = vand.u32 %v4211, 4294901760
    %v4459 = vsub.f32 %v4211, %v4458
    %v4460 = vand.u32 %v4459, 4294901760
    %4461 = vmatpush.msra.mxu0 %v4460
    %v4462 = vand.u32 %v4210, 4294901760
    %v4463 = vsub.f32 %v4210, %v4462
    %v4464 = vand.u32 %v4463, 4294901760
    %4465 = vmatpush.msra.mxu0 %v4464
    %v4466 = vand.u32 %v4209, 4294901760
    %v4467 = vsub.f32 %v4209, %v4466
    %v4468 = vand.u32 %v4467, 4294901760
    %4469 = vmatpush.msra.mxu0 %v4468
    %v4470 = vand.u32 %v4208, 4294901760
    %v4471 = vsub.f32 %v4208, %v4470
    %v4472 = vand.u32 %v4471, 4294901760
    %4473 = vmatpush.msra.mxu0 %v4472
    %v4474 = vand.u32 %v4207, 4294901760
    %v4475 = vsub.f32 %v4207, %v4474
    %v4476 = vand.u32 %v4475, 4294901760
    %4477 = vmatpush.msra.mxu0 %v4476
    %v4478 = vand.u32 %v4206, 4294901760
    %v4479 = vsub.f32 %v4206, %v4478
    %v4480 = vand.u32 %v4479, 4294901760
    %4481 = vmatpush.msra.mxu0 %v4480
    %v4482 = vand.u32 %v4205, 4294901760
    %v4483 = vsub.f32 %v4205, %v4482
    %v4484 = vand.u32 %v4483, 4294901760
    %4485 = vmatpush.msra.mxu0 %v4484
    %v4486 = vand.u32 %v4204, 4294901760
    %v4487 = vsub.f32 %v4204, %v4486
    %v4488 = vand.u32 %v4487, 4294901760
    %4489 = vmatpush.msra.mxu0 %v4488
    %v4490 = vand.u32 %v4203, 4294901760
    %v4491 = vsub.f32 %v4203, %v4490
    %v4492 = vand.u32 %v4491, 4294901760
    %4493 = vmatpush.msra.mxu0 %v4492
    %v4494 = vand.u32 %v4202, 4294901760
    %v4495 = vsub.f32 %v4202, %v4494
    %v4496 = vand.u32 %v4495, 4294901760
    %4497 = vmatpush.msra.mxu0 %v4496
    %v4498 = vand.u32 %v4201, 4294901760
    %v4499 = vsub.f32 %v4201, %v4498
    %v4500 = vand.u32 %v4499, 4294901760
    %4501 = vmatpush.msra.mxu0 %v4500
    %v4502 = vand.u32 %v4200, 4294901760
    %v4503 = vsub.f32 %v4200, %v4502
    %v4504 = vand.u32 %v4503, 4294901760
    %4505 = vmatpush.msra.mxu0 %v4504
    %v4506 = vand.u32 %v4199, 4294901760
    %v4507 = vsub.f32 %v4199, %v4506
    %v4508 = vand.u32 %v4507, 4294901760
    %4509 = vmatpush.msra.mxu0 %v4508
    %v4510 = vand.u32 %v4198, 4294901760
    %v4511 = vsub.f32 %v4198, %v4510
    %v4512 = vand.u32 %v4511, 4294901760
    %4513 = vmatpush.msra.mxu0 %v4512
    %v4514 = vand.u32 %v4196, 4294901760
    %4515 = vmatmul.f32.gmra.mxu0 %v4514
    %v4516 = vpop.f32.mrf.mxu0
    %v4517 = vadd.f32 %v4448, %v4516
    %4518 = vdwg.mxu0
    %v4519 = vand.u32 %v4213, 4294901760
    %4520 = vmatpush.msra.mxu0 %v4519
    %v4521 = vand.u32 %v4212, 4294901760
    %4522 = vmatpush.msra.mxu0 %v4521
    %v4523 = vand.u32 %v4211, 4294901760
    %4524 = vmatpush.msra.mxu0 %v4523
    %v4525 = vand.u32 %v4210, 4294901760
    %4526 = vmatpush.msra.mxu0 %v4525
    %v4527 = vand.u32 %v4209, 4294901760
    %4528 = vmatpush.msra.mxu0 %v4527
    %v4529 = vand.u32 %v4208, 4294901760
    %4530 = vmatpush.msra.mxu0 %v4529
    %v4531 = vand.u32 %v4207, 4294901760
    %4532 = vmatpush.msra.mxu0 %v4531
    %v4533 = vand.u32 %v4206, 4294901760
    %4534 = vmatpush.msra.mxu0 %v4533
    %v4535 = vand.u32 %v4205, 4294901760
    %4536 = vmatpush.msra.mxu0 %v4535
    %v4537 = vand.u32 %v4204, 4294901760
    %4538 = vmatpush.msra.mxu0 %v4537
    %v4539 = vand.u32 %v4203, 4294901760
    %4540 = vmatpush.msra.mxu0 %v4539
    %v4541 = vand.u32 %v4202, 4294901760
    %4542 = vmatpush.msra.mxu0 %v4541
    %v4543 = vand.u32 %v4201, 4294901760
    %4544 = vmatpush.msra.mxu0 %v4543
    %v4545 = vand.u32 %v4200, 4294901760
    %4546 = vmatpush.msra.mxu0 %v4545
    %v4547 = vand.u32 %v4199, 4294901760
    %4548 = vmatpush.msra.mxu0 %v4547
    %v4549 = vand.u32 %v4198, 4294901760
    %4550 = vmatpush.msra.mxu0 %v4549
    %v4551 = vand.u32 %v4196, 4294901760
    %4552 = vmatmul.f32.gmra.mxu0 %v4551
    %v4553 = vpop.f32.mrf.mxu0
    %v4554 = vadd.f32 %v4517, %v4553
    %4555 = vdwg.mxu0
    %v4556 = vsel %vm1840, %v4554, 0.0
    %v4557 = vrot.slane %v4556, 4
    %v4558 = vadd.f32 %v4556, %v4557
    %v4559 = vrot.slane %v4558, 2
    %v4560 = vadd.f32 %v4558, %v4559
    %v4561 = vrot.slane %v4560, 1
    %v4562 = vadd.f32 %v4560, %v4561
    %v4563 = vmul.f32 %v4562, %v655
    %v4564 = vsub.f32 %v4554, %v4563
    %v4565 = vmul.f32 %v4564, %v4564
    %v4566 = vsel %vm1840, %v4565, 0.0
    %v4567 = vrot.slane %v4566, 4
    %v4568 = vadd.f32 %v4566, %v4567
    %v4569 = vrot.slane %v4568, 2
    %v4570 = vadd.f32 %v4568, %v4569
    %v4571 = vrot.slane %v4570, 1
    %v4572 = vadd.f32 %v4570, %v4571
    %v4573 = vmul.f32 %v4572, %v655
    %v4574 = vadd.f32 %v4573, 1e-05
    %v4575 = vrsqrt.pop %v4574
    %v4576 = vmul.f32 %v4575, %v4574
    %v4577 = vmul.f32 %v4576, %v4575
    %v4578 = vmul.f32 0.5, %v4577
    %v4579 = vsub.f32 1.5, %v4578
    %v4580 = vmul.f32 %v4575, %v4579
    %vm4581 = vweird.f32 %v4574
    %vm4582 = vweird.f32 %v4575
    %vm4583 = vmor %vm4581, %vm4582
    %v4584 = vsel %vm4583, %v4575, %v4580
    %v4585 = vmul.f32 %v4564, %v4584
    %v4586 = vperm.slane %v4197, 1
    %v4587 = vmul.f32 %v4585, %v4586
    %v4588 = vperm.slane %v4197, 2
    %v4589 = vadd.f32 %v4587, %v4588
    %v4590 = vmul.f32 %v4589, 0.5
    %v4591 = vmul.f32 %v4589, %v690
    %v4592 = vmul.f32 %v4591, %v4591
    %v4593 = vmin.f32 16.0, %v4592
    %v4594 = vmul.f32 %v4593, 2.1237322e-06
    %v4595 = vadd.f32 %v4594, 0.00028619796
    %v4596 = vmul.f32 %v4593, %v4595
    %v4597 = vadd.f32 %v4596, 0.0036580483
    %v4598 = vmul.f32 %v4593, %v4597
    %v4599 = vadd.f32 %v4598, 0.05243302
    %v4600 = vmul.f32 %v4593, %v4599
    %v4601 = vadd.f32 %v4600, 0.18741608
    %v4602 = vmul.f32 %v4593, %v4601
    %v4603 = vadd.f32 %v4602, 1.1283791
    %v4604 = vmul.f32 %v4591, %v4603
    %v4605 = vmul.f32 %v4593, 3.8918573e-05
    %v4606 = vadd.f32 %v4605, 0.001143296
    %v4607 = vmul.f32 %v4593, %v4606
    %v4608 = vadd.f32 %v4607, 0.014752088
    %v4609 = vmul.f32 %v4593, %v4608
    %v4610 = vadd.f32 %v4609, 0.112945676
    %v4611 = vmul.f32 %v4593, %v4610
    %v4612 = vadd.f32 %v4611, 0.4994258
    %v4613 = vmul.f32 %v4593, %v4612
    %v4614 = vadd.f32 %v4613, 1.0
    %v4615 = vrcp.pop %v4614
    %v4616 = vmul.f32 %v4614, %v4615
    %v4617 = vsub.f32 1.0, %v4616
    %v4618 = vmul.f32 %v4615, %v4617
    %v4619 = vadd.f32 %v4615, %v4618
    %vm4620 = vweird.f32 %v4614
    %vm4621 = vweird.f32 %v4615
    %vm4622 = vmor %vm4620, %vm4621
    %v4623 = vsel %vm4622, %v4615, %v4619
    %v4624 = vand.u32 2147483647, %v4614
    %vm4625 = vcmp.eq.f32.partialorder %v4624, 8.507059e+37
    %v4626 = vand.u32 %v4614, 2147483648
    %v4627 = vor.u32 1.1754944e-38, %v4626
    %v4628 = vsel %vm4625, %v4627, %v4623
    %v4629 = vmul.f32 %v4604, %v4628
    %v4630 = vmin.f32 %v4629, 1.0
    %v4631 = vmax.f32 %v4630, -1.0
    %v4632 = vadd.f32 %v4631, 1.0
    %v4633 = vmul.f32 %v4590, %v4632
    %v4634 = vld [vmem:[#allocation2 + $0x2a8] sm:$0x7]
    %v4635 = vld [vmem:[#allocation2 + $0x288] sm:$0xff]
    %v4636 = vld [vmem:[#allocation2 + $0x290] sm:$0xff]
    %v4637 = vld [vmem:[#allocation2 + $0x298] sm:$0xff]
    %v4638 = vld [vmem:[#allocation2 + $0x2a0] sm:$0xff]
    %v4639 = vperm.slane %v4634, 0
    %v4641 = vsel %vm1840, %v4633, 0
    %4643 = vmatpush.msra.mxu0 0.0
    %4644 = vmatpush.msra.mxu0 0.0
    %4645 = vmatpush.msra.mxu0 0.0
    %4646 = vmatpush.msra.mxu0 0.0
    %4647 = vmatpush.msra.mxu0 0.0
    %4648 = vmatpush.msra.mxu0 0.0
    %4649 = vmatpush.msra.mxu0 0.0
    %4650 = vmatpush.msra.mxu0 0.0
    %4651 = vmatpush.msra.mxu0 0.0
    %4652 = vmatpush.msra.mxu0 0.0
    %4653 = vmatpush.msra.mxu0 0.0
    %4654 = vmatpush.msra.mxu0 0.0
    %v4655 = vand.u32 %v4638, 4294901760
    %4656 = vmatpush.msra.mxu0 %v4655
    %v4657 = vand.u32 %v4637, 4294901760
    %4658 = vmatpush.msra.mxu0 %v4657
    %v4659 = vand.u32 %v4636, 4294901760
    %4660 = vmatpush.msra.mxu0 %v4659
    %v4661 = vand.u32 %v4635, 4294901760
    %4662 = vmatpush.msra.mxu0 %v4661
    %v4663 = vand.u32 %v4641, 4294901760
    %v4664 = vsub.f32 %v4641, %v4663
    %v4665 = vand.u32 %v4664, 4294901760
    %v4666 = vsub.f32 %v4664, %v4665
    %v4667 = vand.u32 %v4666, 4294901760
    %4668 = vmatmul.f32.gmra.mxu0 %v4667
    %v4669 = vpop.f32.mrf.mxu0
    %v4670 = vadd.f32 %v4639, %v4669
    %4671 = vdwg.mxu0
    %4672 = vmatpush.msra.mxu0 0.0
    %4673 = vmatpush.msra.mxu0 0.0
    %4674 = vmatpush.msra.mxu0 0.0
    %4675 = vmatpush.msra.mxu0 0.0
    %4676 = vmatpush.msra.mxu0 0.0
    %4677 = vmatpush.msra.mxu0 0.0
    %4678 = vmatpush.msra.mxu0 0.0
    %4679 = vmatpush.msra.mxu0 0.0
    %4680 = vmatpush.msra.mxu0 0.0
    %4681 = vmatpush.msra.mxu0 0.0
    %4682 = vmatpush.msra.mxu0 0.0
    %4683 = vmatpush.msra.mxu0 0.0
    %v4684 = vand.u32 %v4638, 4294901760
    %v4685 = vsub.f32 %v4638, %v4684
    %v4686 = vand.u32 %v4685, 4294901760
    %v4687 = vsub.f32 %v4685, %v4686
    %v4688 = vand.u32 %v4687, 4294901760
    %4689 = vmatpush.msra.mxu0 %v4688
    %v4690 = vand.u32 %v4637, 4294901760
    %v4691 = vsub.f32 %v4637, %v4690
    %v4692 = vand.u32 %v4691, 4294901760
    %v4693 = vsub.f32 %v4691, %v4692
    %v4694 = vand.u32 %v4693, 4294901760
    %4695 = vmatpush.msra.mxu0 %v4694
    %v4696 = vand.u32 %v4636, 4294901760
    %v4697 = vsub.f32 %v4636, %v4696
    %v4698 = vand.u32 %v4697, 4294901760
    %v4699 = vsub.f32 %v4697, %v4698
    %v4700 = vand.u32 %v4699, 4294901760
    %4701 = vmatpush.msra.mxu0 %v4700
    %v4702 = vand.u32 %v4635, 4294901760
    %v4703 = vsub.f32 %v4635, %v4702
    %v4704 = vand.u32 %v4703, 4294901760
    %v4705 = vsub.f32 %v4703, %v4704
    %v4706 = vand.u32 %v4705, 4294901760
    %4707 = vmatpush.msra.mxu0 %v4706
    %v4708 = vand.u32 %v4641, 4294901760
    %4709 = vmatmul.f32.gmra.mxu0 %v4708
    %v4710 = vpop.f32.mrf.mxu0
    %v4711 = vadd.f32 %v4670, %v4710
    %4712 = vdwg.mxu0
    %4713 = vmatpush.msra.mxu0 0.0
    %4714 = vmatpush.msra.mxu0 0.0
    %4715 = vmatpush.msra.mxu0 0.0
    %4716 = vmatpush.msra.mxu0 0.0
    %4717 = vmatpush.msra.mxu0 0.0
    %4718 = vmatpush.msra.mxu0 0.0
    %4719 = vmatpush.msra.mxu0 0.0
    %4720 = vmatpush.msra.mxu0 0.0
    %4721 = vmatpush.msra.mxu0 0.0
    %4722 = vmatpush.msra.mxu0 0.0
    %4723 = vmatpush.msra.mxu0 0.0
    %4724 = vmatpush.msra.mxu0 0.0
    %v4725 = vand.u32 %v4638, 4294901760
    %v4726 = vsub.f32 %v4638, %v4725
    %4727 = vmatpush.msra.mxu0 %v4726
    %v4728 = vand.u32 %v4637, 4294901760
    %v4729 = vsub.f32 %v4637, %v4728
    %4730 = vmatpush.msra.mxu0 %v4729
    %v4731 = vand.u32 %v4636, 4294901760
    %v4732 = vsub.f32 %v4636, %v4731
    %4733 = vmatpush.msra.mxu0 %v4732
    %v4734 = vand.u32 %v4635, 4294901760
    %v4735 = vsub.f32 %v4635, %v4734
    %4736 = vmatpush.msra.mxu0 %v4735
    %v4737 = vand.u32 %v4641, 4294901760
    %v4738 = vsub.f32 %v4641, %v4737
    %4739 = vmatmul.f32.gmra.mxu0 %v4738
    %v4740 = vpop.f32.mrf.mxu0
    %v4741 = vadd.f32 %v4711, %v4740
    %4742 = vdwg.mxu0
    %4743 = vmatpush.msra.mxu0 0.0
    %4744 = vmatpush.msra.mxu0 0.0
    %4745 = vmatpush.msra.mxu0 0.0
    %4746 = vmatpush.msra.mxu0 0.0
    %4747 = vmatpush.msra.mxu0 0.0
    %4748 = vmatpush.msra.mxu0 0.0
    %4749 = vmatpush.msra.mxu0 0.0
    %4750 = vmatpush.msra.mxu0 0.0
    %4751 = vmatpush.msra.mxu0 0.0
    %4752 = vmatpush.msra.mxu0 0.0
    %4753 = vmatpush.msra.mxu0 0.0
    %4754 = vmatpush.msra.mxu0 0.0
    %v4755 = vand.u32 %v4638, 4294901760
    %4756 = vmatpush.msra.mxu0 %v4755
    %v4757 = vand.u32 %v4637, 4294901760
    %4758 = vmatpush.msra.mxu0 %v4757
    %v4759 = vand.u32 %v4636, 4294901760
    %4760 = vmatpush.msra.mxu0 %v4759
    %v4761 = vand.u32 %v4635, 4294901760
    %4762 = vmatpush.msra.mxu0 %v4761
    %v4763 = vand.u32 %v4641, 4294901760
    %v4764 = vsub.f32 %v4641, %v4763
    %v4765 = vand.u32 %v4764, 4294901760
    %4766 = vmatmul.f32.gmra.mxu0 %v4765
    %v4767 = vpop.f32.mrf.mxu0
    %v4768 = vadd.f32 %v4741, %v4767
    %4769 = vdwg.mxu0
    %4770 = vmatpush.msra.mxu0 0.0
    %4771 = vmatpush.msra.mxu0 0.0
    %4772 = vmatpush.msra.mxu0 0.0
    %4773 = vmatpush.msra.mxu0 0.0
    %4774 = vmatpush.msra.mxu0 0.0
    %4775 = vmatpush.msra.mxu0 0.0
    %4776 = vmatpush.msra.mxu0 0.0
    %4777 = vmatpush.msra.mxu0 0.0
    %4778 = vmatpush.msra.mxu0 0.0
    %4779 = vmatpush.msra.mxu0 0.0
    %4780 = vmatpush.msra.mxu0 0.0
    %4781 = vmatpush.msra.mxu0 0.0
    %v4782 = vand.u32 %v4638, 4294901760
    %v4783 = vsub.f32 %v4638, %v4782
    %v4784 = vand.u32 %v4783, 4294901760
    %4785 = vmatpush.msra.mxu0 %v4784
    %v4786 = vand.u32 %v4637, 4294901760
    %v4787 = vsub.f32 %v4637, %v4786
    %v4788 = vand.u32 %v4787, 4294901760
    %4789 = vmatpush.msra.mxu0 %v4788
    %v4790 = vand.u32 %v4636, 4294901760
    %v4791 = vsub.f32 %v4636, %v4790
    %v4792 = vand.u32 %v4791, 4294901760
    %4793 = vmatpush.msra.mxu0 %v4792
    %v4794 = vand.u32 %v4635, 4294901760
    %v4795 = vsub.f32 %v4635, %v4794
    %v4796 = vand.u32 %v4795, 4294901760
    %4797 = vmatpush.msra.mxu0 %v4796
    %v4798 = vand.u32 %v4641, 4294901760
    %4799 = vmatmul.f32.gmra.mxu0 %v4798
    %v4800 = vpop.f32.mrf.mxu0
    %v4801 = vadd.f32 %v4768, %v4800
    %4802 = vdwg.mxu0
    %4803 = vmatpush.msra.mxu0 0.0
    %4804 = vmatpush.msra.mxu0 0.0
    %4805 = vmatpush.msra.mxu0 0.0
    %4806 = vmatpush.msra.mxu0 0.0
    %4807 = vmatpush.msra.mxu0 0.0
    %4808 = vmatpush.msra.mxu0 0.0
    %4809 = vmatpush.msra.mxu0 0.0
    %4810 = vmatpush.msra.mxu0 0.0
    %4811 = vmatpush.msra.mxu0 0.0
    %4812 = vmatpush.msra.mxu0 0.0
    %4813 = vmatpush.msra.mxu0 0.0
    %4814 = vmatpush.msra.mxu0 0.0
    %v4815 = vand.u32 %v4638, 4294901760
    %4816 = vmatpush.msra.mxu0 %v4815
    %v4817 = vand.u32 %v4637, 4294901760
    %4818 = vmatpush.msra.mxu0 %v4817
    %v4819 = vand.u32 %v4636, 4294901760
    %4820 = vmatpush.msra.mxu0 %v4819
    %v4821 = vand.u32 %v4635, 4294901760
    %4822 = vmatpush.msra.mxu0 %v4821
    %v4823 = vand.u32 %v4641, 4294901760
    %4824 = vmatmul.f32.gmra.mxu0 %v4823
    %v4825 = vpop.f32.mrf.mxu0
    %v4826 = vadd.f32 %v4801, %v4825
    %4827 = vdwg.mxu0
    %v4828 = vrot.slane %v4826, 4
    %v4829 = vadd.f32 %v4826, %v4828
    %v4830 = vrot.slane %v4829, 2
    %v4831 = vadd.f32 %v4829, %v4830
    %v4832 = vrot.slane %v4831, 1
    %v4833 = vadd.f32 %v4831, %v4832
    %v4834 = vmul.f32 %v4833, %v655
    %v4835 = vsub.f32 %v4826, %v4834
    %v4836 = vmul.f32 %v4835, %v4835
    %v4837 = vrot.slane %v4836, 4
    %v4838 = vadd.f32 %v4836, %v4837
    %v4839 = vrot.slane %v4838, 2
    %v4840 = vadd.f32 %v4838, %v4839
    %v4841 = vrot.slane %v4840, 1
    %v4842 = vadd.f32 %v4840, %v4841
    %v4843 = vmul.f32 %v4842, %v655
    %v4844 = vadd.f32 %v4843, 1e-05
    %v4845 = vrsqrt.pop %v4844
    %v4846 = vmul.f32 %v4845, %v4844
    %v4847 = vmul.f32 %v4846, %v4845
    %v4848 = vmul.f32 0.5, %v4847
    %v4849 = vsub.f32 1.5, %v4848
    %v4850 = vmul.f32 %v4845, %v4849
    %vm4851 = vweird.f32 %v4844
    %vm4852 = vweird.f32 %v4845
    %vm4853 = vmor %vm4851, %vm4852
    %v4854 = vsel %vm4853, %v4845, %v4850
    %v4855 = vmul.f32 %v4835, %v4854
    %v4856 = vperm.slane %v4634, 1
    %v4857 = vmul.f32 %v4855, %v4856
    %v4858 = vperm.slane %v4634, 2
    %v4859 = vadd.f32 %v4857, %v4858
    %v4860 = vmul.f32 %v4859, 0.5
    %v4861 = vmul.f32 %v4859, %v690
    %v4862 = vmul.f32 %v4861, %v4861
    %v4863 = vmin.f32 16.0, %v4862
    %v4864 = vmul.f32 %v4863, 2.1237322e-06
    %v4865 = vadd.f32 %v4864, 0.00028619796
    %v4866 = vmul.f32 %v4863, %v4865
    %v4867 = vadd.f32 %v4866, 0.0036580483
    %v4868 = vmul.f32 %v4863, %v4867
    %v4869 = vadd.f32 %v4868, 0.05243302
    %v4870 = vmul.f32 %v4863, %v4869
    %v4871 = vadd.f32 %v4870, 0.18741608
    %v4872 = vmul.f32 %v4863, %v4871
    %v4873 = vadd.f32 %v4872, 1.1283791
    %v4874 = vmul.f32 %v4861, %v4873
    %v4875 = vmul.f32 %v4863, 3.8918573e-05
    %v4876 = vadd.f32 %v4875, 0.001143296
    %v4877 = vmul.f32 %v4863, %v4876
    %v4878 = vadd.f32 %v4877, 0.014752088
    %v4879 = vmul.f32 %v4863, %v4878
    %v4880 = vadd.f32 %v4879, 0.112945676
    %v4881 = vmul.f32 %v4863, %v4880
    %v4882 = vadd.f32 %v4881, 0.4994258
    %v4883 = vmul.f32 %v4863, %v4882
    %v4884 = vadd.f32 %v4883, 1.0
    %v4885 = vrcp.pop %v4884
    %v4886 = vmul.f32 %v4884, %v4885
    %v4887 = vsub.f32 1.0, %v4886
    %v4888 = vmul.f32 %v4885, %v4887
    %v4889 = vadd.f32 %v4885, %v4888
    %vm4890 = vweird.f32 %v4884
    %vm4891 = vweird.f32 %v4885
    %vm4892 = vmor %vm4890, %vm4891
    %v4893 = vsel %vm4892, %v4885, %v4889
    %v4894 = vand.u32 2147483647, %v4884
    %vm4895 = vcmp.eq.f32.partialorder %v4894, 8.507059e+37
    %v4896 = vand.u32 %v4884, 2147483648
    %v4897 = vor.u32 1.1754944e-38, %v4896
    %v4898 = vsel %vm4895, %v4897, %v4893
    %v4899 = vmul.f32 %v4874, %v4898
    %v4900 = vmin.f32 %v4899, 1.0
    %v4901 = vmax.f32 %v4900, -1.0
    %v4902 = vadd.f32 %v4901, 1.0
    %v4903 = vmul.f32 %v4860, %v4902
    %v4904 = vld [vmem:[#allocation2 + $0x330] sm:$0x7]
    %v4905 = vld [vmem:[#allocation2 + $0x2b0] sm:$0xff]
    %v4906 = vld [vmem:[#allocation2 + $0x2b8] sm:$0xff]
    %v4907 = vld [vmem:[#allocation2 + $0x2c0] sm:$0xff]
    %v4908 = vld [vmem:[#allocation2 + $0x2c8] sm:$0xff]
    %v4909 = vld [vmem:[#allocation2 + $0x2d0] sm:$0xff]
    %v4910 = vld [vmem:[#allocation2 + $0x2d8] sm:$0xff]
    %v4911 = vld [vmem:[#allocation2 + $0x2e0] sm:$0xff]
    %v4912 = vld [vmem:[#allocation2 + $0x2e8] sm:$0xff]
    %v4913 = vld [vmem:[#allocation2 + $0x2f0] sm:$0xff]
    %v4914 = vld [vmem:[#allocation2 + $0x2f8] sm:$0xff]
    %v4915 = vld [vmem:[#allocation2 + $0x300] sm:$0xff]
    %v4916 = vld [vmem:[#allocation2 + $0x308] sm:$0xff]
    %v4917 = vld [vmem:[#allocation2 + $0x310] sm:$0xff]
    %v4918 = vld [vmem:[#allocation2 + $0x318] sm:$0xff]
    %v4919 = vld [vmem:[#allocation2 + $0x320] sm:$0xff]
    %v4920 = vld [vmem:[#allocation2 + $0x328] sm:$0xff]
    %v4921 = vperm.slane %v4904, 0
    %v4922 = vand.u32 %v4920, 4294901760
    %4923 = vmatpush.msra.mxu0 %v4922
    %v4924 = vand.u32 %v4919, 4294901760
    %4925 = vmatpush.msra.mxu0 %v4924
    %v4926 = vand.u32 %v4918, 4294901760
    %4927 = vmatpush.msra.mxu0 %v4926
    %v4928 = vand.u32 %v4917, 4294901760
    %4929 = vmatpush.msra.mxu0 %v4928
    %v4930 = vand.u32 %v4916, 4294901760
    %4931 = vmatpush.msra.mxu0 %v4930
    %v4932 = vand.u32 %v4915, 4294901760
    %4933 = vmatpush.msra.mxu0 %v4932
    %v4934 = vand.u32 %v4914, 4294901760
    %4935 = vmatpush.msra.mxu0 %v4934
    %v4936 = vand.u32 %v4913, 4294901760
    %4937 = vmatpush.msra.mxu0 %v4936
    %v4938 = vand.u32 %v4912, 4294901760
    %4939 = vmatpush.msra.mxu0 %v4938
    %v4940 = vand.u32 %v4911, 4294901760
    %4941 = vmatpush.msra.mxu0 %v4940
    %v4942 = vand.u32 %v4910, 4294901760
    %4943 = vmatpush.msra.mxu0 %v4942
    %v4944 = vand.u32 %v4909, 4294901760
    %4945 = vmatpush.msra.mxu0 %v4944
    %v4946 = vand.u32 %v4908, 4294901760
    %4947 = vmatpush.msra.mxu0 %v4946
    %v4948 = vand.u32 %v4907, 4294901760
    %4949 = vmatpush.msra.mxu0 %v4948
    %v4950 = vand.u32 %v4906, 4294901760
    %4951 = vmatpush.msra.mxu0 %v4950
    %v4952 = vand.u32 %v4905, 4294901760
    %4953 = vmatpush.msra.mxu0 %v4952
    %v4954 = vand.u32 %v4903, 4294901760
    %v4955 = vsub.f32 %v4903, %v4954
    %v4956 = vand.u32 %v4955, 4294901760
    %v4957 = vsub.f32 %v4955, %v4956
    %v4958 = vand.u32 %v4957, 4294901760
    %4959 = vmatmul.f32.gmra.mxu0 %v4958
    %v4960 = vpop.f32.mrf.mxu0
    %v4961 = vadd.f32 %v4921, %v4960
    %4962 = vdwg.mxu0
    %v4963 = vand.u32 %v4920, 4294901760
    %v4964 = vsub.f32 %v4920, %v4963
    %v4965 = vand.u32 %v4964, 4294901760
    %v4966 = vsub.f32 %v4964, %v4965
    %v4967 = vand.u32 %v4966, 4294901760
    %4968 = vmatpush.msra.mxu0 %v4967
    %v4969 = vand.u32 %v4919, 4294901760
    %v4970 = vsub.f32 %v4919, %v4969
    %v4971 = vand.u32 %v4970, 4294901760
    %v4972 = vsub.f32 %v4970, %v4971
    %v4973 = vand.u32 %v4972, 4294901760
    %4974 = vmatpush.msra.mxu0 %v4973
    %v4975 = vand.u32 %v4918, 4294901760
    %v4976 = vsub.f32 %v4918, %v4975
    %v4977 = vand.u32 %v4976, 4294901760
    %v4978 = vsub.f32 %v4976, %v4977
    %v4979 = vand.u32 %v4978, 4294901760
    %4980 = vmatpush.msra.mxu0 %v4979
    %v4981 = vand.u32 %v4917, 4294901760
    %v4982 = vsub.f32 %v4917, %v4981
    %v4983 = vand.u32 %v4982, 4294901760
    %v4984 = vsub.f32 %v4982, %v4983
    %v4985 = vand.u32 %v4984, 4294901760
    %4986 = vmatpush.msra.mxu0 %v4985
    %v4987 = vand.u32 %v4916, 4294901760
    %v4988 = vsub.f32 %v4916, %v4987
    %v4989 = vand.u32 %v4988, 4294901760
    %v4990 = vsub.f32 %v4988, %v4989
    %v4991 = vand.u32 %v4990, 4294901760
    %4992 = vmatpush.msra.mxu0 %v4991
    %v4993 = vand.u32 %v4915, 4294901760
    %v4994 = vsub.f32 %v4915, %v4993
    %v4995 = vand.u32 %v4994, 4294901760
    %v4996 = vsub.f32 %v4994, %v4995
    %v4997 = vand.u32 %v4996, 4294901760
    %4998 = vmatpush.msra.mxu0 %v4997
    %v4999 = vand.u32 %v4914, 4294901760
    %v5000 = vsub.f32 %v4914, %v4999
    %v5001 = vand.u32 %v5000, 4294901760
    %v5002 = vsub.f32 %v5000, %v5001
    %v5003 = vand.u32 %v5002, 4294901760
    %5004 = vmatpush.msra.mxu0 %v5003
    %v5005 = vand.u32 %v4913, 4294901760
    %v5006 = vsub.f32 %v4913, %v5005
    %v5007 = vand.u32 %v5006, 4294901760
    %v5008 = vsub.f32 %v5006, %v5007
    %v5009 = vand.u32 %v5008, 4294901760
    %5010 = vmatpush.msra.mxu0 %v5009
    %v5011 = vand.u32 %v4912, 4294901760
    %v5012 = vsub.f32 %v4912, %v5011
    %v5013 = vand.u32 %v5012, 4294901760
    %v5014 = vsub.f32 %v5012, %v5013
    %v5015 = vand.u32 %v5014, 4294901760
    %5016 = vmatpush.msra.mxu0 %v5015
    %v5017 = vand.u32 %v4911, 4294901760
    %v5018 = vsub.f32 %v4911, %v5017
    %v5019 = vand.u32 %v5018, 4294901760
    %v5020 = vsub.f32 %v5018, %v5019
    %v5021 = vand.u32 %v5020, 4294901760
    %5022 = vmatpush.msra.mxu0 %v5021
    %v5023 = vand.u32 %v4910, 4294901760
    %v5024 = vsub.f32 %v4910, %v5023
    %v5025 = vand.u32 %v5024, 4294901760
    %v5026 = vsub.f32 %v5024, %v5025
    %v5027 = vand.u32 %v5026, 4294901760
    %5028 = vmatpush.msra.mxu0 %v5027
    %v5029 = vand.u32 %v4909, 4294901760
    %v5030 = vsub.f32 %v4909, %v5029
    %v5031 = vand.u32 %v5030, 4294901760
    %v5032 = vsub.f32 %v5030, %v5031
    %v5033 = vand.u32 %v5032, 4294901760
    %5034 = vmatpush.msra.mxu0 %v5033
    %v5035 = vand.u32 %v4908, 4294901760
    %v5036 = vsub.f32 %v4908, %v5035
    %v5037 = vand.u32 %v5036, 4294901760
    %v5038 = vsub.f32 %v5036, %v5037
    %v5039 = vand.u32 %v5038, 4294901760
    %5040 = vmatpush.msra.mxu0 %v5039
    %v5041 = vand.u32 %v4907, 4294901760
    %v5042 = vsub.f32 %v4907, %v5041
    %v5043 = vand.u32 %v5042, 4294901760
    %v5044 = vsub.f32 %v5042, %v5043
    %v5045 = vand.u32 %v5044, 4294901760
    %5046 = vmatpush.msra.mxu0 %v5045
    %v5047 = vand.u32 %v4906, 4294901760
    %v5048 = vsub.f32 %v4906, %v5047
    %v5049 = vand.u32 %v5048, 4294901760
    %v5050 = vsub.f32 %v5048, %v5049
    %v5051 = vand.u32 %v5050, 4294901760
    %5052 = vmatpush.msra.mxu0 %v5051
    %v5053 = vand.u32 %v4905, 4294901760
    %v5054 = vsub.f32 %v4905, %v5053
    %v5055 = vand.u32 %v5054, 4294901760
    %v5056 = vsub.f32 %v5054, %v5055
    %v5057 = vand.u32 %v5056, 4294901760
    %5058 = vmatpush.msra.mxu0 %v5057
    %v5059 = vand.u32 %v4903, 4294901760
    %5060 = vmatmul.f32.gmra.mxu0 %v5059
    %v5061 = vpop.f32.mrf.mxu0
    %v5062 = vadd.f32 %v4961, %v5061
    %5063 = vdwg.mxu0
    %v5064 = vand.u32 %v4920, 4294901760
    %v5065 = vsub.f32 %v4920, %v5064
    %5066 = vmatpush.msra.mxu0 %v5065
    %v5067 = vand.u32 %v4919, 4294901760
    %v5068 = vsub.f32 %v4919, %v5067
    %5069 = vmatpush.msra.mxu0 %v5068
    %v5070 = vand.u32 %v4918, 4294901760
    %v5071 = vsub.f32 %v4918, %v5070
    %5072 = vmatpush.msra.mxu0 %v5071
    %v5073 = vand.u32 %v4917, 4294901760
    %v5074 = vsub.f32 %v4917, %v5073
    %5075 = vmatpush.msra.mxu0 %v5074
    %v5076 = vand.u32 %v4916, 4294901760
    %v5077 = vsub.f32 %v4916, %v5076
    %5078 = vmatpush.msra.mxu0 %v5077
    %v5079 = vand.u32 %v4915, 4294901760
    %v5080 = vsub.f32 %v4915, %v5079
    %5081 = vmatpush.msra.mxu0 %v5080
    %v5082 = vand.u32 %v4914, 4294901760
    %v5083 = vsub.f32 %v4914, %v5082
    %5084 = vmatpush.msra.mxu0 %v5083
    %v5085 = vand.u32 %v4913, 4294901760
    %v5086 = vsub.f32 %v4913, %v5085
    %5087 = vmatpush.msra.mxu0 %v5086
    %v5088 = vand.u32 %v4912, 4294901760
    %v5089 = vsub.f32 %v4912, %v5088
    %5090 = vmatpush.msra.mxu0 %v5089
    %v5091 = vand.u32 %v4911, 4294901760
    %v5092 = vsub.f32 %v4911, %v5091
    %5093 = vmatpush.msra.mxu0 %v5092
    %v5094 = vand.u32 %v4910, 4294901760
    %v5095 = vsub.f32 %v4910, %v5094
    %5096 = vmatpush.msra.mxu0 %v5095
    %v5097 = vand.u32 %v4909, 4294901760
    %v5098 = vsub.f32 %v4909, %v5097
    %5099 = vmatpush.msra.mxu0 %v5098
    %v5100 = vand.u32 %v4908, 4294901760
    %v5101 = vsub.f32 %v4908, %v5100
    %5102 = vmatpush.msra.mxu0 %v5101
    %v5103 = vand.u32 %v4907, 4294901760
    %v5104 = vsub.f32 %v4907, %v5103
    %5105 = vmatpush.msra.mxu0 %v5104
    %v5106 = vand.u32 %v4906, 4294901760
    %v5107 = vsub.f32 %v4906, %v5106
    %5108 = vmatpush.msra.mxu0 %v5107
    %v5109 = vand.u32 %v4905, 4294901760
    %v5110 = vsub.f32 %v4905, %v5109
    %5111 = vmatpush.msra.mxu0 %v5110
    %v5112 = vand.u32 %v4903, 4294901760
    %v5113 = vsub.f32 %v4903, %v5112
    %5114 = vmatmul.f32.gmra.mxu0 %v5113
    %v5115 = vpop.f32.mrf.mxu0
    %v5116 = vadd.f32 %v5062, %v5115
    %5117 = vdwg.mxu0
    %v5118 = vand.u32 %v4920, 4294901760
    %5119 = vmatpush.msra.mxu0 %v5118
    %v5120 = vand.u32 %v4919, 4294901760
    %5121 = vmatpush.msra.mxu0 %v5120
    %v5122 = vand.u32 %v4918, 4294901760
    %5123 = vmatpush.msra.mxu0 %v5122
    %v5124 = vand.u32 %v4917, 4294901760
    %5125 = vmatpush.msra.mxu0 %v5124
    %v5126 = vand.u32 %v4916, 4294901760
    %5127 = vmatpush.msra.mxu0 %v5126
    %v5128 = vand.u32 %v4915, 4294901760
    %5129 = vmatpush.msra.mxu0 %v5128
    %v5130 = vand.u32 %v4914, 4294901760
    %5131 = vmatpush.msra.mxu0 %v5130
    %v5132 = vand.u32 %v4913, 4294901760
    %5133 = vmatpush.msra.mxu0 %v5132
    %v5134 = vand.u32 %v4912, 4294901760
    %5135 = vmatpush.msra.mxu0 %v5134
    %v5136 = vand.u32 %v4911, 4294901760
    %5137 = vmatpush.msra.mxu0 %v5136
    %v5138 = vand.u32 %v4910, 4294901760
    %5139 = vmatpush.msra.mxu0 %v5138
    %v5140 = vand.u32 %v4909, 4294901760
    %5141 = vmatpush.msra.mxu0 %v5140
    %v5142 = vand.u32 %v4908, 4294901760
    %5143 = vmatpush.msra.mxu0 %v5142
    %v5144 = vand.u32 %v4907, 4294901760
    %5145 = vmatpush.msra.mxu0 %v5144
    %v5146 = vand.u32 %v4906, 4294901760
    %5147 = vmatpush.msra.mxu0 %v5146
    %v5148 = vand.u32 %v4905, 4294901760
    %5149 = vmatpush.msra.mxu0 %v5148
    %v5150 = vand.u32 %v4903, 4294901760
    %v5151 = vsub.f32 %v4903, %v5150
    %v5152 = vand.u32 %v5151, 4294901760
    %5153 = vmatmul.f32.gmra.mxu0 %v5152
    %v5154 = vpop.f32.mrf.mxu0
    %v5155 = vadd.f32 %v5116, %v5154
    %5156 = vdwg.mxu0
    %v5157 = vand.u32 %v4920, 4294901760
    %v5158 = vsub.f32 %v4920, %v5157
    %v5159 = vand.u32 %v5158, 4294901760
    %5160 = vmatpush.msra.mxu0 %v5159
    %v5161 = vand.u32 %v4919, 4294901760
    %v5162 = vsub.f32 %v4919, %v5161
    %v5163 = vand.u32 %v5162, 4294901760
    %5164 = vmatpush.msra.mxu0 %v5163
    %v5165 = vand.u32 %v4918, 4294901760
    %v5166 = vsub.f32 %v4918, %v5165
    %v5167 = vand.u32 %v5166, 4294901760
    %5168 = vmatpush.msra.mxu0 %v5167
    %v5169 = vand.u32 %v4917, 4294901760
    %v5170 = vsub.f32 %v4917, %v5169
    %v5171 = vand.u32 %v5170, 4294901760
    %5172 = vmatpush.msra.mxu0 %v5171
    %v5173 = vand.u32 %v4916, 4294901760
    %v5174 = vsub.f32 %v4916, %v5173
    %v5175 = vand.u32 %v5174, 4294901760
    %5176 = vmatpush.msra.mxu0 %v5175
    %v5177 = vand.u32 %v4915, 4294901760
    %v5178 = vsub.f32 %v4915, %v5177
    %v5179 = vand.u32 %v5178, 4294901760
    %5180 = vmatpush.msra.mxu0 %v5179
    %v5181 = vand.u32 %v4914, 4294901760
    %v5182 = vsub.f32 %v4914, %v5181
    %v5183 = vand.u32 %v5182, 4294901760
    %5184 = vmatpush.msra.mxu0 %v5183
    %v5185 = vand.u32 %v4913, 4294901760
    %v5186 = vsub.f32 %v4913, %v5185
    %v5187 = vand.u32 %v5186, 4294901760
    %5188 = vmatpush.msra.mxu0 %v5187
    %v5189 = vand.u32 %v4912, 4294901760
    %v5190 = vsub.f32 %v4912, %v5189
    %v5191 = vand.u32 %v5190, 4294901760
    %5192 = vmatpush.msra.mxu0 %v5191
    %v5193 = vand.u32 %v4911, 4294901760
    %v5194 = vsub.f32 %v4911, %v5193
    %v5195 = vand.u32 %v5194, 4294901760
    %5196 = vmatpush.msra.mxu0 %v5195
    %v5197 = vand.u32 %v4910, 4294901760
    %v5198 = vsub.f32 %v4910, %v5197
    %v5199 = vand.u32 %v5198, 4294901760
    %5200 = vmatpush.msra.mxu0 %v5199
    %v5201 = vand.u32 %v4909, 4294901760
    %v5202 = vsub.f32 %v4909, %v5201
    %v5203 = vand.u32 %v5202, 4294901760
    %5204 = vmatpush.msra.mxu0 %v5203
    %v5205 = vand.u32 %v4908, 4294901760
    %v5206 = vsub.f32 %v4908, %v5205
    %v5207 = vand.u32 %v5206, 4294901760
    %5208 = vmatpush.msra.mxu0 %v5207
    %v5209 = vand.u32 %v4907, 4294901760
    %v5210 = vsub.f32 %v4907, %v5209
    %v5211 = vand.u32 %v5210, 4294901760
    %5212 = vmatpush.msra.mxu0 %v5211
    %v5213 = vand.u32 %v4906, 4294901760
    %v5214 = vsub.f32 %v4906, %v5213
    %v5215 = vand.u32 %v5214, 4294901760
    %5216 = vmatpush.msra.mxu0 %v5215
    %v5217 = vand.u32 %v4905, 4294901760
    %v5218 = vsub.f32 %v4905, %v5217
    %v5219 = vand.u32 %v5218, 4294901760
    %5220 = vmatpush.msra.mxu0 %v5219
    %v5221 = vand.u32 %v4903, 4294901760
    %5222 = vmatmul.f32.gmra.mxu0 %v5221
    %v5223 = vpop.f32.mrf.mxu0
    %v5224 = vadd.f32 %v5155, %v5223
    %5225 = vdwg.mxu0
    %v5226 = vand.u32 %v4920, 4294901760
    %5227 = vmatpush.msra.mxu0 %v5226
    %v5228 = vand.u32 %v4919, 4294901760
    %5229 = vmatpush.msra.mxu0 %v5228
    %v5230 = vand.u32 %v4918, 4294901760
    %5231 = vmatpush.msra.mxu0 %v5230
    %v5232 = vand.u32 %v4917, 4294901760
    %5233 = vmatpush.msra.mxu0 %v5232
    %v5234 = vand.u32 %v4916, 4294901760
    %5235 = vmatpush.msra.mxu0 %v5234
    %v5236 = vand.u32 %v4915, 4294901760
    %5237 = vmatpush.msra.mxu0 %v5236
    %v5238 = vand.u32 %v4914, 4294901760
    %5239 = vmatpush.msra.mxu0 %v5238
    %v5240 = vand.u32 %v4913, 4294901760
    %5241 = vmatpush.msra.mxu0 %v5240
    %v5242 = vand.u32 %v4912, 4294901760
    %5243 = vmatpush.msra.mxu0 %v5242
    %v5244 = vand.u32 %v4911, 4294901760
    %5245 = vmatpush.msra.mxu0 %v5244
    %v5246 = vand.u32 %v4910, 4294901760
    %5247 = vmatpush.msra.mxu0 %v5246
    %v5248 = vand.u32 %v4909, 4294901760
    %5249 = vmatpush.msra.mxu0 %v5248
    %v5250 = vand.u32 %v4908, 4294901760
    %5251 = vmatpush.msra.mxu0 %v5250
    %v5252 = vand.u32 %v4907, 4294901760
    %5253 = vmatpush.msra.mxu0 %v5252
    %v5254 = vand.u32 %v4906, 4294901760
    %5255 = vmatpush.msra.mxu0 %v5254
    %v5256 = vand.u32 %v4905, 4294901760
    %5257 = vmatpush.msra.mxu0 %v5256
    %v5258 = vand.u32 %v4903, 4294901760
    %5259 = vmatmul.f32.gmra.mxu0 %v5258
    %v5260 = vpop.f32.mrf.mxu0
    %v5261 = vadd.f32 %v5224, %v5260
    %5262 = vdwg.mxu0
    %v5263 = vsel %vm1840, %v5261, 0.0
    %v5264 = vrot.slane %v5263, 4
    %v5265 = vadd.f32 %v5263, %v5264
    %v5266 = vrot.slane %v5265, 2
    %v5267 = vadd.f32 %v5265, %v5266
    %v5268 = vrot.slane %v5267, 1
    %v5269 = vadd.f32 %v5267, %v5268
    %v5270 = vmul.f32 %v5269, %v655
    %v5271 = vsub.f32 %v5261, %v5270
    %v5272 = vmul.f32 %v5271, %v5271
    %v5273 = vsel %vm1840, %v5272, 0.0
    %v5274 = vrot.slane %v5273, 4
    %v5275 = vadd.f32 %v5273, %v5274
    %v5276 = vrot.slane %v5275, 2
    %v5277 = vadd.f32 %v5275, %v5276
    %v5278 = vrot.slane %v5277, 1
    %v5279 = vadd.f32 %v5277, %v5278
    %v5280 = vmul.f32 %v5279, %v655
    %v5281 = vadd.f32 %v5280, 1e-05
    %v5282 = vrsqrt.pop %v5281
    %v5283 = vmul.f32 %v5282, %v5281
    %v5284 = vmul.f32 %v5283, %v5282
    %v5285 = vmul.f32 0.5, %v5284
    %v5286 = vsub.f32 1.5, %v5285
    %v5287 = vmul.f32 %v5282, %v5286
    %vm5288 = vweird.f32 %v5281
    %vm5289 = vweird.f32 %v5282
    %vm5290 = vmor %vm5288, %vm5289
    %v5291 = vsel %vm5290, %v5282, %v5287
    %v5292 = vmul.f32 %v5271, %v5291
    %v5293 = vperm.slane %v4904, 1
    %v5294 = vmul.f32 %v5292, %v5293
    %v5295 = vperm.slane %v4904, 2
    %v5296 = vadd.f32 %v5294, %v5295
    %v5297 = vadd.f32 %v5296, %v3926
    %v5299 = vsel %vm1840, %v5297, 0
    %5301 = vmatpush.xpose.msra.mxu0 0.0
    %5302 = vmatpush.xpose.msra.mxu0 0.0
    %5303 = vmatpush.xpose.msra.mxu0 0.0
    %5304 = vmatpush.xpose.msra.mxu0 0.0
    %5305 = vmatpush.xpose.msra.mxu0 0.0
    %5306 = vmatpush.xpose.msra.mxu0 0.0
    %5307 = vmatpush.xpose.msra.mxu0 0.0
    %5308 = vmatpush.xpose.msra.mxu0 0.0
    %5309 = vmatpush.xpose.msra.mxu0 0.0
    %5310 = vmatpush.xpose.msra.mxu0 0.0
    %5311 = vmatpush.xpose.msra.mxu0 0.0
    %5312 = vmatpush.xpose.msra.mxu0 0.0
    %5313 = vmatpush.xpose.msra.mxu0 0.0
    %5314 = vmatpush.xpose.msra.mxu0 0.0
    %5315 = vmatpush.xpose.msra.mxu0 0.0
    %v5316 = vand.u32 %v5299, 4294901760
    %5317 = vmatpush.xpose.msra.mxu0 %v5316
    %v5318 = vand.u32 %v5299, 4294901760
    %v5319 = vsub.f32 %v5299, %v5318
    %v5320 = vand.u32 %v5319, 4294901760
    %v5321 = vsub.f32 %v5319, %v5320
    %v5322 = vand.u32 %v5321, 4294901760
    %5323 = vmatmul.f32.gmra.mxu0 %v5322
    %v5324 = vpop.f32.mrf.mxu0
    %v5325 = vadd.f32 %v1877, %v5324
    %5326 = vdwg.mxu0
    %5327 = vmatpush.xpose.msra.mxu0 0.0
    %5328 = vmatpush.xpose.msra.mxu0 0.0
    %5329 = vmatpush.xpose.msra.mxu0 0.0
    %5330 = vmatpush.xpose.msra.mxu0 0.0
    %5331 = vmatpush.xpose.msra.mxu0 0.0
    %5332 = vmatpush.xpose.msra.mxu0 0.0
    %5333 = vmatpush.xpose.msra.mxu0 0.0
    %5334 = vmatpush.xpose.msra.mxu0 0.0
    %5335 = vmatpush.xpose.msra.mxu0 0.0
    %5336 = vmatpush.xpose.msra.mxu0 0.0
    %5337 = vmatpush.xpose.msra.mxu0 0.0
    %5338 = vmatpush.xpose.msra.mxu0 0.0
    %5339 = vmatpush.xpose.msra.mxu0 0.0
    %5340 = vmatpush.xpose.msra.mxu0 0.0
    %5341 = vmatpush.xpose.msra.mxu0 0.0
    %v5342 = vand.u32 %v5299, 4294901760
    %v5343 = vsub.f32 %v5299, %v5342
    %v5344 = vand.u32 %v5343, 4294901760
    %v5345 = vsub.f32 %v5343, %v5344
    %v5346 = vand.u32 %v5345, 4294901760
    %5347 = vmatpush.xpose.msra.mxu0 %v5346
    %v5348 = vand.u32 %v5299, 4294901760
    %5349 = vmatmul.f32.gmra.mxu0 %v5348
    %v5350 = vpop.f32.mrf.mxu0
    %v5351 = vadd.f32 %v5325, %v5350
    %5352 = vdwg.mxu0
    %5353 = vmatpush.xpose.msra.mxu0 0.0
    %5354 = vmatpush.xpose.msra.mxu0 0.0
    %5355 = vmatpush.xpose.msra.mxu0 0.0
    %5356 = vmatpush.xpose.msra.mxu0 0.0
    %5357 = vmatpush.xpose.msra.mxu0 0.0
    %5358 = vmatpush.xpose.msra.mxu0 0.0
    %5359 = vmatpush.xpose.msra.mxu0 0.0
    %5360 = vmatpush.xpose.msra.mxu0 0.0
    %5361 = vmatpush.xpose.msra.mxu0 0.0
    %5362 = vmatpush.xpose.msra.mxu0 0.0
    %5363 = vmatpush.xpose.msra.mxu0 0.0
    %5364 = vmatpush.xpose.msra.mxu0 0.0
    %5365 = vmatpush.xpose.msra.mxu0 0.0
    %5366 = vmatpush.xpose.msra.mxu0 0.0
    %5367 = vmatpush.xpose.msra.mxu0 0.0
    %v5368 = vand.u32 %v5299, 4294901760
    %v5369 = vsub.f32 %v5299, %v5368
    %5370 = vmatpush.xpose.msra.mxu0 %v5369
    %v5371 = vand.u32 %v5299, 4294901760
    %v5372 = vsub.f32 %v5299, %v5371
    %5373 = vmatmul.f32.gmra.mxu0 %v5372
    %v5374 = vpop.f32.mrf.mxu0
    %v5375 = vadd.f32 %v5351, %v5374
    %5376 = vdwg.mxu0
    %5377 = vmatpush.xpose.msra.mxu0 0.0
    %5378 = vmatpush.xpose.msra.mxu0 0.0
    %5379 = vmatpush.xpose.msra.mxu0 0.0
    %5380 = vmatpush.xpose.msra.mxu0 0.0
    %5381 = vmatpush.xpose.msra.mxu0 0.0
    %5382 = vmatpush.xpose.msra.mxu0 0.0
    %5383 = vmatpush.xpose.msra.mxu0 0.0
    %5384 = vmatpush.xpose.msra.mxu0 0.0
    %5385 = vmatpush.xpose.msra.mxu0 0.0
    %5386 = vmatpush.xpose.msra.mxu0 0.0
    %5387 = vmatpush.xpose.msra.mxu0 0.0
    %5388 = vmatpush.xpose.msra.mxu0 0.0
    %5389 = vmatpush.xpose.msra.mxu0 0.0
    %5390 = vmatpush.xpose.msra.mxu0 0.0
    %5391 = vmatpush.xpose.msra.mxu0 0.0
    %v5392 = vand.u32 %v5299, 4294901760
    %5393 = vmatpush.xpose.msra.mxu0 %v5392
    %v5394 = vand.u32 %v5299, 4294901760
    %v5395 = vsub.f32 %v5299, %v5394
    %v5396 = vand.u32 %v5395, 4294901760
    %5397 = vmatmul.f32.gmra.mxu0 %v5396
    %v5398 = vpop.f32.mrf.mxu0
    %v5399 = vadd.f32 %v5375, %v5398
    %5400 = vdwg.mxu0
    %5401 = vmatpush.xpose.msra.mxu0 0.0
    %5402 = vmatpush.xpose.msra.mxu0 0.0
    %5403 = vmatpush.xpose.msra.mxu0 0.0
    %5404 = vmatpush.xpose.msra.mxu0 0.0
    %5405 = vmatpush.xpose.msra.mxu0 0.0
    %5406 = vmatpush.xpose.msra.mxu0 0.0
    %5407 = vmatpush.xpose.msra.mxu0 0.0
    %5408 = vmatpush.xpose.msra.mxu0 0.0
    %5409 = vmatpush.xpose.msra.mxu0 0.0
    %5410 = vmatpush.xpose.msra.mxu0 0.0
    %5411 = vmatpush.xpose.msra.mxu0 0.0
    %5412 = vmatpush.xpose.msra.mxu0 0.0
    %5413 = vmatpush.xpose.msra.mxu0 0.0
    %5414 = vmatpush.xpose.msra.mxu0 0.0
    %5415 = vmatpush.xpose.msra.mxu0 0.0
    %v5416 = vand.u32 %v5299, 4294901760
    %v5417 = vsub.f32 %v5299, %v5416
    %v5418 = vand.u32 %v5417, 4294901760
    %5419 = vmatpush.xpose.msra.mxu0 %v5418
    %v5420 = vand.u32 %v5299, 4294901760
    %5421 = vmatmul.f32.gmra.mxu0 %v5420
    %v5422 = vpop.f32.mrf.mxu0
    %v5423 = vadd.f32 %v5399, %v5422
    %5424 = vdwg.mxu0
    %5425 = vmatpush.xpose.msra.mxu0 0.0
    %5426 = vmatpush.xpose.msra.mxu0 0.0
    %5427 = vmatpush.xpose.msra.mxu0 0.0
    %5428 = vmatpush.xpose.msra.mxu0 0.0
    %5429 = vmatpush.xpose.msra.mxu0 0.0
    %5430 = vmatpush.xpose.msra.mxu0 0.0
    %5431 = vmatpush.xpose.msra.mxu0 0.0
    %5432 = vmatpush.xpose.msra.mxu0 0.0
    %5433 = vmatpush.xpose.msra.mxu0 0.0
    %5434 = vmatpush.xpose.msra.mxu0 0.0
    %5435 = vmatpush.xpose.msra.mxu0 0.0
    %5436 = vmatpush.xpose.msra.mxu0 0.0
    %5437 = vmatpush.xpose.msra.mxu0 0.0
    %5438 = vmatpush.xpose.msra.mxu0 0.0
    %5439 = vmatpush.xpose.msra.mxu0 0.0
    %v5440 = vand.u32 %v5299, 4294901760
    %5441 = vmatpush.xpose.msra.mxu0 %v5440
    %v5442 = vand.u32 %v5299, 4294901760
    %5443 = vmatmul.f32.gmra.mxu0 %v5442
    %v5444 = vpop.f32.mrf.mxu0
    %v5445 = vadd.f32 %v5423, %v5444
    %5446 = vdwg.mxu0
    %v5447 = vld [vmem:[#allocation2 + $0x3a0] sm:$0x7]
    %v5448 = vld [vmem:[#allocation2 + $0x380] sm:$0xff]
    %v5449 = vld [vmem:[#allocation2 + $0x388] sm:$0xff]
    %v5450 = vld [vmem:[#allocation2 + $0x390] sm:$0xff]
    %v5451 = vld [vmem:[#allocation2 + $0x398] sm:$0xff]
    %v5452 = vperm.slane %v5447, 0
    %5453 = vmatpush.msra.mxu0 0.0
    %5454 = vmatpush.msra.mxu0 0.0
    %5455 = vmatpush.msra.mxu0 0.0
    %5456 = vmatpush.msra.mxu0 0.0
    %5457 = vmatpush.msra.mxu0 0.0
    %5458 = vmatpush.msra.mxu0 0.0
    %5459 = vmatpush.msra.mxu0 0.0
    %5460 = vmatpush.msra.mxu0 0.0
    %5461 = vmatpush.msra.mxu0 0.0
    %5462 = vmatpush.msra.mxu0 0.0
    %5463 = vmatpush.msra.mxu0 0.0
    %5464 = vmatpush.msra.mxu0 0.0
    %v5465 = vand.u32 %v5451, 4294901760
    %5466 = vmatpush.msra.mxu0 %v5465
    %v5467 = vand.u32 %v5450, 4294901760
    %5468 = vmatpush.msra.mxu0 %v5467
    %v5469 = vand.u32 %v5449, 4294901760
    %5470 = vmatpush.msra.mxu0 %v5469
    %v5471 = vand.u32 %v5448, 4294901760
    %5472 = vmatpush.msra.mxu0 %v5471
    %v5473 = vand.u32 %v5299, 4294901760
    %v5474 = vsub.f32 %v5299, %v5473
    %v5475 = vand.u32 %v5474, 4294901760
    %v5476 = vsub.f32 %v5474, %v5475
    %v5477 = vand.u32 %v5476, 4294901760
    %5478 = vmatmul.f32.gmra.mxu0 %v5477
    %v5479 = vpop.f32.mrf.mxu0
    %v5480 = vadd.f32 %v5452, %v5479
    %5481 = vdwg.mxu0
    %5482 = vmatpush.msra.mxu0 0.0
    %5483 = vmatpush.msra.mxu0 0.0
    %5484 = vmatpush.msra.mxu0 0.0
    %5485 = vmatpush.msra.mxu0 0.0
    %5486 = vmatpush.msra.mxu0 0.0
    %5487 = vmatpush.msra.mxu0 0.0
    %5488 = vmatpush.msra.mxu0 0.0
    %5489 = vmatpush.msra.mxu0 0.0
    %5490 = vmatpush.msra.mxu0 0.0
    %5491 = vmatpush.msra.mxu0 0.0
    %5492 = vmatpush.msra.mxu0 0.0
    %5493 = vmatpush.msra.mxu0 0.0
    %v5494 = vand.u32 %v5451, 4294901760
    %v5495 = vsub.f32 %v5451, %v5494
    %v5496 = vand.u32 %v5495, 4294901760
    %v5497 = vsub.f32 %v5495, %v5496
    %v5498 = vand.u32 %v5497, 4294901760
    %5499 = vmatpush.msra.mxu0 %v5498
    %v5500 = vand.u32 %v5450, 4294901760
    %v5501 = vsub.f32 %v5450, %v5500
    %v5502 = vand.u32 %v5501, 4294901760
    %v5503 = vsub.f32 %v5501, %v5502
    %v5504 = vand.u32 %v5503, 4294901760
    %5505 = vmatpush.msra.mxu0 %v5504
    %v5506 = vand.u32 %v5449, 4294901760
    %v5507 = vsub.f32 %v5449, %v5506
    %v5508 = vand.u32 %v5507, 4294901760
    %v5509 = vsub.f32 %v5507, %v5508
    %v5510 = vand.u32 %v5509, 4294901760
    %5511 = vmatpush.msra.mxu0 %v5510
    %v5512 = vand.u32 %v5448, 4294901760
    %v5513 = vsub.f32 %v5448, %v5512
    %v5514 = vand.u32 %v5513, 4294901760
    %v5515 = vsub.f32 %v5513, %v5514
    %v5516 = vand.u32 %v5515, 4294901760
    %5517 = vmatpush.msra.mxu0 %v5516
    %v5518 = vand.u32 %v5299, 4294901760
    %5519 = vmatmul.f32.gmra.mxu0 %v5518
    %v5520 = vpop.f32.mrf.mxu0
    %v5521 = vadd.f32 %v5480, %v5520
    %5522 = vdwg.mxu0
    %5523 = vmatpush.msra.mxu0 0.0
    %5524 = vmatpush.msra.mxu0 0.0
    %5525 = vmatpush.msra.mxu0 0.0
    %5526 = vmatpush.msra.mxu0 0.0
    %5527 = vmatpush.msra.mxu0 0.0
    %5528 = vmatpush.msra.mxu0 0.0
    %5529 = vmatpush.msra.mxu0 0.0
    %5530 = vmatpush.msra.mxu0 0.0
    %5531 = vmatpush.msra.mxu0 0.0
    %5532 = vmatpush.msra.mxu0 0.0
    %5533 = vmatpush.msra.mxu0 0.0
    %5534 = vmatpush.msra.mxu0 0.0
    %v5535 = vand.u32 %v5451, 4294901760
    %v5536 = vsub.f32 %v5451, %v5535
    %5537 = vmatpush.msra.mxu0 %v5536
    %v5538 = vand.u32 %v5450, 4294901760
    %v5539 = vsub.f32 %v5450, %v5538
    %5540 = vmatpush.msra.mxu0 %v5539
    %v5541 = vand.u32 %v5449, 4294901760
    %v5542 = vsub.f32 %v5449, %v5541
    %5543 = vmatpush.msra.mxu0 %v5542
    %v5544 = vand.u32 %v5448, 4294901760
    %v5545 = vsub.f32 %v5448, %v5544
    %5546 = vmatpush.msra.mxu0 %v5545
    %v5547 = vand.u32 %v5299, 4294901760
    %v5548 = vsub.f32 %v5299, %v5547
    %5549 = vmatmul.f32.gmra.mxu0 %v5548
    %v5550 = vpop.f32.mrf.mxu0
    %v5551 = vadd.f32 %v5521, %v5550
    %5552 = vdwg.mxu0
    %5553 = vmatpush.msra.mxu0 0.0
    %5554 = vmatpush.msra.mxu0 0.0
    %5555 = vmatpush.msra.mxu0 0.0
    %5556 = vmatpush.msra.mxu0 0.0
    %5557 = vmatpush.msra.mxu0 0.0
    %5558 = vmatpush.msra.mxu0 0.0
    %5559 = vmatpush.msra.mxu0 0.0
    %5560 = vmatpush.msra.mxu0 0.0
    %5561 = vmatpush.msra.mxu0 0.0
    %5562 = vmatpush.msra.mxu0 0.0
    %5563 = vmatpush.msra.mxu0 0.0
    %5564 = vmatpush.msra.mxu0 0.0
    %v5565 = vand.u32 %v5451, 4294901760
    %5566 = vmatpush.msra.mxu0 %v5565
    %v5567 = vand.u32 %v5450, 4294901760
    %5568 = vmatpush.msra.mxu0 %v5567
    %v5569 = vand.u32 %v5449, 4294901760
    %5570 = vmatpush.msra.mxu0 %v5569
    %v5571 = vand.u32 %v5448, 4294901760
    %5572 = vmatpush.msra.mxu0 %v5571
    %v5573 = vand.u32 %v5299, 4294901760
    %v5574 = vsub.f32 %v5299, %v5573
    %v5575 = vand.u32 %v5574, 4294901760
    %5576 = vmatmul.f32.gmra.mxu0 %v5575
    %v5577 = vpop.f32.mrf.mxu0
    %v5578 = vadd.f32 %v5551, %v5577
    %5579 = vdwg.mxu0
    %5580 = vmatpush.msra.mxu0 0.0
    %5581 = vmatpush.msra.mxu0 0.0
    %5582 = vmatpush.msra.mxu0 0.0
    %5583 = vmatpush.msra.mxu0 0.0
    %5584 = vmatpush.msra.mxu0 0.0
    %5585 = vmatpush.msra.mxu0 0.0
    %5586 = vmatpush.msra.mxu0 0.0
    %5587 = vmatpush.msra.mxu0 0.0
    %5588 = vmatpush.msra.mxu0 0.0
    %5589 = vmatpush.msra.mxu0 0.0
    %5590 = vmatpush.msra.mxu0 0.0
    %5591 = vmatpush.msra.mxu0 0.0
    %v5592 = vand.u32 %v5451, 4294901760
    %v5593 = vsub.f32 %v5451, %v5592
    %v5594 = vand.u32 %v5593, 4294901760
    %5595 = vmatpush.msra.mxu0 %v5594
    %v5596 = vand.u32 %v5450, 4294901760
    %v5597 = vsub.f32 %v5450, %v5596
    %v5598 = vand.u32 %v5597, 4294901760
    %5599 = vmatpush.msra.mxu0 %v5598
    %v5600 = vand.u32 %v5449, 4294901760
    %v5601 = vsub.f32 %v5449, %v5600
    %v5602 = vand.u32 %v5601, 4294901760
    %5603 = vmatpush.msra.mxu0 %v5602
    %v5604 = vand.u32 %v5448, 4294901760
    %v5605 = vsub.f32 %v5448, %v5604
    %v5606 = vand.u32 %v5605, 4294901760
    %5607 = vmatpush.msra.mxu0 %v5606
    %v5608 = vand.u32 %v5299, 4294901760
    %5609 = vmatmul.f32.gmra.mxu0 %v5608
    %v5610 = vpop.f32.mrf.mxu0
    %v5611 = vadd.f32 %v5578, %v5610
    %5612 = vdwg.mxu0
    %5613 = vmatpush.msra.mxu0 0.0
    %5614 = vmatpush.msra.mxu0 0.0
    %5615 = vmatpush.msra.mxu0 0.0
    %5616 = vmatpush.msra.mxu0 0.0
    %5617 = vmatpush.msra.mxu0 0.0
    %5618 = vmatpush.msra.mxu0 0.0
    %5619 = vmatpush.msra.mxu0 0.0
    %5620 = vmatpush.msra.mxu0 0.0
    %5621 = vmatpush.msra.mxu0 0.0
    %5622 = vmatpush.msra.mxu0 0.0
    %5623 = vmatpush.msra.mxu0 0.0
    %5624 = vmatpush.msra.mxu0 0.0
    %v5625 = vand.u32 %v5451, 4294901760
    %5626 = vmatpush.msra.mxu0 %v5625
    %v5627 = vand.u32 %v5450, 4294901760
    %5628 = vmatpush.msra.mxu0 %v5627
    %v5629 = vand.u32 %v5449, 4294901760
    %5630 = vmatpush.msra.mxu0 %v5629
    %v5631 = vand.u32 %v5448, 4294901760
    %5632 = vmatpush.msra.mxu0 %v5631
    %v5633 = vand.u32 %v5299, 4294901760
    %5634 = vmatmul.f32.gmra.mxu0 %v5633
    %v5635 = vpop.f32.mrf.mxu0
    %v5636 = vadd.f32 %v5611, %v5635
    %5637 = vdwg.mxu0
    %v5638 = vsel %vm1840, %v5636, 0.0
    %v5639 = vrot.slane %v5638, 4
    %v5640 = vadd.f32 %v5638, %v5639
    %v5641 = vrot.slane %v5640, 2
    %v5642 = vadd.f32 %v5640, %v5641
    %v5643 = vrot.slane %v5642, 1
    %v5644 = vadd.f32 %v5642, %v5643
    %v5645 = vmul.f32 %v5644, %v655
    %v5646 = vsub.f32 %v5636, %v5645
    %v5647 = vmul.f32 %v5646, %v5646
    %v5648 = vsel %vm1840, %v5647, 0.0
    %v5649 = vrot.slane %v5648, 4
    %v5650 = vadd.f32 %v5648, %v5649
    %v5651 = vrot.slane %v5650, 2
    %v5652 = vadd.f32 %v5650, %v5651
    %v5653 = vrot.slane %v5652, 1
    %v5654 = vadd.f32 %v5652, %v5653
    %v5655 = vmul.f32 %v5654, %v655
    %v5656 = vadd.f32 %v5655, 1e-05
    %v5657 = vrsqrt.pop %v5656
    %v5658 = vmul.f32 %v5657, %v5656
    %v5659 = vmul.f32 %v5658, %v5657
    %v5660 = vmul.f32 0.5, %v5659
    %v5661 = vsub.f32 1.5, %v5660
    %v5662 = vmul.f32 %v5657, %v5661
    %vm5663 = vweird.f32 %v5656
    %vm5664 = vweird.f32 %v5657
    %vm5665 = vmor %vm5663, %vm5664
    %v5666 = vsel %vm5665, %v5657, %v5662
    %v5667 = vmul.f32 %v5646, %v5666
    %v5668 = vperm.slane %v5447, 1
    %v5669 = vmul.f32 %v5667, %v5668
    %v5670 = vperm.slane %v5447, 2
    %v5671 = vadd.f32 %v5669, %v5670
    %v5672 = vmul.f32 %v5671, 0.5
    %v5673 = vmul.f32 %v5671, %v690
    %v5674 = vmul.f32 %v5673, %v5673
    %v5675 = vmin.f32 16.0, %v5674
    %v5676 = vmul.f32 %v5675, 2.1237322e-06
    %v5677 = vadd.f32 %v5676, 0.00028619796
    %v5678 = vmul.f32 %v5675, %v5677
    %v5679 = vadd.f32 %v5678, 0.0036580483
    %v5680 = vmul.f32 %v5675, %v5679
    %v5681 = vadd.f32 %v5680, 0.05243302
    %v5682 = vmul.f32 %v5675, %v5681
    %v5683 = vadd.f32 %v5682, 0.18741608
    %v5684 = vmul.f32 %v5675, %v5683
    %v5685 = vadd.f32 %v5684, 1.1283791
    %v5686 = vmul.f32 %v5673, %v5685
    %v5687 = vmul.f32 %v5675, 3.8918573e-05
    %v5688 = vadd.f32 %v5687, 0.001143296
    %v5689 = vmul.f32 %v5675, %v5688
    %v5690 = vadd.f32 %v5689, 0.014752088
    %v5691 = vmul.f32 %v5675, %v5690
    %v5692 = vadd.f32 %v5691, 0.112945676
    %v5693 = vmul.f32 %v5675, %v5692
    %v5694 = vadd.f32 %v5693, 0.4994258
    %v5695 = vmul.f32 %v5675, %v5694
    %v5696 = vadd.f32 %v5695, 1.0
    %v5697 = vrcp.pop %v5696
    %v5698 = vmul.f32 %v5696, %v5697
    %v5699 = vsub.f32 1.0, %v5698
    %v5700 = vmul.f32 %v5697, %v5699
    %v5701 = vadd.f32 %v5697, %v5700
    %vm5702 = vweird.f32 %v5696
    %vm5703 = vweird.f32 %v5697
    %vm5704 = vmor %vm5702, %vm5703
    %v5705 = vsel %vm5704, %v5697, %v5701
    %v5706 = vand.u32 2147483647, %v5696
    %vm5707 = vcmp.eq.f32.partialorder %v5706, 8.507059e+37
    %v5708 = vand.u32 %v5696, 2147483648
    %v5709 = vor.u32 1.1754944e-38, %v5708
    %v5710 = vsel %vm5707, %v5709, %v5705
    %v5711 = vmul.f32 %v5686, %v5710
    %v5712 = vmin.f32 %v5711, 1.0
    %v5713 = vmax.f32 %v5712, -1.0
    %v5714 = vadd.f32 %v5713, 1.0
    %v5715 = vmul.f32 %v5672, %v5714
    %v5716 = vld [vmem:[#allocation2 + $0x3c8] sm:$0x7]
    %v5717 = vld [vmem:[#allocation2 + $0x3a8] sm:$0xff]
    %v5718 = vld [vmem:[#allocation2 + $0x3b0] sm:$0xff]
    %v5719 = vld [vmem:[#allocation2 + $0x3b8] sm:$0xff]
    %v5720 = vld [vmem:[#allocation2 + $0x3c0] sm:$0xff]
    %v5721 = vperm.slane %v5716, 0
    %v5723 = vsel %vm1840, %v5715, 0
    %5725 = vmatpush.msra.mxu0 0.0
    %5726 = vmatpush.msra.mxu0 0.0
    %5727 = vmatpush.msra.mxu0 0.0
    %5728 = vmatpush.msra.mxu0 0.0
    %5729 = vmatpush.msra.mxu0 0.0
    %5730 = vmatpush.msra.mxu0 0.0
    %5731 = vmatpush.msra.mxu0 0.0
    %5732 = vmatpush.msra.mxu0 0.0
    %5733 = vmatpush.msra.mxu0 0.0
    %5734 = vmatpush.msra.mxu0 0.0
    %5735 = vmatpush.msra.mxu0 0.0
    %5736 = vmatpush.msra.mxu0 0.0
    %v5737 = vand.u32 %v5720, 4294901760
    %5738 = vmatpush.msra.mxu0 %v5737
    %v5739 = vand.u32 %v5719, 4294901760
    %5740 = vmatpush.msra.mxu0 %v5739
    %v5741 = vand.u32 %v5718, 4294901760
    %5742 = vmatpush.msra.mxu0 %v5741
    %v5743 = vand.u32 %v5717, 4294901760
    %5744 = vmatpush.msra.mxu0 %v5743
    %v5745 = vand.u32 %v5723, 4294901760
    %v5746 = vsub.f32 %v5723, %v5745
    %v5747 = vand.u32 %v5746, 4294901760
    %v5748 = vsub.f32 %v5746, %v5747
    %v5749 = vand.u32 %v5748, 4294901760
    %5750 = vmatmul.f32.gmra.mxu0 %v5749
    %v5751 = vpop.f32.mrf.mxu0
    %v5752 = vadd.f32 %v5721, %v5751
    %5753 = vdwg.mxu0
    %5754 = vmatpush.msra.mxu0 0.0
    %5755 = vmatpush.msra.mxu0 0.0
    %5756 = vmatpush.msra.mxu0 0.0
    %5757 = vmatpush.msra.mxu0 0.0
    %5758 = vmatpush.msra.mxu0 0.0
    %5759 = vmatpush.msra.mxu0 0.0
    %5760 = vmatpush.msra.mxu0 0.0
    %5761 = vmatpush.msra.mxu0 0.0
    %5762 = vmatpush.msra.mxu0 0.0
    %5763 = vmatpush.msra.mxu0 0.0
    %5764 = vmatpush.msra.mxu0 0.0
    %5765 = vmatpush.msra.mxu0 0.0
    %v5766 = vand.u32 %v5720, 4294901760
    %v5767 = vsub.f32 %v5720, %v5766
    %v5768 = vand.u32 %v5767, 4294901760
    %v5769 = vsub.f32 %v5767, %v5768
    %v5770 = vand.u32 %v5769, 4294901760
    %5771 = vmatpush.msra.mxu0 %v5770
    %v5772 = vand.u32 %v5719, 4294901760
    %v5773 = vsub.f32 %v5719, %v5772
    %v5774 = vand.u32 %v5773, 4294901760
    %v5775 = vsub.f32 %v5773, %v5774
    %v5776 = vand.u32 %v5775, 4294901760
    %5777 = vmatpush.msra.mxu0 %v5776
    %v5778 = vand.u32 %v5718, 4294901760
    %v5779 = vsub.f32 %v5718, %v5778
    %v5780 = vand.u32 %v5779, 4294901760
    %v5781 = vsub.f32 %v5779, %v5780
    %v5782 = vand.u32 %v5781, 4294901760
    %5783 = vmatpush.msra.mxu0 %v5782
    %v5784 = vand.u32 %v5717, 4294901760
    %v5785 = vsub.f32 %v5717, %v5784
    %v5786 = vand.u32 %v5785, 4294901760
    %v5787 = vsub.f32 %v5785, %v5786
    %v5788 = vand.u32 %v5787, 4294901760
    %5789 = vmatpush.msra.mxu0 %v5788
    %v5790 = vand.u32 %v5723, 4294901760
    %5791 = vmatmul.f32.gmra.mxu0 %v5790
    %v5792 = vpop.f32.mrf.mxu0
    %v5793 = vadd.f32 %v5752, %v5792
    %5794 = vdwg.mxu0
    %5795 = vmatpush.msra.mxu0 0.0
    %5796 = vmatpush.msra.mxu0 0.0
    %5797 = vmatpush.msra.mxu0 0.0
    %5798 = vmatpush.msra.mxu0 0.0
    %5799 = vmatpush.msra.mxu0 0.0
    %5800 = vmatpush.msra.mxu0 0.0
    %5801 = vmatpush.msra.mxu0 0.0
    %5802 = vmatpush.msra.mxu0 0.0
    %5803 = vmatpush.msra.mxu0 0.0
    %5804 = vmatpush.msra.mxu0 0.0
    %5805 = vmatpush.msra.mxu0 0.0
    %5806 = vmatpush.msra.mxu0 0.0
    %v5807 = vand.u32 %v5720, 4294901760
    %v5808 = vsub.f32 %v5720, %v5807
    %5809 = vmatpush.msra.mxu0 %v5808
    %v5810 = vand.u32 %v5719, 4294901760
    %v5811 = vsub.f32 %v5719, %v5810
    %5812 = vmatpush.msra.mxu0 %v5811
    %v5813 = vand.u32 %v5718, 4294901760
    %v5814 = vsub.f32 %v5718, %v5813
    %5815 = vmatpush.msra.mxu0 %v5814
    %v5816 = vand.u32 %v5717, 4294901760
    %v5817 = vsub.f32 %v5717, %v5816
    %5818 = vmatpush.msra.mxu0 %v5817
    %v5819 = vand.u32 %v5723, 4294901760
    %v5820 = vsub.f32 %v5723, %v5819
    %5821 = vmatmul.f32.gmra.mxu0 %v5820
    %v5822 = vpop.f32.mrf.mxu0
    %v5823 = vadd.f32 %v5793, %v5822
    %5824 = vdwg.mxu0
    %5825 = vmatpush.msra.mxu0 0.0
    %5826 = vmatpush.msra.mxu0 0.0
    %5827 = vmatpush.msra.mxu0 0.0
    %5828 = vmatpush.msra.mxu0 0.0
    %5829 = vmatpush.msra.mxu0 0.0
    %5830 = vmatpush.msra.mxu0 0.0
    %5831 = vmatpush.msra.mxu0 0.0
    %5832 = vmatpush.msra.mxu0 0.0
    %5833 = vmatpush.msra.mxu0 0.0
    %5834 = vmatpush.msra.mxu0 0.0
    %5835 = vmatpush.msra.mxu0 0.0
    %5836 = vmatpush.msra.mxu0 0.0
    %v5837 = vand.u32 %v5720, 4294901760
    %5838 = vmatpush.msra.mxu0 %v5837
    %v5839 = vand.u32 %v5719, 4294901760
    %5840 = vmatpush.msra.mxu0 %v5839
    %v5841 = vand.u32 %v5718, 4294901760
    %5842 = vmatpush.msra.mxu0 %v5841
    %v5843 = vand.u32 %v5717, 4294901760
    %5844 = vmatpush.msra.mxu0 %v5843
    %v5845 = vand.u32 %v5723, 4294901760
    %v5846 = vsub.f32 %v5723, %v5845
    %v5847 = vand.u32 %v5846, 4294901760
    %5848 = vmatmul.f32.gmra.mxu0 %v5847
    %v5849 = vpop.f32.mrf.mxu0
    %v5850 = vadd.f32 %v5823, %v5849
    %5851 = vdwg.mxu0
    %5852 = vmatpush.msra.mxu0 0.0
    %5853 = vmatpush.msra.mxu0 0.0
    %5854 = vmatpush.msra.mxu0 0.0
    %5855 = vmatpush.msra.mxu0 0.0
    %5856 = vmatpush.msra.mxu0 0.0
    %5857 = vmatpush.msra.mxu0 0.0
    %5858 = vmatpush.msra.mxu0 0.0
    %5859 = vmatpush.msra.mxu0 0.0
    %5860 = vmatpush.msra.mxu0 0.0
    %5861 = vmatpush.msra.mxu0 0.0
    %5862 = vmatpush.msra.mxu0 0.0
    %5863 = vmatpush.msra.mxu0 0.0
    %v5864 = vand.u32 %v5720, 4294901760
    %v5865 = vsub.f32 %v5720, %v5864
    %v5866 = vand.u32 %v5865, 4294901760
    %5867 = vmatpush.msra.mxu0 %v5866
    %v5868 = vand.u32 %v5719, 4294901760
    %v5869 = vsub.f32 %v5719, %v5868
    %v5870 = vand.u32 %v5869, 4294901760
    %5871 = vmatpush.msra.mxu0 %v5870
    %v5872 = vand.u32 %v5718, 4294901760
    %v5873 = vsub.f32 %v5718, %v5872
    %v5874 = vand.u32 %v5873, 4294901760
    %5875 = vmatpush.msra.mxu0 %v5874
    %v5876 = vand.u32 %v5717, 4294901760
    %v5877 = vsub.f32 %v5717, %v5876
    %v5878 = vand.u32 %v5877, 4294901760
    %5879 = vmatpush.msra.mxu0 %v5878
    %v5880 = vand.u32 %v5723, 4294901760
    %5881 = vmatmul.f32.gmra.mxu0 %v5880
    %v5882 = vpop.f32.mrf.mxu0
    %v5883 = vadd.f32 %v5850, %v5882
    %5884 = vdwg.mxu0
    %5885 = vmatpush.msra.mxu0 0.0
    %5886 = vmatpush.msra.mxu0 0.0
    %5887 = vmatpush.msra.mxu0 0.0
    %5888 = vmatpush.msra.mxu0 0.0
    %5889 = vmatpush.msra.mxu0 0.0
    %5890 = vmatpush.msra.mxu0 0.0
    %5891 = vmatpush.msra.mxu0 0.0
    %5892 = vmatpush.msra.mxu0 0.0
    %5893 = vmatpush.msra.mxu0 0.0
    %5894 = vmatpush.msra.mxu0 0.0
    %5895 = vmatpush.msra.mxu0 0.0
    %5896 = vmatpush.msra.mxu0 0.0
    %v5897 = vand.u32 %v5720, 4294901760
    %5898 = vmatpush.msra.mxu0 %v5897
    %v5899 = vand.u32 %v5719, 4294901760
    %5900 = vmatpush.msra.mxu0 %v5899
    %v5901 = vand.u32 %v5718, 4294901760
    %5902 = vmatpush.msra.mxu0 %v5901
    %v5903 = vand.u32 %v5717, 4294901760
    %5904 = vmatpush.msra.mxu0 %v5903
    %v5905 = vand.u32 %v5723, 4294901760
    %5906 = vmatmul.f32.gmra.mxu0 %v5905
    %v5907 = vpop.f32.mrf.mxu0
    %v5908 = vadd.f32 %v5883, %v5907
    %5909 = vdwg.mxu0
    %v5910 = vsel %vm1840, %v5908, 0.0
    %v5911 = vrot.slane %v5910, 4
    %v5912 = vadd.f32 %v5910, %v5911
    %v5913 = vrot.slane %v5912, 2
    %v5914 = vadd.f32 %v5912, %v5913
    %v5915 = vrot.slane %v5914, 1
    %v5916 = vadd.f32 %v5914, %v5915
    %v5917 = vmul.f32 %v5916, %v655
    %v5918 = vsub.f32 %v5908, %v5917
    %v5919 = vmul.f32 %v5918, %v5918
    %v5920 = vsel %vm1840, %v5919, 0.0
    %v5921 = vrot.slane %v5920, 4
    %v5922 = vadd.f32 %v5920, %v5921
    %v5923 = vrot.slane %v5922, 2
    %v5924 = vadd.f32 %v5922, %v5923
    %v5925 = vrot.slane %v5924, 1
    %v5926 = vadd.f32 %v5924, %v5925
    %v5927 = vmul.f32 %v5926, %v655
    %v5928 = vadd.f32 %v5927, 1e-05
    %v5929 = vrsqrt.pop %v5928
    %v5930 = vmul.f32 %v5929, %v5928
    %v5931 = vmul.f32 %v5930, %v5929
    %v5932 = vmul.f32 0.5, %v5931
    %v5933 = vsub.f32 1.5, %v5932
    %v5934 = vmul.f32 %v5929, %v5933
    %vm5935 = vweird.f32 %v5928
    %vm5936 = vweird.f32 %v5929
    %vm5937 = vmor %vm5935, %vm5936
    %v5938 = vsel %vm5937, %v5929, %v5934
    %v5939 = vmul.f32 %v5918, %v5938
    %v5940 = vperm.slane %v5716, 1
    %v5941 = vmul.f32 %v5939, %v5940
    %v5942 = vperm.slane %v5716, 2
    %v5943 = vadd.f32 %v5941, %v5942
    %v5944 = vsel %vm900, %v5445, -inf
    %5945 = vmax.xlane.f32.xlu0 %v5944
    %v5946 = vpop.xlane.xlu0 %5945
    %vm5947 = vcmp.ge.f32.partialorder %v5445, %v5946
    %v5948 = vsel %vm5947, 1, 0
    %v5949 = vcvt.s32.f32 %v5948
    %v5951 = vsel %vm900, %v5949, 0
    %5953 = vmatpush.msra.mxu0 0.0
    %5954 = vmatpush.msra.mxu0 0.0
    %5955 = vmatpush.msra.mxu0 0.0
    %5956 = vmatpush.msra.mxu0 0.0
    %5957 = vmatpush.msra.mxu0 0.0
    %5958 = vmatpush.msra.mxu0 0.0
    %5959 = vmatpush.msra.mxu0 0.0
    %5960 = vmatpush.msra.mxu0 0.0
    %5961 = vmatpush.msra.mxu0 0.0
    %5962 = vmatpush.msra.mxu0 0.0
    %5963 = vmatpush.msra.mxu0 0.0
    %5964 = vmatpush.msra.mxu0 0.0
    %5965 = vmatpush.msra.mxu0 0.0
    %5966 = vmatpush.msra.mxu0 0.0
    %5967 = vmatpush.msra.mxu0 0.0
    %v5968 = vand.u32 %v5943, 4294901760
    %5969 = vmatpush.msra.mxu0 %v5968
    %v5970 = vand.u32 %v5951, 4294901760
    %v5971 = vsub.f32 %v5951, %v5970
    %v5972 = vand.u32 %v5971, 4294901760
    %v5973 = vsub.f32 %v5971, %v5972
    %v5974 = vand.u32 %v5973, 4294901760
    %5975 = vmatmul.f32.gmra.mxu0 %v5974
    %v5976 = vpop.f32.mrf.mxu0
    %v5977 = vadd.f32 0.0, %v5976
    %5978 = vdwg.mxu0
    %5979 = vmatpush.msra.mxu0 0.0
    %5980 = vmatpush.msra.mxu0 0.0
    %5981 = vmatpush.msra.mxu0 0.0
    %5982 = vmatpush.msra.mxu0 0.0
    %5983 = vmatpush.msra.mxu0 0.0
    %5984 = vmatpush.msra.mxu0 0.0
    %5985 = vmatpush.msra.mxu0 0.0
    %5986 = vmatpush.msra.mxu0 0.0
    %5987 = vmatpush.msra.mxu0 0.0
    %5988 = vmatpush.msra.mxu0 0.0
    %5989 = vmatpush.msra.mxu0 0.0
    %5990 = vmatpush.msra.mxu0 0.0
    %5991 = vmatpush.msra.mxu0 0.0
    %5992 = vmatpush.msra.mxu0 0.0
    %5993 = vmatpush.msra.mxu0 0.0
    %v5994 = vand.u32 %v5943, 4294901760
    %v5995 = vsub.f32 %v5943, %v5994
    %v5996 = vand.u32 %v5995, 4294901760
    %v5997 = vsub.f32 %v5995, %v5996
    %v5998 = vand.u32 %v5997, 4294901760
    %5999 = vmatpush.msra.mxu0 %v5998
    %v6000 = vand.u32 %v5951, 4294901760
    %6001 = vmatmul.f32.gmra.mxu0 %v6000
    %v6002 = vpop.f32.mrf.mxu0
    %v6003 = vadd.f32 %v5977, %v6002
    %6004 = vdwg.mxu0
    %6005 = vmatpush.msra.mxu0 0.0
    %6006 = vmatpush.msra.mxu0 0.0
    %6007 = vmatpush.msra.mxu0 0.0
    %6008 = vmatpush.msra.mxu0 0.0
    %6009 = vmatpush.msra.mxu0 0.0
    %6010 = vmatpush.msra.mxu0 0.0
    %6011 = vmatpush.msra.mxu0 0.0
    %6012 = vmatpush.msra.mxu0 0.0
    %6013 = vmatpush.msra.mxu0 0.0
    %6014 = vmatpush.msra.mxu0 0.0
    %6015 = vmatpush.msra.mxu0 0.0
    %6016 = vmatpush.msra.mxu0 0.0
    %6017 = vmatpush.msra.mxu0 0.0
    %6018 = vmatpush.msra.mxu0 0.0
    %6019 = vmatpush.msra.mxu0 0.0
    %v6020 = vand.u32 %v5943, 4294901760
    %v6021 = vsub.f32 %v5943, %v6020
    %6022 = vmatpush.msra.mxu0 %v6021
    %v6023 = vand.u32 %v5951, 4294901760
    %v6024 = vsub.f32 %v5951, %v6023
    %6025 = vmatmul.f32.gmra.mxu0 %v6024
    %v6026 = vpop.f32.mrf.mxu0
    %v6027 = vadd.f32 %v6003, %v6026
    %6028 = vdwg.mxu0
    %6029 = vmatpush.msra.mxu0 0.0
    %6030 = vmatpush.msra.mxu0 0.0
    %6031 = vmatpush.msra.mxu0 0.0
    %6032 = vmatpush.msra.mxu0 0.0
    %6033 = vmatpush.msra.mxu0 0.0
    %6034 = vmatpush.msra.mxu0 0.0
    %6035 = vmatpush.msra.mxu0 0.0
    %6036 = vmatpush.msra.mxu0 0.0
    %6037 = vmatpush.msra.mxu0 0.0
    %6038 = vmatpush.msra.mxu0 0.0
    %6039 = vmatpush.msra.mxu0 0.0
    %6040 = vmatpush.msra.mxu0 0.0
    %6041 = vmatpush.msra.mxu0 0.0
    %6042 = vmatpush.msra.mxu0 0.0
    %6043 = vmatpush.msra.mxu0 0.0
    %v6044 = vand.u32 %v5943, 4294901760
    %6045 = vmatpush.msra.mxu0 %v6044
    %v6046 = vand.u32 %v5951, 4294901760
    %v6047 = vsub.f32 %v5951, %v6046
    %v6048 = vand.u32 %v6047, 4294901760
    %6049 = vmatmul.f32.gmra.mxu0 %v6048
    %v6050 = vpop.f32.mrf.mxu0
    %v6051 = vadd.f32 %v6027, %v6050
    %6052 = vdwg.mxu0
    %6053 = vmatpush.msra.mxu0 0.0
    %6054 = vmatpush.msra.mxu0 0.0
    %6055 = vmatpush.msra.mxu0 0.0
    %6056 = vmatpush.msra.mxu0 0.0
    %6057 = vmatpush.msra.mxu0 0.0
    %6058 = vmatpush.msra.mxu0 0.0
    %6059 = vmatpush.msra.mxu0 0.0
    %6060 = vmatpush.msra.mxu0 0.0
    %6061 = vmatpush.msra.mxu0 0.0
    %6062 = vmatpush.msra.mxu0 0.0
    %6063 = vmatpush.msra.mxu0 0.0
    %6064 = vmatpush.msra.mxu0 0.0
    %6065 = vmatpush.msra.mxu0 0.0
    %6066 = vmatpush.msra.mxu0 0.0
    %6067 = vmatpush.msra.mxu0 0.0
    %v6068 = vand.u32 %v5943, 4294901760
    %v6069 = vsub.f32 %v5943, %v6068
    %v6070 = vand.u32 %v6069, 4294901760
    %6071 = vmatpush.msra.mxu0 %v6070
    %v6072 = vand.u32 %v5951, 4294901760
    %6073 = vmatmul.f32.gmra.mxu0 %v6072
    %v6074 = vpop.f32.mrf.mxu0
    %v6075 = vadd.f32 %v6051, %v6074
    %6076 = vdwg.mxu0
    %6077 = vmatpush.msra.mxu0 0.0
    %6078 = vmatpush.msra.mxu0 0.0
    %6079 = vmatpush.msra.mxu0 0.0
    %6080 = vmatpush.msra.mxu0 0.0
    %6081 = vmatpush.msra.mxu0 0.0
    %6082 = vmatpush.msra.mxu0 0.0
    %6083 = vmatpush.msra.mxu0 0.0
    %6084 = vmatpush.msra.mxu0 0.0
    %6085 = vmatpush.msra.mxu0 0.0
    %6086 = vmatpush.msra.mxu0 0.0
    %6087 = vmatpush.msra.mxu0 0.0
    %6088 = vmatpush.msra.mxu0 0.0
    %6089 = vmatpush.msra.mxu0 0.0
    %6090 = vmatpush.msra.mxu0 0.0
    %6091 = vmatpush.msra.mxu0 0.0
    %v6092 = vand.u32 %v5943, 4294901760
    %6093 = vmatpush.msra.mxu0 %v6092
    %v6094 = vand.u32 %v5951, 4294901760
    %6095 = vmatmul.f32.gmra.mxu0 %v6094
    %v6096 = vpop.f32.mrf.mxu0
    %v6097 = vadd.f32 %v6075, %v6096
    %6098 = vdwg.mxu0
    %v6099 = vmax.f32 %v6097, -1e+30
    %v6100 = vsel %vm5947, -1e+30, %v5445
    %v6101 = vsel %vm900, %v6100, -inf
    %6102 = vmax.xlane.f32.xlu0 %v6101
    %v6103 = vpop.xlane.xlu0 %6102
    %vm6104 = vcmp.ge.f32.partialorder %v6100, %v6103
    %v6105 = vsel %vm6104, 1, 0
    %v6106 = vcvt.s32.f32 %v6105
    %v6108 = vsel %vm900, %v6106, 0
    %6110 = vmatpush.msra.mxu0 0.0
    %6111 = vmatpush.msra.mxu0 0.0
    %6112 = vmatpush.msra.mxu0 0.0
    %6113 = vmatpush.msra.mxu0 0.0
    %6114 = vmatpush.msra.mxu0 0.0
    %6115 = vmatpush.msra.mxu0 0.0
    %6116 = vmatpush.msra.mxu0 0.0
    %6117 = vmatpush.msra.mxu0 0.0
    %6118 = vmatpush.msra.mxu0 0.0
    %6119 = vmatpush.msra.mxu0 0.0
    %6120 = vmatpush.msra.mxu0 0.0
    %6121 = vmatpush.msra.mxu0 0.0
    %6122 = vmatpush.msra.mxu0 0.0
    %6123 = vmatpush.msra.mxu0 0.0
    %6124 = vmatpush.msra.mxu0 0.0
    %v6125 = vand.u32 %v5943, 4294901760
    %6126 = vmatpush.msra.mxu0 %v6125
    %v6127 = vand.u32 %v6108, 4294901760
    %v6128 = vsub.f32 %v6108, %v6127
    %v6129 = vand.u32 %v6128, 4294901760
    %v6130 = vsub.f32 %v6128, %v6129
    %v6131 = vand.u32 %v6130, 4294901760
    %6132 = vmatmul.f32.gmra.mxu0 %v6131
    %v6133 = vpop.f32.mrf.mxu0
    %v6134 = vadd.f32 0.0, %v6133
    %6135 = vdwg.mxu0
    %6136 = vmatpush.msra.mxu0 0.0
    %6137 = vmatpush.msra.mxu0 0.0
    %6138 = vmatpush.msra.mxu0 0.0
    %6139 = vmatpush.msra.mxu0 0.0
    %6140 = vmatpush.msra.mxu0 0.0
    %6141 = vmatpush.msra.mxu0 0.0
    %6142 = vmatpush.msra.mxu0 0.0
    %6143 = vmatpush.msra.mxu0 0.0
    %6144 = vmatpush.msra.mxu0 0.0
    %6145 = vmatpush.msra.mxu0 0.0
    %6146 = vmatpush.msra.mxu0 0.0
    %6147 = vmatpush.msra.mxu0 0.0
    %6148 = vmatpush.msra.mxu0 0.0
    %6149 = vmatpush.msra.mxu0 0.0
    %6150 = vmatpush.msra.mxu0 0.0
    %v6151 = vand.u32 %v5943, 4294901760
    %v6152 = vsub.f32 %v5943, %v6151
    %v6153 = vand.u32 %v6152, 4294901760
    %v6154 = vsub.f32 %v6152, %v6153
    %v6155 = vand.u32 %v6154, 4294901760
    %6156 = vmatpush.msra.mxu0 %v6155
    %v6157 = vand.u32 %v6108, 4294901760
    %6158 = vmatmul.f32.gmra.mxu0 %v6157
    %v6159 = vpop.f32.mrf.mxu0
    %v6160 = vadd.f32 %v6134, %v6159
    %6161 = vdwg.mxu0
    %6162 = vmatpush.msra.mxu0 0.0
    %6163 = vmatpush.msra.mxu0 0.0
    %6164 = vmatpush.msra.mxu0 0.0
    %6165 = vmatpush.msra.mxu0 0.0
    %6166 = vmatpush.msra.mxu0 0.0
    %6167 = vmatpush.msra.mxu0 0.0
    %6168 = vmatpush.msra.mxu0 0.0
    %6169 = vmatpush.msra.mxu0 0.0
    %6170 = vmatpush.msra.mxu0 0.0
    %6171 = vmatpush.msra.mxu0 0.0
    %6172 = vmatpush.msra.mxu0 0.0
    %6173 = vmatpush.msra.mxu0 0.0
    %6174 = vmatpush.msra.mxu0 0.0
    %6175 = vmatpush.msra.mxu0 0.0
    %6176 = vmatpush.msra.mxu0 0.0
    %v6177 = vand.u32 %v5943, 4294901760
    %v6178 = vsub.f32 %v5943, %v6177
    %6179 = vmatpush.msra.mxu0 %v6178
    %v6180 = vand.u32 %v6108, 4294901760
    %v6181 = vsub.f32 %v6108, %v6180
    %6182 = vmatmul.f32.gmra.mxu0 %v6181
    %v6183 = vpop.f32.mrf.mxu0
    %v6184 = vadd.f32 %v6160, %v6183
    %6185 = vdwg.mxu0
    %6186 = vmatpush.msra.mxu0 0.0
    %6187 = vmatpush.msra.mxu0 0.0
    %6188 = vmatpush.msra.mxu0 0.0
    %6189 = vmatpush.msra.mxu0 0.0
    %6190 = vmatpush.msra.mxu0 0.0
    %6191 = vmatpush.msra.mxu0 0.0
    %6192 = vmatpush.msra.mxu0 0.0
    %6193 = vmatpush.msra.mxu0 0.0
    %6194 = vmatpush.msra.mxu0 0.0
    %6195 = vmatpush.msra.mxu0 0.0
    %6196 = vmatpush.msra.mxu0 0.0
    %6197 = vmatpush.msra.mxu0 0.0
    %6198 = vmatpush.msra.mxu0 0.0
    %6199 = vmatpush.msra.mxu0 0.0
    %6200 = vmatpush.msra.mxu0 0.0
    %v6201 = vand.u32 %v5943, 4294901760
    %6202 = vmatpush.msra.mxu0 %v6201
    %v6203 = vand.u32 %v6108, 4294901760
    %v6204 = vsub.f32 %v6108, %v6203
    %v6205 = vand.u32 %v6204, 4294901760
    %6206 = vmatmul.f32.gmra.mxu0 %v6205
    %v6207 = vpop.f32.mrf.mxu0
    %v6208 = vadd.f32 %v6184, %v6207
    %6209 = vdwg.mxu0
    %6210 = vmatpush.msra.mxu0 0.0
    %6211 = vmatpush.msra.mxu0 0.0
    %6212 = vmatpush.msra.mxu0 0.0
    %6213 = vmatpush.msra.mxu0 0.0
    %6214 = vmatpush.msra.mxu0 0.0
    %6215 = vmatpush.msra.mxu0 0.0
    %6216 = vmatpush.msra.mxu0 0.0
    %6217 = vmatpush.msra.mxu0 0.0
    %6218 = vmatpush.msra.mxu0 0.0
    %6219 = vmatpush.msra.mxu0 0.0
    %6220 = vmatpush.msra.mxu0 0.0
    %6221 = vmatpush.msra.mxu0 0.0
    %6222 = vmatpush.msra.mxu0 0.0
    %6223 = vmatpush.msra.mxu0 0.0
    %6224 = vmatpush.msra.mxu0 0.0
    %v6225 = vand.u32 %v5943, 4294901760
    %v6226 = vsub.f32 %v5943, %v6225
    %v6227 = vand.u32 %v6226, 4294901760
    %6228 = vmatpush.msra.mxu0 %v6227
    %v6229 = vand.u32 %v6108, 4294901760
    %6230 = vmatmul.f32.gmra.mxu0 %v6229
    %v6231 = vpop.f32.mrf.mxu0
    %v6232 = vadd.f32 %v6208, %v6231
    %6233 = vdwg.mxu0
    %6234 = vmatpush.msra.mxu0 0.0
    %6235 = vmatpush.msra.mxu0 0.0
    %6236 = vmatpush.msra.mxu0 0.0
    %6237 = vmatpush.msra.mxu0 0.0
    %6238 = vmatpush.msra.mxu0 0.0
    %6239 = vmatpush.msra.mxu0 0.0
    %6240 = vmatpush.msra.mxu0 0.0
    %6241 = vmatpush.msra.mxu0 0.0
    %6242 = vmatpush.msra.mxu0 0.0
    %6243 = vmatpush.msra.mxu0 0.0
    %6244 = vmatpush.msra.mxu0 0.0
    %6245 = vmatpush.msra.mxu0 0.0
    %6246 = vmatpush.msra.mxu0 0.0
    %6247 = vmatpush.msra.mxu0 0.0
    %6248 = vmatpush.msra.mxu0 0.0
    %v6249 = vand.u32 %v5943, 4294901760
    %6250 = vmatpush.msra.mxu0 %v6249
    %v6251 = vand.u32 %v6108, 4294901760
    %6252 = vmatmul.f32.gmra.mxu0 %v6251
    %v6253 = vpop.f32.mrf.mxu0
    %v6254 = vadd.f32 %v6232, %v6253
    %6255 = vdwg.mxu0
    %v6256 = vmax.f32 %v6099, %v6254
    %v6257 = vsel %vm6104, -1e+30, %v6100
    %v6258 = vsel %vm900, %v6257, -inf
    %6259 = vmax.xlane.f32.xlu0 %v6258
    %v6260 = vpop.xlane.xlu0 %6259
    %vm6261 = vcmp.ge.f32.partialorder %v6257, %v6260
    %v6262 = vsel %vm6261, 1, 0
    %v6263 = vcvt.s32.f32 %v6262
    %v6265 = vsel %vm900, %v6263, 0
    %6267 = vmatpush.msra.mxu0 0.0
    %6268 = vmatpush.msra.mxu0 0.0
    %6269 = vmatpush.msra.mxu0 0.0
    %6270 = vmatpush.msra.mxu0 0.0
    %6271 = vmatpush.msra.mxu0 0.0
    %6272 = vmatpush.msra.mxu0 0.0
    %6273 = vmatpush.msra.mxu0 0.0
    %6274 = vmatpush.msra.mxu0 0.0
    %6275 = vmatpush.msra.mxu0 0.0
    %6276 = vmatpush.msra.mxu0 0.0
    %6277 = vmatpush.msra.mxu0 0.0
    %6278 = vmatpush.msra.mxu0 0.0
    %6279 = vmatpush.msra.mxu0 0.0
    %6280 = vmatpush.msra.mxu0 0.0
    %6281 = vmatpush.msra.mxu0 0.0
    %v6282 = vand.u32 %v5943, 4294901760
    %6283 = vmatpush.msra.mxu0 %v6282
    %v6284 = vand.u32 %v6265, 4294901760
    %v6285 = vsub.f32 %v6265, %v6284
    %v6286 = vand.u32 %v6285, 4294901760
    %v6287 = vsub.f32 %v6285, %v6286
    %v6288 = vand.u32 %v6287, 4294901760
    %6289 = vmatmul.f32.gmra.mxu0 %v6288
    %v6290 = vpop.f32.mrf.mxu0
    %v6291 = vadd.f32 0.0, %v6290
    %6292 = vdwg.mxu0
    %6293 = vmatpush.msra.mxu0 0.0
    %6294 = vmatpush.msra.mxu0 0.0
    %6295 = vmatpush.msra.mxu0 0.0
    %6296 = vmatpush.msra.mxu0 0.0
    %6297 = vmatpush.msra.mxu0 0.0
    %6298 = vmatpush.msra.mxu0 0.0
    %6299 = vmatpush.msra.mxu0 0.0
    %6300 = vmatpush.msra.mxu0 0.0
    %6301 = vmatpush.msra.mxu0 0.0
    %6302 = vmatpush.msra.mxu0 0.0
    %6303 = vmatpush.msra.mxu0 0.0
    %6304 = vmatpush.msra.mxu0 0.0
    %6305 = vmatpush.msra.mxu0 0.0
    %6306 = vmatpush.msra.mxu0 0.0
    %6307 = vmatpush.msra.mxu0 0.0
    %v6308 = vand.u32 %v5943, 4294901760
    %v6309 = vsub.f32 %v5943, %v6308
    %v6310 = vand.u32 %v6309, 4294901760
    %v6311 = vsub.f32 %v6309, %v6310
    %v6312 = vand.u32 %v6311, 4294901760
    %6313 = vmatpush.msra.mxu0 %v6312
    %v6314 = vand.u32 %v6265, 4294901760
    %6315 = vmatmul.f32.gmra.mxu0 %v6314
    %v6316 = vpop.f32.mrf.mxu0
    %v6317 = vadd.f32 %v6291, %v6316
    %6318 = vdwg.mxu0
    %6319 = vmatpush.msra.mxu0 0.0
    %6320 = vmatpush.msra.mxu0 0.0
    %6321 = vmatpush.msra.mxu0 0.0
    %6322 = vmatpush.msra.mxu0 0.0
    %6323 = vmatpush.msra.mxu0 0.0
    %6324 = vmatpush.msra.mxu0 0.0
    %6325 = vmatpush.msra.mxu0 0.0
    %6326 = vmatpush.msra.mxu0 0.0
    %6327 = vmatpush.msra.mxu0 0.0
    %6328 = vmatpush.msra.mxu0 0.0
    %6329 = vmatpush.msra.mxu0 0.0
    %6330 = vmatpush.msra.mxu0 0.0
    %6331 = vmatpush.msra.mxu0 0.0
    %6332 = vmatpush.msra.mxu0 0.0
    %6333 = vmatpush.msra.mxu0 0.0
    %v6334 = vand.u32 %v5943, 4294901760
    %v6335 = vsub.f32 %v5943, %v6334
    %6336 = vmatpush.msra.mxu0 %v6335
    %v6337 = vand.u32 %v6265, 4294901760
    %v6338 = vsub.f32 %v6265, %v6337
    %6339 = vmatmul.f32.gmra.mxu0 %v6338
    %v6340 = vpop.f32.mrf.mxu0
    %v6341 = vadd.f32 %v6317, %v6340
    %6342 = vdwg.mxu0
    %6343 = vmatpush.msra.mxu0 0.0
    %6344 = vmatpush.msra.mxu0 0.0
    %6345 = vmatpush.msra.mxu0 0.0
    %6346 = vmatpush.msra.mxu0 0.0
    %6347 = vmatpush.msra.mxu0 0.0
    %6348 = vmatpush.msra.mxu0 0.0
    %6349 = vmatpush.msra.mxu0 0.0
    %6350 = vmatpush.msra.mxu0 0.0
    %6351 = vmatpush.msra.mxu0 0.0
    %6352 = vmatpush.msra.mxu0 0.0
    %6353 = vmatpush.msra.mxu0 0.0
    %6354 = vmatpush.msra.mxu0 0.0
    %6355 = vmatpush.msra.mxu0 0.0
    %6356 = vmatpush.msra.mxu0 0.0
    %6357 = vmatpush.msra.mxu0 0.0
    %v6358 = vand.u32 %v5943, 4294901760
    %6359 = vmatpush.msra.mxu0 %v6358
    %v6360 = vand.u32 %v6265, 4294901760
    %v6361 = vsub.f32 %v6265, %v6360
    %v6362 = vand.u32 %v6361, 4294901760
    %6363 = vmatmul.f32.gmra.mxu0 %v6362
    %v6364 = vpop.f32.mrf.mxu0
    %v6365 = vadd.f32 %v6341, %v6364
    %6366 = vdwg.mxu0
    %6367 = vmatpush.msra.mxu0 0.0
    %6368 = vmatpush.msra.mxu0 0.0
    %6369 = vmatpush.msra.mxu0 0.0
    %6370 = vmatpush.msra.mxu0 0.0
    %6371 = vmatpush.msra.mxu0 0.0
    %6372 = vmatpush.msra.mxu0 0.0
    %6373 = vmatpush.msra.mxu0 0.0
    %6374 = vmatpush.msra.mxu0 0.0
    %6375 = vmatpush.msra.mxu0 0.0
    %6376 = vmatpush.msra.mxu0 0.0
    %6377 = vmatpush.msra.mxu0 0.0
    %6378 = vmatpush.msra.mxu0 0.0
    %6379 = vmatpush.msra.mxu0 0.0
    %6380 = vmatpush.msra.mxu0 0.0
    %6381 = vmatpush.msra.mxu0 0.0
    %v6382 = vand.u32 %v5943, 4294901760
    %v6383 = vsub.f32 %v5943, %v6382
    %v6384 = vand.u32 %v6383, 4294901760
    %6385 = vmatpush.msra.mxu0 %v6384
    %v6386 = vand.u32 %v6265, 4294901760
    %6387 = vmatmul.f32.gmra.mxu0 %v6386
    %v6388 = vpop.f32.mrf.mxu0
    %v6389 = vadd.f32 %v6365, %v6388
    %6390 = vdwg.mxu0
    %6391 = vmatpush.msra.mxu0 0.0
    %6392 = vmatpush.msra.mxu0 0.0
    %6393 = vmatpush.msra.mxu0 0.0
    %6394 = vmatpush.msra.mxu0 0.0
    %6395 = vmatpush.msra.mxu0 0.0
    %6396 = vmatpush.msra.mxu0 0.0
    %6397 = vmatpush.msra.mxu0 0.0
    %6398 = vmatpush.msra.mxu0 0.0
    %6399 = vmatpush.msra.mxu0 0.0
    %6400 = vmatpush.msra.mxu0 0.0
    %6401 = vmatpush.msra.mxu0 0.0
    %6402 = vmatpush.msra.mxu0 0.0
    %6403 = vmatpush.msra.mxu0 0.0
    %6404 = vmatpush.msra.mxu0 0.0
    %6405 = vmatpush.msra.mxu0 0.0
    %v6406 = vand.u32 %v5943, 4294901760
    %6407 = vmatpush.msra.mxu0 %v6406
    %v6408 = vand.u32 %v6265, 4294901760
    %6409 = vmatmul.f32.gmra.mxu0 %v6408
    %v6410 = vpop.f32.mrf.mxu0
    %v6411 = vadd.f32 %v6389, %v6410
    %6412 = vdwg.mxu0
    %v6413 = vmax.f32 %v6256, %v6411
    %v6414 = vsub.f32 %v6413, %v5943
    %v6415 = vld [vmem:[#allocation2 + $0x580] sm:$0xff]
    %v6416 = vld [vmem:[#allocation2 + $0x588] sm:$0xff]
    %v6417 = vld [vmem:[#allocation2 + $0x590] sm:$0xff]
    %v6418 = vld [vmem:[#allocation2 + $0x598] sm:$0xff]
    %v6419 = vld [vmem:[#allocation2 + $0x5a0] sm:$0xff]
    %v6420 = vld [vmem:[#allocation2 + $0x5a8] sm:$0xff]
    %v6421 = vld [vmem:[#allocation2 + $0x5b0] sm:$0xff]
    %v6422 = vld [vmem:[#allocation2 + $0x5b8] sm:$0xff]
    %v6424 = vsel %vm1840, %v6414, 0
    %6426 = vmatpush.msra.mxu0 0.0
    %6427 = vmatpush.msra.mxu0 0.0
    %6428 = vmatpush.msra.mxu0 0.0
    %6429 = vmatpush.msra.mxu0 0.0
    %6430 = vmatpush.msra.mxu0 0.0
    %6431 = vmatpush.msra.mxu0 0.0
    %6432 = vmatpush.msra.mxu0 0.0
    %6433 = vmatpush.msra.mxu0 0.0
    %6434 = vmatpush.msra.mxu0 0.0
    %6435 = vmatpush.msra.mxu0 0.0
    %6436 = vmatpush.msra.mxu0 0.0
    %6437 = vmatpush.msra.mxu0 0.0
    %v6438 = vand.u32 %v6422, 4294901760
    %6439 = vmatpush.msra.mxu0 %v6438
    %v6440 = vand.u32 %v6421, 4294901760
    %6441 = vmatpush.msra.mxu0 %v6440
    %v6442 = vand.u32 %v6420, 4294901760
    %6443 = vmatpush.msra.mxu0 %v6442
    %v6444 = vand.u32 %v6419, 4294901760
    %6445 = vmatpush.msra.mxu0 %v6444
    %v6446 = vand.u32 %v6424, 4294901760
    %v6447 = vsub.f32 %v6424, %v6446
    %v6448 = vand.u32 %v6447, 4294901760
    %v6449 = vsub.f32 %v6447, %v6448
    %v6450 = vand.u32 %v6449, 4294901760
    %6451 = vmatmul.f32.gmra.mxu0 %v6450
    %v6452 = vpop.f32.mrf.mxu0
    %v6453 = vadd.f32 0.0, %v6452
    %6454 = vdwg.mxu0
    %6455 = vmatpush.msra.mxu0 0.0
    %6456 = vmatpush.msra.mxu0 0.0
    %6457 = vmatpush.msra.mxu0 0.0
    %6458 = vmatpush.msra.mxu0 0.0
    %6459 = vmatpush.msra.mxu0 0.0
    %6460 = vmatpush.msra.mxu0 0.0
    %6461 = vmatpush.msra.mxu0 0.0
    %6462 = vmatpush.msra.mxu0 0.0
    %6463 = vmatpush.msra.mxu0 0.0
    %6464 = vmatpush.msra.mxu0 0.0
    %6465 = vmatpush.msra.mxu0 0.0
    %6466 = vmatpush.msra.mxu0 0.0
    %v6467 = vand.u32 %v6422, 4294901760
    %v6468 = vsub.f32 %v6422, %v6467
    %v6469 = vand.u32 %v6468, 4294901760
    %v6470 = vsub.f32 %v6468, %v6469
    %v6471 = vand.u32 %v6470, 4294901760
    %6472 = vmatpush.msra.mxu0 %v6471
    %v6473 = vand.u32 %v6421, 4294901760
    %v6474 = vsub.f32 %v6421, %v6473
    %v6475 = vand.u32 %v6474, 4294901760
    %v6476 = vsub.f32 %v6474, %v6475
    %v6477 = vand.u32 %v6476, 4294901760
    %6478 = vmatpush.msra.mxu0 %v6477
    %v6479 = vand.u32 %v6420, 4294901760
    %v6480 = vsub.f32 %v6420, %v6479
    %v6481 = vand.u32 %v6480, 4294901760
    %v6482 = vsub.f32 %v6480, %v6481
    %v6483 = vand.u32 %v6482, 4294901760
    %6484 = vmatpush.msra.mxu0 %v6483
    %v6485 = vand.u32 %v6419, 4294901760
    %v6486 = vsub.f32 %v6419, %v6485
    %v6487 = vand.u32 %v6486, 4294901760
    %v6488 = vsub.f32 %v6486, %v6487
    %v6489 = vand.u32 %v6488, 4294901760
    %6490 = vmatpush.msra.mxu0 %v6489
    %v6491 = vand.u32 %v6424, 4294901760
    %6492 = vmatmul.f32.gmra.mxu0 %v6491
    %v6493 = vpop.f32.mrf.mxu0
    %v6494 = vadd.f32 %v6453, %v6493
    %6495 = vdwg.mxu0
    %6496 = vmatpush.msra.mxu0 0.0
    %6497 = vmatpush.msra.mxu0 0.0
    %6498 = vmatpush.msra.mxu0 0.0
    %6499 = vmatpush.msra.mxu0 0.0
    %6500 = vmatpush.msra.mxu0 0.0
    %6501 = vmatpush.msra.mxu0 0.0
    %6502 = vmatpush.msra.mxu0 0.0
    %6503 = vmatpush.msra.mxu0 0.0
    %6504 = vmatpush.msra.mxu0 0.0
    %6505 = vmatpush.msra.mxu0 0.0
    %6506 = vmatpush.msra.mxu0 0.0
    %6507 = vmatpush.msra.mxu0 0.0
    %v6508 = vand.u32 %v6422, 4294901760
    %v6509 = vsub.f32 %v6422, %v6508
    %6510 = vmatpush.msra.mxu0 %v6509
    %v6511 = vand.u32 %v6421, 4294901760
    %v6512 = vsub.f32 %v6421, %v6511
    %6513 = vmatpush.msra.mxu0 %v6512
    %v6514 = vand.u32 %v6420, 4294901760
    %v6515 = vsub.f32 %v6420, %v6514
    %6516 = vmatpush.msra.mxu0 %v6515
    %v6517 = vand.u32 %v6419, 4294901760
    %v6518 = vsub.f32 %v6419, %v6517
    %6519 = vmatpush.msra.mxu0 %v6518
    %v6520 = vand.u32 %v6424, 4294901760
    %v6521 = vsub.f32 %v6424, %v6520
    %6522 = vmatmul.f32.gmra.mxu0 %v6521
    %v6523 = vpop.f32.mrf.mxu0
    %v6524 = vadd.f32 %v6494, %v6523
    %6525 = vdwg.mxu0
    %6526 = vmatpush.msra.mxu0 0.0
    %6527 = vmatpush.msra.mxu0 0.0
    %6528 = vmatpush.msra.mxu0 0.0
    %6529 = vmatpush.msra.mxu0 0.0
    %6530 = vmatpush.msra.mxu0 0.0
    %6531 = vmatpush.msra.mxu0 0.0
    %6532 = vmatpush.msra.mxu0 0.0
    %6533 = vmatpush.msra.mxu0 0.0
    %6534 = vmatpush.msra.mxu0 0.0
    %6535 = vmatpush.msra.mxu0 0.0
    %6536 = vmatpush.msra.mxu0 0.0
    %6537 = vmatpush.msra.mxu0 0.0
    %v6538 = vand.u32 %v6422, 4294901760
    %6539 = vmatpush.msra.mxu0 %v6538
    %v6540 = vand.u32 %v6421, 4294901760
    %6541 = vmatpush.msra.mxu0 %v6540
    %v6542 = vand.u32 %v6420, 4294901760
    %6543 = vmatpush.msra.mxu0 %v6542
    %v6544 = vand.u32 %v6419, 4294901760
    %6545 = vmatpush.msra.mxu0 %v6544
    %v6546 = vand.u32 %v6424, 4294901760
    %v6547 = vsub.f32 %v6424, %v6546
    %v6548 = vand.u32 %v6547, 4294901760
    %6549 = vmatmul.f32.gmra.mxu0 %v6548
    %v6550 = vpop.f32.mrf.mxu0
    %v6551 = vadd.f32 %v6524, %v6550
    %6552 = vdwg.mxu0
    %6553 = vmatpush.msra.mxu0 0.0
    %6554 = vmatpush.msra.mxu0 0.0
    %6555 = vmatpush.msra.mxu0 0.0
    %6556 = vmatpush.msra.mxu0 0.0
    %6557 = vmatpush.msra.mxu0 0.0
    %6558 = vmatpush.msra.mxu0 0.0
    %6559 = vmatpush.msra.mxu0 0.0
    %6560 = vmatpush.msra.mxu0 0.0
    %6561 = vmatpush.msra.mxu0 0.0
    %6562 = vmatpush.msra.mxu0 0.0
    %6563 = vmatpush.msra.mxu0 0.0
    %6564 = vmatpush.msra.mxu0 0.0
    %v6565 = vand.u32 %v6422, 4294901760
    %v6566 = vsub.f32 %v6422, %v6565
    %v6567 = vand.u32 %v6566, 4294901760
    %6568 = vmatpush.msra.mxu0 %v6567
    %v6569 = vand.u32 %v6421, 4294901760
    %v6570 = vsub.f32 %v6421, %v6569
    %v6571 = vand.u32 %v6570, 4294901760
    %6572 = vmatpush.msra.mxu0 %v6571
    %v6573 = vand.u32 %v6420, 4294901760
    %v6574 = vsub.f32 %v6420, %v6573
    %v6575 = vand.u32 %v6574, 4294901760
    %6576 = vmatpush.msra.mxu0 %v6575
    %v6577 = vand.u32 %v6419, 4294901760
    %v6578 = vsub.f32 %v6419, %v6577
    %v6579 = vand.u32 %v6578, 4294901760
    %6580 = vmatpush.msra.mxu0 %v6579
    %v6581 = vand.u32 %v6424, 4294901760
    %6582 = vmatmul.f32.gmra.mxu0 %v6581
    %v6583 = vpop.f32.mrf.mxu0
    %v6584 = vadd.f32 %v6551, %v6583
    %6585 = vdwg.mxu0
    %6586 = vmatpush.msra.mxu0 0.0
    %6587 = vmatpush.msra.mxu0 0.0
    %6588 = vmatpush.msra.mxu0 0.0
    %6589 = vmatpush.msra.mxu0 0.0
    %6590 = vmatpush.msra.mxu0 0.0
    %6591 = vmatpush.msra.mxu0 0.0
    %6592 = vmatpush.msra.mxu0 0.0
    %6593 = vmatpush.msra.mxu0 0.0
    %6594 = vmatpush.msra.mxu0 0.0
    %6595 = vmatpush.msra.mxu0 0.0
    %6596 = vmatpush.msra.mxu0 0.0
    %6597 = vmatpush.msra.mxu0 0.0
    %v6598 = vand.u32 %v6422, 4294901760
    %6599 = vmatpush.msra.mxu0 %v6598
    %v6600 = vand.u32 %v6421, 4294901760
    %6601 = vmatpush.msra.mxu0 %v6600
    %v6602 = vand.u32 %v6420, 4294901760
    %6603 = vmatpush.msra.mxu0 %v6602
    %v6604 = vand.u32 %v6419, 4294901760
    %6605 = vmatpush.msra.mxu0 %v6604
    %v6606 = vand.u32 %v6424, 4294901760
    %6607 = vmatmul.f32.gmra.mxu0 %v6606
    %v6608 = vpop.f32.mrf.mxu0
    %v6609 = vadd.f32 %v6584, %v6608
    %6610 = vdwg.mxu0
    %v6612 = vsel %vm1840, %v5943, 0
    %6614 = vmatpush.msra.mxu0 0.0
    %6615 = vmatpush.msra.mxu0 0.0
    %6616 = vmatpush.msra.mxu0 0.0
    %6617 = vmatpush.msra.mxu0 0.0
    %6618 = vmatpush.msra.mxu0 0.0
    %6619 = vmatpush.msra.mxu0 0.0
    %6620 = vmatpush.msra.mxu0 0.0
    %6621 = vmatpush.msra.mxu0 0.0
    %6622 = vmatpush.msra.mxu0 0.0
    %6623 = vmatpush.msra.mxu0 0.0
    %6624 = vmatpush.msra.mxu0 0.0
    %6625 = vmatpush.msra.mxu0 0.0
    %v6626 = vand.u32 %v6418, 4294901760
    %6627 = vmatpush.msra.mxu0 %v6626
    %v6628 = vand.u32 %v6417, 4294901760
    %6629 = vmatpush.msra.mxu0 %v6628
    %v6630 = vand.u32 %v6416, 4294901760
    %6631 = vmatpush.msra.mxu0 %v6630
    %v6632 = vand.u32 %v6415, 4294901760
    %6633 = vmatpush.msra.mxu0 %v6632
    %v6634 = vand.u32 %v6612, 4294901760
    %v6635 = vsub.f32 %v6612, %v6634
    %v6636 = vand.u32 %v6635, 4294901760
    %v6637 = vsub.f32 %v6635, %v6636
    %v6638 = vand.u32 %v6637, 4294901760
    %6639 = vmatmul.f32.gmra.mxu0 %v6638
    %v6640 = vpop.f32.mrf.mxu0
    %v6641 = vadd.f32 %v6609, %v6640
    %6642 = vdwg.mxu0
    %6643 = vmatpush.msra.mxu0 0.0
    %6644 = vmatpush.msra.mxu0 0.0
    %6645 = vmatpush.msra.mxu0 0.0
    %6646 = vmatpush.msra.mxu0 0.0
    %6647 = vmatpush.msra.mxu0 0.0
    %6648 = vmatpush.msra.mxu0 0.0
    %6649 = vmatpush.msra.mxu0 0.0
    %6650 = vmatpush.msra.mxu0 0.0
    %6651 = vmatpush.msra.mxu0 0.0
    %6652 = vmatpush.msra.mxu0 0.0
    %6653 = vmatpush.msra.mxu0 0.0
    %6654 = vmatpush.msra.mxu0 0.0
    %v6655 = vand.u32 %v6418, 4294901760
    %v6656 = vsub.f32 %v6418, %v6655
    %v6657 = vand.u32 %v6656, 4294901760
    %v6658 = vsub.f32 %v6656, %v6657
    %v6659 = vand.u32 %v6658, 4294901760
    %6660 = vmatpush.msra.mxu0 %v6659
    %v6661 = vand.u32 %v6417, 4294901760
    %v6662 = vsub.f32 %v6417, %v6661
    %v6663 = vand.u32 %v6662, 4294901760
    %v6664 = vsub.f32 %v6662, %v6663
    %v6665 = vand.u32 %v6664, 4294901760
    %6666 = vmatpush.msra.mxu0 %v6665
    %v6667 = vand.u32 %v6416, 4294901760
    %v6668 = vsub.f32 %v6416, %v6667
    %v6669 = vand.u32 %v6668, 4294901760
    %v6670 = vsub.f32 %v6668, %v6669
    %v6671 = vand.u32 %v6670, 4294901760
    %6672 = vmatpush.msra.mxu0 %v6671
    %v6673 = vand.u32 %v6415, 4294901760
    %v6674 = vsub.f32 %v6415, %v6673
    %v6675 = vand.u32 %v6674, 4294901760
    %v6676 = vsub.f32 %v6674, %v6675
    %v6677 = vand.u32 %v6676, 4294901760
    %6678 = vmatpush.msra.mxu0 %v6677
    %v6679 = vand.u32 %v6612, 4294901760
    %6680 = vmatmul.f32.gmra.mxu0 %v6679
    %v6681 = vpop.f32.mrf.mxu0
    %v6682 = vadd.f32 %v6641, %v6681
    %6683 = vdwg.mxu0
    %6684 = vmatpush.msra.mxu0 0.0
    %6685 = vmatpush.msra.mxu0 0.0
    %6686 = vmatpush.msra.mxu0 0.0
    %6687 = vmatpush.msra.mxu0 0.0
    %6688 = vmatpush.msra.mxu0 0.0
    %6689 = vmatpush.msra.mxu0 0.0
    %6690 = vmatpush.msra.mxu0 0.0
    %6691 = vmatpush.msra.mxu0 0.0
    %6692 = vmatpush.msra.mxu0 0.0
    %6693 = vmatpush.msra.mxu0 0.0
    %6694 = vmatpush.msra.mxu0 0.0
    %6695 = vmatpush.msra.mxu0 0.0
    %v6696 = vand.u32 %v6418, 4294901760
    %v6697 = vsub.f32 %v6418, %v6696
    %6698 = vmatpush.msra.mxu0 %v6697
    %v6699 = vand.u32 %v6417, 4294901760
    %v6700 = vsub.f32 %v6417, %v6699
    %6701 = vmatpush.msra.mxu0 %v6700
    %v6702 = vand.u32 %v6416, 4294901760
    %v6703 = vsub.f32 %v6416, %v6702
    %6704 = vmatpush.msra.mxu0 %v6703
    %v6705 = vand.u32 %v6415, 4294901760
    %v6706 = vsub.f32 %v6415, %v6705
    %6707 = vmatpush.msra.mxu0 %v6706
    %v6708 = vand.u32 %v6612, 4294901760
    %v6709 = vsub.f32 %v6612, %v6708
    %6710 = vmatmul.f32.gmra.mxu0 %v6709
    %v6711 = vpop.f32.mrf.mxu0
    %v6712 = vadd.f32 %v6682, %v6711
    %6713 = vdwg.mxu0
    %6714 = vmatpush.msra.mxu0 0.0
    %6715 = vmatpush.msra.mxu0 0.0
    %6716 = vmatpush.msra.mxu0 0.0
    %6717 = vmatpush.msra.mxu0 0.0
    %6718 = vmatpush.msra.mxu0 0.0
    %6719 = vmatpush.msra.mxu0 0.0
    %6720 = vmatpush.msra.mxu0 0.0
    %6721 = vmatpush.msra.mxu0 0.0
    %6722 = vmatpush.msra.mxu0 0.0
    %6723 = vmatpush.msra.mxu0 0.0
    %6724 = vmatpush.msra.mxu0 0.0
    %6725 = vmatpush.msra.mxu0 0.0
    %v6726 = vand.u32 %v6418, 4294901760
    %6727 = vmatpush.msra.mxu0 %v6726
    %v6728 = vand.u32 %v6417, 4294901760
    %6729 = vmatpush.msra.mxu0 %v6728
    %v6730 = vand.u32 %v6416, 4294901760
    %6731 = vmatpush.msra.mxu0 %v6730
    %v6732 = vand.u32 %v6415, 4294901760
    %6733 = vmatpush.msra.mxu0 %v6732
    %v6734 = vand.u32 %v6612, 4294901760
    %v6735 = vsub.f32 %v6612, %v6734
    %v6736 = vand.u32 %v6735, 4294901760
    %6737 = vmatmul.f32.gmra.mxu0 %v6736
    %v6738 = vpop.f32.mrf.mxu0
    %v6739 = vadd.f32 %v6712, %v6738
    %6740 = vdwg.mxu0
    %6741 = vmatpush.msra.mxu0 0.0
    %6742 = vmatpush.msra.mxu0 0.0
    %6743 = vmatpush.msra.mxu0 0.0
    %6744 = vmatpush.msra.mxu0 0.0
    %6745 = vmatpush.msra.mxu0 0.0
    %6746 = vmatpush.msra.mxu0 0.0
    %6747 = vmatpush.msra.mxu0 0.0
    %6748 = vmatpush.msra.mxu0 0.0
    %6749 = vmatpush.msra.mxu0 0.0
    %6750 = vmatpush.msra.mxu0 0.0
    %6751 = vmatpush.msra.mxu0 0.0
    %6752 = vmatpush.msra.mxu0 0.0
    %v6753 = vand.u32 %v6418, 4294901760
    %v6754 = vsub.f32 %v6418, %v6753
    %v6755 = vand.u32 %v6754, 4294901760
    %6756 = vmatpush.msra.mxu0 %v6755
    %v6757 = vand.u32 %v6417, 4294901760
    %v6758 = vsub.f32 %v6417, %v6757
    %v6759 = vand.u32 %v6758, 4294901760
    %6760 = vmatpush.msra.mxu0 %v6759
    %v6761 = vand.u32 %v6416, 4294901760
    %v6762 = vsub.f32 %v6416, %v6761
    %v6763 = vand.u32 %v6762, 4294901760
    %6764 = vmatpush.msra.mxu0 %v6763
    %v6765 = vand.u32 %v6415, 4294901760
    %v6766 = vsub.f32 %v6415, %v6765
    %v6767 = vand.u32 %v6766, 4294901760
    %6768 = vmatpush.msra.mxu0 %v6767
    %v6769 = vand.u32 %v6612, 4294901760
    %6770 = vmatmul.f32.gmra.mxu0 %v6769
    %v6771 = vpop.f32.mrf.mxu0
    %v6772 = vadd.f32 %v6739, %v6771
    %6773 = vdwg.mxu0
    %6774 = vmatpush.msra.mxu0 0.0
    %6775 = vmatpush.msra.mxu0 0.0
    %6776 = vmatpush.msra.mxu0 0.0
    %6777 = vmatpush.msra.mxu0 0.0
    %6778 = vmatpush.msra.mxu0 0.0
    %6779 = vmatpush.msra.mxu0 0.0
    %6780 = vmatpush.msra.mxu0 0.0
    %6781 = vmatpush.msra.mxu0 0.0
    %6782 = vmatpush.msra.mxu0 0.0
    %6783 = vmatpush.msra.mxu0 0.0
    %6784 = vmatpush.msra.mxu0 0.0
    %6785 = vmatpush.msra.mxu0 0.0
    %v6786 = vand.u32 %v6418, 4294901760
    %6787 = vmatpush.msra.mxu0 %v6786
    %v6788 = vand.u32 %v6417, 4294901760
    %6789 = vmatpush.msra.mxu0 %v6788
    %v6790 = vand.u32 %v6416, 4294901760
    %6791 = vmatpush.msra.mxu0 %v6790
    %v6792 = vand.u32 %v6415, 4294901760
    %6793 = vmatpush.msra.mxu0 %v6792
    %v6794 = vand.u32 %v6612, 4294901760
    %6795 = vmatmul.f32.gmra.mxu0 %v6794
    %v6796 = vpop.f32.mrf.mxu0
    %v6797 = vadd.f32 %v6772, %v6796
    %6798 = vdwg.mxu0
    %v6799 = vld [vmem:[#allocation2 + $0x5c0] sm:$0x1]
    %v6800 = vperm.slane %v6799, 0
    %v6801 = vadd.f32 %v6797, %v6800
    %v6802 = vmul.f32 %v6801, 0.5
    %v6803 = vmul.f32 %v6801, %v690
    %v6804 = vmul.f32 %v6803, %v6803
    %v6805 = vmin.f32 16.0, %v6804
    %v6806 = vmul.f32 %v6805, 2.1237322e-06
    %v6807 = vadd.f32 %v6806, 0.00028619796
    %v6808 = vmul.f32 %v6805, %v6807
    %v6809 = vadd.f32 %v6808, 0.0036580483
    %v6810 = vmul.f32 %v6805, %v6809
    %v6811 = vadd.f32 %v6810, 0.05243302
    %v6812 = vmul.f32 %v6805, %v6811
    %v6813 = vadd.f32 %v6812, 0.18741608
    %v6814 = vmul.f32 %v6805, %v6813
    %v6815 = vadd.f32 %v6814, 1.1283791
    %v6816 = vmul.f32 %v6803, %v6815
    %v6817 = vmul.f32 %v6805, 3.8918573e-05
    %v6818 = vadd.f32 %v6817, 0.001143296
    %v6819 = vmul.f32 %v6805, %v6818
    %v6820 = vadd.f32 %v6819, 0.014752088
    %v6821 = vmul.f32 %v6805, %v6820
    %v6822 = vadd.f32 %v6821, 0.112945676
    %v6823 = vmul.f32 %v6805, %v6822
    %v6824 = vadd.f32 %v6823, 0.4994258
    %v6825 = vmul.f32 %v6805, %v6824
    %v6826 = vadd.f32 %v6825, 1.0
    %v6827 = vrcp.pop %v6826
    %v6828 = vmul.f32 %v6826, %v6827
    %v6829 = vsub.f32 1.0, %v6828
    %v6830 = vmul.f32 %v6827, %v6829
    %v6831 = vadd.f32 %v6827, %v6830
    %vm6832 = vweird.f32 %v6826
    %vm6833 = vweird.f32 %v6827
    %vm6834 = vmor %vm6832, %vm6833
    %v6835 = vsel %vm6834, %v6827, %v6831
    %v6836 = vand.u32 2147483647, %v6826
    %vm6837 = vcmp.eq.f32.partialorder %v6836, 8.507059e+37
    %v6838 = vand.u32 %v6826, 2147483648
    %v6839 = vor.u32 1.1754944e-38, %v6838
    %v6840 = vsel %vm6837, %v6839, %v6835
    %v6841 = vmul.f32 %v6816, %v6840
    %v6842 = vmin.f32 %v6841, 1.0
    %v6843 = vmax.f32 %v6842, -1.0
    %v6844 = vadd.f32 %v6843, 1.0
    %v6845 = vmul.f32 %v6802, %v6844
    %v6846 = vld [vmem:[#allocation2 + $0x3f0] sm:$0x7]
    %v6847 = vld [vmem:[#allocation2 + $0x3d0] sm:$0xff]
    %v6848 = vld [vmem:[#allocation2 + $0x3d8] sm:$0xff]
    %v6849 = vld [vmem:[#allocation2 + $0x3e0] sm:$0xff]
    %v6850 = vld [vmem:[#allocation2 + $0x3e8] sm:$0xff]
    %v6851 = vperm.slane %v6846, 0
    %v6853 = vsel %vm1840, %v6845, 0
    %6855 = vmatpush.msra.mxu0 0.0
    %6856 = vmatpush.msra.mxu0 0.0
    %6857 = vmatpush.msra.mxu0 0.0
    %6858 = vmatpush.msra.mxu0 0.0
    %6859 = vmatpush.msra.mxu0 0.0
    %6860 = vmatpush.msra.mxu0 0.0
    %6861 = vmatpush.msra.mxu0 0.0
    %6862 = vmatpush.msra.mxu0 0.0
    %6863 = vmatpush.msra.mxu0 0.0
    %6864 = vmatpush.msra.mxu0 0.0
    %6865 = vmatpush.msra.mxu0 0.0
    %6866 = vmatpush.msra.mxu0 0.0
    %v6867 = vand.u32 %v6850, 4294901760
    %6868 = vmatpush.msra.mxu0 %v6867
    %v6869 = vand.u32 %v6849, 4294901760
    %6870 = vmatpush.msra.mxu0 %v6869
    %v6871 = vand.u32 %v6848, 4294901760
    %6872 = vmatpush.msra.mxu0 %v6871
    %v6873 = vand.u32 %v6847, 4294901760
    %6874 = vmatpush.msra.mxu0 %v6873
    %v6875 = vand.u32 %v6853, 4294901760
    %v6876 = vsub.f32 %v6853, %v6875
    %v6877 = vand.u32 %v6876, 4294901760
    %v6878 = vsub.f32 %v6876, %v6877
    %v6879 = vand.u32 %v6878, 4294901760
    %6880 = vmatmul.f32.gmra.mxu0 %v6879
    %v6881 = vpop.f32.mrf.mxu0
    %v6882 = vadd.f32 %v6851, %v6881
    %6883 = vdwg.mxu0
    %6884 = vmatpush.msra.mxu0 0.0
    %6885 = vmatpush.msra.mxu0 0.0
    %6886 = vmatpush.msra.mxu0 0.0
    %6887 = vmatpush.msra.mxu0 0.0
    %6888 = vmatpush.msra.mxu0 0.0
    %6889 = vmatpush.msra.mxu0 0.0
    %6890 = vmatpush.msra.mxu0 0.0
    %6891 = vmatpush.msra.mxu0 0.0
    %6892 = vmatpush.msra.mxu0 0.0
    %6893 = vmatpush.msra.mxu0 0.0
    %6894 = vmatpush.msra.mxu0 0.0
    %6895 = vmatpush.msra.mxu0 0.0
    %v6896 = vand.u32 %v6850, 4294901760
    %v6897 = vsub.f32 %v6850, %v6896
    %v6898 = vand.u32 %v6897, 4294901760
    %v6899 = vsub.f32 %v6897, %v6898
    %v6900 = vand.u32 %v6899, 4294901760
    %6901 = vmatpush.msra.mxu0 %v6900
    %v6902 = vand.u32 %v6849, 4294901760
    %v6903 = vsub.f32 %v6849, %v6902
    %v6904 = vand.u32 %v6903, 4294901760
    %v6905 = vsub.f32 %v6903, %v6904
    %v6906 = vand.u32 %v6905, 4294901760
    %6907 = vmatpush.msra.mxu0 %v6906
    %v6908 = vand.u32 %v6848, 4294901760
    %v6909 = vsub.f32 %v6848, %v6908
    %v6910 = vand.u32 %v6909, 4294901760
    %v6911 = vsub.f32 %v6909, %v6910
    %v6912 = vand.u32 %v6911, 4294901760
    %6913 = vmatpush.msra.mxu0 %v6912
    %v6914 = vand.u32 %v6847, 4294901760
    %v6915 = vsub.f32 %v6847, %v6914
    %v6916 = vand.u32 %v6915, 4294901760
    %v6917 = vsub.f32 %v6915, %v6916
    %v6918 = vand.u32 %v6917, 4294901760
    %6919 = vmatpush.msra.mxu0 %v6918
    %v6920 = vand.u32 %v6853, 4294901760
    %6921 = vmatmul.f32.gmra.mxu0 %v6920
    %v6922 = vpop.f32.mrf.mxu0
    %v6923 = vadd.f32 %v6882, %v6922
    %6924 = vdwg.mxu0
    %6925 = vmatpush.msra.mxu0 0.0
    %6926 = vmatpush.msra.mxu0 0.0
    %6927 = vmatpush.msra.mxu0 0.0
    %6928 = vmatpush.msra.mxu0 0.0
    %6929 = vmatpush.msra.mxu0 0.0
    %6930 = vmatpush.msra.mxu0 0.0
    %6931 = vmatpush.msra.mxu0 0.0
    %6932 = vmatpush.msra.mxu0 0.0
    %6933 = vmatpush.msra.mxu0 0.0
    %6934 = vmatpush.msra.mxu0 0.0
    %6935 = vmatpush.msra.mxu0 0.0
    %6936 = vmatpush.msra.mxu0 0.0
    %v6937 = vand.u32 %v6850, 4294901760
    %v6938 = vsub.f32 %v6850, %v6937
    %6939 = vmatpush.msra.mxu0 %v6938
    %v6940 = vand.u32 %v6849, 4294901760
    %v6941 = vsub.f32 %v6849, %v6940
    %6942 = vmatpush.msra.mxu0 %v6941
    %v6943 = vand.u32 %v6848, 4294901760
    %v6944 = vsub.f32 %v6848, %v6943
    %6945 = vmatpush.msra.mxu0 %v6944
    %v6946 = vand.u32 %v6847, 4294901760
    %v6947 = vsub.f32 %v6847, %v6946
    %6948 = vmatpush.msra.mxu0 %v6947
    %v6949 = vand.u32 %v6853, 4294901760
    %v6950 = vsub.f32 %v6853, %v6949
    %6951 = vmatmul.f32.gmra.mxu0 %v6950
    %v6952 = vpop.f32.mrf.mxu0
    %v6953 = vadd.f32 %v6923, %v6952
    %6954 = vdwg.mxu0
    %6955 = vmatpush.msra.mxu0 0.0
    %6956 = vmatpush.msra.mxu0 0.0
    %6957 = vmatpush.msra.mxu0 0.0
    %6958 = vmatpush.msra.mxu0 0.0
    %6959 = vmatpush.msra.mxu0 0.0
    %6960 = vmatpush.msra.mxu0 0.0
    %6961 = vmatpush.msra.mxu0 0.0
    %6962 = vmatpush.msra.mxu0 0.0
    %6963 = vmatpush.msra.mxu0 0.0
    %6964 = vmatpush.msra.mxu0 0.0
    %6965 = vmatpush.msra.mxu0 0.0
    %6966 = vmatpush.msra.mxu0 0.0
    %v6967 = vand.u32 %v6850, 4294901760
    %6968 = vmatpush.msra.mxu0 %v6967
    %v6969 = vand.u32 %v6849, 4294901760
    %6970 = vmatpush.msra.mxu0 %v6969
    %v6971 = vand.u32 %v6848, 4294901760
    %6972 = vmatpush.msra.mxu0 %v6971
    %v6973 = vand.u32 %v6847, 4294901760
    %6974 = vmatpush.msra.mxu0 %v6973
    %v6975 = vand.u32 %v6853, 4294901760
    %v6976 = vsub.f32 %v6853, %v6975
    %v6977 = vand.u32 %v6976, 4294901760
    %6978 = vmatmul.f32.gmra.mxu0 %v6977
    %v6979 = vpop.f32.mrf.mxu0
    %v6980 = vadd.f32 %v6953, %v6979
    %6981 = vdwg.mxu0
    %6982 = vmatpush.msra.mxu0 0.0
    %6983 = vmatpush.msra.mxu0 0.0
    %6984 = vmatpush.msra.mxu0 0.0
    %6985 = vmatpush.msra.mxu0 0.0
    %6986 = vmatpush.msra.mxu0 0.0
    %6987 = vmatpush.msra.mxu0 0.0
    %6988 = vmatpush.msra.mxu0 0.0
    %6989 = vmatpush.msra.mxu0 0.0
    %6990 = vmatpush.msra.mxu0 0.0
    %6991 = vmatpush.msra.mxu0 0.0
    %6992 = vmatpush.msra.mxu0 0.0
    %6993 = vmatpush.msra.mxu0 0.0
    %v6994 = vand.u32 %v6850, 4294901760
    %v6995 = vsub.f32 %v6850, %v6994
    %v6996 = vand.u32 %v6995, 4294901760
    %6997 = vmatpush.msra.mxu0 %v6996
    %v6998 = vand.u32 %v6849, 4294901760
    %v6999 = vsub.f32 %v6849, %v6998
    %v7000 = vand.u32 %v6999, 4294901760
    %7001 = vmatpush.msra.mxu0 %v7000
    %v7002 = vand.u32 %v6848, 4294901760
    %v7003 = vsub.f32 %v6848, %v7002
    %v7004 = vand.u32 %v7003, 4294901760
    %7005 = vmatpush.msra.mxu0 %v7004
    %v7006 = vand.u32 %v6847, 4294901760
    %v7007 = vsub.f32 %v6847, %v7006
    %v7008 = vand.u32 %v7007, 4294901760
    %7009 = vmatpush.msra.mxu0 %v7008
    %v7010 = vand.u32 %v6853, 4294901760
    %7011 = vmatmul.f32.gmra.mxu0 %v7010
    %v7012 = vpop.f32.mrf.mxu0
    %v7013 = vadd.f32 %v6980, %v7012
    %7014 = vdwg.mxu0
    %7015 = vmatpush.msra.mxu0 0.0
    %7016 = vmatpush.msra.mxu0 0.0
    %7017 = vmatpush.msra.mxu0 0.0
    %7018 = vmatpush.msra.mxu0 0.0
    %7019 = vmatpush.msra.mxu0 0.0
    %7020 = vmatpush.msra.mxu0 0.0
    %7021 = vmatpush.msra.mxu0 0.0
    %7022 = vmatpush.msra.mxu0 0.0
    %7023 = vmatpush.msra.mxu0 0.0
    %7024 = vmatpush.msra.mxu0 0.0
    %7025 = vmatpush.msra.mxu0 0.0
    %7026 = vmatpush.msra.mxu0 0.0
    %v7027 = vand.u32 %v6850, 4294901760
    %7028 = vmatpush.msra.mxu0 %v7027
    %v7029 = vand.u32 %v6849, 4294901760
    %7030 = vmatpush.msra.mxu0 %v7029
    %v7031 = vand.u32 %v6848, 4294901760
    %7032 = vmatpush.msra.mxu0 %v7031
    %v7033 = vand.u32 %v6847, 4294901760
    %7034 = vmatpush.msra.mxu0 %v7033
    %v7035 = vand.u32 %v6853, 4294901760
    %7036 = vmatmul.f32.gmra.mxu0 %v7035
    %v7037 = vpop.f32.mrf.mxu0
    %v7038 = vadd.f32 %v7013, %v7037
    %7039 = vdwg.mxu0
    %v7040 = vsel %vm1840, %v7038, 0.0
    %v7041 = vrot.slane %v7040, 4
    %v7042 = vadd.f32 %v7040, %v7041
    %v7043 = vrot.slane %v7042, 2
    %v7044 = vadd.f32 %v7042, %v7043
    %v7045 = vrot.slane %v7044, 1
    %v7046 = vadd.f32 %v7044, %v7045
    %v7047 = vmul.f32 %v7046, %v655
    %v7048 = vsub.f32 %v7038, %v7047
    %v7049 = vmul.f32 %v7048, %v7048
    %v7050 = vsel %vm1840, %v7049, 0.0
    %v7051 = vrot.slane %v7050, 4
    %v7052 = vadd.f32 %v7050, %v7051
    %v7053 = vrot.slane %v7052, 2
    %v7054 = vadd.f32 %v7052, %v7053
    %v7055 = vrot.slane %v7054, 1
    %v7056 = vadd.f32 %v7054, %v7055
    %v7057 = vmul.f32 %v7056, %v655
    %v7058 = vadd.f32 %v7057, 1e-05
    %v7059 = vrsqrt.pop %v7058
    %v7060 = vmul.f32 %v7059, %v7058
    %v7061 = vmul.f32 %v7060, %v7059
    %v7062 = vmul.f32 0.5, %v7061
    %v7063 = vsub.f32 1.5, %v7062
    %v7064 = vmul.f32 %v7059, %v7063
    %vm7065 = vweird.f32 %v7058
    %vm7066 = vweird.f32 %v7059
    %vm7067 = vmor %vm7065, %vm7066
    %v7068 = vsel %vm7067, %v7059, %v7064
    %v7069 = vmul.f32 %v7048, %v7068
    %v7070 = vperm.slane %v6846, 1
    %v7071 = vmul.f32 %v7069, %v7070
    %v7072 = vperm.slane %v6846, 2
    %v7073 = vadd.f32 %v7071, %v7072
    %v7074 = vmul.f32 %v7073, 0.5
    %v7075 = vmul.f32 %v7073, %v690
    %v7076 = vmul.f32 %v7075, %v7075
    %v7077 = vmin.f32 16.0, %v7076
    %v7078 = vmul.f32 %v7077, 2.1237322e-06
    %v7079 = vadd.f32 %v7078, 0.00028619796
    %v7080 = vmul.f32 %v7077, %v7079
    %v7081 = vadd.f32 %v7080, 0.0036580483
    %v7082 = vmul.f32 %v7077, %v7081
    %v7083 = vadd.f32 %v7082, 0.05243302
    %v7084 = vmul.f32 %v7077, %v7083
    %v7085 = vadd.f32 %v7084, 0.18741608
    %v7086 = vmul.f32 %v7077, %v7085
    %v7087 = vadd.f32 %v7086, 1.1283791
    %v7088 = vmul.f32 %v7075, %v7087
    %v7089 = vmul.f32 %v7077, 3.8918573e-05
    %v7090 = vadd.f32 %v7089, 0.001143296
    %v7091 = vmul.f32 %v7077, %v7090
    %v7092 = vadd.f32 %v7091, 0.014752088
    %v7093 = vmul.f32 %v7077, %v7092
    %v7094 = vadd.f32 %v7093, 0.112945676
    %v7095 = vmul.f32 %v7077, %v7094
    %v7096 = vadd.f32 %v7095, 0.4994258
    %v7097 = vmul.f32 %v7077, %v7096
    %v7098 = vadd.f32 %v7097, 1.0
    %v7099 = vrcp.pop %v7098
    %v7100 = vmul.f32 %v7098, %v7099
    %v7101 = vsub.f32 1.0, %v7100
    %v7102 = vmul.f32 %v7099, %v7101
    %v7103 = vadd.f32 %v7099, %v7102
    %vm7104 = vweird.f32 %v7098
    %vm7105 = vweird.f32 %v7099
    %vm7106 = vmor %vm7104, %vm7105
    %v7107 = vsel %vm7106, %v7099, %v7103
    %v7108 = vand.u32 2147483647, %v7098
    %vm7109 = vcmp.eq.f32.partialorder %v7108, 8.507059e+37
    %v7110 = vand.u32 %v7098, 2147483648
    %v7111 = vor.u32 1.1754944e-38, %v7110
    %v7112 = vsel %vm7109, %v7111, %v7107
    %v7113 = vmul.f32 %v7088, %v7112
    %v7114 = vmin.f32 %v7113, 1.0
    %v7115 = vmax.f32 %v7114, -1.0
    %v7116 = vadd.f32 %v7115, 1.0
    %v7117 = vmul.f32 %v7074, %v7116
    %v7118 = vld [vmem:[#allocation2 + $0x418] sm:$0x7]
    %v7119 = vld [vmem:[#allocation2 + $0x3f8] sm:$0xff]
    %v7120 = vld [vmem:[#allocation2 + $0x400] sm:$0xff]
    %v7121 = vld [vmem:[#allocation2 + $0x408] sm:$0xff]
    %v7122 = vld [vmem:[#allocation2 + $0x410] sm:$0xff]
    %v7123 = vperm.slane %v7118, 0
    %v7125 = vsel %vm1840, %v7117, 0
    %7127 = vmatpush.msra.mxu0 0.0
    %7128 = vmatpush.msra.mxu0 0.0
    %7129 = vmatpush.msra.mxu0 0.0
    %7130 = vmatpush.msra.mxu0 0.0
    %7131 = vmatpush.msra.mxu0 0.0
    %7132 = vmatpush.msra.mxu0 0.0
    %7133 = vmatpush.msra.mxu0 0.0
    %7134 = vmatpush.msra.mxu0 0.0
    %7135 = vmatpush.msra.mxu0 0.0
    %7136 = vmatpush.msra.mxu0 0.0
    %7137 = vmatpush.msra.mxu0 0.0
    %7138 = vmatpush.msra.mxu0 0.0
    %v7139 = vand.u32 %v7122, 4294901760
    %7140 = vmatpush.msra.mxu0 %v7139
    %v7141 = vand.u32 %v7121, 4294901760
    %7142 = vmatpush.msra.mxu0 %v7141
    %v7143 = vand.u32 %v7120, 4294901760
    %7144 = vmatpush.msra.mxu0 %v7143
    %v7145 = vand.u32 %v7119, 4294901760
    %7146 = vmatpush.msra.mxu0 %v7145
    %v7147 = vand.u32 %v7125, 4294901760
    %v7148 = vsub.f32 %v7125, %v7147
    %v7149 = vand.u32 %v7148, 4294901760
    %v7150 = vsub.f32 %v7148, %v7149
    %v7151 = vand.u32 %v7150, 4294901760
    %7152 = vmatmul.f32.gmra.mxu0 %v7151
    %v7153 = vpop.f32.mrf.mxu0
    %v7154 = vadd.f32 %v7123, %v7153
    %7155 = vdwg.mxu0
    %7156 = vmatpush.msra.mxu0 0.0
    %7157 = vmatpush.msra.mxu0 0.0
    %7158 = vmatpush.msra.mxu0 0.0
    %7159 = vmatpush.msra.mxu0 0.0
    %7160 = vmatpush.msra.mxu0 0.0
    %7161 = vmatpush.msra.mxu0 0.0
    %7162 = vmatpush.msra.mxu0 0.0
    %7163 = vmatpush.msra.mxu0 0.0
    %7164 = vmatpush.msra.mxu0 0.0
    %7165 = vmatpush.msra.mxu0 0.0
    %7166 = vmatpush.msra.mxu0 0.0
    %7167 = vmatpush.msra.mxu0 0.0
    %v7168 = vand.u32 %v7122, 4294901760
    %v7169 = vsub.f32 %v7122, %v7168
    %v7170 = vand.u32 %v7169, 4294901760
    %v7171 = vsub.f32 %v7169, %v7170
    %v7172 = vand.u32 %v7171, 4294901760
    %7173 = vmatpush.msra.mxu0 %v7172
    %v7174 = vand.u32 %v7121, 4294901760
    %v7175 = vsub.f32 %v7121, %v7174
    %v7176 = vand.u32 %v7175, 4294901760
    %v7177 = vsub.f32 %v7175, %v7176
    %v7178 = vand.u32 %v7177, 4294901760
    %7179 = vmatpush.msra.mxu0 %v7178
    %v7180 = vand.u32 %v7120, 4294901760
    %v7181 = vsub.f32 %v7120, %v7180
    %v7182 = vand.u32 %v7181, 4294901760
    %v7183 = vsub.f32 %v7181, %v7182
    %v7184 = vand.u32 %v7183, 4294901760
    %7185 = vmatpush.msra.mxu0 %v7184
    %v7186 = vand.u32 %v7119, 4294901760
    %v7187 = vsub.f32 %v7119, %v7186
    %v7188 = vand.u32 %v7187, 4294901760
    %v7189 = vsub.f32 %v7187, %v7188
    %v7190 = vand.u32 %v7189, 4294901760
    %7191 = vmatpush.msra.mxu0 %v7190
    %v7192 = vand.u32 %v7125, 4294901760
    %7193 = vmatmul.f32.gmra.mxu0 %v7192
    %v7194 = vpop.f32.mrf.mxu0
    %v7195 = vadd.f32 %v7154, %v7194
    %7196 = vdwg.mxu0
    %7197 = vmatpush.msra.mxu0 0.0
    %7198 = vmatpush.msra.mxu0 0.0
    %7199 = vmatpush.msra.mxu0 0.0
    %7200 = vmatpush.msra.mxu0 0.0
    %7201 = vmatpush.msra.mxu0 0.0
    %7202 = vmatpush.msra.mxu0 0.0
    %7203 = vmatpush.msra.mxu0 0.0
    %7204 = vmatpush.msra.mxu0 0.0
    %7205 = vmatpush.msra.mxu0 0.0
    %7206 = vmatpush.msra.mxu0 0.0
    %7207 = vmatpush.msra.mxu0 0.0
    %7208 = vmatpush.msra.mxu0 0.0
    %v7209 = vand.u32 %v7122, 4294901760
    %v7210 = vsub.f32 %v7122, %v7209
    %7211 = vmatpush.msra.mxu0 %v7210
    %v7212 = vand.u32 %v7121, 4294901760
    %v7213 = vsub.f32 %v7121, %v7212
    %7214 = vmatpush.msra.mxu0 %v7213
    %v7215 = vand.u32 %v7120, 4294901760
    %v7216 = vsub.f32 %v7120, %v7215
    %7217 = vmatpush.msra.mxu0 %v7216
    %v7218 = vand.u32 %v7119, 4294901760
    %v7219 = vsub.f32 %v7119, %v7218
    %7220 = vmatpush.msra.mxu0 %v7219
    %v7221 = vand.u32 %v7125, 4294901760
    %v7222 = vsub.f32 %v7125, %v7221
    %7223 = vmatmul.f32.gmra.mxu0 %v7222
    %v7224 = vpop.f32.mrf.mxu0
    %v7225 = vadd.f32 %v7195, %v7224
    %7226 = vdwg.mxu0
    %7227 = vmatpush.msra.mxu0 0.0
    %7228 = vmatpush.msra.mxu0 0.0
    %7229 = vmatpush.msra.mxu0 0.0
    %7230 = vmatpush.msra.mxu0 0.0
    %7231 = vmatpush.msra.mxu0 0.0
    %7232 = vmatpush.msra.mxu0 0.0
    %7233 = vmatpush.msra.mxu0 0.0
    %7234 = vmatpush.msra.mxu0 0.0
    %7235 = vmatpush.msra.mxu0 0.0
    %7236 = vmatpush.msra.mxu0 0.0
    %7237 = vmatpush.msra.mxu0 0.0
    %7238 = vmatpush.msra.mxu0 0.0
    %v7239 = vand.u32 %v7122, 4294901760
    %7240 = vmatpush.msra.mxu0 %v7239
    %v7241 = vand.u32 %v7121, 4294901760
    %7242 = vmatpush.msra.mxu0 %v7241
    %v7243 = vand.u32 %v7120, 4294901760
    %7244 = vmatpush.msra.mxu0 %v7243
    %v7245 = vand.u32 %v7119, 4294901760
    %7246 = vmatpush.msra.mxu0 %v7245
    %v7247 = vand.u32 %v7125, 4294901760
    %v7248 = vsub.f32 %v7125, %v7247
    %v7249 = vand.u32 %v7248, 4294901760
    %7250 = vmatmul.f32.gmra.mxu0 %v7249
    %v7251 = vpop.f32.mrf.mxu0
    %v7252 = vadd.f32 %v7225, %v7251
    %7253 = vdwg.mxu0
    %7254 = vmatpush.msra.mxu0 0.0
    %7255 = vmatpush.msra.mxu0 0.0
    %7256 = vmatpush.msra.mxu0 0.0
    %7257 = vmatpush.msra.mxu0 0.0
    %7258 = vmatpush.msra.mxu0 0.0
    %7259 = vmatpush.msra.mxu0 0.0
    %7260 = vmatpush.msra.mxu0 0.0
    %7261 = vmatpush.msra.mxu0 0.0
    %7262 = vmatpush.msra.mxu0 0.0
    %7263 = vmatpush.msra.mxu0 0.0
    %7264 = vmatpush.msra.mxu0 0.0
    %7265 = vmatpush.msra.mxu0 0.0
    %v7266 = vand.u32 %v7122, 4294901760
    %v7267 = vsub.f32 %v7122, %v7266
    %v7268 = vand.u32 %v7267, 4294901760
    %7269 = vmatpush.msra.mxu0 %v7268
    %v7270 = vand.u32 %v7121, 4294901760
    %v7271 = vsub.f32 %v7121, %v7270
    %v7272 = vand.u32 %v7271, 4294901760
    %7273 = vmatpush.msra.mxu0 %v7272
    %v7274 = vand.u32 %v7120, 4294901760
    %v7275 = vsub.f32 %v7120, %v7274
    %v7276 = vand.u32 %v7275, 4294901760
    %7277 = vmatpush.msra.mxu0 %v7276
    %v7278 = vand.u32 %v7119, 4294901760
    %v7279 = vsub.f32 %v7119, %v7278
    %v7280 = vand.u32 %v7279, 4294901760
    %7281 = vmatpush.msra.mxu0 %v7280
    %v7282 = vand.u32 %v7125, 4294901760
    %7283 = vmatmul.f32.gmra.mxu0 %v7282
    %v7284 = vpop.f32.mrf.mxu0
    %v7285 = vadd.f32 %v7252, %v7284
    %7286 = vdwg.mxu0
    %7287 = vmatpush.msra.mxu0 0.0
    %7288 = vmatpush.msra.mxu0 0.0
    %7289 = vmatpush.msra.mxu0 0.0
    %7290 = vmatpush.msra.mxu0 0.0
    %7291 = vmatpush.msra.mxu0 0.0
    %7292 = vmatpush.msra.mxu0 0.0
    %7293 = vmatpush.msra.mxu0 0.0
    %7294 = vmatpush.msra.mxu0 0.0
    %7295 = vmatpush.msra.mxu0 0.0
    %7296 = vmatpush.msra.mxu0 0.0
    %7297 = vmatpush.msra.mxu0 0.0
    %7298 = vmatpush.msra.mxu0 0.0
    %v7299 = vand.u32 %v7122, 4294901760
    %7300 = vmatpush.msra.mxu0 %v7299
    %v7301 = vand.u32 %v7121, 4294901760
    %7302 = vmatpush.msra.mxu0 %v7301
    %v7303 = vand.u32 %v7120, 4294901760
    %7304 = vmatpush.msra.mxu0 %v7303
    %v7305 = vand.u32 %v7119, 4294901760
    %7306 = vmatpush.msra.mxu0 %v7305
    %v7307 = vand.u32 %v7125, 4294901760
    %7308 = vmatmul.f32.gmra.mxu0 %v7307
    %v7309 = vpop.f32.mrf.mxu0
    %v7310 = vadd.f32 %v7285, %v7309
    %7311 = vdwg.mxu0
    %v7312 = vsel %vm1840, %v7310, 0.0
    %v7313 = vrot.slane %v7312, 4
    %v7314 = vadd.f32 %v7312, %v7313
    %v7315 = vrot.slane %v7314, 2
    %v7316 = vadd.f32 %v7314, %v7315
    %v7317 = vrot.slane %v7316, 1
    %v7318 = vadd.f32 %v7316, %v7317
    %v7319 = vmul.f32 %v7318, %v655
    %v7320 = vsub.f32 %v7310, %v7319
    %v7321 = vmul.f32 %v7320, %v7320
    %v7322 = vsel %vm1840, %v7321, 0.0
    %v7323 = vrot.slane %v7322, 4
    %v7324 = vadd.f32 %v7322, %v7323
    %v7325 = vrot.slane %v7324, 2
    %v7326 = vadd.f32 %v7324, %v7325
    %v7327 = vrot.slane %v7326, 1
    %v7328 = vadd.f32 %v7326, %v7327
    %v7329 = vmul.f32 %v7328, %v655
    %v7330 = vadd.f32 %v7329, 1e-05
    %v7331 = vrsqrt.pop %v7330
    %v7332 = vmul.f32 %v7331, %v7330
    %v7333 = vmul.f32 %v7332, %v7331
    %v7334 = vmul.f32 0.5, %v7333
    %v7335 = vsub.f32 1.5, %v7334
    %v7336 = vmul.f32 %v7331, %v7335
    %vm7337 = vweird.f32 %v7330
    %vm7338 = vweird.f32 %v7331
    %vm7339 = vmor %vm7337, %vm7338
    %v7340 = vsel %vm7339, %v7331, %v7336
    %v7341 = vmul.f32 %v7320, %v7340
    %v7342 = vperm.slane %v7118, 1
    %v7343 = vmul.f32 %v7341, %v7342
    %v7344 = vperm.slane %v7118, 2
    %v7345 = vadd.f32 %v7343, %v7344
    %v7346 = vadd.f32 %v7345, %v5297
    %v7347 = vld [vmem:[#allocation2 + $0x440] sm:$0x7]
    %v7348 = vld [vmem:[#allocation2 + $0x420] sm:$0xff]
    %v7349 = vld [vmem:[#allocation2 + $0x428] sm:$0xff]
    %v7350 = vld [vmem:[#allocation2 + $0x430] sm:$0xff]
    %v7351 = vld [vmem:[#allocation2 + $0x438] sm:$0xff]
    %v7352 = vperm.slane %v7347, 0
    %v7354 = vsel %vm1840, %v7346, 0
    %7356 = vmatpush.msra.mxu0 0.0
    %7357 = vmatpush.msra.mxu0 0.0
    %7358 = vmatpush.msra.mxu0 0.0
    %7359 = vmatpush.msra.mxu0 0.0
    %7360 = vmatpush.msra.mxu0 0.0
    %7361 = vmatpush.msra.mxu0 0.0
    %7362 = vmatpush.msra.mxu0 0.0
    %7363 = vmatpush.msra.mxu0 0.0
    %7364 = vmatpush.msra.mxu0 0.0
    %7365 = vmatpush.msra.mxu0 0.0
    %7366 = vmatpush.msra.mxu0 0.0
    %7367 = vmatpush.msra.mxu0 0.0
    %v7368 = vand.u32 %v7351, 4294901760
    %7369 = vmatpush.msra.mxu0 %v7368
    %v7370 = vand.u32 %v7350, 4294901760
    %7371 = vmatpush.msra.mxu0 %v7370
    %v7372 = vand.u32 %v7349, 4294901760
    %7373 = vmatpush.msra.mxu0 %v7372
    %v7374 = vand.u32 %v7348, 4294901760
    %7375 = vmatpush.msra.mxu0 %v7374
    %v7376 = vand.u32 %v7354, 4294901760
    %v7377 = vsub.f32 %v7354, %v7376
    %v7378 = vand.u32 %v7377, 4294901760
    %v7379 = vsub.f32 %v7377, %v7378
    %v7380 = vand.u32 %v7379, 4294901760
    %7381 = vmatmul.f32.gmra.mxu0 %v7380
    %v7382 = vpop.f32.mrf.mxu0
    %v7383 = vadd.f32 %v7352, %v7382
    %7384 = vdwg.mxu0
    %7385 = vmatpush.msra.mxu0 0.0
    %7386 = vmatpush.msra.mxu0 0.0
    %7387 = vmatpush.msra.mxu0 0.0
    %7388 = vmatpush.msra.mxu0 0.0
    %7389 = vmatpush.msra.mxu0 0.0
    %7390 = vmatpush.msra.mxu0 0.0
    %7391 = vmatpush.msra.mxu0 0.0
    %7392 = vmatpush.msra.mxu0 0.0
    %7393 = vmatpush.msra.mxu0 0.0
    %7394 = vmatpush.msra.mxu0 0.0
    %7395 = vmatpush.msra.mxu0 0.0
    %7396 = vmatpush.msra.mxu0 0.0
    %v7397 = vand.u32 %v7351, 4294901760
    %v7398 = vsub.f32 %v7351, %v7397
    %v7399 = vand.u32 %v7398, 4294901760
    %v7400 = vsub.f32 %v7398, %v7399
    %v7401 = vand.u32 %v7400, 4294901760
    %7402 = vmatpush.msra.mxu0 %v7401
    %v7403 = vand.u32 %v7350, 4294901760
    %v7404 = vsub.f32 %v7350, %v7403
    %v7405 = vand.u32 %v7404, 4294901760
    %v7406 = vsub.f32 %v7404, %v7405
    %v7407 = vand.u32 %v7406, 4294901760
    %7408 = vmatpush.msra.mxu0 %v7407
    %v7409 = vand.u32 %v7349, 4294901760
    %v7410 = vsub.f32 %v7349, %v7409
    %v7411 = vand.u32 %v7410, 4294901760
    %v7412 = vsub.f32 %v7410, %v7411
    %v7413 = vand.u32 %v7412, 4294901760
    %7414 = vmatpush.msra.mxu0 %v7413
    %v7415 = vand.u32 %v7348, 4294901760
    %v7416 = vsub.f32 %v7348, %v7415
    %v7417 = vand.u32 %v7416, 4294901760
    %v7418 = vsub.f32 %v7416, %v7417
    %v7419 = vand.u32 %v7418, 4294901760
    %7420 = vmatpush.msra.mxu0 %v7419
    %v7421 = vand.u32 %v7354, 4294901760
    %7422 = vmatmul.f32.gmra.mxu0 %v7421
    %v7423 = vpop.f32.mrf.mxu0
    %v7424 = vadd.f32 %v7383, %v7423
    %7425 = vdwg.mxu0
    %7426 = vmatpush.msra.mxu0 0.0
    %7427 = vmatpush.msra.mxu0 0.0
    %7428 = vmatpush.msra.mxu0 0.0
    %7429 = vmatpush.msra.mxu0 0.0
    %7430 = vmatpush.msra.mxu0 0.0
    %7431 = vmatpush.msra.mxu0 0.0
    %7432 = vmatpush.msra.mxu0 0.0
    %7433 = vmatpush.msra.mxu0 0.0
    %7434 = vmatpush.msra.mxu0 0.0
    %7435 = vmatpush.msra.mxu0 0.0
    %7436 = vmatpush.msra.mxu0 0.0
    %7437 = vmatpush.msra.mxu0 0.0
    %v7438 = vand.u32 %v7351, 4294901760
    %v7439 = vsub.f32 %v7351, %v7438
    %7440 = vmatpush.msra.mxu0 %v7439
    %v7441 = vand.u32 %v7350, 4294901760
    %v7442 = vsub.f32 %v7350, %v7441
    %7443 = vmatpush.msra.mxu0 %v7442
    %v7444 = vand.u32 %v7349, 4294901760
    %v7445 = vsub.f32 %v7349, %v7444
    %7446 = vmatpush.msra.mxu0 %v7445
    %v7447 = vand.u32 %v7348, 4294901760
    %v7448 = vsub.f32 %v7348, %v7447
    %7449 = vmatpush.msra.mxu0 %v7448
    %v7450 = vand.u32 %v7354, 4294901760
    %v7451 = vsub.f32 %v7354, %v7450
    %7452 = vmatmul.f32.gmra.mxu0 %v7451
    %v7453 = vpop.f32.mrf.mxu0
    %v7454 = vadd.f32 %v7424, %v7453
    %7455 = vdwg.mxu0
    %7456 = vmatpush.msra.mxu0 0.0
    %7457 = vmatpush.msra.mxu0 0.0
    %7458 = vmatpush.msra.mxu0 0.0
    %7459 = vmatpush.msra.mxu0 0.0
    %7460 = vmatpush.msra.mxu0 0.0
    %7461 = vmatpush.msra.mxu0 0.0
    %7462 = vmatpush.msra.mxu0 0.0
    %7463 = vmatpush.msra.mxu0 0.0
    %7464 = vmatpush.msra.mxu0 0.0
    %7465 = vmatpush.msra.mxu0 0.0
    %7466 = vmatpush.msra.mxu0 0.0
    %7467 = vmatpush.msra.mxu0 0.0
    %v7468 = vand.u32 %v7351, 4294901760
    %7469 = vmatpush.msra.mxu0 %v7468
    %v7470 = vand.u32 %v7350, 4294901760
    %7471 = vmatpush.msra.mxu0 %v7470
    %v7472 = vand.u32 %v7349, 4294901760
    %7473 = vmatpush.msra.mxu0 %v7472
    %v7474 = vand.u32 %v7348, 4294901760
    %7475 = vmatpush.msra.mxu0 %v7474
    %v7476 = vand.u32 %v7354, 4294901760
    %v7477 = vsub.f32 %v7354, %v7476
    %v7478 = vand.u32 %v7477, 4294901760
    %7479 = vmatmul.f32.gmra.mxu0 %v7478
    %v7480 = vpop.f32.mrf.mxu0
    %v7481 = vadd.f32 %v7454, %v7480
    %7482 = vdwg.mxu0
    %7483 = vmatpush.msra.mxu0 0.0
    %7484 = vmatpush.msra.mxu0 0.0
    %7485 = vmatpush.msra.mxu0 0.0
    %7486 = vmatpush.msra.mxu0 0.0
    %7487 = vmatpush.msra.mxu0 0.0
    %7488 = vmatpush.msra.mxu0 0.0
    %7489 = vmatpush.msra.mxu0 0.0
    %7490 = vmatpush.msra.mxu0 0.0
    %7491 = vmatpush.msra.mxu0 0.0
    %7492 = vmatpush.msra.mxu0 0.0
    %7493 = vmatpush.msra.mxu0 0.0
    %7494 = vmatpush.msra.mxu0 0.0
    %v7495 = vand.u32 %v7351, 4294901760
    %v7496 = vsub.f32 %v7351, %v7495
    %v7497 = vand.u32 %v7496, 4294901760
    %7498 = vmatpush.msra.mxu0 %v7497
    %v7499 = vand.u32 %v7350, 4294901760
    %v7500 = vsub.f32 %v7350, %v7499
    %v7501 = vand.u32 %v7500, 4294901760
    %7502 = vmatpush.msra.mxu0 %v7501
    %v7503 = vand.u32 %v7349, 4294901760
    %v7504 = vsub.f32 %v7349, %v7503
    %v7505 = vand.u32 %v7504, 4294901760
    %7506 = vmatpush.msra.mxu0 %v7505
    %v7507 = vand.u32 %v7348, 4294901760
    %v7508 = vsub.f32 %v7348, %v7507
    %v7509 = vand.u32 %v7508, 4294901760
    %7510 = vmatpush.msra.mxu0 %v7509
    %v7511 = vand.u32 %v7354, 4294901760
    %7512 = vmatmul.f32.gmra.mxu0 %v7511
    %v7513 = vpop.f32.mrf.mxu0
    %v7514 = vadd.f32 %v7481, %v7513
    %7515 = vdwg.mxu0
    %7516 = vmatpush.msra.mxu0 0.0
    %7517 = vmatpush.msra.mxu0 0.0
    %7518 = vmatpush.msra.mxu0 0.0
    %7519 = vmatpush.msra.mxu0 0.0
    %7520 = vmatpush.msra.mxu0 0.0
    %7521 = vmatpush.msra.mxu0 0.0
    %7522 = vmatpush.msra.mxu0 0.0
    %7523 = vmatpush.msra.mxu0 0.0
    %7524 = vmatpush.msra.mxu0 0.0
    %7525 = vmatpush.msra.mxu0 0.0
    %7526 = vmatpush.msra.mxu0 0.0
    %7527 = vmatpush.msra.mxu0 0.0
    %v7528 = vand.u32 %v7351, 4294901760
    %7529 = vmatpush.msra.mxu0 %v7528
    %v7530 = vand.u32 %v7350, 4294901760
    %7531 = vmatpush.msra.mxu0 %v7530
    %v7532 = vand.u32 %v7349, 4294901760
    %7533 = vmatpush.msra.mxu0 %v7532
    %v7534 = vand.u32 %v7348, 4294901760
    %7535 = vmatpush.msra.mxu0 %v7534
    %v7536 = vand.u32 %v7354, 4294901760
    %7537 = vmatmul.f32.gmra.mxu0 %v7536
    %v7538 = vpop.f32.mrf.mxu0
    %v7539 = vadd.f32 %v7514, %v7538
    %7540 = vdwg.mxu0
    %v7541 = vrot.slane %v7539, 4
    %v7542 = vadd.f32 %v7539, %v7541
    %v7543 = vrot.slane %v7542, 2
    %v7544 = vadd.f32 %v7542, %v7543
    %v7545 = vrot.slane %v7544, 1
    %v7546 = vadd.f32 %v7544, %v7545
    %v7547 = vmul.f32 %v7546, %v655
    %v7548 = vsub.f32 %v7539, %v7547
    %v7549 = vmul.f32 %v7548, %v7548
    %v7550 = vrot.slane %v7549, 4
    %v7551 = vadd.f32 %v7549, %v7550
    %v7552 = vrot.slane %v7551, 2
    %v7553 = vadd.f32 %v7551, %v7552
    %v7554 = vrot.slane %v7553, 1
    %v7555 = vadd.f32 %v7553, %v7554
    %v7556 = vmul.f32 %v7555, %v655
    %v7557 = vadd.f32 %v7556, 1e-05
    %v7558 = vrsqrt.pop %v7557
    %v7559 = vmul.f32 %v7558, %v7557
    %v7560 = vmul.f32 %v7559, %v7558
    %v7561 = vmul.f32 0.5, %v7560
    %v7562 = vsub.f32 1.5, %v7561
    %v7563 = vmul.f32 %v7558, %v7562
    %vm7564 = vweird.f32 %v7557
    %vm7565 = vweird.f32 %v7558
    %vm7566 = vmor %vm7564, %vm7565
    %v7567 = vsel %vm7566, %v7558, %v7563
    %v7568 = vmul.f32 %v7548, %v7567
    %v7569 = vperm.slane %v7347, 1
    %v7570 = vmul.f32 %v7568, %v7569
    %v7571 = vperm.slane %v7347, 2
    %v7572 = vadd.f32 %v7570, %v7571
    %v7573 = vmul.f32 %v7572, 0.5
    %v7574 = vmul.f32 %v7572, %v690
    %v7575 = vmul.f32 %v7574, %v7574
    %v7576 = vmin.f32 16.0, %v7575
    %v7577 = vmul.f32 %v7576, 2.1237322e-06
    %v7578 = vadd.f32 %v7577, 0.00028619796
    %v7579 = vmul.f32 %v7576, %v7578
    %v7580 = vadd.f32 %v7579, 0.0036580483
    %v7581 = vmul.f32 %v7576, %v7580
    %v7582 = vadd.f32 %v7581, 0.05243302
    %v7583 = vmul.f32 %v7576, %v7582
    %v7584 = vadd.f32 %v7583, 0.18741608
    %v7585 = vmul.f32 %v7576, %v7584
    %v7586 = vadd.f32 %v7585, 1.1283791
    %v7587 = vmul.f32 %v7574, %v7586
    %v7588 = vmul.f32 %v7576, 3.8918573e-05
    %v7589 = vadd.f32 %v7588, 0.001143296
    %v7590 = vmul.f32 %v7576, %v7589
    %v7591 = vadd.f32 %v7590, 0.014752088
    %v7592 = vmul.f32 %v7576, %v7591
    %v7593 = vadd.f32 %v7592, 0.112945676
    %v7594 = vmul.f32 %v7576, %v7593
    %v7595 = vadd.f32 %v7594, 0.4994258
    %v7596 = vmul.f32 %v7576, %v7595
    %v7597 = vadd.f32 %v7596, 1.0
    %v7598 = vrcp.pop %v7597
    %v7599 = vmul.f32 %v7597, %v7598
    %v7600 = vsub.f32 1.0, %v7599
    %v7601 = vmul.f32 %v7598, %v7600
    %v7602 = vadd.f32 %v7598, %v7601
    %vm7603 = vweird.f32 %v7597
    %vm7604 = vweird.f32 %v7598
    %vm7605 = vmor %vm7603, %vm7604
    %v7606 = vsel %vm7605, %v7598, %v7602
    %v7607 = vand.u32 2147483647, %v7597
    %vm7608 = vcmp.eq.f32.partialorder %v7607, 8.507059e+37
    %v7609 = vand.u32 %v7597, 2147483648
    %v7610 = vor.u32 1.1754944e-38, %v7609
    %v7611 = vsel %vm7608, %v7610, %v7606
    %v7612 = vmul.f32 %v7587, %v7611
    %v7613 = vmin.f32 %v7612, 1.0
    %v7614 = vmax.f32 %v7613, -1.0
    %v7615 = vadd.f32 %v7614, 1.0
    %v7616 = vmul.f32 %v7573, %v7615
    %v7617 = vld [vmem:[#allocation2 + $0x4c8] sm:$0x7]
    %v7618 = vld [vmem:[#allocation2 + $0x448] sm:$0xff]
    %v7619 = vld [vmem:[#allocation2 + $0x450] sm:$0xff]
    %v7620 = vld [vmem:[#allocation2 + $0x458] sm:$0xff]
    %v7621 = vld [vmem:[#allocation2 + $0x460] sm:$0xff]
    %v7622 = vld [vmem:[#allocation2 + $0x468] sm:$0xff]
    %v7623 = vld [vmem:[#allocation2 + $0x470] sm:$0xff]
    %v7624 = vld [vmem:[#allocation2 + $0x478] sm:$0xff]
    %v7625 = vld [vmem:[#allocation2 + $0x480] sm:$0xff]
    %v7626 = vld [vmem:[#allocation2 + $0x488] sm:$0xff]
    %v7627 = vld [vmem:[#allocation2 + $0x490] sm:$0xff]
    %v7628 = vld [vmem:[#allocation2 + $0x498] sm:$0xff]
    %v7629 = vld [vmem:[#allocation2 + $0x4a0] sm:$0xff]
    %v7630 = vld [vmem:[#allocation2 + $0x4a8] sm:$0xff]
    %v7631 = vld [vmem:[#allocation2 + $0x4b0] sm:$0xff]
    %v7632 = vld [vmem:[#allocation2 + $0x4b8] sm:$0xff]
    %v7633 = vld [vmem:[#allocation2 + $0x4c0] sm:$0xff]
    %v7634 = vperm.slane %v7617, 0
    %v7635 = vand.u32 %v7633, 4294901760
    %7636 = vmatpush.msra.mxu0 %v7635
    %v7637 = vand.u32 %v7632, 4294901760
    %7638 = vmatpush.msra.mxu0 %v7637
    %v7639 = vand.u32 %v7631, 4294901760
    %7640 = vmatpush.msra.mxu0 %v7639
    %v7641 = vand.u32 %v7630, 4294901760
    %7642 = vmatpush.msra.mxu0 %v7641
    %v7643 = vand.u32 %v7629, 4294901760
    %7644 = vmatpush.msra.mxu0 %v7643
    %v7645 = vand.u32 %v7628, 4294901760
    %7646 = vmatpush.msra.mxu0 %v7645
    %v7647 = vand.u32 %v7627, 4294901760
    %7648 = vmatpush.msra.mxu0 %v7647
    %v7649 = vand.u32 %v7626, 4294901760
    %7650 = vmatpush.msra.mxu0 %v7649
    %v7651 = vand.u32 %v7625, 4294901760
    %7652 = vmatpush.msra.mxu0 %v7651
    %v7653 = vand.u32 %v7624, 4294901760
    %7654 = vmatpush.msra.mxu0 %v7653
    %v7655 = vand.u32 %v7623, 4294901760
    %7656 = vmatpush.msra.mxu0 %v7655
    %v7657 = vand.u32 %v7622, 4294901760
    %7658 = vmatpush.msra.mxu0 %v7657
    %v7659 = vand.u32 %v7621, 4294901760
    %7660 = vmatpush.msra.mxu0 %v7659
    %v7661 = vand.u32 %v7620, 4294901760
    %7662 = vmatpush.msra.mxu0 %v7661
    %v7663 = vand.u32 %v7619, 4294901760
    %7664 = vmatpush.msra.mxu0 %v7663
    %v7665 = vand.u32 %v7618, 4294901760
    %7666 = vmatpush.msra.mxu0 %v7665
    %v7667 = vand.u32 %v7616, 4294901760
    %v7668 = vsub.f32 %v7616, %v7667
    %v7669 = vand.u32 %v7668, 4294901760
    %v7670 = vsub.f32 %v7668, %v7669
    %v7671 = vand.u32 %v7670, 4294901760
    %7672 = vmatmul.f32.gmra.mxu0 %v7671
    %v7673 = vpop.f32.mrf.mxu0
    %v7674 = vadd.f32 %v7634, %v7673
    %7675 = vdwg.mxu0
    %v7676 = vand.u32 %v7633, 4294901760
    %v7677 = vsub.f32 %v7633, %v7676
    %v7678 = vand.u32 %v7677, 4294901760
    %v7679 = vsub.f32 %v7677, %v7678
    %v7680 = vand.u32 %v7679, 4294901760
    %7681 = vmatpush.msra.mxu0 %v7680
    %v7682 = vand.u32 %v7632, 4294901760
    %v7683 = vsub.f32 %v7632, %v7682
    %v7684 = vand.u32 %v7683, 4294901760
    %v7685 = vsub.f32 %v7683, %v7684
    %v7686 = vand.u32 %v7685, 4294901760
    %7687 = vmatpush.msra.mxu0 %v7686
    %v7688 = vand.u32 %v7631, 4294901760
    %v7689 = vsub.f32 %v7631, %v7688
    %v7690 = vand.u32 %v7689, 4294901760
    %v7691 = vsub.f32 %v7689, %v7690
    %v7692 = vand.u32 %v7691, 4294901760
    %7693 = vmatpush.msra.mxu0 %v7692
    %v7694 = vand.u32 %v7630, 4294901760
    %v7695 = vsub.f32 %v7630, %v7694
    %v7696 = vand.u32 %v7695, 4294901760
    %v7697 = vsub.f32 %v7695, %v7696
    %v7698 = vand.u32 %v7697, 4294901760
    %7699 = vmatpush.msra.mxu0 %v7698
    %v7700 = vand.u32 %v7629, 4294901760
    %v7701 = vsub.f32 %v7629, %v7700
    %v7702 = vand.u32 %v7701, 4294901760
    %v7703 = vsub.f32 %v7701, %v7702
    %v7704 = vand.u32 %v7703, 4294901760
    %7705 = vmatpush.msra.mxu0 %v7704
    %v7706 = vand.u32 %v7628, 4294901760
    %v7707 = vsub.f32 %v7628, %v7706
    %v7708 = vand.u32 %v7707, 4294901760
    %v7709 = vsub.f32 %v7707, %v7708
    %v7710 = vand.u32 %v7709, 4294901760
    %7711 = vmatpush.msra.mxu0 %v7710
    %v7712 = vand.u32 %v7627, 4294901760
    %v7713 = vsub.f32 %v7627, %v7712
    %v7714 = vand.u32 %v7713, 4294901760
    %v7715 = vsub.f32 %v7713, %v7714
    %v7716 = vand.u32 %v7715, 4294901760
    %7717 = vmatpush.msra.mxu0 %v7716
    %v7718 = vand.u32 %v7626, 4294901760
    %v7719 = vsub.f32 %v7626, %v7718
    %v7720 = vand.u32 %v7719, 4294901760
    %v7721 = vsub.f32 %v7719, %v7720
    %v7722 = vand.u32 %v7721, 4294901760
    %7723 = vmatpush.msra.mxu0 %v7722
    %v7724 = vand.u32 %v7625, 4294901760
    %v7725 = vsub.f32 %v7625, %v7724
    %v7726 = vand.u32 %v7725, 4294901760
    %v7727 = vsub.f32 %v7725, %v7726
    %v7728 = vand.u32 %v7727, 4294901760
    %7729 = vmatpush.msra.mxu0 %v7728
    %v7730 = vand.u32 %v7624, 4294901760
    %v7731 = vsub.f32 %v7624, %v7730
    %v7732 = vand.u32 %v7731, 4294901760
    %v7733 = vsub.f32 %v7731, %v7732
    %v7734 = vand.u32 %v7733, 4294901760
    %7735 = vmatpush.msra.mxu0 %v7734
    %v7736 = vand.u32 %v7623, 4294901760
    %v7737 = vsub.f32 %v7623, %v7736
    %v7738 = vand.u32 %v7737, 4294901760
    %v7739 = vsub.f32 %v7737, %v7738
    %v7740 = vand.u32 %v7739, 4294901760
    %7741 = vmatpush.msra.mxu0 %v7740
    %v7742 = vand.u32 %v7622, 4294901760
    %v7743 = vsub.f32 %v7622, %v7742
    %v7744 = vand.u32 %v7743, 4294901760
    %v7745 = vsub.f32 %v7743, %v7744
    %v7746 = vand.u32 %v7745, 4294901760
    %7747 = vmatpush.msra.mxu0 %v7746
    %v7748 = vand.u32 %v7621, 4294901760
    %v7749 = vsub.f32 %v7621, %v7748
    %v7750 = vand.u32 %v7749, 4294901760
    %v7751 = vsub.f32 %v7749, %v7750
    %v7752 = vand.u32 %v7751, 4294901760
    %7753 = vmatpush.msra.mxu0 %v7752
    %v7754 = vand.u32 %v7620, 4294901760
    %v7755 = vsub.f32 %v7620, %v7754
    %v7756 = vand.u32 %v7755, 4294901760
    %v7757 = vsub.f32 %v7755, %v7756
    %v7758 = vand.u32 %v7757, 4294901760
    %7759 = vmatpush.msra.mxu0 %v7758
    %v7760 = vand.u32 %v7619, 4294901760
    %v7761 = vsub.f32 %v7619, %v7760
    %v7762 = vand.u32 %v7761, 4294901760
    %v7763 = vsub.f32 %v7761, %v7762
    %v7764 = vand.u32 %v7763, 4294901760
    %7765 = vmatpush.msra.mxu0 %v7764
    %v7766 = vand.u32 %v7618, 4294901760
    %v7767 = vsub.f32 %v7618, %v7766
    %v7768 = vand.u32 %v7767, 4294901760
    %v7769 = vsub.f32 %v7767, %v7768
    %v7770 = vand.u32 %v7769, 4294901760
    %7771 = vmatpush.msra.mxu0 %v7770
    %v7772 = vand.u32 %v7616, 4294901760
    %7773 = vmatmul.f32.gmra.mxu0 %v7772
    %v7774 = vpop.f32.mrf.mxu0
    %v7775 = vadd.f32 %v7674, %v7774
    %7776 = vdwg.mxu0
    %v7777 = vand.u32 %v7633, 4294901760
    %v7778 = vsub.f32 %v7633, %v7777
    %7779 = vmatpush.msra.mxu0 %v7778
    %v7780 = vand.u32 %v7632, 4294901760
    %v7781 = vsub.f32 %v7632, %v7780
    %7782 = vmatpush.msra.mxu0 %v7781
    %v7783 = vand.u32 %v7631, 4294901760
    %v7784 = vsub.f32 %v7631, %v7783
    %7785 = vmatpush.msra.mxu0 %v7784
    %v7786 = vand.u32 %v7630, 4294901760
    %v7787 = vsub.f32 %v7630, %v7786
    %7788 = vmatpush.msra.mxu0 %v7787
    %v7789 = vand.u32 %v7629, 4294901760
    %v7790 = vsub.f32 %v7629, %v7789
    %7791 = vmatpush.msra.mxu0 %v7790
    %v7792 = vand.u32 %v7628, 4294901760
    %v7793 = vsub.f32 %v7628, %v7792
    %7794 = vmatpush.msra.mxu0 %v7793
    %v7795 = vand.u32 %v7627, 4294901760
    %v7796 = vsub.f32 %v7627, %v7795
    %7797 = vmatpush.msra.mxu0 %v7796
    %v7798 = vand.u32 %v7626, 4294901760
    %v7799 = vsub.f32 %v7626, %v7798
    %7800 = vmatpush.msra.mxu0 %v7799
    %v7801 = vand.u32 %v7625, 4294901760
    %v7802 = vsub.f32 %v7625, %v7801
    %7803 = vmatpush.msra.mxu0 %v7802
    %v7804 = vand.u32 %v7624, 4294901760
    %v7805 = vsub.f32 %v7624, %v7804
    %7806 = vmatpush.msra.mxu0 %v7805
    %v7807 = vand.u32 %v7623, 4294901760
    %v7808 = vsub.f32 %v7623, %v7807
    %7809 = vmatpush.msra.mxu0 %v7808
    %v7810 = vand.u32 %v7622, 4294901760
    %v7811 = vsub.f32 %v7622, %v7810
    %7812 = vmatpush.msra.mxu0 %v7811
    %v7813 = vand.u32 %v7621, 4294901760
    %v7814 = vsub.f32 %v7621, %v7813
    %7815 = vmatpush.msra.mxu0 %v7814
    %v7816 = vand.u32 %v7620, 4294901760
    %v7817 = vsub.f32 %v7620, %v7816
    %7818 = vmatpush.msra.mxu0 %v7817
    %v7819 = vand.u32 %v7619, 4294901760
    %v7820 = vsub.f32 %v7619, %v7819
    %7821 = vmatpush.msra.mxu0 %v7820
    %v7822 = vand.u32 %v7618, 4294901760
    %v7823 = vsub.f32 %v7618, %v7822
    %7824 = vmatpush.msra.mxu0 %v7823
    %v7825 = vand.u32 %v7616, 4294901760
    %v7826 = vsub.f32 %v7616, %v7825
    %7827 = vmatmul.f32.gmra.mxu0 %v7826
    %v7828 = vpop.f32.mrf.mxu0
    %v7829 = vadd.f32 %v7775, %v7828
    %7830 = vdwg.mxu0
    %v7831 = vand.u32 %v7633, 4294901760
    %7832 = vmatpush.msra.mxu0 %v7831
    %v7833 = vand.u32 %v7632, 4294901760
    %7834 = vmatpush.msra.mxu0 %v7833
    %v7835 = vand.u32 %v7631, 4294901760
    %7836 = vmatpush.msra.mxu0 %v7835
    %v7837 = vand.u32 %v7630, 4294901760
    %7838 = vmatpush.msra.mxu0 %v7837
    %v7839 = vand.u32 %v7629, 4294901760
    %7840 = vmatpush.msra.mxu0 %v7839
    %v7841 = vand.u32 %v7628, 4294901760
    %7842 = vmatpush.msra.mxu0 %v7841
    %v7843 = vand.u32 %v7627, 4294901760
    %7844 = vmatpush.msra.mxu0 %v7843
    %v7845 = vand.u32 %v7626, 4294901760
    %7846 = vmatpush.msra.mxu0 %v7845
    %v7847 = vand.u32 %v7625, 4294901760
    %7848 = vmatpush.msra.mxu0 %v7847
    %v7849 = vand.u32 %v7624, 4294901760
    %7850 = vmatpush.msra.mxu0 %v7849
    %v7851 = vand.u32 %v7623, 4294901760
    %7852 = vmatpush.msra.mxu0 %v7851
    %v7853 = vand.u32 %v7622, 4294901760
    %7854 = vmatpush.msra.mxu0 %v7853
    %v7855 = vand.u32 %v7621, 4294901760
    %7856 = vmatpush.msra.mxu0 %v7855
    %v7857 = vand.u32 %v7620, 4294901760
    %7858 = vmatpush.msra.mxu0 %v7857
    %v7859 = vand.u32 %v7619, 4294901760
    %7860 = vmatpush.msra.mxu0 %v7859
    %v7861 = vand.u32 %v7618, 4294901760
    %7862 = vmatpush.msra.mxu0 %v7861
    %v7863 = vand.u32 %v7616, 4294901760
    %v7864 = vsub.f32 %v7616, %v7863
    %v7865 = vand.u32 %v7864, 4294901760
    %7866 = vmatmul.f32.gmra.mxu0 %v7865
    %v7867 = vpop.f32.mrf.mxu0
    %v7868 = vadd.f32 %v7829, %v7867
    %7869 = vdwg.mxu0
    %v7870 = vand.u32 %v7633, 4294901760
    %v7871 = vsub.f32 %v7633, %v7870
    %v7872 = vand.u32 %v7871, 4294901760
    %7873 = vmatpush.msra.mxu0 %v7872
    %v7874 = vand.u32 %v7632, 4294901760
    %v7875 = vsub.f32 %v7632, %v7874
    %v7876 = vand.u32 %v7875, 4294901760
    %7877 = vmatpush.msra.mxu0 %v7876
    %v7878 = vand.u32 %v7631, 4294901760
    %v7879 = vsub.f32 %v7631, %v7878
    %v7880 = vand.u32 %v7879, 4294901760
    %7881 = vmatpush.msra.mxu0 %v7880
    %v7882 = vand.u32 %v7630, 4294901760
    %v7883 = vsub.f32 %v7630, %v7882
    %v7884 = vand.u32 %v7883, 4294901760
    %7885 = vmatpush.msra.mxu0 %v7884
    %v7886 = vand.u32 %v7629, 4294901760
    %v7887 = vsub.f32 %v7629, %v7886
    %v7888 = vand.u32 %v7887, 4294901760
    %7889 = vmatpush.msra.mxu0 %v7888
    %v7890 = vand.u32 %v7628, 4294901760
    %v7891 = vsub.f32 %v7628, %v7890
    %v7892 = vand.u32 %v7891, 4294901760
    %7893 = vmatpush.msra.mxu0 %v7892
    %v7894 = vand.u32 %v7627, 4294901760
    %v7895 = vsub.f32 %v7627, %v7894
    %v7896 = vand.u32 %v7895, 4294901760
    %7897 = vmatpush.msra.mxu0 %v7896
    %v7898 = vand.u32 %v7626, 4294901760
    %v7899 = vsub.f32 %v7626, %v7898
    %v7900 = vand.u32 %v7899, 4294901760
    %7901 = vmatpush.msra.mxu0 %v7900
    %v7902 = vand.u32 %v7625, 4294901760
    %v7903 = vsub.f32 %v7625, %v7902
    %v7904 = vand.u32 %v7903, 4294901760
    %7905 = vmatpush.msra.mxu0 %v7904
    %v7906 = vand.u32 %v7624, 4294901760
    %v7907 = vsub.f32 %v7624, %v7906
    %v7908 = vand.u32 %v7907, 4294901760
    %7909 = vmatpush.msra.mxu0 %v7908
    %v7910 = vand.u32 %v7623, 4294901760
    %v7911 = vsub.f32 %v7623, %v7910
    %v7912 = vand.u32 %v7911, 4294901760
    %7913 = vmatpush.msra.mxu0 %v7912
    %v7914 = vand.u32 %v7622, 4294901760
    %v7915 = vsub.f32 %v7622, %v7914
    %v7916 = vand.u32 %v7915, 4294901760
    %7917 = vmatpush.msra.mxu0 %v7916
    %v7918 = vand.u32 %v7621, 4294901760
    %v7919 = vsub.f32 %v7621, %v7918
    %v7920 = vand.u32 %v7919, 4294901760
    %7921 = vmatpush.msra.mxu0 %v7920
    %v7922 = vand.u32 %v7620, 4294901760
    %v7923 = vsub.f32 %v7620, %v7922
    %v7924 = vand.u32 %v7923, 4294901760
    %7925 = vmatpush.msra.mxu0 %v7924
    %v7926 = vand.u32 %v7619, 4294901760
    %v7927 = vsub.f32 %v7619, %v7926
    %v7928 = vand.u32 %v7927, 4294901760
    %7929 = vmatpush.msra.mxu0 %v7928
    %v7930 = vand.u32 %v7618, 4294901760
    %v7931 = vsub.f32 %v7618, %v7930
    %v7932 = vand.u32 %v7931, 4294901760
    %7933 = vmatpush.msra.mxu0 %v7932
    %v7934 = vand.u32 %v7616, 4294901760
    %7935 = vmatmul.f32.gmra.mxu0 %v7934
    %v7936 = vpop.f32.mrf.mxu0
    %v7937 = vadd.f32 %v7868, %v7936
    %7938 = vdwg.mxu0
    %v7939 = vand.u32 %v7633, 4294901760
    %7940 = vmatpush.msra.mxu0 %v7939
    %v7941 = vand.u32 %v7632, 4294901760
    %7942 = vmatpush.msra.mxu0 %v7941
    %v7943 = vand.u32 %v7631, 4294901760
    %7944 = vmatpush.msra.mxu0 %v7943
    %v7945 = vand.u32 %v7630, 4294901760
    %7946 = vmatpush.msra.mxu0 %v7945
    %v7947 = vand.u32 %v7629, 4294901760
    %7948 = vmatpush.msra.mxu0 %v7947
    %v7949 = vand.u32 %v7628, 4294901760
    %7950 = vmatpush.msra.mxu0 %v7949
    %v7951 = vand.u32 %v7627, 4294901760
    %7952 = vmatpush.msra.mxu0 %v7951
    %v7953 = vand.u32 %v7626, 4294901760
    %7954 = vmatpush.msra.mxu0 %v7953
    %v7955 = vand.u32 %v7625, 4294901760
    %7956 = vmatpush.msra.mxu0 %v7955
    %v7957 = vand.u32 %v7624, 4294901760
    %7958 = vmatpush.msra.mxu0 %v7957
    %v7959 = vand.u32 %v7623, 4294901760
    %7960 = vmatpush.msra.mxu0 %v7959
    %v7961 = vand.u32 %v7622, 4294901760
    %7962 = vmatpush.msra.mxu0 %v7961
    %v7963 = vand.u32 %v7621, 4294901760
    %7964 = vmatpush.msra.mxu0 %v7963
    %v7965 = vand.u32 %v7620, 4294901760
    %7966 = vmatpush.msra.mxu0 %v7965
    %v7967 = vand.u32 %v7619, 4294901760
    %7968 = vmatpush.msra.mxu0 %v7967
    %v7969 = vand.u32 %v7618, 4294901760
    %7970 = vmatpush.msra.mxu0 %v7969
    %v7971 = vand.u32 %v7616, 4294901760
    %7972 = vmatmul.f32.gmra.mxu0 %v7971
    %v7973 = vpop.f32.mrf.mxu0
    %v7974 = vadd.f32 %v7937, %v7973
    %7975 = vdwg.mxu0
    %v7976 = vsel %vm1840, %v7974, 0.0
    %v7977 = vrot.slane %v7976, 4
    %v7978 = vadd.f32 %v7976, %v7977
    %v7979 = vrot.slane %v7978, 2
    %v7980 = vadd.f32 %v7978, %v7979
    %v7981 = vrot.slane %v7980, 1
    %v7982 = vadd.f32 %v7980, %v7981
    %v7983 = vmul.f32 %v7982, %v655
    %v7984 = vsub.f32 %v7974, %v7983
    %v7985 = vmul.f32 %v7984, %v7984
    %v7986 = vsel %vm1840, %v7985, 0.0
    %v7987 = vrot.slane %v7986, 4
    %v7988 = vadd.f32 %v7986, %v7987
    %v7989 = vrot.slane %v7988, 2
    %v7990 = vadd.f32 %v7988, %v7989
    %v7991 = vrot.slane %v7990, 1
    %v7992 = vadd.f32 %v7990, %v7991
    %v7993 = vmul.f32 %v7992, %v655
    %v7994 = vadd.f32 %v7993, 1e-05
    %v7995 = vrsqrt.pop %v7994
    %v7996 = vmul.f32 %v7995, %v7994
    %v7997 = vmul.f32 %v7996, %v7995
    %v7998 = vmul.f32 0.5, %v7997
    %v7999 = vsub.f32 1.5, %v7998
    %v8000 = vmul.f32 %v7995, %v7999
    %vm8001 = vweird.f32 %v7994
    %vm8002 = vweird.f32 %v7995
    %vm8003 = vmor %vm8001, %vm8002
    %v8004 = vsel %vm8003, %v7995, %v8000
    %v8005 = vmul.f32 %v7984, %v8004
    %v8006 = vperm.slane %v7617, 1
    %v8007 = vmul.f32 %v8005, %v8006
    %v8008 = vperm.slane %v7617, 2
    %v8009 = vadd.f32 %v8007, %v8008
    %v8010 = vmul.f32 %v8009, 0.5
    %v8011 = vmul.f32 %v8009, %v690
    %v8012 = vmul.f32 %v8011, %v8011
    %v8013 = vmin.f32 16.0, %v8012
    %v8014 = vmul.f32 %v8013, 2.1237322e-06
    %v8015 = vadd.f32 %v8014, 0.00028619796
    %v8016 = vmul.f32 %v8013, %v8015
    %v8017 = vadd.f32 %v8016, 0.0036580483
    %v8018 = vmul.f32 %v8013, %v8017
    %v8019 = vadd.f32 %v8018, 0.05243302
    %v8020 = vmul.f32 %v8013, %v8019
    %v8021 = vadd.f32 %v8020, 0.18741608
    %v8022 = vmul.f32 %v8013, %v8021
    %v8023 = vadd.f32 %v8022, 1.1283791
    %v8024 = vmul.f32 %v8011, %v8023
    %v8025 = vmul.f32 %v8013, 3.8918573e-05
    %v8026 = vadd.f32 %v8025, 0.001143296
    %v8027 = vmul.f32 %v8013, %v8026
    %v8028 = vadd.f32 %v8027, 0.014752088
    %v8029 = vmul.f32 %v8013, %v8028
    %v8030 = vadd.f32 %v8029, 0.112945676
    %v8031 = vmul.f32 %v8013, %v8030
    %v8032 = vadd.f32 %v8031, 0.4994258
    %v8033 = vmul.f32 %v8013, %v8032
    %v8034 = vadd.f32 %v8033, 1.0
    %v8035 = vrcp.pop %v8034
    %v8036 = vmul.f32 %v8034, %v8035
    %v8037 = vsub.f32 1.0, %v8036
    %v8038 = vmul.f32 %v8035, %v8037
    %v8039 = vadd.f32 %v8035, %v8038
    %vm8040 = vweird.f32 %v8034
    %vm8041 = vweird.f32 %v8035
    %vm8042 = vmor %vm8040, %vm8041
    %v8043 = vsel %vm8042, %v8035, %v8039
    %v8044 = vand.u32 2147483647, %v8034
    %vm8045 = vcmp.eq.f32.partialorder %v8044, 8.507059e+37
    %v8046 = vand.u32 %v8034, 2147483648
    %v8047 = vor.u32 1.1754944e-38, %v8046
    %v8048 = vsel %vm8045, %v8047, %v8043
    %v8049 = vmul.f32 %v8024, %v8048
    %v8050 = vmin.f32 %v8049, 1.0
    %v8051 = vmax.f32 %v8050, -1.0
    %v8052 = vadd.f32 %v8051, 1.0
    %v8053 = vmul.f32 %v8010, %v8052
    %v8054 = vld [vmem:[#allocation2 + $0x4f0] sm:$0x7]
    %v8055 = vld [vmem:[#allocation2 + $0x4d0] sm:$0xff]
    %v8056 = vld [vmem:[#allocation2 + $0x4d8] sm:$0xff]
    %v8057 = vld [vmem:[#allocation2 + $0x4e0] sm:$0xff]
    %v8058 = vld [vmem:[#allocation2 + $0x4e8] sm:$0xff]
    %v8059 = vperm.slane %v8054, 0
    %v8061 = vsel %vm1840, %v8053, 0
    %8063 = vmatpush.msra.mxu0 0.0
    %8064 = vmatpush.msra.mxu0 0.0
    %8065 = vmatpush.msra.mxu0 0.0
    %8066 = vmatpush.msra.mxu0 0.0
    %8067 = vmatpush.msra.mxu0 0.0
    %8068 = vmatpush.msra.mxu0 0.0
    %8069 = vmatpush.msra.mxu0 0.0
    %8070 = vmatpush.msra.mxu0 0.0
    %8071 = vmatpush.msra.mxu0 0.0
    %8072 = vmatpush.msra.mxu0 0.0
    %8073 = vmatpush.msra.mxu0 0.0
    %8074 = vmatpush.msra.mxu0 0.0
    %v8075 = vand.u32 %v8058, 4294901760
    %8076 = vmatpush.msra.mxu0 %v8075
    %v8077 = vand.u32 %v8057, 4294901760
    %8078 = vmatpush.msra.mxu0 %v8077
    %v8079 = vand.u32 %v8056, 4294901760
    %8080 = vmatpush.msra.mxu0 %v8079
    %v8081 = vand.u32 %v8055, 4294901760
    %8082 = vmatpush.msra.mxu0 %v8081
    %v8083 = vand.u32 %v8061, 4294901760
    %v8084 = vsub.f32 %v8061, %v8083
    %v8085 = vand.u32 %v8084, 4294901760
    %v8086 = vsub.f32 %v8084, %v8085
    %v8087 = vand.u32 %v8086, 4294901760
    %8088 = vmatmul.f32.gmra.mxu0 %v8087
    %v8089 = vpop.f32.mrf.mxu0
    %v8090 = vadd.f32 %v8059, %v8089
    %8091 = vdwg.mxu0
    %8092 = vmatpush.msra.mxu0 0.0
    %8093 = vmatpush.msra.mxu0 0.0
    %8094 = vmatpush.msra.mxu0 0.0
    %8095 = vmatpush.msra.mxu0 0.0
    %8096 = vmatpush.msra.mxu0 0.0
    %8097 = vmatpush.msra.mxu0 0.0
    %8098 = vmatpush.msra.mxu0 0.0
    %8099 = vmatpush.msra.mxu0 0.0
    %8100 = vmatpush.msra.mxu0 0.0
    %8101 = vmatpush.msra.mxu0 0.0
    %8102 = vmatpush.msra.mxu0 0.0
    %8103 = vmatpush.msra.mxu0 0.0
    %v8104 = vand.u32 %v8058, 4294901760
    %v8105 = vsub.f32 %v8058, %v8104
    %v8106 = vand.u32 %v8105, 4294901760
    %v8107 = vsub.f32 %v8105, %v8106
    %v8108 = vand.u32 %v8107, 4294901760
    %8109 = vmatpush.msra.mxu0 %v8108
    %v8110 = vand.u32 %v8057, 4294901760
    %v8111 = vsub.f32 %v8057, %v8110
    %v8112 = vand.u32 %v8111, 4294901760
    %v8113 = vsub.f32 %v8111, %v8112
    %v8114 = vand.u32 %v8113, 4294901760
    %8115 = vmatpush.msra.mxu0 %v8114
    %v8116 = vand.u32 %v8056, 4294901760
    %v8117 = vsub.f32 %v8056, %v8116
    %v8118 = vand.u32 %v8117, 4294901760
    %v8119 = vsub.f32 %v8117, %v8118
    %v8120 = vand.u32 %v8119, 4294901760
    %8121 = vmatpush.msra.mxu0 %v8120
    %v8122 = vand.u32 %v8055, 4294901760
    %v8123 = vsub.f32 %v8055, %v8122
    %v8124 = vand.u32 %v8123, 4294901760
    %v8125 = vsub.f32 %v8123, %v8124
    %v8126 = vand.u32 %v8125, 4294901760
    %8127 = vmatpush.msra.mxu0 %v8126
    %v8128 = vand.u32 %v8061, 4294901760
    %8129 = vmatmul.f32.gmra.mxu0 %v8128
    %v8130 = vpop.f32.mrf.mxu0
    %v8131 = vadd.f32 %v8090, %v8130
    %8132 = vdwg.mxu0
    %8133 = vmatpush.msra.mxu0 0.0
    %8134 = vmatpush.msra.mxu0 0.0
    %8135 = vmatpush.msra.mxu0 0.0
    %8136 = vmatpush.msra.mxu0 0.0
    %8137 = vmatpush.msra.mxu0 0.0
    %8138 = vmatpush.msra.mxu0 0.0
    %8139 = vmatpush.msra.mxu0 0.0
    %8140 = vmatpush.msra.mxu0 0.0
    %8141 = vmatpush.msra.mxu0 0.0
    %8142 = vmatpush.msra.mxu0 0.0
    %8143 = vmatpush.msra.mxu0 0.0
    %8144 = vmatpush.msra.mxu0 0.0
    %v8145 = vand.u32 %v8058, 4294901760
    %v8146 = vsub.f32 %v8058, %v8145
    %8147 = vmatpush.msra.mxu0 %v8146
    %v8148 = vand.u32 %v8057, 4294901760
    %v8149 = vsub.f32 %v8057, %v8148
    %8150 = vmatpush.msra.mxu0 %v8149
    %v8151 = vand.u32 %v8056, 4294901760
    %v8152 = vsub.f32 %v8056, %v8151
    %8153 = vmatpush.msra.mxu0 %v8152
    %v8154 = vand.u32 %v8055, 4294901760
    %v8155 = vsub.f32 %v8055, %v8154
    %8156 = vmatpush.msra.mxu0 %v8155
    %v8157 = vand.u32 %v8061, 4294901760
    %v8158 = vsub.f32 %v8061, %v8157
    %8159 = vmatmul.f32.gmra.mxu0 %v8158
    %v8160 = vpop.f32.mrf.mxu0
    %v8161 = vadd.f32 %v8131, %v8160
    %8162 = vdwg.mxu0
    %8163 = vmatpush.msra.mxu0 0.0
    %8164 = vmatpush.msra.mxu0 0.0
    %8165 = vmatpush.msra.mxu0 0.0
    %8166 = vmatpush.msra.mxu0 0.0
    %8167 = vmatpush.msra.mxu0 0.0
    %8168 = vmatpush.msra.mxu0 0.0
    %8169 = vmatpush.msra.mxu0 0.0
    %8170 = vmatpush.msra.mxu0 0.0
    %8171 = vmatpush.msra.mxu0 0.0
    %8172 = vmatpush.msra.mxu0 0.0
    %8173 = vmatpush.msra.mxu0 0.0
    %8174 = vmatpush.msra.mxu0 0.0
    %v8175 = vand.u32 %v8058, 4294901760
    %8176 = vmatpush.msra.mxu0 %v8175
    %v8177 = vand.u32 %v8057, 4294901760
    %8178 = vmatpush.msra.mxu0 %v8177
    %v8179 = vand.u32 %v8056, 4294901760
    %8180 = vmatpush.msra.mxu0 %v8179
    %v8181 = vand.u32 %v8055, 4294901760
    %8182 = vmatpush.msra.mxu0 %v8181
    %v8183 = vand.u32 %v8061, 4294901760
    %v8184 = vsub.f32 %v8061, %v8183
    %v8185 = vand.u32 %v8184, 4294901760
    %8186 = vmatmul.f32.gmra.mxu0 %v8185
    %v8187 = vpop.f32.mrf.mxu0
    %v8188 = vadd.f32 %v8161, %v8187
    %8189 = vdwg.mxu0
    %8190 = vmatpush.msra.mxu0 0.0
    %8191 = vmatpush.msra.mxu0 0.0
    %8192 = vmatpush.msra.mxu0 0.0
    %8193 = vmatpush.msra.mxu0 0.0
    %8194 = vmatpush.msra.mxu0 0.0
    %8195 = vmatpush.msra.mxu0 0.0
    %8196 = vmatpush.msra.mxu0 0.0
    %8197 = vmatpush.msra.mxu0 0.0
    %8198 = vmatpush.msra.mxu0 0.0
    %8199 = vmatpush.msra.mxu0 0.0
    %8200 = vmatpush.msra.mxu0 0.0
    %8201 = vmatpush.msra.mxu0 0.0
    %v8202 = vand.u32 %v8058, 4294901760
    %v8203 = vsub.f32 %v8058, %v8202
    %v8204 = vand.u32 %v8203, 4294901760
    %8205 = vmatpush.msra.mxu0 %v8204
    %v8206 = vand.u32 %v8057, 4294901760
    %v8207 = vsub.f32 %v8057, %v8206
    %v8208 = vand.u32 %v8207, 4294901760
    %8209 = vmatpush.msra.mxu0 %v8208
    %v8210 = vand.u32 %v8056, 4294901760
    %v8211 = vsub.f32 %v8056, %v8210
    %v8212 = vand.u32 %v8211, 4294901760
    %8213 = vmatpush.msra.mxu0 %v8212
    %v8214 = vand.u32 %v8055, 4294901760
    %v8215 = vsub.f32 %v8055, %v8214
    %v8216 = vand.u32 %v8215, 4294901760
    %8217 = vmatpush.msra.mxu0 %v8216
    %v8218 = vand.u32 %v8061, 4294901760
    %8219 = vmatmul.f32.gmra.mxu0 %v8218
    %v8220 = vpop.f32.mrf.mxu0
    %v8221 = vadd.f32 %v8188, %v8220
    %8222 = vdwg.mxu0
    %8223 = vmatpush.msra.mxu0 0.0
    %8224 = vmatpush.msra.mxu0 0.0
    %8225 = vmatpush.msra.mxu0 0.0
    %8226 = vmatpush.msra.mxu0 0.0
    %8227 = vmatpush.msra.mxu0 0.0
    %8228 = vmatpush.msra.mxu0 0.0
    %8229 = vmatpush.msra.mxu0 0.0
    %8230 = vmatpush.msra.mxu0 0.0
    %8231 = vmatpush.msra.mxu0 0.0
    %8232 = vmatpush.msra.mxu0 0.0
    %8233 = vmatpush.msra.mxu0 0.0
    %8234 = vmatpush.msra.mxu0 0.0
    %v8235 = vand.u32 %v8058, 4294901760
    %8236 = vmatpush.msra.mxu0 %v8235
    %v8237 = vand.u32 %v8057, 4294901760
    %8238 = vmatpush.msra.mxu0 %v8237
    %v8239 = vand.u32 %v8056, 4294901760
    %8240 = vmatpush.msra.mxu0 %v8239
    %v8241 = vand.u32 %v8055, 4294901760
    %8242 = vmatpush.msra.mxu0 %v8241
    %v8243 = vand.u32 %v8061, 4294901760
    %8244 = vmatmul.f32.gmra.mxu0 %v8243
    %v8245 = vpop.f32.mrf.mxu0
    %v8246 = vadd.f32 %v8221, %v8245
    %8247 = vdwg.mxu0
    %v8248 = vrot.slane %v8246, 4
    %v8249 = vadd.f32 %v8246, %v8248
    %v8250 = vrot.slane %v8249, 2
    %v8251 = vadd.f32 %v8249, %v8250
    %v8252 = vrot.slane %v8251, 1
    %v8253 = vadd.f32 %v8251, %v8252
    %v8254 = vmul.f32 %v8253, %v655
    %v8255 = vsub.f32 %v8246, %v8254
    %v8256 = vmul.f32 %v8255, %v8255
    %v8257 = vrot.slane %v8256, 4
    %v8258 = vadd.f32 %v8256, %v8257
    %v8259 = vrot.slane %v8258, 2
    %v8260 = vadd.f32 %v8258, %v8259
    %v8261 = vrot.slane %v8260, 1
    %v8262 = vadd.f32 %v8260, %v8261
    %v8263 = vmul.f32 %v8262, %v655
    %v8264 = vadd.f32 %v8263, 1e-05
    %v8265 = vrsqrt.pop %v8264
    %v8266 = vmul.f32 %v8265, %v8264
    %v8267 = vmul.f32 %v8266, %v8265
    %v8268 = vmul.f32 0.5, %v8267
    %v8269 = vsub.f32 1.5, %v8268
    %v8270 = vmul.f32 %v8265, %v8269
    %vm8271 = vweird.f32 %v8264
    %vm8272 = vweird.f32 %v8265
    %vm8273 = vmor %vm8271, %vm8272
    %v8274 = vsel %vm8273, %v8265, %v8270
    %v8275 = vmul.f32 %v8255, %v8274
    %v8276 = vperm.slane %v8054, 1
    %v8277 = vmul.f32 %v8275, %v8276
    %v8278 = vperm.slane %v8054, 2
    %v8279 = vadd.f32 %v8277, %v8278
    %v8280 = vmul.f32 %v8279, 0.5
    %v8281 = vmul.f32 %v8279, %v690
    %v8282 = vmul.f32 %v8281, %v8281
    %v8283 = vmin.f32 16.0, %v8282
    %v8284 = vmul.f32 %v8283, 2.1237322e-06
    %v8285 = vadd.f32 %v8284, 0.00028619796
    %v8286 = vmul.f32 %v8283, %v8285
    %v8287 = vadd.f32 %v8286, 0.0036580483
    %v8288 = vmul.f32 %v8283, %v8287
    %v8289 = vadd.f32 %v8288, 0.05243302
    %v8290 = vmul.f32 %v8283, %v8289
    %v8291 = vadd.f32 %v8290, 0.18741608
    %v8292 = vmul.f32 %v8283, %v8291
    %v8293 = vadd.f32 %v8292, 1.1283791
    %v8294 = vmul.f32 %v8281, %v8293
    %v8295 = vmul.f32 %v8283, 3.8918573e-05
    %v8296 = vadd.f32 %v8295, 0.001143296
    %v8297 = vmul.f32 %v8283, %v8296
    %v8298 = vadd.f32 %v8297, 0.014752088
    %v8299 = vmul.f32 %v8283, %v8298
    %v8300 = vadd.f32 %v8299, 0.112945676
    %v8301 = vmul.f32 %v8283, %v8300
    %v8302 = vadd.f32 %v8301, 0.4994258
    %v8303 = vmul.f32 %v8283, %v8302
    %v8304 = vadd.f32 %v8303, 1.0
    %v8305 = vrcp.pop %v8304
    %v8306 = vmul.f32 %v8304, %v8305
    %v8307 = vsub.f32 1.0, %v8306
    %v8308 = vmul.f32 %v8305, %v8307
    %v8309 = vadd.f32 %v8305, %v8308
    %vm8310 = vweird.f32 %v8304
    %vm8311 = vweird.f32 %v8305
    %vm8312 = vmor %vm8310, %vm8311
    %v8313 = vsel %vm8312, %v8305, %v8309
    %v8314 = vand.u32 2147483647, %v8304
    %vm8315 = vcmp.eq.f32.partialorder %v8314, 8.507059e+37
    %v8316 = vand.u32 %v8304, 2147483648
    %v8317 = vor.u32 1.1754944e-38, %v8316
    %v8318 = vsel %vm8315, %v8317, %v8313
    %v8319 = vmul.f32 %v8294, %v8318
    %v8320 = vmin.f32 %v8319, 1.0
    %v8321 = vmax.f32 %v8320, -1.0
    %v8322 = vadd.f32 %v8321, 1.0
    %v8323 = vmul.f32 %v8280, %v8322
    %v8324 = vld [vmem:[#allocation2 + $0x578] sm:$0x7]
    %v8325 = vld [vmem:[#allocation2 + $0x4f8] sm:$0xff]
    %v8326 = vld [vmem:[#allocation2 + $0x500] sm:$0xff]
    %v8327 = vld [vmem:[#allocation2 + $0x508] sm:$0xff]
    %v8328 = vld [vmem:[#allocation2 + $0x510] sm:$0xff]
    %v8329 = vld [vmem:[#allocation2 + $0x518] sm:$0xff]
    %v8330 = vld [vmem:[#allocation2 + $0x520] sm:$0xff]
    %v8331 = vld [vmem:[#allocation2 + $0x528] sm:$0xff]
    %v8332 = vld [vmem:[#allocation2 + $0x530] sm:$0xff]
    %v8333 = vld [vmem:[#allocation2 + $0x538] sm:$0xff]
    %v8334 = vld [vmem:[#allocation2 + $0x540] sm:$0xff]
    %v8335 = vld [vmem:[#allocation2 + $0x548] sm:$0xff]
    %v8336 = vld [vmem:[#allocation2 + $0x550] sm:$0xff]
    %v8337 = vld [vmem:[#allocation2 + $0x558] sm:$0xff]
    %v8338 = vld [vmem:[#allocation2 + $0x560] sm:$0xff]
    %v8339 = vld [vmem:[#allocation2 + $0x568] sm:$0xff]
    %v8340 = vld [vmem:[#allocation2 + $0x570] sm:$0xff]
    %v8341 = vperm.slane %v8324, 0
    %v8342 = vand.u32 %v8340, 4294901760
    %8343 = vmatpush.msra.mxu0 %v8342
    %v8344 = vand.u32 %v8339, 4294901760
    %8345 = vmatpush.msra.mxu0 %v8344
    %v8346 = vand.u32 %v8338, 4294901760
    %8347 = vmatpush.msra.mxu0 %v8346
    %v8348 = vand.u32 %v8337, 4294901760
    %8349 = vmatpush.msra.mxu0 %v8348
    %v8350 = vand.u32 %v8336, 4294901760
    %8351 = vmatpush.msra.mxu0 %v8350
    %v8352 = vand.u32 %v8335, 4294901760
    %8353 = vmatpush.msra.mxu0 %v8352
    %v8354 = vand.u32 %v8334, 4294901760
    %8355 = vmatpush.msra.mxu0 %v8354
    %v8356 = vand.u32 %v8333, 4294901760
    %8357 = vmatpush.msra.mxu0 %v8356
    %v8358 = vand.u32 %v8332, 4294901760
    %8359 = vmatpush.msra.mxu0 %v8358
    %v8360 = vand.u32 %v8331, 4294901760
    %8361 = vmatpush.msra.mxu0 %v8360
    %v8362 = vand.u32 %v8330, 4294901760
    %8363 = vmatpush.msra.mxu0 %v8362
    %v8364 = vand.u32 %v8329, 4294901760
    %8365 = vmatpush.msra.mxu0 %v8364
    %v8366 = vand.u32 %v8328, 4294901760
    %8367 = vmatpush.msra.mxu0 %v8366
    %v8368 = vand.u32 %v8327, 4294901760
    %8369 = vmatpush.msra.mxu0 %v8368
    %v8370 = vand.u32 %v8326, 4294901760
    %8371 = vmatpush.msra.mxu0 %v8370
    %v8372 = vand.u32 %v8325, 4294901760
    %8373 = vmatpush.msra.mxu0 %v8372
    %v8374 = vand.u32 %v8323, 4294901760
    %v8375 = vsub.f32 %v8323, %v8374
    %v8376 = vand.u32 %v8375, 4294901760
    %v8377 = vsub.f32 %v8375, %v8376
    %v8378 = vand.u32 %v8377, 4294901760
    %8379 = vmatmul.f32.gmra.mxu0 %v8378
    %v8380 = vpop.f32.mrf.mxu0
    %v8381 = vadd.f32 %v8341, %v8380
    %8382 = vdwg.mxu0
    %v8383 = vand.u32 %v8340, 4294901760
    %v8384 = vsub.f32 %v8340, %v8383
    %v8385 = vand.u32 %v8384, 4294901760
    %v8386 = vsub.f32 %v8384, %v8385
    %v8387 = vand.u32 %v8386, 4294901760
    %8388 = vmatpush.msra.mxu0 %v8387
    %v8389 = vand.u32 %v8339, 4294901760
    %v8390 = vsub.f32 %v8339, %v8389
    %v8391 = vand.u32 %v8390, 4294901760
    %v8392 = vsub.f32 %v8390, %v8391
    %v8393 = vand.u32 %v8392, 4294901760
    %8394 = vmatpush.msra.mxu0 %v8393
    %v8395 = vand.u32 %v8338, 4294901760
    %v8396 = vsub.f32 %v8338, %v8395
    %v8397 = vand.u32 %v8396, 4294901760
    %v8398 = vsub.f32 %v8396, %v8397
    %v8399 = vand.u32 %v8398, 4294901760
    %8400 = vmatpush.msra.mxu0 %v8399
    %v8401 = vand.u32 %v8337, 4294901760
    %v8402 = vsub.f32 %v8337, %v8401
    %v8403 = vand.u32 %v8402, 4294901760
    %v8404 = vsub.f32 %v8402, %v8403
    %v8405 = vand.u32 %v8404, 4294901760
    %8406 = vmatpush.msra.mxu0 %v8405
    %v8407 = vand.u32 %v8336, 4294901760
    %v8408 = vsub.f32 %v8336, %v8407
    %v8409 = vand.u32 %v8408, 4294901760
    %v8410 = vsub.f32 %v8408, %v8409
    %v8411 = vand.u32 %v8410, 4294901760
    %8412 = vmatpush.msra.mxu0 %v8411
    %v8413 = vand.u32 %v8335, 4294901760
    %v8414 = vsub.f32 %v8335, %v8413
    %v8415 = vand.u32 %v8414, 4294901760
    %v8416 = vsub.f32 %v8414, %v8415
    %v8417 = vand.u32 %v8416, 4294901760
    %8418 = vmatpush.msra.mxu0 %v8417
    %v8419 = vand.u32 %v8334, 4294901760
    %v8420 = vsub.f32 %v8334, %v8419
    %v8421 = vand.u32 %v8420, 4294901760
    %v8422 = vsub.f32 %v8420, %v8421
    %v8423 = vand.u32 %v8422, 4294901760
    %8424 = vmatpush.msra.mxu0 %v8423
    %v8425 = vand.u32 %v8333, 4294901760
    %v8426 = vsub.f32 %v8333, %v8425
    %v8427 = vand.u32 %v8426, 4294901760
    %v8428 = vsub.f32 %v8426, %v8427
    %v8429 = vand.u32 %v8428, 4294901760
    %8430 = vmatpush.msra.mxu0 %v8429
    %v8431 = vand.u32 %v8332, 4294901760
    %v8432 = vsub.f32 %v8332, %v8431
    %v8433 = vand.u32 %v8432, 4294901760
    %v8434 = vsub.f32 %v8432, %v8433
    %v8435 = vand.u32 %v8434, 4294901760
    %8436 = vmatpush.msra.mxu0 %v8435
    %v8437 = vand.u32 %v8331, 4294901760
    %v8438 = vsub.f32 %v8331, %v8437
    %v8439 = vand.u32 %v8438, 4294901760
    %v8440 = vsub.f32 %v8438, %v8439
    %v8441 = vand.u32 %v8440, 4294901760
    %8442 = vmatpush.msra.mxu0 %v8441
    %v8443 = vand.u32 %v8330, 4294901760
    %v8444 = vsub.f32 %v8330, %v8443
    %v8445 = vand.u32 %v8444, 4294901760
    %v8446 = vsub.f32 %v8444, %v8445
    %v8447 = vand.u32 %v8446, 4294901760
    %8448 = vmatpush.msra.mxu0 %v8447
    %v8449 = vand.u32 %v8329, 4294901760
    %v8450 = vsub.f32 %v8329, %v8449
    %v8451 = vand.u32 %v8450, 4294901760
    %v8452 = vsub.f32 %v8450, %v8451
    %v8453 = vand.u32 %v8452, 4294901760
    %8454 = vmatpush.msra.mxu0 %v8453
    %v8455 = vand.u32 %v8328, 4294901760
    %v8456 = vsub.f32 %v8328, %v8455
    %v8457 = vand.u32 %v8456, 4294901760
    %v8458 = vsub.f32 %v8456, %v8457
    %v8459 = vand.u32 %v8458, 4294901760
    %8460 = vmatpush.msra.mxu0 %v8459
    %v8461 = vand.u32 %v8327, 4294901760
    %v8462 = vsub.f32 %v8327, %v8461
    %v8463 = vand.u32 %v8462, 4294901760
    %v8464 = vsub.f32 %v8462, %v8463
    %v8465 = vand.u32 %v8464, 4294901760
    %8466 = vmatpush.msra.mxu0 %v8465
    %v8467 = vand.u32 %v8326, 4294901760
    %v8468 = vsub.f32 %v8326, %v8467
    %v8469 = vand.u32 %v8468, 4294901760
    %v8470 = vsub.f32 %v8468, %v8469
    %v8471 = vand.u32 %v8470, 4294901760
    %8472 = vmatpush.msra.mxu0 %v8471
    %v8473 = vand.u32 %v8325, 4294901760
    %v8474 = vsub.f32 %v8325, %v8473
    %v8475 = vand.u32 %v8474, 4294901760
    %v8476 = vsub.f32 %v8474, %v8475
    %v8477 = vand.u32 %v8476, 4294901760
    %8478 = vmatpush.msra.mxu0 %v8477
    %v8479 = vand.u32 %v8323, 4294901760
    %8480 = vmatmul.f32.gmra.mxu0 %v8479
    %v8481 = vpop.f32.mrf.mxu0
    %v8482 = vadd.f32 %v8381, %v8481
    %8483 = vdwg.mxu0
    %v8484 = vand.u32 %v8340, 4294901760
    %v8485 = vsub.f32 %v8340, %v8484
    %8486 = vmatpush.msra.mxu0 %v8485
    %v8487 = vand.u32 %v8339, 4294901760
    %v8488 = vsub.f32 %v8339, %v8487
    %8489 = vmatpush.msra.mxu0 %v8488
    %v8490 = vand.u32 %v8338, 4294901760
    %v8491 = vsub.f32 %v8338, %v8490
    %8492 = vmatpush.msra.mxu0 %v8491
    %v8493 = vand.u32 %v8337, 4294901760
    %v8494 = vsub.f32 %v8337, %v8493
    %8495 = vmatpush.msra.mxu0 %v8494
    %v8496 = vand.u32 %v8336, 4294901760
    %v8497 = vsub.f32 %v8336, %v8496
    %8498 = vmatpush.msra.mxu0 %v8497
    %v8499 = vand.u32 %v8335, 4294901760
    %v8500 = vsub.f32 %v8335, %v8499
    %8501 = vmatpush.msra.mxu0 %v8500
    %v8502 = vand.u32 %v8334, 4294901760
    %v8503 = vsub.f32 %v8334, %v8502
    %8504 = vmatpush.msra.mxu0 %v8503
    %v8505 = vand.u32 %v8333, 4294901760
    %v8506 = vsub.f32 %v8333, %v8505
    %8507 = vmatpush.msra.mxu0 %v8506
    %v8508 = vand.u32 %v8332, 4294901760
    %v8509 = vsub.f32 %v8332, %v8508
    %8510 = vmatpush.msra.mxu0 %v8509
    %v8511 = vand.u32 %v8331, 4294901760
    %v8512 = vsub.f32 %v8331, %v8511
    %8513 = vmatpush.msra.mxu0 %v8512
    %v8514 = vand.u32 %v8330, 4294901760
    %v8515 = vsub.f32 %v8330, %v8514
    %8516 = vmatpush.msra.mxu0 %v8515
    %v8517 = vand.u32 %v8329, 4294901760
    %v8518 = vsub.f32 %v8329, %v8517
    %8519 = vmatpush.msra.mxu0 %v8518
    %v8520 = vand.u32 %v8328, 4294901760
    %v8521 = vsub.f32 %v8328, %v8520
    %8522 = vmatpush.msra.mxu0 %v8521
    %v8523 = vand.u32 %v8327, 4294901760
    %v8524 = vsub.f32 %v8327, %v8523
    %8525 = vmatpush.msra.mxu0 %v8524
    %v8526 = vand.u32 %v8326, 4294901760
    %v8527 = vsub.f32 %v8326, %v8526
    %8528 = vmatpush.msra.mxu0 %v8527
    %v8529 = vand.u32 %v8325, 4294901760
    %v8530 = vsub.f32 %v8325, %v8529
    %8531 = vmatpush.msra.mxu0 %v8530
    %v8532 = vand.u32 %v8323, 4294901760
    %v8533 = vsub.f32 %v8323, %v8532
    %8534 = vmatmul.f32.gmra.mxu0 %v8533
    %v8535 = vpop.f32.mrf.mxu0
    %v8536 = vadd.f32 %v8482, %v8535
    %8537 = vdwg.mxu0
    %v8538 = vand.u32 %v8340, 4294901760
    %8539 = vmatpush.msra.mxu0 %v8538
    %v8540 = vand.u32 %v8339, 4294901760
    %8541 = vmatpush.msra.mxu0 %v8540
    %v8542 = vand.u32 %v8338, 4294901760
    %8543 = vmatpush.msra.mxu0 %v8542
    %v8544 = vand.u32 %v8337, 4294901760
    %8545 = vmatpush.msra.mxu0 %v8544
    %v8546 = vand.u32 %v8336, 4294901760
    %8547 = vmatpush.msra.mxu0 %v8546
    %v8548 = vand.u32 %v8335, 4294901760
    %8549 = vmatpush.msra.mxu0 %v8548
    %v8550 = vand.u32 %v8334, 4294901760
    %8551 = vmatpush.msra.mxu0 %v8550
    %v8552 = vand.u32 %v8333, 4294901760
    %8553 = vmatpush.msra.mxu0 %v8552
    %v8554 = vand.u32 %v8332, 4294901760
    %8555 = vmatpush.msra.mxu0 %v8554
    %v8556 = vand.u32 %v8331, 4294901760
    %8557 = vmatpush.msra.mxu0 %v8556
    %v8558 = vand.u32 %v8330, 4294901760
    %8559 = vmatpush.msra.mxu0 %v8558
    %v8560 = vand.u32 %v8329, 4294901760
    %8561 = vmatpush.msra.mxu0 %v8560
    %v8562 = vand.u32 %v8328, 4294901760
    %8563 = vmatpush.msra.mxu0 %v8562
    %v8564 = vand.u32 %v8327, 4294901760
    %8565 = vmatpush.msra.mxu0 %v8564
    %v8566 = vand.u32 %v8326, 4294901760
    %8567 = vmatpush.msra.mxu0 %v8566
    %v8568 = vand.u32 %v8325, 4294901760
    %8569 = vmatpush.msra.mxu0 %v8568
    %v8570 = vand.u32 %v8323, 4294901760
    %v8571 = vsub.f32 %v8323, %v8570
    %v8572 = vand.u32 %v8571, 4294901760
    %8573 = vmatmul.f32.gmra.mxu0 %v8572
    %v8574 = vpop.f32.mrf.mxu0
    %v8575 = vadd.f32 %v8536, %v8574
    %8576 = vdwg.mxu0
    %v8577 = vand.u32 %v8340, 4294901760
    %v8578 = vsub.f32 %v8340, %v8577
    %v8579 = vand.u32 %v8578, 4294901760
    %8580 = vmatpush.msra.mxu0 %v8579
    %v8581 = vand.u32 %v8339, 4294901760
    %v8582 = vsub.f32 %v8339, %v8581
    %v8583 = vand.u32 %v8582, 4294901760
    %8584 = vmatpush.msra.mxu0 %v8583
    %v8585 = vand.u32 %v8338, 4294901760
    %v8586 = vsub.f32 %v8338, %v8585
    %v8587 = vand.u32 %v8586, 4294901760
    %8588 = vmatpush.msra.mxu0 %v8587
    %v8589 = vand.u32 %v8337, 4294901760
    %v8590 = vsub.f32 %v8337, %v8589
    %v8591 = vand.u32 %v8590, 4294901760
    %8592 = vmatpush.msra.mxu0 %v8591
    %v8593 = vand.u32 %v8336, 4294901760
    %v8594 = vsub.f32 %v8336, %v8593
    %v8595 = vand.u32 %v8594, 4294901760
    %8596 = vmatpush.msra.mxu0 %v8595
    %v8597 = vand.u32 %v8335, 4294901760
    %v8598 = vsub.f32 %v8335, %v8597
    %v8599 = vand.u32 %v8598, 4294901760
    %8600 = vmatpush.msra.mxu0 %v8599
    %v8601 = vand.u32 %v8334, 4294901760
    %v8602 = vsub.f32 %v8334, %v8601
    %v8603 = vand.u32 %v8602, 4294901760
    %8604 = vmatpush.msra.mxu0 %v8603
    %v8605 = vand.u32 %v8333, 4294901760
    %v8606 = vsub.f32 %v8333, %v8605
    %v8607 = vand.u32 %v8606, 4294901760
    %8608 = vmatpush.msra.mxu0 %v8607
    %v8609 = vand.u32 %v8332, 4294901760
    %v8610 = vsub.f32 %v8332, %v8609
    %v8611 = vand.u32 %v8610, 4294901760
    %8612 = vmatpush.msra.mxu0 %v8611
    %v8613 = vand.u32 %v8331, 4294901760
    %v8614 = vsub.f32 %v8331, %v8613
    %v8615 = vand.u32 %v8614, 4294901760
    %8616 = vmatpush.msra.mxu0 %v8615
    %v8617 = vand.u32 %v8330, 4294901760
    %v8618 = vsub.f32 %v8330, %v8617
    %v8619 = vand.u32 %v8618, 4294901760
    %8620 = vmatpush.msra.mxu0 %v8619
    %v8621 = vand.u32 %v8329, 4294901760
    %v8622 = vsub.f32 %v8329, %v8621
    %v8623 = vand.u32 %v8622, 4294901760
    %8624 = vmatpush.msra.mxu0 %v8623
    %v8625 = vand.u32 %v8328, 4294901760
    %v8626 = vsub.f32 %v8328, %v8625
    %v8627 = vand.u32 %v8626, 4294901760
    %8628 = vmatpush.msra.mxu0 %v8627
    %v8629 = vand.u32 %v8327, 4294901760
    %v8630 = vsub.f32 %v8327, %v8629
    %v8631 = vand.u32 %v8630, 4294901760
    %8632 = vmatpush.msra.mxu0 %v8631
    %v8633 = vand.u32 %v8326, 4294901760
    %v8634 = vsub.f32 %v8326, %v8633
    %v8635 = vand.u32 %v8634, 4294901760
    %8636 = vmatpush.msra.mxu0 %v8635
    %v8637 = vand.u32 %v8325, 4294901760
    %v8638 = vsub.f32 %v8325, %v8637
    %v8639 = vand.u32 %v8638, 4294901760
    %8640 = vmatpush.msra.mxu0 %v8639
    %v8641 = vand.u32 %v8323, 4294901760
    %8642 = vmatmul.f32.gmra.mxu0 %v8641
    %v8643 = vpop.f32.mrf.mxu0
    %v8644 = vadd.f32 %v8575, %v8643
    %8645 = vdwg.mxu0
    %v8646 = vand.u32 %v8340, 4294901760
    %8647 = vmatpush.msra.mxu0 %v8646
    %v8648 = vand.u32 %v8339, 4294901760
    %8649 = vmatpush.msra.mxu0 %v8648
    %v8650 = vand.u32 %v8338, 4294901760
    %8651 = vmatpush.msra.mxu0 %v8650
    %v8652 = vand.u32 %v8337, 4294901760
    %8653 = vmatpush.msra.mxu0 %v8652
    %v8654 = vand.u32 %v8336, 4294901760
    %8655 = vmatpush.msra.mxu0 %v8654
    %v8656 = vand.u32 %v8335, 4294901760
    %8657 = vmatpush.msra.mxu0 %v8656
    %v8658 = vand.u32 %v8334, 4294901760
    %8659 = vmatpush.msra.mxu0 %v8658
    %v8660 = vand.u32 %v8333, 4294901760
    %8661 = vmatpush.msra.mxu0 %v8660
    %v8662 = vand.u32 %v8332, 4294901760
    %8663 = vmatpush.msra.mxu0 %v8662
    %v8664 = vand.u32 %v8331, 4294901760
    %8665 = vmatpush.msra.mxu0 %v8664
    %v8666 = vand.u32 %v8330, 4294901760
    %8667 = vmatpush.msra.mxu0 %v8666
    %v8668 = vand.u32 %v8329, 4294901760
    %8669 = vmatpush.msra.mxu0 %v8668
    %v8670 = vand.u32 %v8328, 4294901760
    %8671 = vmatpush.msra.mxu0 %v8670
    %v8672 = vand.u32 %v8327, 4294901760
    %8673 = vmatpush.msra.mxu0 %v8672
    %v8674 = vand.u32 %v8326, 4294901760
    %8675 = vmatpush.msra.mxu0 %v8674
    %v8676 = vand.u32 %v8325, 4294901760
    %8677 = vmatpush.msra.mxu0 %v8676
    %v8678 = vand.u32 %v8323, 4294901760
    %8679 = vmatmul.f32.gmra.mxu0 %v8678
    %v8680 = vpop.f32.mrf.mxu0
    %v8681 = vadd.f32 %v8644, %v8680
    %8682 = vdwg.mxu0
    %v8683 = vsel %vm1840, %v8681, 0.0
    %v8684 = vrot.slane %v8683, 4
    %v8685 = vadd.f32 %v8683, %v8684
    %v8686 = vrot.slane %v8685, 2
    %v8687 = vadd.f32 %v8685, %v8686
    %v8688 = vrot.slane %v8687, 1
    %v8689 = vadd.f32 %v8687, %v8688
    %v8690 = vmul.f32 %v8689, %v655
    %v8691 = vsub.f32 %v8681, %v8690
    %v8692 = vmul.f32 %v8691, %v8691
    %v8693 = vsel %vm1840, %v8692, 0.0
    %v8694 = vrot.slane %v8693, 4
    %v8695 = vadd.f32 %v8693, %v8694
    %v8696 = vrot.slane %v8695, 2
    %v8697 = vadd.f32 %v8695, %v8696
    %v8698 = vrot.slane %v8697, 1
    %v8699 = vadd.f32 %v8697, %v8698
    %v8700 = vmul.f32 %v8699, %v655
    %v8701 = vadd.f32 %v8700, 1e-05
    %v8702 = vrsqrt.pop %v8701
    %v8703 = vmul.f32 %v8702, %v8701
    %v8704 = vmul.f32 %v8703, %v8702
    %v8705 = vmul.f32 0.5, %v8704
    %v8706 = vsub.f32 1.5, %v8705
    %v8707 = vmul.f32 %v8702, %v8706
    %vm8708 = vweird.f32 %v8701
    %vm8709 = vweird.f32 %v8702
    %vm8710 = vmor %vm8708, %vm8709
    %v8711 = vsel %vm8710, %v8702, %v8707
    %v8712 = vmul.f32 %v8691, %v8711
    %v8713 = vperm.slane %v8324, 1
    %v8714 = vmul.f32 %v8712, %v8713
    %v8715 = vperm.slane %v8324, 2
    %v8716 = vadd.f32 %v8714, %v8715
    %v8717 = vadd.f32 %v8716, %v7346
    %8718 = vst.msk [vmem:[#allocation5] sm:$0xff] %vm1840, %v8717
    %v8719 = vld [vmem:[#allocation2 + $0x5c8] sm:$0xff]
    %v8720 = vld [vmem:[#allocation2 + $0x5d0] sm:$0x3]
    %v8721 = vld [vmem:[#allocation2 + $0x5d8] sm:$0xff]
    %v8722 = vld [vmem:[#allocation2 + $0x5e0] sm:$0xff]
    %v8723 = vld [vmem:[#allocation2 + $0x5e8] sm:$0xff]
    %v8724 = vld [vmem:[#allocation2 + $0x5f0] sm:$0xff]
    %v8726 = vsel %vm1840, %v8717, 0
    %8728 = vmatpush.msra.mxu0 0.0
    %8729 = vmatpush.msra.mxu0 0.0
    %8730 = vmatpush.msra.mxu0 0.0
    %8731 = vmatpush.msra.mxu0 0.0
    %8732 = vmatpush.msra.mxu0 0.0
    %8733 = vmatpush.msra.mxu0 0.0
    %8734 = vmatpush.msra.mxu0 0.0
    %8735 = vmatpush.msra.mxu0 0.0
    %8736 = vmatpush.msra.mxu0 0.0
    %8737 = vmatpush.msra.mxu0 0.0
    %8738 = vmatpush.msra.mxu0 0.0
    %8739 = vmatpush.msra.mxu0 0.0
    %v8740 = vand.u32 %v8724, 4294901760
    %8741 = vmatpush.msra.mxu0 %v8740
    %v8742 = vand.u32 %v8723, 4294901760
    %8743 = vmatpush.msra.mxu0 %v8742
    %v8744 = vand.u32 %v8722, 4294901760
    %8745 = vmatpush.msra.mxu0 %v8744
    %v8746 = vand.u32 %v8721, 4294901760
    %8747 = vmatpush.msra.mxu0 %v8746
    %v8748 = vand.u32 %v8726, 4294901760
    %v8749 = vsub.f32 %v8726, %v8748
    %v8750 = vand.u32 %v8749, 4294901760
    %v8751 = vsub.f32 %v8749, %v8750
    %v8752 = vand.u32 %v8751, 4294901760
    %8753 = vmatmul.f32.gmra.mxu0 %v8752
    %v8754 = vpop.f32.mrf.mxu0
    %v8755 = vadd.f32 0.0, %v8754
    %8756 = vdwg.mxu0
    %8757 = vmatpush.msra.mxu0 0.0
    %8758 = vmatpush.msra.mxu0 0.0
    %8759 = vmatpush.msra.mxu0 0.0
    %8760 = vmatpush.msra.mxu0 0.0
    %8761 = vmatpush.msra.mxu0 0.0
    %8762 = vmatpush.msra.mxu0 0.0
    %8763 = vmatpush.msra.mxu0 0.0
    %8764 = vmatpush.msra.mxu0 0.0
    %8765 = vmatpush.msra.mxu0 0.0
    %8766 = vmatpush.msra.mxu0 0.0
    %8767 = vmatpush.msra.mxu0 0.0
    %8768 = vmatpush.msra.mxu0 0.0
    %v8769 = vand.u32 %v8724, 4294901760
    %v8770 = vsub.f32 %v8724, %v8769
    %v8771 = vand.u32 %v8770, 4294901760
    %v8772 = vsub.f32 %v8770, %v8771
    %v8773 = vand.u32 %v8772, 4294901760
    %8774 = vmatpush.msra.mxu0 %v8773
    %v8775 = vand.u32 %v8723, 4294901760
    %v8776 = vsub.f32 %v8723, %v8775
    %v8777 = vand.u32 %v8776, 4294901760
    %v8778 = vsub.f32 %v8776, %v8777
    %v8779 = vand.u32 %v8778, 4294901760
    %8780 = vmatpush.msra.mxu0 %v8779
    %v8781 = vand.u32 %v8722, 4294901760
    %v8782 = vsub.f32 %v8722, %v8781
    %v8783 = vand.u32 %v8782, 4294901760
    %v8784 = vsub.f32 %v8782, %v8783
    %v8785 = vand.u32 %v8784, 4294901760
    %8786 = vmatpush.msra.mxu0 %v8785
    %v8787 = vand.u32 %v8721, 4294901760
    %v8788 = vsub.f32 %v8721, %v8787
    %v8789 = vand.u32 %v8788, 4294901760
    %v8790 = vsub.f32 %v8788, %v8789
    %v8791 = vand.u32 %v8790, 4294901760
    %8792 = vmatpush.msra.mxu0 %v8791
    %v8793 = vand.u32 %v8726, 4294901760
    %8794 = vmatmul.f32.gmra.mxu0 %v8793
    %v8795 = vpop.f32.mrf.mxu0
    %v8796 = vadd.f32 %v8755, %v8795
    %8797 = vdwg.mxu0
    %8798 = vmatpush.msra.mxu0 0.0
    %8799 = vmatpush.msra.mxu0 0.0
    %8800 = vmatpush.msra.mxu0 0.0
    %8801 = vmatpush.msra.mxu0 0.0
    %8802 = vmatpush.msra.mxu0 0.0
    %8803 = vmatpush.msra.mxu0 0.0
    %8804 = vmatpush.msra.mxu0 0.0
    %8805 = vmatpush.msra.mxu0 0.0
    %8806 = vmatpush.msra.mxu0 0.0
    %8807 = vmatpush.msra.mxu0 0.0
    %8808 = vmatpush.msra.mxu0 0.0
    %8809 = vmatpush.msra.mxu0 0.0
    %v8810 = vand.u32 %v8724, 4294901760
    %v8811 = vsub.f32 %v8724, %v8810
    %8812 = vmatpush.msra.mxu0 %v8811
    %v8813 = vand.u32 %v8723, 4294901760
    %v8814 = vsub.f32 %v8723, %v8813
    %8815 = vmatpush.msra.mxu0 %v8814
    %v8816 = vand.u32 %v8722, 4294901760
    %v8817 = vsub.f32 %v8722, %v8816
    %8818 = vmatpush.msra.mxu0 %v8817
    %v8819 = vand.u32 %v8721, 4294901760
    %v8820 = vsub.f32 %v8721, %v8819
    %8821 = vmatpush.msra.mxu0 %v8820
    %v8822 = vand.u32 %v8726, 4294901760
    %v8823 = vsub.f32 %v8726, %v8822
    %8824 = vmatmul.f32.gmra.mxu0 %v8823
    %v8825 = vpop.f32.mrf.mxu0
    %v8826 = vadd.f32 %v8796, %v8825
    %8827 = vdwg.mxu0
    %8828 = vmatpush.msra.mxu0 0.0
    %8829 = vmatpush.msra.mxu0 0.0
    %8830 = vmatpush.msra.mxu0 0.0
    %8831 = vmatpush.msra.mxu0 0.0
    %8832 = vmatpush.msra.mxu0 0.0
    %8833 = vmatpush.msra.mxu0 0.0
    %8834 = vmatpush.msra.mxu0 0.0
    %8835 = vmatpush.msra.mxu0 0.0
    %8836 = vmatpush.msra.mxu0 0.0
    %8837 = vmatpush.msra.mxu0 0.0
    %8838 = vmatpush.msra.mxu0 0.0
    %8839 = vmatpush.msra.mxu0 0.0
    %v8840 = vand.u32 %v8724, 4294901760
    %8841 = vmatpush.msra.mxu0 %v8840
    %v8842 = vand.u32 %v8723, 4294901760
    %8843 = vmatpush.msra.mxu0 %v8842
    %v8844 = vand.u32 %v8722, 4294901760
    %8845 = vmatpush.msra.mxu0 %v8844
    %v8846 = vand.u32 %v8721, 4294901760
    %8847 = vmatpush.msra.mxu0 %v8846
    %v8848 = vand.u32 %v8726, 4294901760
    %v8849 = vsub.f32 %v8726, %v8848
    %v8850 = vand.u32 %v8849, 4294901760
    %8851 = vmatmul.f32.gmra.mxu0 %v8850
    %v8852 = vpop.f32.mrf.mxu0
    %v8853 = vadd.f32 %v8826, %v8852
    %8854 = vdwg.mxu0
    %8855 = vmatpush.msra.mxu0 0.0
    %8856 = vmatpush.msra.mxu0 0.0
    %8857 = vmatpush.msra.mxu0 0.0
    %8858 = vmatpush.msra.mxu0 0.0
    %8859 = vmatpush.msra.mxu0 0.0
    %8860 = vmatpush.msra.mxu0 0.0
    %8861 = vmatpush.msra.mxu0 0.0
    %8862 = vmatpush.msra.mxu0 0.0
    %8863 = vmatpush.msra.mxu0 0.0
    %8864 = vmatpush.msra.mxu0 0.0
    %8865 = vmatpush.msra.mxu0 0.0
    %8866 = vmatpush.msra.mxu0 0.0
    %v8867 = vand.u32 %v8724, 4294901760
    %v8868 = vsub.f32 %v8724, %v8867
    %v8869 = vand.u32 %v8868, 4294901760
    %8870 = vmatpush.msra.mxu0 %v8869
    %v8871 = vand.u32 %v8723, 4294901760
    %v8872 = vsub.f32 %v8723, %v8871
    %v8873 = vand.u32 %v8872, 4294901760
    %8874 = vmatpush.msra.mxu0 %v8873
    %v8875 = vand.u32 %v8722, 4294901760
    %v8876 = vsub.f32 %v8722, %v8875
    %v8877 = vand.u32 %v8876, 4294901760
    %8878 = vmatpush.msra.mxu0 %v8877
    %v8879 = vand.u32 %v8721, 4294901760
    %v8880 = vsub.f32 %v8721, %v8879
    %v8881 = vand.u32 %v8880, 4294901760
    %8882 = vmatpush.msra.mxu0 %v8881
    %v8883 = vand.u32 %v8726, 4294901760
    %8884 = vmatmul.f32.gmra.mxu0 %v8883
    %v8885 = vpop.f32.mrf.mxu0
    %v8886 = vadd.f32 %v8853, %v8885
    %8887 = vdwg.mxu0
    %8888 = vmatpush.msra.mxu0 0.0
    %8889 = vmatpush.msra.mxu0 0.0
    %8890 = vmatpush.msra.mxu0 0.0
    %8891 = vmatpush.msra.mxu0 0.0
    %8892 = vmatpush.msra.mxu0 0.0
    %8893 = vmatpush.msra.mxu0 0.0
    %8894 = vmatpush.msra.mxu0 0.0
    %8895 = vmatpush.msra.mxu0 0.0
    %8896 = vmatpush.msra.mxu0 0.0
    %8897 = vmatpush.msra.mxu0 0.0
    %8898 = vmatpush.msra.mxu0 0.0
    %8899 = vmatpush.msra.mxu0 0.0
    %v8900 = vand.u32 %v8724, 4294901760
    %8901 = vmatpush.msra.mxu0 %v8900
    %v8902 = vand.u32 %v8723, 4294901760
    %8903 = vmatpush.msra.mxu0 %v8902
    %v8904 = vand.u32 %v8722, 4294901760
    %8905 = vmatpush.msra.mxu0 %v8904
    %v8906 = vand.u32 %v8721, 4294901760
    %8907 = vmatpush.msra.mxu0 %v8906
    %v8908 = vand.u32 %v8726, 4294901760
    %8909 = vmatmul.f32.gmra.mxu0 %v8908
    %v8910 = vpop.f32.mrf.mxu0
    %v8911 = vadd.f32 %v8886, %v8910
    %8912 = vdwg.mxu0
    %8914 = vset.pattern.permute.xlu0 0
    %8915 = vperm.xlu0 %8914, %v8719
    %v8916 = vpop.permute.xlu0 %8915
    %v8918 = vmul.f32 %v8916, %v8911
    %v8919 = vadd.f32 %v8918, 0.0
    %v8920 = vld [vmem:[#allocation2 + $0x5f8] sm:$0xff]
    %v8921 = vld [vmem:[#allocation2 + $0x600] sm:$0xff]
    %v8922 = vld [vmem:[#allocation2 + $0x608] sm:$0xff]
    %v8923 = vld [vmem:[#allocation2 + $0x610] sm:$0xff]
    %8924 = vmatpush.msra.mxu0 0.0
    %8925 = vmatpush.msra.mxu0 0.0
    %8926 = vmatpush.msra.mxu0 0.0
    %8927 = vmatpush.msra.mxu0 0.0
    %8928 = vmatpush.msra.mxu0 0.0
    %8929 = vmatpush.msra.mxu0 0.0
    %8930 = vmatpush.msra.mxu0 0.0
    %8931 = vmatpush.msra.mxu0 0.0
    %8932 = vmatpush.msra.mxu0 0.0
    %8933 = vmatpush.msra.mxu0 0.0
    %8934 = vmatpush.msra.mxu0 0.0
    %8935 = vmatpush.msra.mxu0 0.0
    %v8936 = vand.u32 %v8923, 4294901760
    %8937 = vmatpush.msra.mxu0 %v8936
    %v8938 = vand.u32 %v8922, 4294901760
    %8939 = vmatpush.msra.mxu0 %v8938
    %v8940 = vand.u32 %v8921, 4294901760
    %8941 = vmatpush.msra.mxu0 %v8940
    %v8942 = vand.u32 %v8920, 4294901760
    %8943 = vmatpush.msra.mxu0 %v8942
    %v8944 = vand.u32 %v8726, 4294901760
    %v8945 = vsub.f32 %v8726, %v8944
    %v8946 = vand.u32 %v8945, 4294901760
    %v8947 = vsub.f32 %v8945, %v8946
    %v8948 = vand.u32 %v8947, 4294901760
    %8949 = vmatmul.f32.gmra.mxu0 %v8948
    %v8950 = vpop.f32.mrf.mxu0
    %v8951 = vadd.f32 0.0, %v8950
    %8952 = vdwg.mxu0
    %8953 = vmatpush.msra.mxu0 0.0
    %8954 = vmatpush.msra.mxu0 0.0
    %8955 = vmatpush.msra.mxu0 0.0
    %8956 = vmatpush.msra.mxu0 0.0
    %8957 = vmatpush.msra.mxu0 0.0
    %8958 = vmatpush.msra.mxu0 0.0
    %8959 = vmatpush.msra.mxu0 0.0
    %8960 = vmatpush.msra.mxu0 0.0
    %8961 = vmatpush.msra.mxu0 0.0
    %8962 = vmatpush.msra.mxu0 0.0
    %8963 = vmatpush.msra.mxu0 0.0
    %8964 = vmatpush.msra.mxu0 0.0
    %v8965 = vand.u32 %v8923, 4294901760
    %v8966 = vsub.f32 %v8923, %v8965
    %v8967 = vand.u32 %v8966, 4294901760
    %v8968 = vsub.f32 %v8966, %v8967
    %v8969 = vand.u32 %v8968, 4294901760
    %8970 = vmatpush.msra.mxu0 %v8969
    %v8971 = vand.u32 %v8922, 4294901760
    %v8972 = vsub.f32 %v8922, %v8971
    %v8973 = vand.u32 %v8972, 4294901760
    %v8974 = vsub.f32 %v8972, %v8973
    %v8975 = vand.u32 %v8974, 4294901760
    %8976 = vmatpush.msra.mxu0 %v8975
    %v8977 = vand.u32 %v8921, 4294901760
    %v8978 = vsub.f32 %v8921, %v8977
    %v8979 = vand.u32 %v8978, 4294901760
    %v8980 = vsub.f32 %v8978, %v8979
    %v8981 = vand.u32 %v8980, 4294901760
    %8982 = vmatpush.msra.mxu0 %v8981
    %v8983 = vand.u32 %v8920, 4294901760
    %v8984 = vsub.f32 %v8920, %v8983
    %v8985 = vand.u32 %v8984, 4294901760
    %v8986 = vsub.f32 %v8984, %v8985
    %v8987 = vand.u32 %v8986, 4294901760
    %8988 = vmatpush.msra.mxu0 %v8987
    %v8989 = vand.u32 %v8726, 4294901760
    %8990 = vmatmul.f32.gmra.mxu0 %v8989
    %v8991 = vpop.f32.mrf.mxu0
    %v8992 = vadd.f32 %v8951, %v8991
    %8993 = vdwg.mxu0
    %8994 = vmatpush.msra.mxu0 0.0
    %8995 = vmatpush.msra.mxu0 0.0
    %8996 = vmatpush.msra.mxu0 0.0
    %8997 = vmatpush.msra.mxu0 0.0
    %8998 = vmatpush.msra.mxu0 0.0
    %8999 = vmatpush.msra.mxu0 0.0
    %9000 = vmatpush.msra.mxu0 0.0
    %9001 = vmatpush.msra.mxu0 0.0
    %9002 = vmatpush.msra.mxu0 0.0
    %9003 = vmatpush.msra.mxu0 0.0
    %9004 = vmatpush.msra.mxu0 0.0
    %9005 = vmatpush.msra.mxu0 0.0
    %v9006 = vand.u32 %v8923, 4294901760
    %v9007 = vsub.f32 %v8923, %v9006
    %9008 = vmatpush.msra.mxu0 %v9007
    %v9009 = vand.u32 %v8922, 4294901760
    %v9010 = vsub.f32 %v8922, %v9009
    %9011 = vmatpush.msra.mxu0 %v9010
    %v9012 = vand.u32 %v8921, 4294901760
    %v9013 = vsub.f32 %v8921, %v9012
    %9014 = vmatpush.msra.mxu0 %v9013
    %v9015 = vand.u32 %v8920, 4294901760
    %v9016 = vsub.f32 %v8920, %v9015
    %9017 = vmatpush.msra.mxu0 %v9016
    %v9018 = vand.u32 %v8726, 4294901760
    %v9019 = vsub.f32 %v8726, %v9018
    %9020 = vmatmul.f32.gmra.mxu0 %v9019
    %v9021 = vpop.f32.mrf.mxu0
    %v9022 = vadd.f32 %v8992, %v9021
    %9023 = vdwg.mxu0
    %9024 = vmatpush.msra.mxu0 0.0
    %9025 = vmatpush.msra.mxu0 0.0
    %9026 = vmatpush.msra.mxu0 0.0
    %9027 = vmatpush.msra.mxu0 0.0
    %9028 = vmatpush.msra.mxu0 0.0
    %9029 = vmatpush.msra.mxu0 0.0
    %9030 = vmatpush.msra.mxu0 0.0
    %9031 = vmatpush.msra.mxu0 0.0
    %9032 = vmatpush.msra.mxu0 0.0
    %9033 = vmatpush.msra.mxu0 0.0
    %9034 = vmatpush.msra.mxu0 0.0
    %9035 = vmatpush.msra.mxu0 0.0
    %v9036 = vand.u32 %v8923, 4294901760
    %9037 = vmatpush.msra.mxu0 %v9036
    %v9038 = vand.u32 %v8922, 4294901760
    %9039 = vmatpush.msra.mxu0 %v9038
    %v9040 = vand.u32 %v8921, 4294901760
    %9041 = vmatpush.msra.mxu0 %v9040
    %v9042 = vand.u32 %v8920, 4294901760
    %9043 = vmatpush.msra.mxu0 %v9042
    %v9044 = vand.u32 %v8726, 4294901760
    %v9045 = vsub.f32 %v8726, %v9044
    %v9046 = vand.u32 %v9045, 4294901760
    %9047 = vmatmul.f32.gmra.mxu0 %v9046
    %v9048 = vpop.f32.mrf.mxu0
    %v9049 = vadd.f32 %v9022, %v9048
    %9050 = vdwg.mxu0
    %9051 = vmatpush.msra.mxu0 0.0
    %9052 = vmatpush.msra.mxu0 0.0
    %9053 = vmatpush.msra.mxu0 0.0
    %9054 = vmatpush.msra.mxu0 0.0
    %9055 = vmatpush.msra.mxu0 0.0
    %9056 = vmatpush.msra.mxu0 0.0
    %9057 = vmatpush.msra.mxu0 0.0
    %9058 = vmatpush.msra.mxu0 0.0
    %9059 = vmatpush.msra.mxu0 0.0
    %9060 = vmatpush.msra.mxu0 0.0
    %9061 = vmatpush.msra.mxu0 0.0
    %9062 = vmatpush.msra.mxu0 0.0
    %v9063 = vand.u32 %v8923, 4294901760
    %v9064 = vsub.f32 %v8923, %v9063
    %v9065 = vand.u32 %v9064, 4294901760
    %9066 = vmatpush.msra.mxu0 %v9065
    %v9067 = vand.u32 %v8922, 4294901760
    %v9068 = vsub.f32 %v8922, %v9067
    %v9069 = vand.u32 %v9068, 4294901760
    %9070 = vmatpush.msra.mxu0 %v9069
    %v9071 = vand.u32 %v8921, 4294901760
    %v9072 = vsub.f32 %v8921, %v9071
    %v9073 = vand.u32 %v9072, 4294901760
    %9074 = vmatpush.msra.mxu0 %v9073
    %v9075 = vand.u32 %v8920, 4294901760
    %v9076 = vsub.f32 %v8920, %v9075
    %v9077 = vand.u32 %v9076, 4294901760
    %9078 = vmatpush.msra.mxu0 %v9077
    %v9079 = vand.u32 %v8726, 4294901760
    %9080 = vmatmul.f32.gmra.mxu0 %v9079
    %v9081 = vpop.f32.mrf.mxu0
    %v9082 = vadd.f32 %v9049, %v9081
    %9083 = vdwg.mxu0
    %9084 = vmatpush.msra.mxu0 0.0
    %9085 = vmatpush.msra.mxu0 0.0
    %9086 = vmatpush.msra.mxu0 0.0
    %9087 = vmatpush.msra.mxu0 0.0
    %9088 = vmatpush.msra.mxu0 0.0
    %9089 = vmatpush.msra.mxu0 0.0
    %9090 = vmatpush.msra.mxu0 0.0
    %9091 = vmatpush.msra.mxu0 0.0
    %9092 = vmatpush.msra.mxu0 0.0
    %9093 = vmatpush.msra.mxu0 0.0
    %9094 = vmatpush.msra.mxu0 0.0
    %9095 = vmatpush.msra.mxu0 0.0
    %v9096 = vand.u32 %v8923, 4294901760
    %9097 = vmatpush.msra.mxu0 %v9096
    %v9098 = vand.u32 %v8922, 4294901760
    %9099 = vmatpush.msra.mxu0 %v9098
    %v9100 = vand.u32 %v8921, 4294901760
    %9101 = vmatpush.msra.mxu0 %v9100
    %v9102 = vand.u32 %v8920, 4294901760
    %9103 = vmatpush.msra.mxu0 %v9102
    %v9104 = vand.u32 %v8726, 4294901760
    %9105 = vmatmul.f32.gmra.mxu0 %v9104
    %v9106 = vpop.f32.mrf.mxu0
    %v9107 = vadd.f32 %v9082, %v9106
    %9108 = vdwg.mxu0
    %9109 = vset.pattern.permute.xlu0 1
    %9110 = vperm.xlu0 %9109, %v8719
    %v9111 = vpop.permute.xlu0 %9110
    %v9113 = vmul.f32 %v9111, %v9107
    %v9114 = vadd.f32 %v8919, %v9113
    %v9115 = vld [vmem:[#allocation2 + $0x618] sm:$0xff]
    %v9116 = vld [vmem:[#allocation2 + $0x620] sm:$0xff]
    %v9117 = vld [vmem:[#allocation2 + $0x628] sm:$0xff]
    %v9118 = vld [vmem:[#allocation2 + $0x630] sm:$0xff]
    %9119 = vmatpush.msra.mxu0 0.0
    %9120 = vmatpush.msra.mxu0 0.0
    %9121 = vmatpush.msra.mxu0 0.0
    %9122 = vmatpush.msra.mxu0 0.0
    %9123 = vmatpush.msra.mxu0 0.0
    %9124 = vmatpush.msra.mxu0 0.0
    %9125 = vmatpush.msra.mxu0 0.0
    %9126 = vmatpush.msra.mxu0 0.0
    %9127 = vmatpush.msra.mxu0 0.0
    %9128 = vmatpush.msra.mxu0 0.0
    %9129 = vmatpush.msra.mxu0 0.0
    %9130 = vmatpush.msra.mxu0 0.0
    %v9131 = vand.u32 %v9118, 4294901760
    %9132 = vmatpush.msra.mxu0 %v9131
    %v9133 = vand.u32 %v9117, 4294901760
    %9134 = vmatpush.msra.mxu0 %v9133
    %v9135 = vand.u32 %v9116, 4294901760
    %9136 = vmatpush.msra.mxu0 %v9135
    %v9137 = vand.u32 %v9115, 4294901760
    %9138 = vmatpush.msra.mxu0 %v9137
    %v9139 = vand.u32 %v8726, 4294901760
    %v9140 = vsub.f32 %v8726, %v9139
    %v9141 = vand.u32 %v9140, 4294901760
    %v9142 = vsub.f32 %v9140, %v9141
    %v9143 = vand.u32 %v9142, 4294901760
    %9144 = vmatmul.f32.gmra.mxu0 %v9143
    %v9145 = vpop.f32.mrf.mxu0
    %v9146 = vadd.f32 0.0, %v9145
    %9147 = vdwg.mxu0
    %9148 = vmatpush.msra.mxu0 0.0
    %9149 = vmatpush.msra.mxu0 0.0
    %9150 = vmatpush.msra.mxu0 0.0
    %9151 = vmatpush.msra.mxu0 0.0
    %9152 = vmatpush.msra.mxu0 0.0
    %9153 = vmatpush.msra.mxu0 0.0
    %9154 = vmatpush.msra.mxu0 0.0
    %9155 = vmatpush.msra.mxu0 0.0
    %9156 = vmatpush.msra.mxu0 0.0
    %9157 = vmatpush.msra.mxu0 0.0
    %9158 = vmatpush.msra.mxu0 0.0
    %9159 = vmatpush.msra.mxu0 0.0
    %v9160 = vand.u32 %v9118, 4294901760
    %v9161 = vsub.f32 %v9118, %v9160
    %v9162 = vand.u32 %v9161, 4294901760
    %v9163 = vsub.f32 %v9161, %v9162
    %v9164 = vand.u32 %v9163, 4294901760
    %9165 = vmatpush.msra.mxu0 %v9164
    %v9166 = vand.u32 %v9117, 4294901760
    %v9167 = vsub.f32 %v9117, %v9166
    %v9168 = vand.u32 %v9167, 4294901760
    %v9169 = vsub.f32 %v9167, %v9168
    %v9170 = vand.u32 %v9169, 4294901760
    %9171 = vmatpush.msra.mxu0 %v9170
    %v9172 = vand.u32 %v9116, 4294901760
    %v9173 = vsub.f32 %v9116, %v9172
    %v9174 = vand.u32 %v9173, 4294901760
    %v9175 = vsub.f32 %v9173, %v9174
    %v9176 = vand.u32 %v9175, 4294901760
    %9177 = vmatpush.msra.mxu0 %v9176
    %v9178 = vand.u32 %v9115, 4294901760
    %v9179 = vsub.f32 %v9115, %v9178
    %v9180 = vand.u32 %v9179, 4294901760
    %v9181 = vsub.f32 %v9179, %v9180
    %v9182 = vand.u32 %v9181, 4294901760
    %9183 = vmatpush.msra.mxu0 %v9182
    %v9184 = vand.u32 %v8726, 4294901760
    %9185 = vmatmul.f32.gmra.mxu0 %v9184
    %v9186 = vpop.f32.mrf.mxu0
    %v9187 = vadd.f32 %v9146, %v9186
    %9188 = vdwg.mxu0
    %9189 = vmatpush.msra.mxu0 0.0
    %9190 = vmatpush.msra.mxu0 0.0
    %9191 = vmatpush.msra.mxu0 0.0
    %9192 = vmatpush.msra.mxu0 0.0
    %9193 = vmatpush.msra.mxu0 0.0
    %9194 = vmatpush.msra.mxu0 0.0
    %9195 = vmatpush.msra.mxu0 0.0
    %9196 = vmatpush.msra.mxu0 0.0
    %9197 = vmatpush.msra.mxu0 0.0
    %9198 = vmatpush.msra.mxu0 0.0
    %9199 = vmatpush.msra.mxu0 0.0
    %9200 = vmatpush.msra.mxu0 0.0
    %v9201 = vand.u32 %v9118, 4294901760
    %v9202 = vsub.f32 %v9118, %v9201
    %9203 = vmatpush.msra.mxu0 %v9202
    %v9204 = vand.u32 %v9117, 4294901760
    %v9205 = vsub.f32 %v9117, %v9204
    %9206 = vmatpush.msra.mxu0 %v9205
    %v9207 = vand.u32 %v9116, 4294901760
    %v9208 = vsub.f32 %v9116, %v9207
    %9209 = vmatpush.msra.mxu0 %v9208
    %v9210 = vand.u32 %v9115, 4294901760
    %v9211 = vsub.f32 %v9115, %v9210
    %9212 = vmatpush.msra.mxu0 %v9211
    %v9213 = vand.u32 %v8726, 4294901760
    %v9214 = vsub.f32 %v8726, %v9213
    %9215 = vmatmul.f32.gmra.mxu0 %v9214
    %v9216 = vpop.f32.mrf.mxu0
    %v9217 = vadd.f32 %v9187, %v9216
    %9218 = vdwg.mxu0
    %9219 = vmatpush.msra.mxu0 0.0
    %9220 = vmatpush.msra.mxu0 0.0
    %9221 = vmatpush.msra.mxu0 0.0
    %9222 = vmatpush.msra.mxu0 0.0
    %9223 = vmatpush.msra.mxu0 0.0
    %9224 = vmatpush.msra.mxu0 0.0
    %9225 = vmatpush.msra.mxu0 0.0
    %9226 = vmatpush.msra.mxu0 0.0
    %9227 = vmatpush.msra.mxu0 0.0
    %9228 = vmatpush.msra.mxu0 0.0
    %9229 = vmatpush.msra.mxu0 0.0
    %9230 = vmatpush.msra.mxu0 0.0
    %v9231 = vand.u32 %v9118, 4294901760
    %9232 = vmatpush.msra.mxu0 %v9231
    %v9233 = vand.u32 %v9117, 4294901760
    %9234 = vmatpush.msra.mxu0 %v9233
    %v9235 = vand.u32 %v9116, 4294901760
    %9236 = vmatpush.msra.mxu0 %v9235
    %v9237 = vand.u32 %v9115, 4294901760
    %9238 = vmatpush.msra.mxu0 %v9237
    %v9239 = vand.u32 %v8726, 4294901760
    %v9240 = vsub.f32 %v8726, %v9239
    %v9241 = vand.u32 %v9240, 4294901760
    %9242 = vmatmul.f32.gmra.mxu0 %v9241
    %v9243 = vpop.f32.mrf.mxu0
    %v9244 = vadd.f32 %v9217, %v9243
    %9245 = vdwg.mxu0
    %9246 = vmatpush.msra.mxu0 0.0
    %9247 = vmatpush.msra.mxu0 0.0
    %9248 = vmatpush.msra.mxu0 0.0
    %9249 = vmatpush.msra.mxu0 0.0
    %9250 = vmatpush.msra.mxu0 0.0
    %9251 = vmatpush.msra.mxu0 0.0
    %9252 = vmatpush.msra.mxu0 0.0
    %9253 = vmatpush.msra.mxu0 0.0
    %9254 = vmatpush.msra.mxu0 0.0
    %9255 = vmatpush.msra.mxu0 0.0
    %9256 = vmatpush.msra.mxu0 0.0
    %9257 = vmatpush.msra.mxu0 0.0
    %v9258 = vand.u32 %v9118, 4294901760
    %v9259 = vsub.f32 %v9118, %v9258
    %v9260 = vand.u32 %v9259, 4294901760
    %9261 = vmatpush.msra.mxu0 %v9260
    %v9262 = vand.u32 %v9117, 4294901760
    %v9263 = vsub.f32 %v9117, %v9262
    %v9264 = vand.u32 %v9263, 4294901760
    %9265 = vmatpush.msra.mxu0 %v9264
    %v9266 = vand.u32 %v9116, 4294901760
    %v9267 = vsub.f32 %v9116, %v9266
    %v9268 = vand.u32 %v9267, 4294901760
    %9269 = vmatpush.msra.mxu0 %v9268
    %v9270 = vand.u32 %v9115, 4294901760
    %v9271 = vsub.f32 %v9115, %v9270
    %v9272 = vand.u32 %v9271, 4294901760
    %9273 = vmatpush.msra.mxu0 %v9272
    %v9274 = vand.u32 %v8726, 4294901760
    %9275 = vmatmul.f32.gmra.mxu0 %v9274
    %v9276 = vpop.f32.mrf.mxu0
    %v9277 = vadd.f32 %v9244, %v9276
    %9278 = vdwg.mxu0
    %9279 = vmatpush.msra.mxu0 0.0
    %9280 = vmatpush.msra.mxu0 0.0
    %9281 = vmatpush.msra.mxu0 0.0
    %9282 = vmatpush.msra.mxu0 0.0
    %9283 = vmatpush.msra.mxu0 0.0
    %9284 = vmatpush.msra.mxu0 0.0
    %9285 = vmatpush.msra.mxu0 0.0
    %9286 = vmatpush.msra.mxu0 0.0
    %9287 = vmatpush.msra.mxu0 0.0
    %9288 = vmatpush.msra.mxu0 0.0
    %9289 = vmatpush.msra.mxu0 0.0
    %9290 = vmatpush.msra.mxu0 0.0
    %v9291 = vand.u32 %v9118, 4294901760
    %9292 = vmatpush.msra.mxu0 %v9291
    %v9293 = vand.u32 %v9117, 4294901760
    %9294 = vmatpush.msra.mxu0 %v9293
    %v9295 = vand.u32 %v9116, 4294901760
    %9296 = vmatpush.msra.mxu0 %v9295
    %v9297 = vand.u32 %v9115, 4294901760
    %9298 = vmatpush.msra.mxu0 %v9297
    %v9299 = vand.u32 %v8726, 4294901760
    %9300 = vmatmul.f32.gmra.mxu0 %v9299
    %v9301 = vpop.f32.mrf.mxu0
    %v9302 = vadd.f32 %v9277, %v9301
    %9303 = vdwg.mxu0
    %9304 = vset.pattern.permute.xlu0 2
    %9305 = vperm.xlu0 %9304, %v8719
    %v9306 = vpop.permute.xlu0 %9305
    %v9308 = vmul.f32 %v9306, %v9302
    %v9309 = vadd.f32 %v9114, %v9308
    %v9310 = vld [vmem:[#allocation2 + $0x638] sm:$0xff]
    %v9311 = vld [vmem:[#allocation2 + $0x640] sm:$0xff]
    %v9312 = vld [vmem:[#allocation2 + $0x648] sm:$0xff]
    %v9313 = vld [vmem:[#allocation2 + $0x650] sm:$0xff]
    %9314 = vmatpush.msra.mxu0 0.0
    %9315 = vmatpush.msra.mxu0 0.0
    %9316 = vmatpush.msra.mxu0 0.0
    %9317 = vmatpush.msra.mxu0 0.0
    %9318 = vmatpush.msra.mxu0 0.0
    %9319 = vmatpush.msra.mxu0 0.0
    %9320 = vmatpush.msra.mxu0 0.0
    %9321 = vmatpush.msra.mxu0 0.0
    %9322 = vmatpush.msra.mxu0 0.0
    %9323 = vmatpush.msra.mxu0 0.0
    %9324 = vmatpush.msra.mxu0 0.0
    %9325 = vmatpush.msra.mxu0 0.0
    %v9326 = vand.u32 %v9313, 4294901760
    %9327 = vmatpush.msra.mxu0 %v9326
    %v9328 = vand.u32 %v9312, 4294901760
    %9329 = vmatpush.msra.mxu0 %v9328
    %v9330 = vand.u32 %v9311, 4294901760
    %9331 = vmatpush.msra.mxu0 %v9330
    %v9332 = vand.u32 %v9310, 4294901760
    %9333 = vmatpush.msra.mxu0 %v9332
    %v9334 = vand.u32 %v8726, 4294901760
    %v9335 = vsub.f32 %v8726, %v9334
    %v9336 = vand.u32 %v9335, 4294901760
    %v9337 = vsub.f32 %v9335, %v9336
    %v9338 = vand.u32 %v9337, 4294901760
    %9339 = vmatmul.f32.gmra.mxu0 %v9338
    %v9340 = vpop.f32.mrf.mxu0
    %v9341 = vadd.f32 0.0, %v9340
    %9342 = vdwg.mxu0
    %9343 = vmatpush.msra.mxu0 0.0
    %9344 = vmatpush.msra.mxu0 0.0
    %9345 = vmatpush.msra.mxu0 0.0
    %9346 = vmatpush.msra.mxu0 0.0
    %9347 = vmatpush.msra.mxu0 0.0
    %9348 = vmatpush.msra.mxu0 0.0
    %9349 = vmatpush.msra.mxu0 0.0
    %9350 = vmatpush.msra.mxu0 0.0
    %9351 = vmatpush.msra.mxu0 0.0
    %9352 = vmatpush.msra.mxu0 0.0
    %9353 = vmatpush.msra.mxu0 0.0
    %9354 = vmatpush.msra.mxu0 0.0
    %v9355 = vand.u32 %v9313, 4294901760
    %v9356 = vsub.f32 %v9313, %v9355
    %v9357 = vand.u32 %v9356, 4294901760
    %v9358 = vsub.f32 %v9356, %v9357
    %v9359 = vand.u32 %v9358, 4294901760
    %9360 = vmatpush.msra.mxu0 %v9359
    %v9361 = vand.u32 %v9312, 4294901760
    %v9362 = vsub.f32 %v9312, %v9361
    %v9363 = vand.u32 %v9362, 4294901760
    %v9364 = vsub.f32 %v9362, %v9363
    %v9365 = vand.u32 %v9364, 4294901760
    %9366 = vmatpush.msra.mxu0 %v9365
    %v9367 = vand.u32 %v9311, 4294901760
    %v9368 = vsub.f32 %v9311, %v9367
    %v9369 = vand.u32 %v9368, 4294901760
    %v9370 = vsub.f32 %v9368, %v9369
    %v9371 = vand.u32 %v9370, 4294901760
    %9372 = vmatpush.msra.mxu0 %v9371
    %v9373 = vand.u32 %v9310, 4294901760
    %v9374 = vsub.f32 %v9310, %v9373
    %v9375 = vand.u32 %v9374, 4294901760
    %v9376 = vsub.f32 %v9374, %v9375
    %v9377 = vand.u32 %v9376, 4294901760
    %9378 = vmatpush.msra.mxu0 %v9377
    %v9379 = vand.u32 %v8726, 4294901760
    %9380 = vmatmul.f32.gmra.mxu0 %v9379
    %v9381 = vpop.f32.mrf.mxu0
    %v9382 = vadd.f32 %v9341, %v9381
    %9383 = vdwg.mxu0
    %9384 = vmatpush.msra.mxu0 0.0
    %9385 = vmatpush.msra.mxu0 0.0
    %9386 = vmatpush.msra.mxu0 0.0
    %9387 = vmatpush.msra.mxu0 0.0
    %9388 = vmatpush.msra.mxu0 0.0
    %9389 = vmatpush.msra.mxu0 0.0
    %9390 = vmatpush.msra.mxu0 0.0
    %9391 = vmatpush.msra.mxu0 0.0
    %9392 = vmatpush.msra.mxu0 0.0
    %9393 = vmatpush.msra.mxu0 0.0
    %9394 = vmatpush.msra.mxu0 0.0
    %9395 = vmatpush.msra.mxu0 0.0
    %v9396 = vand.u32 %v9313, 4294901760
    %v9397 = vsub.f32 %v9313, %v9396
    %9398 = vmatpush.msra.mxu0 %v9397
    %v9399 = vand.u32 %v9312, 4294901760
    %v9400 = vsub.f32 %v9312, %v9399
    %9401 = vmatpush.msra.mxu0 %v9400
    %v9402 = vand.u32 %v9311, 4294901760
    %v9403 = vsub.f32 %v9311, %v9402
    %9404 = vmatpush.msra.mxu0 %v9403
    %v9405 = vand.u32 %v9310, 4294901760
    %v9406 = vsub.f32 %v9310, %v9405
    %9407 = vmatpush.msra.mxu0 %v9406
    %v9408 = vand.u32 %v8726, 4294901760
    %v9409 = vsub.f32 %v8726, %v9408
    %9410 = vmatmul.f32.gmra.mxu0 %v9409
    %v9411 = vpop.f32.mrf.mxu0
    %v9412 = vadd.f32 %v9382, %v9411
    %9413 = vdwg.mxu0
    %9414 = vmatpush.msra.mxu0 0.0
    %9415 = vmatpush.msra.mxu0 0.0
    %9416 = vmatpush.msra.mxu0 0.0
    %9417 = vmatpush.msra.mxu0 0.0
    %9418 = vmatpush.msra.mxu0 0.0
    %9419 = vmatpush.msra.mxu0 0.0
    %9420 = vmatpush.msra.mxu0 0.0
    %9421 = vmatpush.msra.mxu0 0.0
    %9422 = vmatpush.msra.mxu0 0.0
    %9423 = vmatpush.msra.mxu0 0.0
    %9424 = vmatpush.msra.mxu0 0.0
    %9425 = vmatpush.msra.mxu0 0.0
    %v9426 = vand.u32 %v9313, 4294901760
    %9427 = vmatpush.msra.mxu0 %v9426
    %v9428 = vand.u32 %v9312, 4294901760
    %9429 = vmatpush.msra.mxu0 %v9428
    %v9430 = vand.u32 %v9311, 4294901760
    %9431 = vmatpush.msra.mxu0 %v9430
    %v9432 = vand.u32 %v9310, 4294901760
    %9433 = vmatpush.msra.mxu0 %v9432
    %v9434 = vand.u32 %v8726, 4294901760
    %v9435 = vsub.f32 %v8726, %v9434
    %v9436 = vand.u32 %v9435, 4294901760
    %9437 = vmatmul.f32.gmra.mxu0 %v9436
    %v9438 = vpop.f32.mrf.mxu0
    %v9439 = vadd.f32 %v9412, %v9438
    %9440 = vdwg.mxu0
    %9441 = vmatpush.msra.mxu0 0.0
    %9442 = vmatpush.msra.mxu0 0.0
    %9443 = vmatpush.msra.mxu0 0.0
    %9444 = vmatpush.msra.mxu0 0.0
    %9445 = vmatpush.msra.mxu0 0.0
    %9446 = vmatpush.msra.mxu0 0.0
    %9447 = vmatpush.msra.mxu0 0.0
    %9448 = vmatpush.msra.mxu0 0.0
    %9449 = vmatpush.msra.mxu0 0.0
    %9450 = vmatpush.msra.mxu0 0.0
    %9451 = vmatpush.msra.mxu0 0.0
    %9452 = vmatpush.msra.mxu0 0.0
    %v9453 = vand.u32 %v9313, 4294901760
    %v9454 = vsub.f32 %v9313, %v9453
    %v9455 = vand.u32 %v9454, 4294901760
    %9456 = vmatpush.msra.mxu0 %v9455
    %v9457 = vand.u32 %v9312, 4294901760
    %v9458 = vsub.f32 %v9312, %v9457
    %v9459 = vand.u32 %v9458, 4294901760
    %9460 = vmatpush.msra.mxu0 %v9459
    %v9461 = vand.u32 %v9311, 4294901760
    %v9462 = vsub.f32 %v9311, %v9461
    %v9463 = vand.u32 %v9462, 4294901760
    %9464 = vmatpush.msra.mxu0 %v9463
    %v9465 = vand.u32 %v9310, 4294901760
    %v9466 = vsub.f32 %v9310, %v9465
    %v9467 = vand.u32 %v9466, 4294901760
    %9468 = vmatpush.msra.mxu0 %v9467
    %v9469 = vand.u32 %v8726, 4294901760
    %9470 = vmatmul.f32.gmra.mxu0 %v9469
    %v9471 = vpop.f32.mrf.mxu0
    %v9472 = vadd.f32 %v9439, %v9471
    %9473 = vdwg.mxu0
    %9474 = vmatpush.msra.mxu0 0.0
    %9475 = vmatpush.msra.mxu0 0.0
    %9476 = vmatpush.msra.mxu0 0.0
    %9477 = vmatpush.msra.mxu0 0.0
    %9478 = vmatpush.msra.mxu0 0.0
    %9479 = vmatpush.msra.mxu0 0.0
    %9480 = vmatpush.msra.mxu0 0.0
    %9481 = vmatpush.msra.mxu0 0.0
    %9482 = vmatpush.msra.mxu0 0.0
    %9483 = vmatpush.msra.mxu0 0.0
    %9484 = vmatpush.msra.mxu0 0.0
    %9485 = vmatpush.msra.mxu0 0.0
    %v9486 = vand.u32 %v9313, 4294901760
    %9487 = vmatpush.msra.mxu0 %v9486
    %v9488 = vand.u32 %v9312, 4294901760
    %9489 = vmatpush.msra.mxu0 %v9488
    %v9490 = vand.u32 %v9311, 4294901760
    %9491 = vmatpush.msra.mxu0 %v9490
    %v9492 = vand.u32 %v9310, 4294901760
    %9493 = vmatpush.msra.mxu0 %v9492
    %v9494 = vand.u32 %v8726, 4294901760
    %9495 = vmatmul.f32.gmra.mxu0 %v9494
    %v9496 = vpop.f32.mrf.mxu0
    %v9497 = vadd.f32 %v9472, %v9496
    %9498 = vdwg.mxu0
    %9499 = vset.pattern.permute.xlu0 3
    %9500 = vperm.xlu0 %9499, %v8719
    %v9501 = vpop.permute.xlu0 %9500
    %v9503 = vmul.f32 %v9501, %v9497
    %v9504 = vadd.f32 %v9309, %v9503
    %v9505 = vld [vmem:[#allocation2 + $0x658] sm:$0x7]
    %v9506 = vperm.slane %v9505, 0
    %v9508 = vsel %vm900, %v8720, 0
    %9510 = vmatpush.msra.mxu0 0.0
    %9511 = vmatpush.msra.mxu0 0.0
    %9512 = vmatpush.msra.mxu0 0.0
    %9513 = vmatpush.msra.mxu0 0.0
    %9514 = vmatpush.msra.mxu0 0.0
    %9515 = vmatpush.msra.mxu0 0.0
    %9516 = vmatpush.msra.mxu0 0.0
    %9517 = vmatpush.msra.mxu0 0.0
    %9518 = vmatpush.msra.mxu0 0.0
    %9519 = vmatpush.msra.mxu0 0.0
    %9520 = vmatpush.msra.mxu0 0.0
    %9521 = vmatpush.msra.mxu0 0.0
    %9522 = vmatpush.msra.mxu0 0.0
    %9523 = vmatpush.msra.mxu0 0.0
    %9524 = vmatpush.msra.mxu0 0.0
    %v9525 = vand.u32 %v9504, 4294901760
    %9526 = vmatpush.msra.mxu0 %v9525
    %v9527 = vand.u32 %v9508, 4294901760
    %v9528 = vsub.f32 %v9508, %v9527
    %v9529 = vand.u32 %v9528, 4294901760
    %v9530 = vsub.f32 %v9528, %v9529
    %v9531 = vand.u32 %v9530, 4294901760
    %9532 = vmatmul.f32.gmra.mxu0 %v9531
    %v9533 = vpop.f32.mrf.mxu0
    %v9534 = vadd.f32 %v9506, %v9533
    %9535 = vdwg.mxu0
    %9536 = vmatpush.msra.mxu0 0.0
    %9537 = vmatpush.msra.mxu0 0.0
    %9538 = vmatpush.msra.mxu0 0.0
    %9539 = vmatpush.msra.mxu0 0.0
    %9540 = vmatpush.msra.mxu0 0.0
    %9541 = vmatpush.msra.mxu0 0.0
    %9542 = vmatpush.msra.mxu0 0.0
    %9543 = vmatpush.msra.mxu0 0.0
    %9544 = vmatpush.msra.mxu0 0.0
    %9545 = vmatpush.msra.mxu0 0.0
    %9546 = vmatpush.msra.mxu0 0.0
    %9547 = vmatpush.msra.mxu0 0.0
    %9548 = vmatpush.msra.mxu0 0.0
    %9549 = vmatpush.msra.mxu0 0.0
    %9550 = vmatpush.msra.mxu0 0.0
    %v9551 = vand.u32 %v9504, 4294901760
    %v9552 = vsub.f32 %v9504, %v9551
    %v9553 = vand.u32 %v9552, 4294901760
    %v9554 = vsub.f32 %v9552, %v9553
    %v9555 = vand.u32 %v9554, 4294901760
    %9556 = vmatpush.msra.mxu0 %v9555
    %v9557 = vand.u32 %v9508, 4294901760
    %9558 = vmatmul.f32.gmra.mxu0 %v9557
    %v9559 = vpop.f32.mrf.mxu0
    %v9560 = vadd.f32 %v9534, %v9559
    %9561 = vdwg.mxu0
    %9562 = vmatpush.msra.mxu0 0.0
    %9563 = vmatpush.msra.mxu0 0.0
    %9564 = vmatpush.msra.mxu0 0.0
    %9565 = vmatpush.msra.mxu0 0.0
    %9566 = vmatpush.msra.mxu0 0.0
    %9567 = vmatpush.msra.mxu0 0.0
    %9568 = vmatpush.msra.mxu0 0.0
    %9569 = vmatpush.msra.mxu0 0.0
    %9570 = vmatpush.msra.mxu0 0.0
    %9571 = vmatpush.msra.mxu0 0.0
    %9572 = vmatpush.msra.mxu0 0.0
    %9573 = vmatpush.msra.mxu0 0.0
    %9574 = vmatpush.msra.mxu0 0.0
    %9575 = vmatpush.msra.mxu0 0.0
    %9576 = vmatpush.msra.mxu0 0.0
    %v9577 = vand.u32 %v9504, 4294901760
    %v9578 = vsub.f32 %v9504, %v9577
    %9579 = vmatpush.msra.mxu0 %v9578
    %v9580 = vand.u32 %v9508, 4294901760
    %v9581 = vsub.f32 %v9508, %v9580
    %9582 = vmatmul.f32.gmra.mxu0 %v9581
    %v9583 = vpop.f32.mrf.mxu0
    %v9584 = vadd.f32 %v9560, %v9583
    %9585 = vdwg.mxu0
    %9586 = vmatpush.msra.mxu0 0.0
    %9587 = vmatpush.msra.mxu0 0.0
    %9588 = vmatpush.msra.mxu0 0.0
    %9589 = vmatpush.msra.mxu0 0.0
    %9590 = vmatpush.msra.mxu0 0.0
    %9591 = vmatpush.msra.mxu0 0.0
    %9592 = vmatpush.msra.mxu0 0.0
    %9593 = vmatpush.msra.mxu0 0.0
    %9594 = vmatpush.msra.mxu0 0.0
    %9595 = vmatpush.msra.mxu0 0.0
    %9596 = vmatpush.msra.mxu0 0.0
    %9597 = vmatpush.msra.mxu0 0.0
    %9598 = vmatpush.msra.mxu0 0.0
    %9599 = vmatpush.msra.mxu0 0.0
    %9600 = vmatpush.msra.mxu0 0.0
    %v9601 = vand.u32 %v9504, 4294901760
    %9602 = vmatpush.msra.mxu0 %v9601
    %v9603 = vand.u32 %v9508, 4294901760
    %v9604 = vsub.f32 %v9508, %v9603
    %v9605 = vand.u32 %v9604, 4294901760
    %9606 = vmatmul.f32.gmra.mxu0 %v9605
    %v9607 = vpop.f32.mrf.mxu0
    %v9608 = vadd.f32 %v9584, %v9607
    %9609 = vdwg.mxu0
    %9610 = vmatpush.msra.mxu0 0.0
    %9611 = vmatpush.msra.mxu0 0.0
    %9612 = vmatpush.msra.mxu0 0.0
    %9613 = vmatpush.msra.mxu0 0.0
    %9614 = vmatpush.msra.mxu0 0.0
    %9615 = vmatpush.msra.mxu0 0.0
    %9616 = vmatpush.msra.mxu0 0.0
    %9617 = vmatpush.msra.mxu0 0.0
    %9618 = vmatpush.msra.mxu0 0.0
    %9619 = vmatpush.msra.mxu0 0.0
    %9620 = vmatpush.msra.mxu0 0.0
    %9621 = vmatpush.msra.mxu0 0.0
    %9622 = vmatpush.msra.mxu0 0.0
    %9623 = vmatpush.msra.mxu0 0.0
    %9624 = vmatpush.msra.mxu0 0.0
    %v9625 = vand.u32 %v9504, 4294901760
    %v9626 = vsub.f32 %v9504, %v9625
    %v9627 = vand.u32 %v9626, 4294901760
    %9628 = vmatpush.msra.mxu0 %v9627
    %v9629 = vand.u32 %v9508, 4294901760
    %9630 = vmatmul.f32.gmra.mxu0 %v9629
    %v9631 = vpop.f32.mrf.mxu0
    %v9632 = vadd.f32 %v9608, %v9631
    %9633 = vdwg.mxu0
    %9634 = vmatpush.msra.mxu0 0.0
    %9635 = vmatpush.msra.mxu0 0.0
    %9636 = vmatpush.msra.mxu0 0.0
    %9637 = vmatpush.msra.mxu0 0.0
    %9638 = vmatpush.msra.mxu0 0.0
    %9639 = vmatpush.msra.mxu0 0.0
    %9640 = vmatpush.msra.mxu0 0.0
    %9641 = vmatpush.msra.mxu0 0.0
    %9642 = vmatpush.msra.mxu0 0.0
    %9643 = vmatpush.msra.mxu0 0.0
    %9644 = vmatpush.msra.mxu0 0.0
    %9645 = vmatpush.msra.mxu0 0.0
    %9646 = vmatpush.msra.mxu0 0.0
    %9647 = vmatpush.msra.mxu0 0.0
    %9648 = vmatpush.msra.mxu0 0.0
    %v9649 = vand.u32 %v9504, 4294901760
    %9650 = vmatpush.msra.mxu0 %v9649
    %v9651 = vand.u32 %v9508, 4294901760
    %9652 = vmatmul.f32.gmra.mxu0 %v9651
    %v9653 = vpop.f32.mrf.mxu0
    %v9654 = vadd.f32 %v9632, %v9653
    %9655 = vdwg.mxu0
    %vm9656 = vcmask 517120
    %v9657 = vsel %vm9656, %v9654, 0.0
    %v9658 = vrot.slane %v9657, 4
    %v9659 = vadd.f32 %v9657, %v9658
    %v9660 = vrot.slane %v9659, 2
    %v9661 = vadd.f32 %v9659, %v9660
    %v9662 = vrot.slane %v9661, 1
    %v9663 = vadd.f32 %v9661, %v9662
    %v9664 = vrcp.pop 2.0
    %v9665 = vmul.f32 2.0, %v9664
    %v9666 = vsub.f32 1.0, %v9665
    %v9667 = vmul.f32 %v9664, %v9666
    %v9668 = vadd.f32 %v9664, %v9667
    %vm9669 = vweird.f32 %v9664
    %v9670 = vsel %vm9669, %v9664, %v9668
    %v9671 = vmul.f32 %v9663, %v9670
    %v9672 = vsub.f32 %v9654, %v9671
    %v9673 = vmul.f32 %v9672, %v9672
    %v9674 = vsel %vm9656, %v9673, 0.0
    %v9675 = vrot.slane %v9674, 4
    %v9676 = vadd.f32 %v9674, %v9675
    %v9677 = vrot.slane %v9676, 2
    %v9678 = vadd.f32 %v9676, %v9677
    %v9679 = vrot.slane %v9678, 1
    %v9680 = vadd.f32 %v9678, %v9679
    %v9681 = vmul.f32 %v9680, %v9670
    %v9682 = vadd.f32 %v9681, 1e-05
    %v9683 = vrsqrt.pop %v9682
    %v9684 = vmul.f32 %v9683, %v9682
    %v9685 = vmul.f32 %v9684, %v9683
    %v9686 = vmul.f32 0.5, %v9685
    %v9687 = vsub.f32 1.5, %v9686
    %v9688 = vmul.f32 %v9683, %v9687
    %vm9689 = vweird.f32 %v9682
    %vm9690 = vweird.f32 %v9683
    %vm9691 = vmor %vm9689, %vm9690
    %v9692 = vsel %vm9691, %v9683, %v9688
    %v9693 = vmul.f32 %v9672, %v9692
    %v9694 = vperm.slane %v9505, 1
    %v9695 = vmul.f32 %v9693, %v9694
    %v9696 = vperm.slane %v9505, 2
    %v9697 = vadd.f32 %v9695, %v9696
    %v9698 = vmul.f32 %v9697, 0.5
    %v9699 = vmul.f32 %v9697, %v690
    %v9700 = vmul.f32 %v9699, %v9699
    %v9701 = vmin.f32 16.0, %v9700
    %v9702 = vmul.f32 %v9701, 2.1237322e-06
    %v9703 = vadd.f32 %v9702, 0.00028619796
    %v9704 = vmul.f32 %v9701, %v9703
    %v9705 = vadd.f32 %v9704, 0.0036580483
    %v9706 = vmul.f32 %v9701, %v9705
    %v9707 = vadd.f32 %v9706, 0.05243302
    %v9708 = vmul.f32 %v9701, %v9707
    %v9709 = vadd.f32 %v9708, 0.18741608
    %v9710 = vmul.f32 %v9701, %v9709
    %v9711 = vadd.f32 %v9710, 1.1283791
    %v9712 = vmul.f32 %v9699, %v9711
    %v9713 = vmul.f32 %v9701, 3.8918573e-05
    %v9714 = vadd.f32 %v9713, 0.001143296
    %v9715 = vmul.f32 %v9701, %v9714
    %v9716 = vadd.f32 %v9715, 0.014752088
    %v9717 = vmul.f32 %v9701, %v9716
    %v9718 = vadd.f32 %v9717, 0.112945676
    %v9719 = vmul.f32 %v9701, %v9718
    %v9720 = vadd.f32 %v9719, 0.4994258
    %v9721 = vmul.f32 %v9701, %v9720
    %v9722 = vadd.f32 %v9721, 1.0
    %v9723 = vrcp.pop %v9722
    %v9724 = vmul.f32 %v9722, %v9723
    %v9725 = vsub.f32 1.0, %v9724
    %v9726 = vmul.f32 %v9723, %v9725
    %v9727 = vadd.f32 %v9723, %v9726
    %vm9728 = vweird.f32 %v9722
    %vm9729 = vweird.f32 %v9723
    %vm9730 = vmor %vm9728, %vm9729
    %v9731 = vsel %vm9730, %v9723, %v9727
    %v9732 = vand.u32 2147483647, %v9722
    %vm9733 = vcmp.eq.f32.partialorder %v9732, 8.507059e+37
    %v9734 = vand.u32 %v9722, 2147483648
    %v9735 = vor.u32 1.1754944e-38, %v9734
    %v9736 = vsel %vm9733, %v9735, %v9731
    %v9737 = vmul.f32 %v9712, %v9736
    %v9738 = vmin.f32 %v9737, 1.0
    %v9739 = vmax.f32 %v9738, -1.0
    %v9740 = vadd.f32 %v9739, 1.0
    %v9741 = vmul.f32 %v9698, %v9740
    %v9742 = vld [vmem:[#allocation2 + $0x660] sm:$0xff]
    %v9743 = vld [vmem:[#allocation2 + $0x668] sm:$0xff]
    %v9744 = vld [vmem:[#allocation2 + $0x670] sm:$0xff]
    %v9745 = vld [vmem:[#allocation2 + $0x678] sm:$0xff]
    %v9746 = vld [vmem:[#allocation2 + $0x680] sm:$0xff]
    %v9747 = vld [vmem:[#allocation2 + $0x688] sm:$0xff]
    %v9748 = vld [vmem:[#allocation2 + $0x690] sm:$0xff]
    %v9749 = vld [vmem:[#allocation2 + $0x698] sm:$0xff]
    %v9750 = vld [vmem:[#allocation2 + $0x6a0] sm:$0x1]
    %v9751 = vperm.slane %v9750, 0
    %v9753 = vsel %vm59, %v9741, 0
    %9755 = vmatpush.msra.mxu0 0.0
    %9756 = vmatpush.msra.mxu0 0.0
    %9757 = vmatpush.msra.mxu0 0.0
    %9758 = vmatpush.msra.mxu0 0.0
    %9759 = vmatpush.msra.mxu0 0.0
    %9760 = vmatpush.msra.mxu0 0.0
    %9761 = vmatpush.msra.mxu0 0.0
    %9762 = vmatpush.msra.mxu0 0.0
    %v9763 = vand.u32 %v9749, 4294901760
    %9764 = vmatpush.msra.mxu0 %v9763
    %v9765 = vand.u32 %v9748, 4294901760
    %9766 = vmatpush.msra.mxu0 %v9765
    %v9767 = vand.u32 %v9747, 4294901760
    %9768 = vmatpush.msra.mxu0 %v9767
    %v9769 = vand.u32 %v9746, 4294901760
    %9770 = vmatpush.msra.mxu0 %v9769
    %v9771 = vand.u32 %v9745, 4294901760
    %9772 = vmatpush.msra.mxu0 %v9771
    %v9773 = vand.u32 %v9744, 4294901760
    %9774 = vmatpush.msra.mxu0 %v9773
    %v9775 = vand.u32 %v9743, 4294901760
    %9776 = vmatpush.msra.mxu0 %v9775
    %v9777 = vand.u32 %v9742, 4294901760
    %9778 = vmatpush.msra.mxu0 %v9777
    %v9779 = vand.u32 %v9753, 4294901760
    %v9780 = vsub.f32 %v9753, %v9779
    %v9781 = vand.u32 %v9780, 4294901760
    %v9782 = vsub.f32 %v9780, %v9781
    %v9783 = vand.u32 %v9782, 4294901760
    %9784 = vmatmul.f32.gmra.mxu0 %v9783
    %v9785 = vpop.f32.mrf.mxu0
    %v9786 = vadd.f32 %v9751, %v9785
    %9787 = vdwg.mxu0
    %9788 = vmatpush.msra.mxu0 0.0
    %9789 = vmatpush.msra.mxu0 0.0
    %9790 = vmatpush.msra.mxu0 0.0
    %9791 = vmatpush.msra.mxu0 0.0
    %9792 = vmatpush.msra.mxu0 0.0
    %9793 = vmatpush.msra.mxu0 0.0
    %9794 = vmatpush.msra.mxu0 0.0
    %9795 = vmatpush.msra.mxu0 0.0
    %v9796 = vand.u32 %v9749, 4294901760
    %v9797 = vsub.f32 %v9749, %v9796
    %v9798 = vand.u32 %v9797, 4294901760
    %v9799 = vsub.f32 %v9797, %v9798
    %v9800 = vand.u32 %v9799, 4294901760
    %9801 = vmatpush.msra.mxu0 %v9800
    %v9802 = vand.u32 %v9748, 4294901760
    %v9803 = vsub.f32 %v9748, %v9802
    %v9804 = vand.u32 %v9803, 4294901760
    %v9805 = vsub.f32 %v9803, %v9804
    %v9806 = vand.u32 %v9805, 4294901760
    %9807 = vmatpush.msra.mxu0 %v9806
    %v9808 = vand.u32 %v9747, 4294901760
    %v9809 = vsub.f32 %v9747, %v9808
    %v9810 = vand.u32 %v9809, 4294901760
    %v9811 = vsub.f32 %v9809, %v9810
    %v9812 = vand.u32 %v9811, 4294901760
    %9813 = vmatpush.msra.mxu0 %v9812
    %v9814 = vand.u32 %v9746, 4294901760
    %v9815 = vsub.f32 %v9746, %v9814
    %v9816 = vand.u32 %v9815, 4294901760
    %v9817 = vsub.f32 %v9815, %v9816
    %v9818 = vand.u32 %v9817, 4294901760
    %9819 = vmatpush.msra.mxu0 %v9818
    %v9820 = vand.u32 %v9745, 4294901760
    %v9821 = vsub.f32 %v9745, %v9820
    %v9822 = vand.u32 %v9821, 4294901760
    %v9823 = vsub.f32 %v9821, %v9822
    %v9824 = vand.u32 %v9823, 4294901760
    %9825 = vmatpush.msra.mxu0 %v9824
    %v9826 = vand.u32 %v9744, 4294901760
    %v9827 = vsub.f32 %v9744, %v9826
    %v9828 = vand.u32 %v9827, 4294901760
    %v9829 = vsub.f32 %v9827, %v9828
    %v9830 = vand.u32 %v9829, 4294901760
    %9831 = vmatpush.msra.mxu0 %v9830
    %v9832 = vand.u32 %v9743, 4294901760
    %v9833 = vsub.f32 %v9743, %v9832
    %v9834 = vand.u32 %v9833, 4294901760
    %v9835 = vsub.f32 %v9833, %v9834
    %v9836 = vand.u32 %v9835, 4294901760
    %9837 = vmatpush.msra.mxu0 %v9836
    %v9838 = vand.u32 %v9742, 4294901760
    %v9839 = vsub.f32 %v9742, %v9838
    %v9840 = vand.u32 %v9839, 4294901760
    %v9841 = vsub.f32 %v9839, %v9840
    %v9842 = vand.u32 %v9841, 4294901760
    %9843 = vmatpush.msra.mxu0 %v9842
    %v9844 = vand.u32 %v9753, 4294901760
    %9845 = vmatmul.f32.gmra.mxu0 %v9844
    %v9846 = vpop.f32.mrf.mxu0
    %v9847 = vadd.f32 %v9786, %v9846
    %9848 = vdwg.mxu0
    %9849 = vmatpush.msra.mxu0 0.0
    %9850 = vmatpush.msra.mxu0 0.0
    %9851 = vmatpush.msra.mxu0 0.0
    %9852 = vmatpush.msra.mxu0 0.0
    %9853 = vmatpush.msra.mxu0 0.0
    %9854 = vmatpush.msra.mxu0 0.0
    %9855 = vmatpush.msra.mxu0 0.0
    %9856 = vmatpush.msra.mxu0 0.0
    %v9857 = vand.u32 %v9749, 4294901760
    %v9858 = vsub.f32 %v9749, %v9857
    %9859 = vmatpush.msra.mxu0 %v9858
    %v9860 = vand.u32 %v9748, 4294901760
    %v9861 = vsub.f32 %v9748, %v9860
    %9862 = vmatpush.msra.mxu0 %v9861
    %v9863 = vand.u32 %v9747, 4294901760
    %v9864 = vsub.f32 %v9747, %v9863
    %9865 = vmatpush.msra.mxu0 %v9864
    %v9866 = vand.u32 %v9746, 4294901760
    %v9867 = vsub.f32 %v9746, %v9866
    %9868 = vmatpush.msra.mxu0 %v9867
    %v9869 = vand.u32 %v9745, 4294901760
    %v9870 = vsub.f32 %v9745, %v9869
    %9871 = vmatpush.msra.mxu0 %v9870
    %v9872 = vand.u32 %v9744, 4294901760
    %v9873 = vsub.f32 %v9744, %v9872
    %9874 = vmatpush.msra.mxu0 %v9873
    %v9875 = vand.u32 %v9743, 4294901760
    %v9876 = vsub.f32 %v9743, %v9875
    %9877 = vmatpush.msra.mxu0 %v9876
    %v9878 = vand.u32 %v9742, 4294901760
    %v9879 = vsub.f32 %v9742, %v9878
    %9880 = vmatpush.msra.mxu0 %v9879
    %v9881 = vand.u32 %v9753, 4294901760
    %v9882 = vsub.f32 %v9753, %v9881
    %9883 = vmatmul.f32.gmra.mxu0 %v9882
    %v9884 = vpop.f32.mrf.mxu0
    %v9885 = vadd.f32 %v9847, %v9884
    %9886 = vdwg.mxu0
    %9887 = vmatpush.msra.mxu0 0.0
    %9888 = vmatpush.msra.mxu0 0.0
    %9889 = vmatpush.msra.mxu0 0.0
    %9890 = vmatpush.msra.mxu0 0.0
    %9891 = vmatpush.msra.mxu0 0.0
    %9892 = vmatpush.msra.mxu0 0.0
    %9893 = vmatpush.msra.mxu0 0.0
    %9894 = vmatpush.msra.mxu0 0.0
    %v9895 = vand.u32 %v9749, 4294901760
    %9896 = vmatpush.msra.mxu0 %v9895
    %v9897 = vand.u32 %v9748, 4294901760
    %9898 = vmatpush.msra.mxu0 %v9897
    %v9899 = vand.u32 %v9747, 4294901760
    %9900 = vmatpush.msra.mxu0 %v9899
    %v9901 = vand.u32 %v9746, 4294901760
    %9902 = vmatpush.msra.mxu0 %v9901
    %v9903 = vand.u32 %v9745, 4294901760
    %9904 = vmatpush.msra.mxu0 %v9903
    %v9905 = vand.u32 %v9744, 4294901760
    %9906 = vmatpush.msra.mxu0 %v9905
    %v9907 = vand.u32 %v9743, 4294901760
    %9908 = vmatpush.msra.mxu0 %v9907
    %v9909 = vand.u32 %v9742, 4294901760
    %9910 = vmatpush.msra.mxu0 %v9909
    %v9911 = vand.u32 %v9753, 4294901760
    %v9912 = vsub.f32 %v9753, %v9911
    %v9913 = vand.u32 %v9912, 4294901760
    %9914 = vmatmul.f32.gmra.mxu0 %v9913
    %v9915 = vpop.f32.mrf.mxu0
    %v9916 = vadd.f32 %v9885, %v9915
    %9917 = vdwg.mxu0
    %9918 = vmatpush.msra.mxu0 0.0
    %9919 = vmatpush.msra.mxu0 0.0
    %9920 = vmatpush.msra.mxu0 0.0
    %9921 = vmatpush.msra.mxu0 0.0
    %9922 = vmatpush.msra.mxu0 0.0
    %9923 = vmatpush.msra.mxu0 0.0
    %9924 = vmatpush.msra.mxu0 0.0
    %9925 = vmatpush.msra.mxu0 0.0
    %v9926 = vand.u32 %v9749, 4294901760
    %v9927 = vsub.f32 %v9749, %v9926
    %v9928 = vand.u32 %v9927, 4294901760
    %9929 = vmatpush.msra.mxu0 %v9928
    %v9930 = vand.u32 %v9748, 4294901760
    %v9931 = vsub.f32 %v9748, %v9930
    %v9932 = vand.u32 %v9931, 4294901760
    %9933 = vmatpush.msra.mxu0 %v9932
    %v9934 = vand.u32 %v9747, 4294901760
    %v9935 = vsub.f32 %v9747, %v9934
    %v9936 = vand.u32 %v9935, 4294901760
    %9937 = vmatpush.msra.mxu0 %v9936
    %v9938 = vand.u32 %v9746, 4294901760
    %v9939 = vsub.f32 %v9746, %v9938
    %v9940 = vand.u32 %v9939, 4294901760
    %9941 = vmatpush.msra.mxu0 %v9940
    %v9942 = vand.u32 %v9745, 4294901760
    %v9943 = vsub.f32 %v9745, %v9942
    %v9944 = vand.u32 %v9943, 4294901760
    %9945 = vmatpush.msra.mxu0 %v9944
    %v9946 = vand.u32 %v9744, 4294901760
    %v9947 = vsub.f32 %v9744, %v9946
    %v9948 = vand.u32 %v9947, 4294901760
    %9949 = vmatpush.msra.mxu0 %v9948
    %v9950 = vand.u32 %v9743, 4294901760
    %v9951 = vsub.f32 %v9743, %v9950
    %v9952 = vand.u32 %v9951, 4294901760
    %9953 = vmatpush.msra.mxu0 %v9952
    %v9954 = vand.u32 %v9742, 4294901760
    %v9955 = vsub.f32 %v9742, %v9954
    %v9956 = vand.u32 %v9955, 4294901760
    %9957 = vmatpush.msra.mxu0 %v9956
    %v9958 = vand.u32 %v9753, 4294901760
    %9959 = vmatmul.f32.gmra.mxu0 %v9958
    %v9960 = vpop.f32.mrf.mxu0
    %v9961 = vadd.f32 %v9916, %v9960
    %9962 = vdwg.mxu0
    %9963 = vmatpush.msra.mxu0 0.0
    %9964 = vmatpush.msra.mxu0 0.0
    %9965 = vmatpush.msra.mxu0 0.0
    %9966 = vmatpush.msra.mxu0 0.0
    %9967 = vmatpush.msra.mxu0 0.0
    %9968 = vmatpush.msra.mxu0 0.0
    %9969 = vmatpush.msra.mxu0 0.0
    %9970 = vmatpush.msra.mxu0 0.0
    %v9971 = vand.u32 %v9749, 4294901760
    %9972 = vmatpush.msra.mxu0 %v9971
    %v9973 = vand.u32 %v9748, 4294901760
    %9974 = vmatpush.msra.mxu0 %v9973
    %v9975 = vand.u32 %v9747, 4294901760
    %9976 = vmatpush.msra.mxu0 %v9975
    %v9977 = vand.u32 %v9746, 4294901760
    %9978 = vmatpush.msra.mxu0 %v9977
    %v9979 = vand.u32 %v9745, 4294901760
    %9980 = vmatpush.msra.mxu0 %v9979
    %v9981 = vand.u32 %v9744, 4294901760
    %9982 = vmatpush.msra.mxu0 %v9981
    %v9983 = vand.u32 %v9743, 4294901760
    %9984 = vmatpush.msra.mxu0 %v9983
    %v9985 = vand.u32 %v9742, 4294901760
    %9986 = vmatpush.msra.mxu0 %v9985
    %v9987 = vand.u32 %v9753, 4294901760
    %9988 = vmatmul.f32.gmra.mxu0 %v9987
    %v9989 = vpop.f32.mrf.mxu0
    %v9990 = vadd.f32 %v9961, %v9989
    %9991 = vdwg.mxu0
    %9992 = vst [vmem:[#allocation6] sm:$0x3] %v9990
    // Predicated region
    $region14: #{fwd.1} parent=1 // pred_check
      _
    $region15: #{fwd.1} parent=1 // pred_check_branch
      %9994 = sbr.rel (0) target = $region17
    $region16: #{fwd.1} parent=1 // pred_region
      %9996 = vsyncadd [#allocation4], 0
      %s9998 = sshll.u32 [#allocation5], 4
      %s9999 = int_to_ptr.vmem [resolvable:$true] %s9998
      %s10000 = sshll.u32 %s2, 4
      %s10001 = int_to_ptr.hbm [resolvable:$true] %s10000
      %10003 = dma.vmem_to_hbm [thread:$0]  %s9999, 128, %s10001, [#allocation4]
    $region17: #{fwd.1} parent=1 // pred_fallthru
      _
    // Predicated region
    $region18: #{fwd.1} parent=1 // pred_check
      _
    $region19: #{fwd.1} parent=1 // pred_check_branch
      %10005 = sbr.rel (0) target = $region21
    $region20: #{fwd.1} parent=1 // pred_region
      %10007 = vsyncadd [#allocation7], 0
      %s10009 = sshll.u32 [#allocation6], 4
      %s10010 = int_to_ptr.vmem [resolvable:$true] %s10009
      %s10011 = sshll.u32 %s3, 4
      %s10012 = int_to_ptr.hbm [resolvable:$true] %s10011
      %10014 = dma.vmem_to_hbm [thread:$0]  %s10010, 32, %s10012, [#allocation7]
    $region21: #{fwd.1} parent=1 // pred_fallthru
      _
    // Predicated region
    $region22: #{fwd.1} parent=1 // pred_check
      _
    $region23: #{fwd.1} parent=1 // pred_check_branch
      %10016 = sbr.rel (0) target = $region25
    $region24: #{fwd.1} parent=1 // pred_region
      %10018 = dma.done [#allocation4], 128
    $region25: #{fwd.1} parent=1 // pred_fallthru
      _
    // Predicated region
    $region26: #{fwd.1} parent=1 // pred_check
      _
    $region27: #{fwd.1} parent=1 // pred_check_branch
      %10020 = sbr.rel (0) target = $region29
    $region28: #{fwd.1} parent=1 // pred_region
      %10022 = dma.done [#allocation7], 32
    $region29: #{fwd.1} parent=1 // pred_fallthru
      _
    %10023 = vsyncpa [#allocation3], 1
    %10024 = vsyncpa [#allocation4], 1
    %10025 = vsyncpa [#allocation7], 1

</llo_original>
